<compile_context>
chip_gen: v7x
topology: tpu7x:2x2x1
jax: 0.10.0
libtpu: 0.0.40
codegen_flags: <defaults>
</compile_context>

<pallas_src>
import functools

import numpy as np
import jax
import jax.numpy as jnp
from jax.experimental import pallas as pl
from jax.experimental.pallas import tpu as pltpu


def _round_up(x, m):
    return ((x + m - 1) // m) * m


def _ceil_div(a, b):
    return -(-a // b)


# ----------------------------------------------------------------------------
# Pallas kernel: tiled matmul with optional fused bias + PReLU epilogue.
#   grid = (M//tm, N//tn, K//tk), reduction axis last, f32 VMEM accumulator.
# ----------------------------------------------------------------------------
def _matmul_kernel(*refs, has_bias, has_act, out_dtype):
    a_ref, b_ref = refs[0], refs[1]
    pos = 2
    bias_ref = None
    alpha_ref = None
    if has_bias:
        bias_ref = refs[pos]
        pos += 1
    if has_act:
        alpha_ref = refs[pos]
        pos += 1
    o_ref, acc_ref = refs[pos], refs[pos + 1]

    k = pl.program_id(2)

    @pl.when(k == 0)
    def _():
        acc_ref[...] = jnp.zeros_like(acc_ref)

    acc_ref[...] += jnp.dot(a_ref[...], b_ref[...],
                            preferred_element_type=jnp.float32)

    @pl.when(k == pl.num_programs(2) - 1)
    def _():
        y = acc_ref[...]
        if has_bias:
            y = y + bias_ref[...]
        if has_act:
            alpha = alpha_ref[0]                 # learned PReLU slope (SMEM scalar)
            y = jnp.where(y > 0, y, alpha * y)
        o_ref[...] = y.astype(out_dtype)


def matmul_bias_prelu(a, b, bias=None, alpha=None,
                      out_dtype=jnp.float32, mxu_dtype=jnp.bfloat16):
    """a: (M, K) @ b: (K, N) [+ bias (N,)] [-> PReLU(alpha)] -> (M, N) out_dtype.

    K is NOT padded (the K block equals the full reduction dim); N is padded to
    a multiple of 128 for lane-dense stores; M is padded to the row tile.
    """
    M, K = a.shape
    K2, N = b.shape
    assert K == K2
    has_bias = bias is not None
    has_act = alpha is not None

    Np = _round_up(N, 128)
    if K <= 2048:
        Kp, tk = K, K                            # single reduction step, no K pad
    else:
        tk = 512
        Kp = _round_up(K, tk)

    tn = 256 if Np % 256 == 0 else 128
    tm = min(256, _round_up(M, 8))
    Mp = _round_up(M, tm)
    # v7x: try to give the parallel (i, j) grid >= 2 steps so both TensorCores
    # get work; near-zero cost on single-core v5e / v6e.
    if (Mp // tm) * (Np // tn) < 2:
        if Np // 128 >= 2:
            tn = 128
        elif M >= 16:
            tm = _round_up(_ceil_div(M, 2), 8)
            Mp = _round_up(M, tm)

    # Cast to the MXU dtype first, THEN pad (halves the bytes the pad writes).
    a_p = a.astype(mxu_dtype)
    if Mp != M or Kp != K:
        a_p = jnp.pad(a_p, ((0, Mp - M), (0, Kp - K)))
    b_p = b.astype(mxu_dtype)
    if Kp != K or Np != N:
        b_p = jnp.pad(b_p, ((0, Kp - K), (0, Np - N)))

    inputs = [a_p, b_p]
    in_specs = [pl.BlockSpec((tm, tk), lambda i, j, k: (i, k)),
                pl.BlockSpec((tk, tn), lambda i, j, k: (k, j))]
    if has_bias:
        bias_p = jnp.asarray(bias, jnp.float32)
        if Np != N:
            bias_p = jnp.pad(bias_p, (0, Np - N))
        inputs.append(bias_p.reshape(1, Np))
        in_specs.append(pl.BlockSpec((1, tn), lambda i, j, k: (0, j)))
    if has_act:
        inputs.append(jnp.asarray(alpha, jnp.float32).reshape((1,)))
        in_specs.append(pl.BlockSpec(memory_space=pltpu.MemorySpace.SMEM))

    out_bytes = jnp.dtype(out_dtype).itemsize
    cost = pl.CostEstimate(
        flops=2 * Mp * Kp * Np,
        transcendentals=0,
        bytes_accessed=(a_p.size * a_p.dtype.itemsize
                        + b_p.size * b_p.dtype.itemsize
                        + Mp * Np * out_bytes),
    )

    out = pl.pallas_call(
        functools.partial(_matmul_kernel, has_bias=has_bias, has_act=has_act,
                          out_dtype=out_dtype),
        out_shape=jax.ShapeDtypeStruct((Mp, Np), out_dtype),
        grid_spec=pltpu.PrefetchScalarGridSpec(
            num_scalar_prefetch=0,
            grid=(Mp // tm, Np // tn, Kp // tk),
            in_specs=in_specs,
            out_specs=pl.BlockSpec((tm, tn), lambda i, j, k: (i, j)),
            scratch_shapes=[pltpu.VMEM((tm, tn), jnp.float32)],
        ),
        compiler_params=pltpu.CompilerParams(
            dimension_semantics=("parallel", "parallel", "arbitrary")),
        cost_estimate=cost,
    )(*inputs)
    return out[:M, :N]


# ----------------------------------------------------------------------------
# Conv / transposed-conv / upsample wrappers (NHWC end-to-end, PyTorch layouts)
# ----------------------------------------------------------------------------
def conv2d(x, w, b, alpha=None, stride=1, padding=0,
           out_dtype=jnp.float32, mxu_dtype=jnp.bfloat16):
    """x: (N,H,W,Cin), w: (Cout,Cin,kh,kw), b: (Cout,), alpha: (1,) or None."""
    N, H, W, Cin = x.shape
    Cout, Cin2, kh, kw = w.shape
    assert Cin == Cin2
    if kh == 1 and kw == 1 and stride == 1 and padding == 0:
        A = x.reshape(N * H * W, Cin)
        B = w.reshape(Cout, Cin).T
        y = matmul_bias_prelu(A, B, b, alpha, out_dtype=out_dtype, mxu_dtype=mxu_dtype)
        return y.reshape(N, H, W, Cout)
    xc = x.astype(mxu_dtype)
    xp = jnp.pad(xc, ((0, 0), (padding, padding), (padding, padding), (0, 0))) \
        if padding else xc
    Hp, Wp = H + 2 * padding, W + 2 * padding
    Ho = (Hp - kh) // stride + 1
    Wo = (Wp - kw) // stride + 1
    # im2col in NHWC: taps concatenated on the channel axis (no layout transposes).
    # TODO(synk): fold the kh*kw taps into the matmul grid's K axis via
    # shifted-window index_maps so the patch tensor never hits HBM.
    patches = [xp[:, i:i + stride * Ho:stride, j:j + stride * Wo:stride, :]
               for i in range(kh) for j in range(kw)]
    A = jnp.concatenate(patches, axis=-1).reshape(N * Ho * Wo, kh * kw * Cin)
    B = w.transpose(2, 3, 1, 0).reshape(kh * kw * Cin, Cout)
    y = matmul_bias_prelu(A, B, b, alpha, out_dtype=out_dtype, mxu_dtype=mxu_dtype)
    return y.reshape(N, Ho, Wo, Cout)


def _phase_geometry(k, s, p, in_size, out_size):
    """Per-axis phase decomposition geometry; None if not uniformly factorable."""
    if k % s != 0:
        return None
    kk = k // s
    t_mins, counts = [], []
    for r in range(s):
        t_min = -((r - p) // s)                       # ceil((p - r) / s)
        t_max = (out_size - 1 + p - r) // s
        t_mins.append(t_min)
        counts.append(t_max - t_min + 1)
    if len(set(t_mins)) != 1 or len(set(counts)) != 1:
        return None
    t_min, count = t_mins[0], counts[0]
    if s * t_min != p:                                # phase r -> output offset r
        return None
    if out_size != s * count:
        return None
    pad_lo = kk - 1 - t_min
    if pad_lo < 0:
        return None
    pad_hi = max(0, count - 1 + t_min - (in_size - 1))
    return t_min, count, pad_lo, pad_hi


def _conv_transpose2d_fallback(x, w, b, alpha, s, p, out_dtype):
    # TODO(synk): slow generic path (jnp overlap-add + jnp bias/PReLU); only
    # reached for upscale factors whose (k, s, p) don't phase-factor (3, 4, 8).
    N, H, W, Cin = x.shape
    _, Cout, kh, kw = w.shape
    Ho = (H - 1) * s - 2 * p + kh
    Wo = (W - 1) * s - 2 * p + kw
    A = x.reshape(N * H * W, Cin)
    B = w.transpose(0, 2, 3, 1).reshape(Cin, kh * kw * Cout)
    z = matmul_bias_prelu(A, B)                       # no bias / act, f32 out
    z = z.reshape(N, H, W, kh, kw, Cout)
    y = jnp.zeros((N, Ho, Wo, Cout), jnp.float32)     # keep overlap-add in f32
    for ky in range(kh):
        iy_lo = max(0, _ceil_div(p - ky, s))
        iy_hi = min(H, _ceil_div(Ho + p - ky, s))
        if iy_hi <= iy_lo:
            continue
        oy0 = iy_lo * s - p + ky
        for kx in range(kw):
            ix_lo = max(0, _ceil_div(p - kx, s))
            ix_hi = min(W, _ceil_div(Wo + p - kx, s))
            if ix_hi <= ix_lo:
                continue
            ox0 = ix_lo * s - p + kx
            y = y.at[:, oy0:oy0 + (iy_hi - iy_lo) * s:s,
                     ox0:ox0 + (ix_hi - ix_lo) * s:s, :].add(
                z[:, iy_lo:iy_hi, ix_lo:ix_hi, ky, kx, :])
    y = y + jnp.asarray(b, jnp.float32)
    if alpha is not None:
        a0 = jnp.asarray(alpha, jnp.float32).reshape(())
        y = jnp.where(y > 0, y, a0 * y)
    return y.astype(out_dtype)


def conv_transpose2d(x, w, b, alpha=None, stride=2, padding=2,
                     out_dtype=jnp.float32, mxu_dtype=jnp.bfloat16):
    """ConvTranspose2d as ONE phase-decomposed matmul (bias+PReLU fused).

    x: (N,H,W,Cin), w: (Cin,Cout,kh,kw) (PyTorch layout), b: (Cout,).
    """
    N, H, W, Cin = x.shape
    Cin2, Cout, kh, kw = w.shape
    assert Cin == Cin2 and kh == kw
    s, p, k = stride, padding, kh
    Ho = (H - 1) * s - 2 * p + k
    Wo = (W - 1) * s - 2 * p + k

    gh = _phase_geometry(k, s, p, H, Ho)
    gw = _phase_geometry(k, s, p, W, Wo)
    if gh is None or gw is None:
        return _conv_transpose2d_fallback(x, w, b, alpha, s, p, out_dtype)

    kk = k // s
    _, count_h, padlo_h, padhi_h = gh
    _, count_w, padlo_w, padhi_w = gw

    xc = x.astype(mxu_dtype)
    xp = jnp.pad(xc, ((0, 0), (padlo_h, padhi_h), (padlo_w, padhi_w), (0, 0)))
    patches = [xp[:, jy:jy + count_h, jx:jx + count_w, :]
               for jy in range(kk) for jx in range(kk)]
    A = jnp.concatenate(patches, axis=-1).reshape(N * count_h * count_w, kk * kk * Cin)

    # B[(jy,jx,cin), (ry,rx,cout)] = w[cin, cout, ry + s*(kk-1-jy), rx + s*(kk-1-jx)]
    k_idx = np.arange(s)[None, :] + s * (kk - 1 - np.arange(kk))[:, None]   # (kk, s)
    Bt = w[:, :, k_idx[:, :, None, None], k_idx[None, None, :, :]]          # (Cin,Cout,kk,s,kk,s)
    B = Bt.transpose(2, 4, 0, 3, 5, 1).reshape(kk * kk * Cin, s * s * Cout)
    bias_tiled = jnp.tile(jnp.asarray(b, jnp.float32), s * s)

    y = matmul_bias_prelu(A, B, bias_tiled, alpha,
                          out_dtype=out_dtype, mxu_dtype=mxu_dtype)
    y = y.reshape(N, count_h, count_w, s, s, Cout)
    y = y.transpose(0, 1, 3, 2, 4, 5).reshape(N, Ho, Wo, Cout)
    return y


def _interp_matrix(out_size, in_size, scale):
    # PyTorch bilinear, align_corners=False: src = (dst + 0.5)/scale - 0.5, clamp >= 0.
    M = np.zeros((out_size, in_size), np.float32)
    for o in range(out_size):
        src = max((o + 0.5) / scale - 0.5, 0.0)
        i0 = min(int(np.floor(src)), in_size - 1)
        i1 = min(i0 + 1, in_size - 1)
        lam = src - i0
        M[o, i0] += 1.0 - lam
        M[o, i1] += lam
    return M


def bilinear_upsample(x, scale):
    """x: (N,H,W,C) -> (N,H*scale,W*scale,C).  Separable interpolation folded
    into one static (H*W, Ho*Wo) Kronecker operator -> a single Pallas matmul."""
    N, H, W, C = x.shape
    Ho, Wo = H * scale, W * scale
    mh = _interp_matrix(Ho, H, scale)                  # (Ho, H)
    mw = _interp_matrix(Wo, W, scale)                  # (Wo, W)
    kron = np.einsum('oh,qw->hwoq', mh, mw).reshape(H * W, Ho * Wo)
    planes = x.transpose(0, 3, 1, 2).reshape(N * C, H * W)
    out = matmul_bias_prelu(planes, jnp.asarray(kron),
                            out_dtype=jnp.float32, mxu_dtype=jnp.float32)
    return out.reshape(N, C, Ho, Wo).transpose(0, 2, 3, 1)


# ----------------------------------------------------------------------------
# SRFBN model
# ----------------------------------------------------------------------------
_RGB_MEAN = jnp.array([0.42913573, 0.44984126, 0.63257891], jnp.float32)
_RGB_STD = jnp.array([1.0, 1.0, 1.0], jnp.float32)


def mean_shift(x, sign):
    w = (jnp.eye(3, dtype=jnp.float32) / _RGB_STD[:, None]).reshape(3, 3, 1, 1)
    b = sign * 255.0 * _RGB_MEAN / _RGB_STD
    return conv2d(x, w, b, alpha=None, stride=1, padding=0,
                  out_dtype=jnp.float32, mxu_dtype=jnp.float32)


def init_params(key, in_ch, out_ch, nf, num_groups, ksize):
    keys = iter(jax.random.split(key, 256))

    def prelu_alpha():
        # nn.PReLU(num_parameters=1, init=0.2) -> learned per-layer scalar.
        return jnp.full((1,), 0.2, jnp.float32)

    def conv_p(cin, cout, k, act=True):
        w = jax.random.normal(next(keys), (cout, cin, k, k), jnp.float32) * 0.05
        b = jax.random.normal(next(keys), (cout,), jnp.float32) * 0.05
        return (w, b, prelu_alpha()) if act else (w, b)

    def deconv_p(cin, cout, k):
        w = jax.random.normal(next(keys), (cin, cout, k, k), jnp.float32) * 0.05
        b = jax.random.normal(next(keys), (cout,), jnp.float32) * 0.05
        return (w, b, prelu_alpha())

    p = {}
    p['conv_in'] = conv_p(in_ch, 4 * nf, 3)
    p['feat_in'] = conv_p(4 * nf, nf, 1)
    p['compress_in'] = conv_p(2 * nf, nf, 1)
    p['up'] = [deconv_p(nf, nf, ksize) for _ in range(num_groups)]
    p['down'] = [conv_p(nf, nf, ksize) for _ in range(num_groups)]
    p['uptran'] = [conv_p(nf * (g + 1), nf, 1) for g in range(1, num_groups)]
    p['downtran'] = [conv_p(nf * (g + 1), nf, 1) for g in range(1, num_groups)]
    p['compress_out'] = conv_p(num_groups * nf, nf, 1)
    p['out'] = deconv_p(nf, nf, ksize)
    p['conv_out'] = conv_p(nf, out_ch, 3, act=False)
    return p


def feedback_block(x, last_hidden, params, num_groups, stride):
    bf16 = jnp.bfloat16
    xc = jnp.concatenate([x, last_hidden], axis=-1)
    x = conv2d(xc, *params['compress_in'], stride=1, padding=0, out_dtype=bf16)
    lr_features = [x]
    hr_features = []
    for g in range(num_groups):
        LD_L = jnp.concatenate(lr_features, axis=-1)
        if g > 0:
            LD_L = conv2d(LD_L, *params['uptran'][g - 1], stride=1, padding=0,
                          out_dtype=bf16)
        LD_H = conv_transpose2d(LD_L, *params['up'][g], stride=stride, padding=2,
                                out_dtype=bf16)
        hr_features.append(LD_H)
        LD_Hc = jnp.concatenate(hr_features, axis=-1)
        if g > 0:
            LD_Hc = conv2d(LD_Hc, *params['downtran'][g - 1], stride=1, padding=0,
                           out_dtype=bf16)
        LD_L2 = conv2d(LD_Hc, *params['down'][g], stride=stride, padding=2,
                       out_dtype=bf16)
        lr_features.append(LD_L2)
    out = jnp.concatenate(lr_features[1:], axis=-1)
    out = conv2d(out, *params['compress_out'], stride=1, padding=0, out_dtype=bf16)
    return out


def srfbn_forward(x_nchw, params, num_steps, num_groups, upscale, stride):
    bf16 = jnp.bfloat16
    x = x_nchw.transpose(0, 2, 3, 1)                         # NHWC for the whole net
    x = mean_shift(x, -1.0)                                  # sub_mean (f32)
    inter_res = bilinear_upsample(x, upscale)                # F.interpolate(bilinear)

    # Fold add_mean (fixed 1x1 conv, diag(1/std) weight) into conv_out and apply
    # its inter_res contribution once, outside the step loop:
    #   add_mean(inter_res + conv_out(h)) == mean_shift(inter_res, +1) + conv_out'(h)
    inter_res_shifted = mean_shift(inter_res, +1.0)
    d = 1.0 / _RGB_STD
    w_co, b_co = params['conv_out']
    w_co = w_co * d[:, None, None, None]
    b_co = b_co * d

    x = conv2d(x, *params['conv_in'], stride=1, padding=1, out_dtype=bf16)
    x = conv2d(x, *params['feat_in'], stride=1, padding=0, out_dtype=bf16)
    last_hidden = x                                          # should_reset: copy of x
    outs = []
    for _ in range(num_steps):
        h = feedback_block(x, last_hidden, params, num_groups, stride)
        last_hidden = h
        h = conv_transpose2d(h, *params['out'], stride=stride, padding=2,
                             out_dtype=bf16)
        h = conv2d(h, w_co, b_co, alpha=None, stride=1, padding=1,
                   out_dtype=jnp.float32)                    # conv_out (no act)
        h = inter_res_shifted + h                            # == add_mean(inter_res + conv_out)
        outs.append(h.transpose(0, 3, 1, 2))                 # back to NCHW
    return outs


# ----------------------------------------------------------------------------
if __name__ == "__main__":
    # SRFBN(in_channels=3, out_channels=3, num_features=8, num_steps=2,
    #       num_groups=2, upscale_factor=2, act_type='prelu', norm_type=None)
    in_channels, out_channels = 3, 3
    num_features = 8
    num_steps = 2
    num_groups = 2
    upscale_factor = 2
    stride, ksize = 2, 6          # from upscale_factor == 2

    key = jax.random.PRNGKey(0)
    kx, kp = jax.random.split(key)
    x = jax.random.uniform(kx, (2, 3, 8, 8), jnp.float32) * 255.0

    params = init_params(kp, in_channels, out_channels, num_features, num_groups, ksize)

    fwd = jax.jit(functools.partial(srfbn_forward, num_steps=num_steps,
                                    num_groups=num_groups, upscale=upscale_factor,
                                    stride=stride))
    outs = fwd(x, params)

    for o in outs:
        jax.block_until_ready(o)
    assert len(outs) == num_steps
    assert outs[0].shape == (2, out_channels, 8 * upscale_factor, 8 * upscale_factor)
    print("KERNEL_OK")
</pallas_src>

<mosaic_0001>
module attributes {stable_mosaic.version = 11 : i64} {
  func.func @_matmul_kernel(%arg0: i32, %arg1: i32, %arg2: i32, %arg3: memref<64x3xf32, #tpu.memory_space<vmem>>, %arg4: memref<3x128xf32, #tpu.memory_space<vmem>>, %arg5: memref<1x128xf32, #tpu.memory_space<vmem>>, %arg6: memref<64x128xf32, #tpu.memory_space<vmem>>, %arg7: memref<64x128xf32, #tpu.memory_space<vmem>>) attributes {dimension_semantics = [#tpu.dimension_semantics<parallel>, #tpu.dimension_semantics<parallel>, #tpu.dimension_semantics<arbitrary>], iteration_bounds = array<i64: 2, 1, 1>, scalar_prefetch = 0 : i64, scratch_operands = 1 : i64, tpu.core_type = #tpu.core_type<tc>, window_params = [{transform_indices = @transform_0, window_bounds = array<i64: 64, 3>}, {transform_indices = @transform_1, window_bounds = array<i64: 3, 128>}, {transform_indices = @transform_2, window_bounds = array<i64: 1, 128>}, {transform_indices = @transform_3, window_bounds = array<i64: 64, 128>}]} {
    %c0_i32 = arith.constant 0 : i32
    %0 = arith.cmpi eq, %arg2, %c0_i32 : i32
    %1 = arith.extui %0 : i1 to i32
    %c0_i32_0 = arith.constant 0 : i32
    %2 = arith.cmpi ne, %1, %c0_i32_0 : i32
    scf.if %2 {
      %cst_10 = arith.constant 0.000000e+00 : f32
      %12 = vector.broadcast %cst_10 : f32 to vector<64x128xf32>
      %c0_11 = arith.constant 0 : index
      %c0_12 = arith.constant 0 : index
      %13 = vector.load %arg7[%c0_11, %c0_12] : memref<64x128xf32, #tpu.memory_space<vmem>>, vector<64x128xf32>
      tpu.vector_store %arg7[%c0_11, %c0_12], %12 {strides = array<i32>} : memref<64x128xf32, #tpu.memory_space<vmem>>, vector<64x128xf32>,
    } else {
    }
    %c0 = arith.constant 0 : index
    %c0_1 = arith.constant 0 : index
    %3 = vector.load %arg7[%c0, %c0_1] : memref<64x128xf32, #tpu.memory_space<vmem>>, vector<64x128xf32>
    %c0_2 = arith.constant 0 : index
    %c0_3 = arith.constant 0 : index
    %4 = vector.load %arg3[%c0_2, %c0_3] : memref<64x3xf32, #tpu.memory_space<vmem>>, vector<64x3xf32>
    %c0_4 = arith.constant 0 : index
    %c0_5 = arith.constant 0 : index
    %5 = vector.load %arg4[%c0_4, %c0_5] : memref<3x128xf32, #tpu.memory_space<vmem>>, vector<3x128xf32>
    %cst = arith.constant dense<0.000000e+00> : vector<64x128xf32>
    %6 = tpu.matmul %4, %5, %cst {dimension_numbers = #tpu.dot_dimension_numbers<[1], [0], [0], [1], [0, 0, 1, 1], [], []>} : vector<64x3xf32>, vector<3x128xf32>, vector<64x128xf32> -> vector<64x128xf32>
    %7 = arith.addf %3, %6 : vector<64x128xf32>
    %c0_6 = arith.constant 0 : index
    %c0_7 = arith.constant 0 : index
    %8 = vector.load %arg7[%c0_6, %c0_7] : memref<64x128xf32, #tpu.memory_space<vmem>>, vector<64x128xf32>
    tpu.vector_store %arg7[%c0_6, %c0_7], %7 {strides = array<i32>} : memref<64x128xf32, #tpu.memory_space<vmem>>, vector<64x128xf32>,
    %c0_i32_8 = arith.constant 0 : i32
    %9 = arith.cmpi eq, %arg2, %c0_i32_8 : i32
    %10 = arith.extui %9 : i1 to i32
    %c0_i32_9 = arith.constant 0 : i32
    %11 = arith.cmpi ne, %10, %c0_i32_9 : i32
    scf.if %11 {
      %c0_10 = arith.constant 0 : index
      %c0_11 = arith.constant 0 : index
      %12 = vector.load %arg7[%c0_10, %c0_11] : memref<64x128xf32, #tpu.memory_space<vmem>>, vector<64x128xf32>
      %c0_12 = arith.constant 0 : index
      %c0_13 = arith.constant 0 : index
      %13 = vector.load %arg5[%c0_12, %c0_13] : memref<1x128xf32, #tpu.memory_space<vmem>>, vector<1x128xf32>
      %14 = vector.broadcast %13 : vector<1x128xf32> to vector<64x128xf32>
      %15 = arith.addf %12, %14 : vector<64x128xf32>
      %c0_14 = arith.constant 0 : index
      %c0_15 = arith.constant 0 : index
      %16 = vector.load %arg6[%c0_14, %c0_15] : memref<64x128xf32, #tpu.memory_space<vmem>>, vector<64x128xf32>
      tpu.vector_store %arg6[%c0_14, %c0_15], %15 {strides = array<i32>} : memref<64x128xf32, #tpu.memory_space<vmem>>, vector<64x128xf32>,
    } else {
    }
    return
  }
  func.func @transform_0(%arg0: i32, %arg1: i32, %arg2: i32) -> (i32, i32) {
    %c0_i32 = arith.constant 0 : i32
    return %arg0, %arg2 : i32, i32
  }
  func.func @transform_1(%arg0: i32, %arg1: i32, %arg2: i32) -> (i32, i32) {
    %c0_i32 = arith.constant 0 : i32
    return %arg2, %arg1 : i32, i32
  }
  func.func @transform_2(%arg0: i32, %arg1: i32, %arg2: i32) -> (i32, i32) {
    %c0_i32 = arith.constant 0 : i32
    %c0_i32_0 = arith.constant 0 : i32
    return %c0_i32, %arg1 : i32, i32
  }
  func.func @transform_3(%arg0: i32, %arg1: i32, %arg2: i32) -> (i32, i32) {
    %c0_i32 = arith.constant 0 : i32
    return %arg0, %arg1 : i32, i32
  }
}

module attributes {stable_mosaic.version = 11 : i64} {
  func.func @_matmul_kernel(%arg0: i32, %arg1: i32, %arg2: i32, %arg3: memref<64x27xbf16, #tpu.memory_space<vmem>>, %arg4: memref<27x128xbf16, #tpu.memory_space<vmem>>, %arg5: memref<1x128xf32, #tpu.memory_space<vmem>>, %arg6: memref<1xf32, #tpu.memory_space<smem>>, %arg7: memref<64x128xbf16, #tpu.memory_space<vmem>>, %arg8: memref<64x128xf32, #tpu.memory_space<vmem>>) attributes {dimension_semantics = [#tpu.dimension_semantics<parallel>, #tpu.dimension_semantics<parallel>, #tpu.dimension_semantics<arbitrary>], iteration_bounds = array<i64: 2, 1, 1>, scalar_prefetch = 0 : i64, scratch_operands = 1 : i64, tpu.core_type = #tpu.core_type<tc>, window_params = [{transform_indices = @transform_0, window_bounds = array<i64: 64, 27>}, {transform_indices = @transform_1, window_bounds = array<i64: 27, 128>}, {transform_indices = @transform_2, window_bounds = array<i64: 1, 128>}, {transform_indices = @transform_3, window_bounds = array<i64: 1>}, {transform_indices = @transform_4, window_bounds = array<i64: 64, 128>}]} {
    %c0_i32 = arith.constant 0 : i32
    %0 = arith.cmpi eq, %arg2, %c0_i32 : i32
    %1 = arith.extui %0 : i1 to i32
    %c0_i32_0 = arith.constant 0 : i32
    %2 = arith.cmpi ne, %1, %c0_i32_0 : i32
    scf.if %2 {
      %cst_10 = arith.constant 0.000000e+00 : f32
      %12 = vector.broadcast %cst_10 : f32 to vector<64x128xf32>
      %c0_11 = arith.constant 0 : index
      %c0_12 = arith.constant 0 : index
      %13 = vector.load %arg8[%c0_11, %c0_12] : memref<64x128xf32, #tpu.memory_space<vmem>>, vector<64x128xf32>
      tpu.vector_store %arg8[%c0_11, %c0_12], %12 {strides = array<i32>} : memref<64x128xf32, #tpu.memory_space<vmem>>, vector<64x128xf32>,
    } else {
    }
    %c0 = arith.constant 0 : index
    %c0_1 = arith.constant 0 : index
    %3 = vector.load %arg8[%c0, %c0_1] : memref<64x128xf32, #tpu.memory_space<vmem>>, vector<64x128xf32>
    %c0_2 = arith.constant 0 : index
    %c0_3 = arith.constant 0 : index
    %4 = vector.load %arg3[%c0_2, %c0_3] : memref<64x27xbf16, #tpu.memory_space<vmem>>, vector<64x27xbf16>
    %c0_4 = arith.constant 0 : index
    %c0_5 = arith.constant 0 : index
    %5 = vector.load %arg4[%c0_4, %c0_5] : memref<27x128xbf16, #tpu.memory_space<vmem>>, vector<27x128xbf16>
    %cst = arith.constant dense<0.000000e+00> : vector<64x128xf32>
    %6 = tpu.matmul %4, %5, %cst {dimension_numbers = #tpu.dot_dimension_numbers<[1], [0], [0], [1], [0, 0, 1, 1], [], []>} : vector<64x27xbf16>, vector<27x128xbf16>, vector<64x128xf32> -> vector<64x128xf32>
    %7 = arith.addf %3, %6 : vector<64x128xf32>
    %c0_6 = arith.constant 0 : index
    %c0_7 = arith.constant 0 : index
    %8 = vector.load %arg8[%c0_6, %c0_7] : memref<64x128xf32, #tpu.memory_space<vmem>>, vector<64x128xf32>
    tpu.vector_store %arg8[%c0_6, %c0_7], %7 {strides = array<i32>} : memref<64x128xf32, #tpu.memory_space<vmem>>, vector<64x128xf32>,
    %c0_i32_8 = arith.constant 0 : i32
    %9 = arith.cmpi eq, %arg2, %c0_i32_8 : i32
    %10 = arith.extui %9 : i1 to i32
    %c0_i32_9 = arith.constant 0 : i32
    %11 = arith.cmpi ne, %10, %c0_i32_9 : i32
    scf.if %11 {
      %c0_10 = arith.constant 0 : index
      %c0_11 = arith.constant 0 : index
      %12 = vector.load %arg8[%c0_10, %c0_11] : memref<64x128xf32, #tpu.memory_space<vmem>>, vector<64x128xf32>
      %c0_12 = arith.constant 0 : index
      %c0_13 = arith.constant 0 : index
      %13 = vector.load %arg5[%c0_12, %c0_13] : memref<1x128xf32, #tpu.memory_space<vmem>>, vector<1x128xf32>
      %14 = vector.broadcast %13 : vector<1x128xf32> to vector<64x128xf32>
      %15 = arith.addf %12, %14 : vector<64x128xf32>
      %c0_14 = arith.constant 0 : index
      %16 = memref.load %arg6[%c0_14] : memref<1xf32, #tpu.memory_space<smem>>
      %cst_15 = arith.constant 0.000000e+00 : f32
      %17 = vector.broadcast %cst_15 : f32 to vector<64x128xf32>
      %18 = arith.cmpf ogt, %15, %17 : vector<64x128xf32>
      %19 = vector.broadcast %16 : f32 to vector<64x128xf32>
      %20 = arith.mulf %19, %15 : vector<64x128xf32>
      %21 = arith.select %18, %15, %20 : vector<64x128xi1>, vector<64x128xf32>
      %22 = arith.truncf %21 : vector<64x128xf32> to vector<64x128xbf16>
      %c0_16 = arith.constant 0 : index
      %c0_17 = arith.constant 0 : index
      %23 = vector.load %arg7[%c0_16, %c0_17] : memref<64x128xbf16, #tpu.memory_space<vmem>>, vector<64x128xbf16>
      tpu.vector_store %arg7[%c0_16, %c0_17], %22 {strides = array<i32>} : memref<64x128xbf16, #tpu.memory_space<vmem>>, vector<64x128xbf16>,
    } else {
    }
    return
  }
  func.func @transform_0(%arg0: i32, %arg1: i32, %arg2: i32) -> (i32, i32) {
    %c0_i32 = arith.constant 0 : i32
    return %arg0, %arg2 : i32, i32
  }
  func.func @transform_1(%arg0: i32, %arg1: i32, %arg2: i32) -> (i32, i32) {
    %c0_i32 = arith.constant 0 : i32
    return %arg2, %arg1 : i32, i32
  }
  func.func @transform_2(%arg0: i32, %arg1: i32, %arg2: i32) -> (i32, i32) {
    %c0_i32 = arith.constant 0 : i32
    %c0_i32_0 = arith.constant 0 : i32
    return %c0_i32, %arg1 : i32, i32
  }
  func.func @transform_3(%arg0: i32, %arg1: i32, %arg2: i32) -> i32 {
    %c0_i32 = arith.constant 0 : i32
    %c0_i32_0 = arith.constant 0 : i32
    return %c0_i32 : i32
  }
  func.func @transform_4(%arg0: i32, %arg1: i32, %arg2: i32) -> (i32, i32) {
    %c0_i32 = arith.constant 0 : i32
    return %arg0, %arg1 : i32, i32
  }
}

module attributes {stable_mosaic.version = 11 : i64} {
  func.func @_matmul_kernel(%arg0: i32, %arg1: i32, %arg2: i32, %arg3: memref<64x32xbf16, #tpu.memory_space<vmem>>, %arg4: memref<32x128xbf16, #tpu.memory_space<vmem>>, %arg5: memref<1x128xf32, #tpu.memory_space<vmem>>, %arg6: memref<1xf32, #tpu.memory_space<smem>>, %arg7: memref<64x128xbf16, #tpu.memory_space<vmem>>, %arg8: memref<64x128xf32, #tpu.memory_space<vmem>>) attributes {dimension_semantics = [#tpu.dimension_semantics<parallel>, #tpu.dimension_semantics<parallel>, #tpu.dimension_semantics<arbitrary>], iteration_bounds = array<i64: 2, 1, 1>, scalar_prefetch = 0 : i64, scratch_operands = 1 : i64, tpu.core_type = #tpu.core_type<tc>, window_params = [{transform_indices = @transform_0, window_bounds = array<i64: 64, 32>}, {transform_indices = @transform_1, window_bounds = array<i64: 32, 128>}, {transform_indices = @transform_2, window_bounds = array<i64: 1, 128>}, {transform_indices = @transform_3, window_bounds = array<i64: 1>}, {transform_indices = @transform_4, window_bounds = array<i64: 64, 128>}]} {
    %c0_i32 = arith.constant 0 : i32
    %0 = arith.cmpi eq, %arg2, %c0_i32 : i32
    %1 = arith.extui %0 : i1 to i32
    %c0_i32_0 = arith.constant 0 : i32
    %2 = arith.cmpi ne, %1, %c0_i32_0 : i32
    scf.if %2 {
      %cst_10 = arith.constant 0.000000e+00 : f32
      %12 = vector.broadcast %cst_10 : f32 to vector<64x128xf32>
      %c0_11 = arith.constant 0 : index
      %c0_12 = arith.constant 0 : index
      %13 = vector.load %arg8[%c0_11, %c0_12] : memref<64x128xf32, #tpu.memory_space<vmem>>, vector<64x128xf32>
      tpu.vector_store %arg8[%c0_11, %c0_12], %12 {strides = array<i32>} : memref<64x128xf32, #tpu.memory_space<vmem>>, vector<64x128xf32>,
    } else {
    }
    %c0 = arith.constant 0 : index
    %c0_1 = arith.constant 0 : index
    %3 = vector.load %arg8[%c0, %c0_1] : memref<64x128xf32, #tpu.memory_space<vmem>>, vector<64x128xf32>
    %c0_2 = arith.constant 0 : index
    %c0_3 = arith.constant 0 : index
    %4 = vector.load %arg3[%c0_2, %c0_3] : memref<64x32xbf16, #tpu.memory_space<vmem>>, vector<64x32xbf16>
    %c0_4 = arith.constant 0 : index
    %c0_5 = arith.constant 0 : index
    %5 = vector.load %arg4[%c0_4, %c0_5] : memref<32x128xbf16, #tpu.memory_space<vmem>>, vector<32x128xbf16>
    %cst = arith.constant dense<0.000000e+00> : vector<64x128xf32>
    %6 = tpu.matmul %4, %5, %cst {dimension_numbers = #tpu.dot_dimension_numbers<[1], [0], [0], [1], [0, 0, 1, 1], [], []>} : vector<64x32xbf16>, vector<32x128xbf16>, vector<64x128xf32> -> vector<64x128xf32>
    %7 = arith.addf %3, %6 : vector<64x128xf32>
    %c0_6 = arith.constant 0 : index
    %c0_7 = arith.constant 0 : index
    %8 = vector.load %arg8[%c0_6, %c0_7] : memref<64x128xf32, #tpu.memory_space<vmem>>, vector<64x128xf32>
    tpu.vector_store %arg8[%c0_6, %c0_7], %7 {strides = array<i32>} : memref<64x128xf32, #tpu.memory_space<vmem>>, vector<64x128xf32>,
    %c0_i32_8 = arith.constant 0 : i32
    %9 = arith.cmpi eq, %arg2, %c0_i32_8 : i32
    %10 = arith.extui %9 : i1 to i32
    %c0_i32_9 = arith.constant 0 : i32
    %11 = arith.cmpi ne, %10, %c0_i32_9 : i32
    scf.if %11 {
      %c0_10 = arith.constant 0 : index
      %c0_11 = arith.constant 0 : index
      %12 = vector.load %arg8[%c0_10, %c0_11] : memref<64x128xf32, #tpu.memory_space<vmem>>, vector<64x128xf32>
      %c0_12 = arith.constant 0 : index
      %c0_13 = arith.constant 0 : index
      %13 = vector.load %arg5[%c0_12, %c0_13] : memref<1x128xf32, #tpu.memory_space<vmem>>, vector<1x128xf32>
      %14 = vector.broadcast %13 : vector<1x128xf32> to vector<64x128xf32>
      %15 = arith.addf %12, %14 : vector<64x128xf32>
      %c0_14 = arith.constant 0 : index
      %16 = memref.load %arg6[%c0_14] : memref<1xf32, #tpu.memory_space<smem>>
      %cst_15 = arith.constant 0.000000e+00 : f32
      %17 = vector.broadcast %cst_15 : f32 to vector<64x128xf32>
      %18 = arith.cmpf ogt, %15, %17 : vector<64x128xf32>
      %19 = vector.broadcast %16 : f32 to vector<64x128xf32>
      %20 = arith.mulf %19, %15 : vector<64x128xf32>
      %21 = arith.select %18, %15, %20 : vector<64x128xi1>, vector<64x128xf32>
      %22 = arith.truncf %21 : vector<64x128xf32> to vector<64x128xbf16>
      %c0_16 = arith.constant 0 : index
      %c0_17 = arith.constant 0 : index
      %23 = vector.load %arg7[%c0_16, %c0_17] : memref<64x128xbf16, #tpu.memory_space<vmem>>, vector<64x128xbf16>
      tpu.vector_store %arg7[%c0_16, %c0_17], %22 {strides = array<i32>} : memref<64x128xbf16, #tpu.memory_space<vmem>>, vector<64x128xbf16>,
    } else {
    }
    return
  }
  func.func @transform_0(%arg0: i32, %arg1: i32, %arg2: i32) -> (i32, i32) {
    %c0_i32 = arith.constant 0 : i32
    return %arg0, %arg2 : i32, i32
  }
  func.func @transform_1(%arg0: i32, %arg1: i32, %arg2: i32) -> (i32, i32) {
    %c0_i32 = arith.constant 0 : i32
    return %arg2, %arg1 : i32, i32
  }
  func.func @transform_2(%arg0: i32, %arg1: i32, %arg2: i32) -> (i32, i32) {
    %c0_i32 = arith.constant 0 : i32
    %c0_i32_0 = arith.constant 0 : i32
    return %c0_i32, %arg1 : i32, i32
  }
  func.func @transform_3(%arg0: i32, %arg1: i32, %arg2: i32) -> i32 {
    %c0_i32 = arith.constant 0 : i32
    %c0_i32_0 = arith.constant 0 : i32
    return %c0_i32 : i32
  }
  func.func @transform_4(%arg0: i32, %arg1: i32, %arg2: i32) -> (i32, i32) {
    %c0_i32 = arith.constant 0 : i32
    return %arg0, %arg1 : i32, i32
  }
}

module attributes {stable_mosaic.version = 11 : i64} {
  func.func @_matmul_kernel(%arg0: i32, %arg1: i32, %arg2: i32, %arg3: memref<64x16xbf16, #tpu.memory_space<vmem>>, %arg4: memref<16x128xbf16, #tpu.memory_space<vmem>>, %arg5: memref<1x128xf32, #tpu.memory_space<vmem>>, %arg6: memref<1xf32, #tpu.memory_space<smem>>, %arg7: memref<64x128xbf16, #tpu.memory_space<vmem>>, %arg8: memref<64x128xf32, #tpu.memory_space<vmem>>) attributes {dimension_semantics = [#tpu.dimension_semantics<parallel>, #tpu.dimension_semantics<parallel>, #tpu.dimension_semantics<arbitrary>], iteration_bounds = array<i64: 2, 1, 1>, scalar_prefetch = 0 : i64, scratch_operands = 1 : i64, tpu.core_type = #tpu.core_type<tc>, window_params = [{transform_indices = @transform_0, window_bounds = array<i64: 64, 16>}, {transform_indices = @transform_1, window_bounds = array<i64: 16, 128>}, {transform_indices = @transform_2, window_bounds = array<i64: 1, 128>}, {transform_indices = @transform_3, window_bounds = array<i64: 1>}, {transform_indices = @transform_4, window_bounds = array<i64: 64, 128>}]} {
    %c0_i32 = arith.constant 0 : i32
    %0 = arith.cmpi eq, %arg2, %c0_i32 : i32
    %1 = arith.extui %0 : i1 to i32
    %c0_i32_0 = arith.constant 0 : i32
    %2 = arith.cmpi ne, %1, %c0_i32_0 : i32
    scf.if %2 {
      %cst_10 = arith.constant 0.000000e+00 : f32
      %12 = vector.broadcast %cst_10 : f32 to vector<64x128xf32>
      %c0_11 = arith.constant 0 : index
      %c0_12 = arith.constant 0 : index
      %13 = vector.load %arg8[%c0_11, %c0_12] : memref<64x128xf32, #tpu.memory_space<vmem>>, vector<64x128xf32>
      tpu.vector_store %arg8[%c0_11, %c0_12], %12 {strides = array<i32>} : memref<64x128xf32, #tpu.memory_space<vmem>>, vector<64x128xf32>,
    } else {
    }
    %c0 = arith.constant 0 : index
    %c0_1 = arith.constant 0 : index
    %3 = vector.load %arg8[%c0, %c0_1] : memref<64x128xf32, #tpu.memory_space<vmem>>, vector<64x128xf32>
    %c0_2 = arith.constant 0 : index
    %c0_3 = arith.constant 0 : index
    %4 = vector.load %arg3[%c0_2, %c0_3] : memref<64x16xbf16, #tpu.memory_space<vmem>>, vector<64x16xbf16>
    %c0_4 = arith.constant 0 : index
    %c0_5 = arith.constant 0 : index
    %5 = vector.load %arg4[%c0_4, %c0_5] : memref<16x128xbf16, #tpu.memory_space<vmem>>, vector<16x128xbf16>
    %cst = arith.constant dense<0.000000e+00> : vector<64x128xf32>
    %6 = tpu.matmul %4, %5, %cst {dimension_numbers = #tpu.dot_dimension_numbers<[1], [0], [0], [1], [0, 0, 1, 1], [], []>} : vector<64x16xbf16>, vector<16x128xbf16>, vector<64x128xf32> -> vector<64x128xf32>
    %7 = arith.addf %3, %6 : vector<64x128xf32>
    %c0_6 = arith.constant 0 : index
    %c0_7 = arith.constant 0 : index
    %8 = vector.load %arg8[%c0_6, %c0_7] : memref<64x128xf32, #tpu.memory_space<vmem>>, vector<64x128xf32>
    tpu.vector_store %arg8[%c0_6, %c0_7], %7 {strides = array<i32>} : memref<64x128xf32, #tpu.memory_space<vmem>>, vector<64x128xf32>,
    %c0_i32_8 = arith.constant 0 : i32
    %9 = arith.cmpi eq, %arg2, %c0_i32_8 : i32
    %10 = arith.extui %9 : i1 to i32
    %c0_i32_9 = arith.constant 0 : i32
    %11 = arith.cmpi ne, %10, %c0_i32_9 : i32
    scf.if %11 {
      %c0_10 = arith.constant 0 : index
      %c0_11 = arith.constant 0 : index
      %12 = vector.load %arg8[%c0_10, %c0_11] : memref<64x128xf32, #tpu.memory_space<vmem>>, vector<64x128xf32>
      %c0_12 = arith.constant 0 : index
      %c0_13 = arith.constant 0 : index
      %13 = vector.load %arg5[%c0_12, %c0_13] : memref<1x128xf32, #tpu.memory_space<vmem>>, vector<1x128xf32>
      %14 = vector.broadcast %13 : vector<1x128xf32> to vector<64x128xf32>
      %15 = arith.addf %12, %14 : vector<64x128xf32>
      %c0_14 = arith.constant 0 : index
      %16 = memref.load %arg6[%c0_14] : memref<1xf32, #tpu.memory_space<smem>>
      %cst_15 = arith.constant 0.000000e+00 : f32
      %17 = vector.broadcast %cst_15 : f32 to vector<64x128xf32>
      %18 = arith.cmpf ogt, %15, %17 : vector<64x128xf32>
      %19 = vector.broadcast %16 : f32 to vector<64x128xf32>
      %20 = arith.mulf %19, %15 : vector<64x128xf32>
      %21 = arith.select %18, %15, %20 : vector<64x128xi1>, vector<64x128xf32>
      %22 = arith.truncf %21 : vector<64x128xf32> to vector<64x128xbf16>
      %c0_16 = arith.constant 0 : index
      %c0_17 = arith.constant 0 : index
      %23 = vector.load %arg7[%c0_16, %c0_17] : memref<64x128xbf16, #tpu.memory_space<vmem>>, vector<64x128xbf16>
      tpu.vector_store %arg7[%c0_16, %c0_17], %22 {strides = array<i32>} : memref<64x128xbf16, #tpu.memory_space<vmem>>, vector<64x128xbf16>,
    } else {
    }
    return
  }
  func.func @transform_0(%arg0: i32, %arg1: i32, %arg2: i32) -> (i32, i32) {
    %c0_i32 = arith.constant 0 : i32
    return %arg0, %arg2 : i32, i32
  }
  func.func @transform_1(%arg0: i32, %arg1: i32, %arg2: i32) -> (i32, i32) {
    %c0_i32 = arith.constant 0 : i32
    return %arg2, %arg1 : i32, i32
  }
  func.func @transform_2(%arg0: i32, %arg1: i32, %arg2: i32) -> (i32, i32) {
    %c0_i32 = arith.constant 0 : i32
    %c0_i32_0 = arith.constant 0 : i32
    return %c0_i32, %arg1 : i32, i32
  }
  func.func @transform_3(%arg0: i32, %arg1: i32, %arg2: i32) -> i32 {
    %c0_i32 = arith.constant 0 : i32
    %c0_i32_0 = arith.constant 0 : i32
    return %c0_i32 : i32
  }
  func.func @transform_4(%arg0: i32, %arg1: i32, %arg2: i32) -> (i32, i32) {
    %c0_i32 = arith.constant 0 : i32
    return %arg0, %arg1 : i32, i32
  }
}

module attributes {stable_mosaic.version = 11 : i64} {
  func.func @_matmul_kernel(%arg0: i32, %arg1: i32, %arg2: i32, %arg3: memref<64x72xbf16, #tpu.memory_space<vmem>>, %arg4: memref<72x128xbf16, #tpu.memory_space<vmem>>, %arg5: memref<1x128xf32, #tpu.memory_space<vmem>>, %arg6: memref<1xf32, #tpu.memory_space<smem>>, %arg7: memref<64x128xbf16, #tpu.memory_space<vmem>>, %arg8: memref<64x128xf32, #tpu.memory_space<vmem>>) attributes {dimension_semantics = [#tpu.dimension_semantics<parallel>, #tpu.dimension_semantics<parallel>, #tpu.dimension_semantics<arbitrary>], iteration_bounds = array<i64: 2, 1, 1>, scalar_prefetch = 0 : i64, scratch_operands = 1 : i64, tpu.core_type = #tpu.core_type<tc>, window_params = [{transform_indices = @transform_0, window_bounds = array<i64: 64, 72>}, {transform_indices = @transform_1, window_bounds = array<i64: 72, 128>}, {transform_indices = @transform_2, window_bounds = array<i64: 1, 128>}, {transform_indices = @transform_3, window_bounds = array<i64: 1>}, {transform_indices = @transform_4, window_bounds = array<i64: 64, 128>}]} {
    %c0_i32 = arith.constant 0 : i32
    %0 = arith.cmpi eq, %arg2, %c0_i32 : i32
    %1 = arith.extui %0 : i1 to i32
    %c0_i32_0 = arith.constant 0 : i32
    %2 = arith.cmpi ne, %1, %c0_i32_0 : i32
    scf.if %2 {
      %cst_10 = arith.constant 0.000000e+00 : f32
      %12 = vector.broadcast %cst_10 : f32 to vector<64x128xf32>
      %c0_11 = arith.constant 0 : index
      %c0_12 = arith.constant 0 : index
      %13 = vector.load %arg8[%c0_11, %c0_12] : memref<64x128xf32, #tpu.memory_space<vmem>>, vector<64x128xf32>
      tpu.vector_store %arg8[%c0_11, %c0_12], %12 {strides = array<i32>} : memref<64x128xf32, #tpu.memory_space<vmem>>, vector<64x128xf32>,
    } else {
    }
    %c0 = arith.constant 0 : index
    %c0_1 = arith.constant 0 : index
    %3 = vector.load %arg8[%c0, %c0_1] : memref<64x128xf32, #tpu.memory_space<vmem>>, vector<64x128xf32>
    %c0_2 = arith.constant 0 : index
    %c0_3 = arith.constant 0 : index
    %4 = vector.load %arg3[%c0_2, %c0_3] : memref<64x72xbf16, #tpu.memory_space<vmem>>, vector<64x72xbf16>
    %c0_4 = arith.constant 0 : index
    %c0_5 = arith.constant 0 : index
    %5 = vector.load %arg4[%c0_4, %c0_5] : memref<72x128xbf16, #tpu.memory_space<vmem>>, vector<72x128xbf16>
    %cst = arith.constant dense<0.000000e+00> : vector<64x128xf32>
    %6 = tpu.matmul %4, %5, %cst {dimension_numbers = #tpu.dot_dimension_numbers<[1], [0], [0], [1], [0, 0, 1, 1], [], []>} : vector<64x72xbf16>, vector<72x128xbf16>, vector<64x128xf32> -> vector<64x128xf32>
    %7 = arith.addf %3, %6 : vector<64x128xf32>
    %c0_6 = arith.constant 0 : index
    %c0_7 = arith.constant 0 : index
    %8 = vector.load %arg8[%c0_6, %c0_7] : memref<64x128xf32, #tpu.memory_space<vmem>>, vector<64x128xf32>
    tpu.vector_store %arg8[%c0_6, %c0_7], %7 {strides = array<i32>} : memref<64x128xf32, #tpu.memory_space<vmem>>, vector<64x128xf32>,
    %c0_i32_8 = arith.constant 0 : i32
    %9 = arith.cmpi eq, %arg2, %c0_i32_8 : i32
    %10 = arith.extui %9 : i1 to i32
    %c0_i32_9 = arith.constant 0 : i32
    %11 = arith.cmpi ne, %10, %c0_i32_9 : i32
    scf.if %11 {
      %c0_10 = arith.constant 0 : index
      %c0_11 = arith.constant 0 : index
      %12 = vector.load %arg8[%c0_10, %c0_11] : memref<64x128xf32, #tpu.memory_space<vmem>>, vector<64x128xf32>
      %c0_12 = arith.constant 0 : index
      %c0_13 = arith.constant 0 : index
      %13 = vector.load %arg5[%c0_12, %c0_13] : memref<1x128xf32, #tpu.memory_space<vmem>>, vector<1x128xf32>
      %14 = vector.broadcast %13 : vector<1x128xf32> to vector<64x128xf32>
      %15 = arith.addf %12, %14 : vector<64x128xf32>
      %c0_14 = arith.constant 0 : index
      %16 = memref.load %arg6[%c0_14] : memref<1xf32, #tpu.memory_space<smem>>
      %cst_15 = arith.constant 0.000000e+00 : f32
      %17 = vector.broadcast %cst_15 : f32 to vector<64x128xf32>
      %18 = arith.cmpf ogt, %15, %17 : vector<64x128xf32>
      %19 = vector.broadcast %16 : f32 to vector<64x128xf32>
      %20 = arith.mulf %19, %15 : vector<64x128xf32>
      %21 = arith.select %18, %15, %20 : vector<64x128xi1>, vector<64x128xf32>
      %22 = arith.truncf %21 : vector<64x128xf32> to vector<64x128xbf16>
      %c0_16 = arith.constant 0 : index
      %c0_17 = arith.constant 0 : index
      %23 = vector.load %arg7[%c0_16, %c0_17] : memref<64x128xbf16, #tpu.memory_space<vmem>>, vector<64x128xbf16>
      tpu.vector_store %arg7[%c0_16, %c0_17], %22 {strides = array<i32>} : memref<64x128xbf16, #tpu.memory_space<vmem>>, vector<64x128xbf16>,
    } else {
    }
    return
  }
  func.func @transform_0(%arg0: i32, %arg1: i32, %arg2: i32) -> (i32, i32) {
    %c0_i32 = arith.constant 0 : i32
    return %arg0, %arg2 : i32, i32
  }
  func.func @transform_1(%arg0: i32, %arg1: i32, %arg2: i32) -> (i32, i32) {
    %c0_i32 = arith.constant 0 : i32
    return %arg2, %arg1 : i32, i32
  }
  func.func @transform_2(%arg0: i32, %arg1: i32, %arg2: i32) -> (i32, i32) {
    %c0_i32 = arith.constant 0 : i32
    %c0_i32_0 = arith.constant 0 : i32
    return %c0_i32, %arg1 : i32, i32
  }
  func.func @transform_3(%arg0: i32, %arg1: i32, %arg2: i32) -> i32 {
    %c0_i32 = arith.constant 0 : i32
    %c0_i32_0 = arith.constant 0 : i32
    return %c0_i32 : i32
  }
  func.func @transform_4(%arg0: i32, %arg1: i32, %arg2: i32) -> (i32, i32) {
    %c0_i32 = arith.constant 0 : i32
    return %arg0, %arg1 : i32, i32
  }
}

module attributes {stable_mosaic.version = 11 : i64} {
  func.func @_matmul_kernel(%arg0: i32, %arg1: i32, %arg2: i32, %arg3: memref<64x288xbf16, #tpu.memory_space<vmem>>, %arg4: memref<288x128xbf16, #tpu.memory_space<vmem>>, %arg5: memref<1x128xf32, #tpu.memory_space<vmem>>, %arg6: memref<1xf32, #tpu.memory_space<smem>>, %arg7: memref<64x128xbf16, #tpu.memory_space<vmem>>, %arg8: memref<64x128xf32, #tpu.memory_space<vmem>>) attributes {dimension_semantics = [#tpu.dimension_semantics<parallel>, #tpu.dimension_semantics<parallel>, #tpu.dimension_semantics<arbitrary>], iteration_bounds = array<i64: 2, 1, 1>, scalar_prefetch = 0 : i64, scratch_operands = 1 : i64, tpu.core_type = #tpu.core_type<tc>, window_params = [{transform_indices = @transform_0, window_bounds = array<i64: 64, 288>}, {transform_indices = @transform_1, window_bounds = array<i64: 288, 128>}, {transform_indices = @transform_2, window_bounds = array<i64: 1, 128>}, {transform_indices = @transform_3, window_bounds = array<i64: 1>}, {transform_indices = @transform_4, window_bounds = array<i64: 64, 128>}]} {
    %c0_i32 = arith.constant 0 : i32
    %0 = arith.cmpi eq, %arg2, %c0_i32 : i32
    %1 = arith.extui %0 : i1 to i32
    %c0_i32_0 = arith.constant 0 : i32
    %2 = arith.cmpi ne, %1, %c0_i32_0 : i32
    scf.if %2 {
      %cst_10 = arith.constant 0.000000e+00 : f32
      %12 = vector.broadcast %cst_10 : f32 to vector<64x128xf32>
      %c0_11 = arith.constant 0 : index
      %c0_12 = arith.constant 0 : index
      %13 = vector.load %arg8[%c0_11, %c0_12] : memref<64x128xf32, #tpu.memory_space<vmem>>, vector<64x128xf32>
      tpu.vector_store %arg8[%c0_11, %c0_12], %12 {strides = array<i32>} : memref<64x128xf32, #tpu.memory_space<vmem>>, vector<64x128xf32>,
    } else {
    }
    %c0 = arith.constant 0 : index
    %c0_1 = arith.constant 0 : index
    %3 = vector.load %arg8[%c0, %c0_1] : memref<64x128xf32, #tpu.memory_space<vmem>>, vector<64x128xf32>
    %c0_2 = arith.constant 0 : index
    %c0_3 = arith.constant 0 : index
    %4 = vector.load %arg3[%c0_2, %c0_3] : memref<64x288xbf16, #tpu.memory_space<vmem>>, vector<64x288xbf16>
    %c0_4 = arith.constant 0 : index
    %c0_5 = arith.constant 0 : index
    %5 = vector.load %arg4[%c0_4, %c0_5] : memref<288x128xbf16, #tpu.memory_space<vmem>>, vector<288x128xbf16>
    %cst = arith.constant dense<0.000000e+00> : vector<64x128xf32>
    %6 = tpu.matmul %4, %5, %cst {dimension_numbers = #tpu.dot_dimension_numbers<[1], [0], [0], [1], [0, 0, 1, 1], [], []>} : vector<64x288xbf16>, vector<288x128xbf16>, vector<64x128xf32> -> vector<64x128xf32>
    %7 = arith.addf %3, %6 : vector<64x128xf32>
    %c0_6 = arith.constant 0 : index
    %c0_7 = arith.constant 0 : index
    %8 = vector.load %arg8[%c0_6, %c0_7] : memref<64x128xf32, #tpu.memory_space<vmem>>, vector<64x128xf32>
    tpu.vector_store %arg8[%c0_6, %c0_7], %7 {strides = array<i32>} : memref<64x128xf32, #tpu.memory_space<vmem>>, vector<64x128xf32>,
    %c0_i32_8 = arith.constant 0 : i32
    %9 = arith.cmpi eq, %arg2, %c0_i32_8 : i32
    %10 = arith.extui %9 : i1 to i32
    %c0_i32_9 = arith.constant 0 : i32
    %11 = arith.cmpi ne, %10, %c0_i32_9 : i32
    scf.if %11 {
      %c0_10 = arith.constant 0 : index
      %c0_11 = arith.constant 0 : index
      %12 = vector.load %arg8[%c0_10, %c0_11] : memref<64x128xf32, #tpu.memory_space<vmem>>, vector<64x128xf32>
      %c0_12 = arith.constant 0 : index
      %c0_13 = arith.constant 0 : index
      %13 = vector.load %arg5[%c0_12, %c0_13] : memref<1x128xf32, #tpu.memory_space<vmem>>, vector<1x128xf32>
      %14 = vector.broadcast %13 : vector<1x128xf32> to vector<64x128xf32>
      %15 = arith.addf %12, %14 : vector<64x128xf32>
      %c0_14 = arith.constant 0 : index
      %16 = memref.load %arg6[%c0_14] : memref<1xf32, #tpu.memory_space<smem>>
      %cst_15 = arith.constant 0.000000e+00 : f32
      %17 = vector.broadcast %cst_15 : f32 to vector<64x128xf32>
      %18 = arith.cmpf ogt, %15, %17 : vector<64x128xf32>
      %19 = vector.broadcast %16 : f32 to vector<64x128xf32>
      %20 = arith.mulf %19, %15 : vector<64x128xf32>
      %21 = arith.select %18, %15, %20 : vector<64x128xi1>, vector<64x128xf32>
      %22 = arith.truncf %21 : vector<64x128xf32> to vector<64x128xbf16>
      %c0_16 = arith.constant 0 : index
      %c0_17 = arith.constant 0 : index
      %23 = vector.load %arg7[%c0_16, %c0_17] : memref<64x128xbf16, #tpu.memory_space<vmem>>, vector<64x128xbf16>
      tpu.vector_store %arg7[%c0_16, %c0_17], %22 {strides = array<i32>} : memref<64x128xbf16, #tpu.memory_space<vmem>>, vector<64x128xbf16>,
    } else {
    }
    return
  }
  func.func @transform_0(%arg0: i32, %arg1: i32, %arg2: i32) -> (i32, i32) {
    %c0_i32 = arith.constant 0 : i32
    return %arg0, %arg2 : i32, i32
  }
  func.func @transform_1(%arg0: i32, %arg1: i32, %arg2: i32) -> (i32, i32) {
    %c0_i32 = arith.constant 0 : i32
    return %arg2, %arg1 : i32, i32
  }
  func.func @transform_2(%arg0: i32, %arg1: i32, %arg2: i32) -> (i32, i32) {
    %c0_i32 = arith.constant 0 : i32
    %c0_i32_0 = arith.constant 0 : i32
    return %c0_i32, %arg1 : i32, i32
  }
  func.func @transform_3(%arg0: i32, %arg1: i32, %arg2: i32) -> i32 {
    %c0_i32 = arith.constant 0 : i32
    %c0_i32_0 = arith.constant 0 : i32
    return %c0_i32 : i32
  }
  func.func @transform_4(%arg0: i32, %arg1: i32, %arg2: i32) -> (i32, i32) {
    %c0_i32 = arith.constant 0 : i32
    return %arg0, %arg1 : i32, i32
  }
}

module attributes {stable_mosaic.version = 11 : i64} {
  func.func @_matmul_kernel(%arg0: i32, %arg1: i32, %arg2: i32, %arg3: memref<256x16xbf16, #tpu.memory_space<vmem>>, %arg4: memref<16x128xbf16, #tpu.memory_space<vmem>>, %arg5: memref<1x128xf32, #tpu.memory_space<vmem>>, %arg6: memref<1xf32, #tpu.memory_space<smem>>, %arg7: memref<256x128xbf16, #tpu.memory_space<vmem>>, %arg8: memref<256x128xf32, #tpu.memory_space<vmem>>) attributes {dimension_semantics = [#tpu.dimension_semantics<parallel>, #tpu.dimension_semantics<parallel>, #tpu.dimension_semantics<arbitrary>], iteration_bounds = array<i64: 2, 1, 1>, scalar_prefetch = 0 : i64, scratch_operands = 1 : i64, tpu.core_type = #tpu.core_type<tc>, window_params = [{transform_indices = @transform_0, window_bounds = array<i64: 256, 16>}, {transform_indices = @transform_1, window_bounds = array<i64: 16, 128>}, {transform_indices = @transform_2, window_bounds = array<i64: 1, 128>}, {transform_indices = @transform_3, window_bounds = array<i64: 1>}, {transform_indices = @transform_4, window_bounds = array<i64: 256, 128>}]} {
    %c0_i32 = arith.constant 0 : i32
    %0 = arith.cmpi eq, %arg2, %c0_i32 : i32
    %1 = arith.extui %0 : i1 to i32
    %c0_i32_0 = arith.constant 0 : i32
    %2 = arith.cmpi ne, %1, %c0_i32_0 : i32
    scf.if %2 {
      %cst_10 = arith.constant 0.000000e+00 : f32
      %12 = vector.broadcast %cst_10 : f32 to vector<256x128xf32>
      %c0_11 = arith.constant 0 : index
      %c0_12 = arith.constant 0 : index
      %13 = vector.load %arg8[%c0_11, %c0_12] : memref<256x128xf32, #tpu.memory_space<vmem>>, vector<256x128xf32>
      tpu.vector_store %arg8[%c0_11, %c0_12], %12 {strides = array<i32>} : memref<256x128xf32, #tpu.memory_space<vmem>>, vector<256x128xf32>,
    } else {
    }
    %c0 = arith.constant 0 : index
    %c0_1 = arith.constant 0 : index
    %3 = vector.load %arg8[%c0, %c0_1] : memref<256x128xf32, #tpu.memory_space<vmem>>, vector<256x128xf32>
    %c0_2 = arith.constant 0 : index
    %c0_3 = arith.constant 0 : index
    %4 = vector.load %arg3[%c0_2, %c0_3] : memref<256x16xbf16, #tpu.memory_space<vmem>>, vector<256x16xbf16>
    %c0_4 = arith.constant 0 : index
    %c0_5 = arith.constant 0 : index
    %5 = vector.load %arg4[%c0_4, %c0_5] : memref<16x128xbf16, #tpu.memory_space<vmem>>, vector<16x128xbf16>
    %cst = arith.constant dense<0.000000e+00> : vector<256x128xf32>
    %6 = tpu.matmul %4, %5, %cst {dimension_numbers = #tpu.dot_dimension_numbers<[1], [0], [0], [1], [0, 0, 1, 1], [], []>} : vector<256x16xbf16>, vector<16x128xbf16>, vector<256x128xf32> -> vector<256x128xf32>
    %7 = arith.addf %3, %6 : vector<256x128xf32>
    %c0_6 = arith.constant 0 : index
    %c0_7 = arith.constant 0 : index
    %8 = vector.load %arg8[%c0_6, %c0_7] : memref<256x128xf32, #tpu.memory_space<vmem>>, vector<256x128xf32>
    tpu.vector_store %arg8[%c0_6, %c0_7], %7 {strides = array<i32>} : memref<256x128xf32, #tpu.memory_space<vmem>>, vector<256x128xf32>,
    %c0_i32_8 = arith.constant 0 : i32
    %9 = arith.cmpi eq, %arg2, %c0_i32_8 : i32
    %10 = arith.extui %9 : i1 to i32
    %c0_i32_9 = arith.constant 0 : i32
    %11 = arith.cmpi ne, %10, %c0_i32_9 : i32
    scf.if %11 {
      %c0_10 = arith.constant 0 : index
      %c0_11 = arith.constant 0 : index
      %12 = vector.load %arg8[%c0_10, %c0_11] : memref<256x128xf32, #tpu.memory_space<vmem>>, vector<256x128xf32>
      %c0_12 = arith.constant 0 : index
      %c0_13 = arith.constant 0 : index
      %13 = vector.load %arg5[%c0_12, %c0_13] : memref<1x128xf32, #tpu.memory_space<vmem>>, vector<1x128xf32>
      %14 = vector.broadcast %13 : vector<1x128xf32> to vector<256x128xf32>
      %15 = arith.addf %12, %14 : vector<256x128xf32>
      %c0_14 = arith.constant 0 : index
      %16 = memref.load %arg6[%c0_14] : memref<1xf32, #tpu.memory_space<smem>>
      %cst_15 = arith.constant 0.000000e+00 : f32
      %17 = vector.broadcast %cst_15 : f32 to vector<256x128xf32>
      %18 = arith.cmpf ogt, %15, %17 : vector<256x128xf32>
      %19 = vector.broadcast %16 : f32 to vector<256x128xf32>
      %20 = arith.mulf %19, %15 : vector<256x128xf32>
      %21 = arith.select %18, %15, %20 : vector<256x128xi1>, vector<256x128xf32>
      %22 = arith.truncf %21 : vector<256x128xf32> to vector<256x128xbf16>
      %c0_16 = arith.constant 0 : index
      %c0_17 = arith.constant 0 : index
      %23 = vector.load %arg7[%c0_16, %c0_17] : memref<256x128xbf16, #tpu.memory_space<vmem>>, vector<256x128xbf16>
      tpu.vector_store %arg7[%c0_16, %c0_17], %22 {strides = array<i32>} : memref<256x128xbf16, #tpu.memory_space<vmem>>, vector<256x128xbf16>,
    } else {
    }
    return
  }
  func.func @transform_0(%arg0: i32, %arg1: i32, %arg2: i32) -> (i32, i32) {
    %c0_i32 = arith.constant 0 : i32
    return %arg0, %arg2 : i32, i32
  }
  func.func @transform_1(%arg0: i32, %arg1: i32, %arg2: i32) -> (i32, i32) {
    %c0_i32 = arith.constant 0 : i32
    return %arg2, %arg1 : i32, i32
  }
  func.func @transform_2(%arg0: i32, %arg1: i32, %arg2: i32) -> (i32, i32) {
    %c0_i32 = arith.constant 0 : i32
    %c0_i32_0 = arith.constant 0 : i32
    return %c0_i32, %arg1 : i32, i32
  }
  func.func @transform_3(%arg0: i32, %arg1: i32, %arg2: i32) -> i32 {
    %c0_i32 = arith.constant 0 : i32
    %c0_i32_0 = arith.constant 0 : i32
    return %c0_i32 : i32
  }
  func.func @transform_4(%arg0: i32, %arg1: i32, %arg2: i32) -> (i32, i32) {
    %c0_i32 = arith.constant 0 : i32
    return %arg0, %arg1 : i32, i32
  }
}

module attributes {stable_mosaic.version = 11 : i64} {
  func.func @_matmul_kernel(%arg0: i32, %arg1: i32, %arg2: i32, %arg3: memref<256x72xbf16, #tpu.memory_space<vmem>>, %arg4: memref<72x128xbf16, #tpu.memory_space<vmem>>, %arg5: memref<1x128xf32, #tpu.memory_space<vmem>>, %arg6: memref<256x128xf32, #tpu.memory_space<vmem>>, %arg7: memref<256x128xf32, #tpu.memory_space<vmem>>) attributes {dimension_semantics = [#tpu.dimension_semantics<parallel>, #tpu.dimension_semantics<parallel>, #tpu.dimension_semantics<arbitrary>], iteration_bounds = array<i64: 2, 1, 1>, scalar_prefetch = 0 : i64, scratch_operands = 1 : i64, tpu.core_type = #tpu.core_type<tc>, window_params = [{transform_indices = @transform_0, window_bounds = array<i64: 256, 72>}, {transform_indices = @transform_1, window_bounds = array<i64: 72, 128>}, {transform_indices = @transform_2, window_bounds = array<i64: 1, 128>}, {transform_indices = @transform_3, window_bounds = array<i64: 256, 128>}]} {
    %c0_i32 = arith.constant 0 : i32
    %0 = arith.cmpi eq, %arg2, %c0_i32 : i32
    %1 = arith.extui %0 : i1 to i32
    %c0_i32_0 = arith.constant 0 : i32
    %2 = arith.cmpi ne, %1, %c0_i32_0 : i32
    scf.if %2 {
      %cst_10 = arith.constant 0.000000e+00 : f32
      %12 = vector.broadcast %cst_10 : f32 to vector<256x128xf32>
      %c0_11 = arith.constant 0 : index
      %c0_12 = arith.constant 0 : index
      %13 = vector.load %arg7[%c0_11, %c0_12] : memref<256x128xf32, #tpu.memory_space<vmem>>, vector<256x128xf32>
      tpu.vector_store %arg7[%c0_11, %c0_12], %12 {strides = array<i32>} : memref<256x128xf32, #tpu.memory_space<vmem>>, vector<256x128xf32>,
    } else {
    }
    %c0 = arith.constant 0 : index
    %c0_1 = arith.constant 0 : index
    %3 = vector.load %arg7[%c0, %c0_1] : memref<256x128xf32, #tpu.memory_space<vmem>>, vector<256x128xf32>
    %c0_2 = arith.constant 0 : index
    %c0_3 = arith.constant 0 : index
    %4 = vector.load %arg3[%c0_2, %c0_3] : memref<256x72xbf16, #tpu.memory_space<vmem>>, vector<256x72xbf16>
    %c0_4 = arith.constant 0 : index
    %c0_5 = arith.constant 0 : index
    %5 = vector.load %arg4[%c0_4, %c0_5] : memref<72x128xbf16, #tpu.memory_space<vmem>>, vector<72x128xbf16>
    %cst = arith.constant dense<0.000000e+00> : vector<256x128xf32>
    %6 = tpu.matmul %4, %5, %cst {dimension_numbers = #tpu.dot_dimension_numbers<[1], [0], [0], [1], [0, 0, 1, 1], [], []>} : vector<256x72xbf16>, vector<72x128xbf16>, vector<256x128xf32> -> vector<256x128xf32>
    %7 = arith.addf %3, %6 : vector<256x128xf32>
    %c0_6 = arith.constant 0 : index
    %c0_7 = arith.constant 0 : index
    %8 = vector.load %arg7[%c0_6, %c0_7] : memref<256x128xf32, #tpu.memory_space<vmem>>, vector<256x128xf32>
    tpu.vector_store %arg7[%c0_6, %c0_7], %7 {strides = array<i32>} : memref<256x128xf32, #tpu.memory_space<vmem>>, vector<256x128xf32>,
    %c0_i32_8 = arith.constant 0 : i32
    %9 = arith.cmpi eq, %arg2, %c0_i32_8 : i32
    %10 = arith.extui %9 : i1 to i32
    %c0_i32_9 = arith.constant 0 : i32
    %11 = arith.cmpi ne, %10, %c0_i32_9 : i32
    scf.if %11 {
      %c0_10 = arith.constant 0 : index
      %c0_11 = arith.constant 0 : index
      %12 = vector.load %arg7[%c0_10, %c0_11] : memref<256x128xf32, #tpu.memory_space<vmem>>, vector<256x128xf32>
      %c0_12 = arith.constant 0 : index
      %c0_13 = arith.constant 0 : index
      %13 = vector.load %arg5[%c0_12, %c0_13] : memref<1x128xf32, #tpu.memory_space<vmem>>, vector<1x128xf32>
      %14 = vector.broadcast %13 : vector<1x128xf32> to vector<256x128xf32>
      %15 = arith.addf %12, %14 : vector<256x128xf32>
      %c0_14 = arith.constant 0 : index
      %c0_15 = arith.constant 0 : index
      %16 = vector.load %arg6[%c0_14, %c0_15] : memref<256x128xf32, #tpu.memory_space<vmem>>, vector<256x128xf32>
      tpu.vector_store %arg6[%c0_14, %c0_15], %15 {strides = array<i32>} : memref<256x128xf32, #tpu.memory_space<vmem>>, vector<256x128xf32>,
    } else {
    }
    return
  }
  func.func @transform_0(%arg0: i32, %arg1: i32, %arg2: i32) -> (i32, i32) {
    %c0_i32 = arith.constant 0 : i32
    return %arg0, %arg2 : i32, i32
  }
  func.func @transform_1(%arg0: i32, %arg1: i32, %arg2: i32) -> (i32, i32) {
    %c0_i32 = arith.constant 0 : i32
    return %arg2, %arg1 : i32, i32
  }
  func.func @transform_2(%arg0: i32, %arg1: i32, %arg2: i32) -> (i32, i32) {
    %c0_i32 = arith.constant 0 : i32
    %c0_i32_0 = arith.constant 0 : i32
    return %c0_i32, %arg1 : i32, i32
  }
  func.func @transform_3(%arg0: i32, %arg1: i32, %arg2: i32) -> (i32, i32) {
    %c0_i32 = arith.constant 0 : i32
    return %arg0, %arg1 : i32, i32
  }
}

module attributes {stable_mosaic.version = 11 : i64} {
  func.func @_matmul_kernel(%arg0: i32, %arg1: i32, %arg2: i32, %arg3: memref<8x64xf32, #tpu.memory_space<vmem>>, %arg4: memref<64x128xf32, #tpu.memory_space<vmem>>, %arg5: memref<8x128xf32, #tpu.memory_space<vmem>>, %arg6: memref<8x128xf32, #tpu.memory_space<vmem>>) attributes {dimension_semantics = [#tpu.dimension_semantics<parallel>, #tpu.dimension_semantics<parallel>, #tpu.dimension_semantics<arbitrary>], iteration_bounds = array<i64: 1, 2, 1>, scalar_prefetch = 0 : i64, scratch_operands = 1 : i64, tpu.core_type = #tpu.core_type<tc>, window_params = [{transform_indices = @transform_0, window_bounds = array<i64: 8, 64>}, {transform_indices = @transform_1, window_bounds = array<i64: 64, 128>}, {transform_indices = @transform_2, window_bounds = array<i64: 8, 128>}]} {
    %c0_i32 = arith.constant 0 : i32
    %0 = arith.cmpi eq, %arg2, %c0_i32 : i32
    %1 = arith.extui %0 : i1 to i32
    %c0_i32_0 = arith.constant 0 : i32
    %2 = arith.cmpi ne, %1, %c0_i32_0 : i32
    scf.if %2 {
      %cst_10 = arith.constant 0.000000e+00 : f32
      %12 = vector.broadcast %cst_10 : f32 to vector<8x128xf32>
      %c0_11 = arith.constant 0 : index
      %c0_12 = arith.constant 0 : index
      %13 = vector.load %arg6[%c0_11, %c0_12] : memref<8x128xf32, #tpu.memory_space<vmem>>, vector<8x128xf32>
      tpu.vector_store %arg6[%c0_11, %c0_12], %12 {strides = array<i32>} : memref<8x128xf32, #tpu.memory_space<vmem>>, vector<8x128xf32>,
    } else {
    }
    %c0 = arith.constant 0 : index
    %c0_1 = arith.constant 0 : index
    %3 = vector.load %arg6[%c0, %c0_1] : memref<8x128xf32, #tpu.memory_space<vmem>>, vector<8x128xf32>
    %c0_2 = arith.constant 0 : index
    %c0_3 = arith.constant 0 : index
    %4 = vector.load %arg3[%c0_2, %c0_3] : memref<8x64xf32, #tpu.memory_space<vmem>>, vector<8x64xf32>
    %c0_4 = arith.constant 0 : index
    %c0_5 = arith.constant 0 : index
    %5 = vector.load %arg4[%c0_4, %c0_5] : memref<64x128xf32, #tpu.memory_space<vmem>>, vector<64x128xf32>
    %cst = arith.constant dense<0.000000e+00> : vector<8x128xf32>
    %6 = tpu.matmul %4, %5, %cst {dimension_numbers = #tpu.dot_dimension_numbers<[1], [0], [0], [1], [0, 0, 1, 1], [], []>} : vector<8x64xf32>, vector<64x128xf32>, vector<8x128xf32> -> vector<8x128xf32>
    %7 = arith.addf %3, %6 : vector<8x128xf32>
    %c0_6 = arith.constant 0 : index
    %c0_7 = arith.constant 0 : index
    %8 = vector.load %arg6[%c0_6, %c0_7] : memref<8x128xf32, #tpu.memory_space<vmem>>, vector<8x128xf32>
    tpu.vector_store %arg6[%c0_6, %c0_7], %7 {strides = array<i32>} : memref<8x128xf32, #tpu.memory_space<vmem>>, vector<8x128xf32>,
    %c0_i32_8 = arith.constant 0 : i32
    %9 = arith.cmpi eq, %arg2, %c0_i32_8 : i32
    %10 = arith.extui %9 : i1 to i32
    %c0_i32_9 = arith.constant 0 : i32
    %11 = arith.cmpi ne, %10, %c0_i32_9 : i32
    scf.if %11 {
      %c0_10 = arith.constant 0 : index
      %c0_11 = arith.constant 0 : index
      %12 = vector.load %arg6[%c0_10, %c0_11] : memref<8x128xf32, #tpu.memory_space<vmem>>, vector<8x128xf32>
      %c0_12 = arith.constant 0 : index
      %c0_13 = arith.constant 0 : index
      %13 = vector.load %arg5[%c0_12, %c0_13] : memref<8x128xf32, #tpu.memory_space<vmem>>, vector<8x128xf32>
      tpu.vector_store %arg5[%c0_12, %c0_13], %12 {strides = array<i32>} : memref<8x128xf32, #tpu.memory_space<vmem>>, vector<8x128xf32>,
    } else {
    }
    return
  }
  func.func @transform_0(%arg0: i32, %arg1: i32, %arg2: i32) -> (i32, i32) {
    %c0_i32 = arith.constant 0 : i32
    return %arg0, %arg2 : i32, i32
  }
  func.func @transform_1(%arg0: i32, %arg1: i32, %arg2: i32) -> (i32, i32) {
    %c0_i32 = arith.constant 0 : i32
    return %arg2, %arg1 : i32, i32
  }
  func.func @transform_2(%arg0: i32, %arg1: i32, %arg2: i32) -> (i32, i32) {
    %c0_i32 = arith.constant 0 : i32
    return %arg0, %arg1 : i32, i32
  }
}

module attributes {stable_mosaic.version = 11 : i64} {
  func.func @_matmul_kernel(%arg0: i32, %arg1: i32, %arg2: i32, %arg3: memref<256x3xf32, #tpu.memory_space<vmem>>, %arg4: memref<3x128xf32, #tpu.memory_space<vmem>>, %arg5: memref<1x128xf32, #tpu.memory_space<vmem>>, %arg6: memref<256x128xf32, #tpu.memory_space<vmem>>, %arg7: memref<256x128xf32, #tpu.memory_space<vmem>>) attributes {dimension_semantics = [#tpu.dimension_semantics<parallel>, #tpu.dimension_semantics<parallel>, #tpu.dimension_semantics<arbitrary>], iteration_bounds = array<i64: 2, 1, 1>, scalar_prefetch = 0 : i64, scratch_operands = 1 : i64, tpu.core_type = #tpu.core_type<tc>, window_params = [{transform_indices = @transform_0, window_bounds = array<i64: 256, 3>}, {transform_indices = @transform_1, window_bounds = array<i64: 3, 128>}, {transform_indices = @transform_2, window_bounds = array<i64: 1, 128>}, {transform_indices = @transform_3, window_bounds = array<i64: 256, 128>}]} {
    %c0_i32 = arith.constant 0 : i32
    %0 = arith.cmpi eq, %arg2, %c0_i32 : i32
    %1 = arith.extui %0 : i1 to i32
    %c0_i32_0 = arith.constant 0 : i32
    %2 = arith.cmpi ne, %1, %c0_i32_0 : i32
    scf.if %2 {
      %cst_10 = arith.constant 0.000000e+00 : f32
      %12 = vector.broadcast %cst_10 : f32 to vector<256x128xf32>
      %c0_11 = arith.constant 0 : index
      %c0_12 = arith.constant 0 : index
      %13 = vector.load %arg7[%c0_11, %c0_12] : memref<256x128xf32, #tpu.memory_space<vmem>>, vector<256x128xf32>
      tpu.vector_store %arg7[%c0_11, %c0_12], %12 {strides = array<i32>} : memref<256x128xf32, #tpu.memory_space<vmem>>, vector<256x128xf32>,
    } else {
    }
    %c0 = arith.constant 0 : index
    %c0_1 = arith.constant 0 : index
    %3 = vector.load %arg7[%c0, %c0_1] : memref<256x128xf32, #tpu.memory_space<vmem>>, vector<256x128xf32>
    %c0_2 = arith.constant 0 : index
    %c0_3 = arith.constant 0 : index
    %4 = vector.load %arg3[%c0_2, %c0_3] : memref<256x3xf32, #tpu.memory_space<vmem>>, vector<256x3xf32>
    %c0_4 = arith.constant 0 : index
    %c0_5 = arith.constant 0 : index
    %5 = vector.load %arg4[%c0_4, %c0_5] : memref<3x128xf32, #tpu.memory_space<vmem>>, vector<3x128xf32>
    %cst = arith.constant dense<0.000000e+00> : vector<256x128xf32>
    %6 = tpu.matmul %4, %5, %cst {dimension_numbers = #tpu.dot_dimension_numbers<[1], [0], [0], [1], [0, 0, 1, 1], [], []>} : vector<256x3xf32>, vector<3x128xf32>, vector<256x128xf32> -> vector<256x128xf32>
    %7 = arith.addf %3, %6 : vector<256x128xf32>
    %c0_6 = arith.constant 0 : index
    %c0_7 = arith.constant 0 : index
    %8 = vector.load %arg7[%c0_6, %c0_7] : memref<256x128xf32, #tpu.memory_space<vmem>>, vector<256x128xf32>
    tpu.vector_store %arg7[%c0_6, %c0_7], %7 {strides = array<i32>} : memref<256x128xf32, #tpu.memory_space<vmem>>, vector<256x128xf32>,
    %c0_i32_8 = arith.constant 0 : i32
    %9 = arith.cmpi eq, %arg2, %c0_i32_8 : i32
    %10 = arith.extui %9 : i1 to i32
    %c0_i32_9 = arith.constant 0 : i32
    %11 = arith.cmpi ne, %10, %c0_i32_9 : i32
    scf.if %11 {
      %c0_10 = arith.constant 0 : index
      %c0_11 = arith.constant 0 : index
      %12 = vector.load %arg7[%c0_10, %c0_11] : memref<256x128xf32, #tpu.memory_space<vmem>>, vector<256x128xf32>
      %c0_12 = arith.constant 0 : index
      %c0_13 = arith.constant 0 : index
      %13 = vector.load %arg5[%c0_12, %c0_13] : memref<1x128xf32, #tpu.memory_space<vmem>>, vector<1x128xf32>
      %14 = vector.broadcast %13 : vector<1x128xf32> to vector<256x128xf32>
      %15 = arith.addf %12, %14 : vector<256x128xf32>
      %c0_14 = arith.constant 0 : index
      %c0_15 = arith.constant 0 : index
      %16 = vector.load %arg6[%c0_14, %c0_15] : memref<256x128xf32, #tpu.memory_space<vmem>>, vector<256x128xf32>
      tpu.vector_store %arg6[%c0_14, %c0_15], %15 {strides = array<i32>} : memref<256x128xf32, #tpu.memory_space<vmem>>, vector<256x128xf32>,
    } else {
    }
    return
  }
  func.func @transform_0(%arg0: i32, %arg1: i32, %arg2: i32) -> (i32, i32) {
    %c0_i32 = arith.constant 0 : i32
    return %arg0, %arg2 : i32, i32
  }
  func.func @transform_1(%arg0: i32, %arg1: i32, %arg2: i32) -> (i32, i32) {
    %c0_i32 = arith.constant 0 : i32
    return %arg2, %arg1 : i32, i32
  }
  func.func @transform_2(%arg0: i32, %arg1: i32, %arg2: i32) -> (i32, i32) {
    %c0_i32 = arith.constant 0 : i32
    %c0_i32_0 = arith.constant 0 : i32
    return %c0_i32, %arg1 : i32, i32
  }
  func.func @transform_3(%arg0: i32, %arg1: i32, %arg2: i32) -> (i32, i32) {
    %c0_i32 = arith.constant 0 : i32
    return %arg0, %arg1 : i32, i32
  }
}

</mosaic_0001>

<llo_original>
// kernel: srfbn_forward.25
$region0: #{srfbn_forward.25}
  #allocation0 [shape = 'u32[]', space=smem, size = 0x4, offset = 0x4, fixed_abs, tag = 'smem constant byte address 0x4 - core index']
  #allocation1 [shape = 'u32[144,128]{1,0:T(1,128)}', space=vmem, size = 0x12000, scoped, tag = 'internal scratch']
  #allocation2 [shape = 'f32[64,128]{1,0:T(8,128)}', space=vmem, size = 0x8000, scoped, tag = 'scratch operand']
  %s0 = inlined_call_operand.vmem [shape: f32[128,3], index: 0, kind: input, shape index: {}]
  %s1 = inlined_call_operand.vmem [shape: f32[3,128], index: 1, kind: input, shape index: {}]
  %s2 = inlined_call_operand.vmem [shape: f32[1,128], index: 2, kind: input, shape index: {}]
  %s3 = inlined_call_operand.vmem [shape: f32[128,128], index: 3, kind: output, shape index: {}]
  %s4 = sld [smem:[#allocation0]]
  $region53: #{srfbn_forward.25} parent=0
    _
  %s6 = ssub.s32 1, %s4
  %s7 = scalar_select 0, %s6, %s4
  loop: start=0, step=1, limit=4
  $region2: #{srfbn_forward.25} parent=0 // loop_pre_header
    _
  $region3: #{srfbn_forward.25} parent=0 // loop_header
    %s9 = sphi 0, %s13
    %p10 = scmp.ge.s32.totalorder %s9, 4
    %s16 = sphi 0, %s35
    %s17 = sphi 0, %s31
    %s18 = sphi 0, %s27
    %s19 = sphi 0, %s16
    %s20 = sphi 0, %s17
    %s21 = sphi 0, %s18
    %s22 = sphi 0, %s19
    %s23 = sphi 0, %s20
    %s24 = sphi 0, %s21
    %s40 = sphi 0, %s42
    %s43 = sphi 0, %s40
    %s44 = sphi 0, %s43
    %s60 = sphi 0, %s44
    %s68 = sphi 0, %s70
    %s71 = sphi 0, %s68
    %s72 = sphi 0, %s71
    %s88 = sphi 0, %s72
    %s94 = sphi 0, %s96
    %s97 = sphi 0, %s94
    %s98 = sphi 0, %s97
    %s114 = sphi 0, %s98
    %s122 = sphi 0, %s124
    %s125 = sphi 0, %s122
    %s126 = sphi 0, %s125
    %s142 = sphi 0, %s126
  $region4: #{srfbn_forward.25} parent=0 // loop_header_branch
    %12 = sbr.rel (%p10) target = $region8
  $region5: #{srfbn_forward.25} parent=0 // loop_body
    %s14 = ssub.s32 %s9, 1
    %s15 = ssub.s32 %s9, 2
    %s25 = sadd.s32 1, %s18
    %p26 = scmp.ge.s32.totalorder %s25, 1
    %s27 = scalar_select %p26, 0, %s25
    %s28 = sadd.s32 1, %s17
    %s29 = scalar_select %p26, %s28, %s17
    %p30 = scmp.ge.s32.totalorder %s29, 1
    %s31 = scalar_select %p30, 0, %s29
    %s32 = sadd.s32 1, %s16
    %s33 = scalar_select %p30, %s32, %s16
    %p34 = scmp.ge.s32.totalorder %s33, 2
    %s35 = scalar_select %p34, 0, %s33
    %s36 = ssub.s32 %s16, %s35
    %s37 = ssub.s32 %s18, %s27
    %s38 = sor.u32 %s36, %s37
    %p39 = scmp.eq.s32.totalorder %s38, 0
    %s41 = sadd.s32 %s40, 1
    %s42 = scalar_select %p39, %s40, %s41
    %p45 = pneg %p39
    %p46 = scmp.eq.s32.totalorder %s9, 1
    %p47 = por %p45, %p46
    %p48 = scmp.ne.s32.totalorder %s40, %s43
    %p49 = scmp.eq.s32.totalorder %s9, 0
    %p50 = por %p48, %p49
    %p51 = scmp.ne.s32.totalorder %s40, %s43
    %p52 = scmp.eq.s32.totalorder %s14, 1
    %p53 = por %p51, %p52
    %p54 = scmp.ne.s32.totalorder %s43, %s44
    %p55 = scmp.eq.s32.totalorder %s14, 0
    %p56 = por %p54, %p55
    %p57 = scmp.ne.s32.totalorder %s43, %s44
    %p58 = scmp.eq.s32.totalorder %s15, 1
    %p59 = por %p57, %p58
    %p61 = scmp.ne.s32.totalorder %s44, %s60
    %p62 = scmp.eq.s32.totalorder %s15, 0
    %p63 = por %p61, %p62
    %s64 = ssub.s32 %s18, %s27
    %s65 = ssub.s32 %s17, %s31
    %s66 = sor.u32 %s64, %s65
    %p67 = scmp.eq.s32.totalorder %s66, 0
    %s69 = sadd.s32 %s68, 1
    %s70 = scalar_select %p67, %s68, %s69
    %p73 = pneg %p67
    %p74 = scmp.eq.s32.totalorder %s9, 1
    %p75 = por %p73, %p74
    %p76 = scmp.ne.s32.totalorder %s68, %s71
    %p77 = scmp.eq.s32.totalorder %s9, 0
    %p78 = por %p76, %p77
    %p79 = scmp.ne.s32.totalorder %s68, %s71
    %p80 = scmp.eq.s32.totalorder %s14, 1
    %p81 = por %p79, %p80
    %p82 = scmp.ne.s32.totalorder %s71, %s72
    %p83 = scmp.eq.s32.totalorder %s14, 0
    %p84 = por %p82, %p83
    %p85 = scmp.ne.s32.totalorder %s71, %s72
    %p86 = scmp.eq.s32.totalorder %s15, 1
    %p87 = por %p85, %p86
    %p89 = scmp.ne.s32.totalorder %s72, %s88
    %p90 = scmp.eq.s32.totalorder %s15, 0
    %p91 = por %p89, %p90
    %s92 = ssub.s32 %s17, %s31
    %p93 = scmp.eq.s32.totalorder %s92, 0
    %s95 = sadd.s32 %s94, 1
    %s96 = scalar_select %p93, %s94, %s95
    %p99 = pneg %p93
    %p100 = scmp.eq.s32.totalorder %s9, 1
    %p101 = por %p99, %p100
    %p102 = scmp.ne.s32.totalorder %s94, %s97
    %p103 = scmp.eq.s32.totalorder %s9, 0
    %p104 = por %p102, %p103
    %p105 = scmp.ne.s32.totalorder %s94, %s97
    %p106 = scmp.eq.s32.totalorder %s14, 1
    %p107 = por %p105, %p106
    %p108 = scmp.ne.s32.totalorder %s97, %s98
    %p109 = scmp.eq.s32.totalorder %s14, 0
    %p110 = por %p108, %p109
    %p111 = scmp.ne.s32.totalorder %s97, %s98
    %p112 = scmp.eq.s32.totalorder %s15, 1
    %p113 = por %p111, %p112
    %p115 = scmp.ne.s32.totalorder %s98, %s114
    %p116 = scmp.eq.s32.totalorder %s15, 0
    %p117 = por %p115, %p116
    %s118 = ssub.s32 %s16, %s35
    %s119 = ssub.s32 %s17, %s31
    %s120 = sor.u32 %s118, %s119
    %p121 = scmp.eq.s32.totalorder %s120, 0
    %s123 = sadd.s32 %s122, 1
    %s124 = scalar_select %p121, %s122, %s123
    %p127 = pneg %p121
    %p128 = scmp.eq.s32.totalorder %s9, 1
    %p129 = por %p127, %p128
    %p130 = scmp.ne.s32.totalorder %s122, %s125
    %p131 = scmp.eq.s32.totalorder %s9, 0
    %p132 = por %p130, %p131
    %p133 = scmp.ne.s32.totalorder %s122, %s125
    %p134 = scmp.eq.s32.totalorder %s14, 1
    %p135 = por %p133, %p134
    %p136 = scmp.ne.s32.totalorder %s125, %s126
    %p137 = scmp.eq.s32.totalorder %s14, 0
    %p138 = por %p136, %p137
    %p139 = scmp.ne.s32.totalorder %s125, %s126
    %p140 = scmp.eq.s32.totalorder %s15, 1
    %p141 = por %p139, %p140
    %p143 = scmp.ne.s32.totalorder %s126, %s142
    %p144 = scmp.eq.s32.totalorder %s15, 0
    %p145 = por %p143, %p144
    %p146 = scmp.le.s32.totalorder 1, %s9
    %p147 = scmp.lt.s32.totalorder %s9, 3
    %p148 = pnand %p146, %p147
    %p149 = pneg %p148
    // Predicated region
    $region9: #{srfbn_forward.25} parent=5 // pred_check
      _
    $region10: #{srfbn_forward.25} parent=5 // pred_check_branch
      %151 = sbr.rel (%p148) target = $region12
    $region11: #{srfbn_forward.25} parent=5 // pred_region
      %s152 = ssub.s32 %s9, 1
      // Predicated region
      $region13: #{srfbn_forward.25} parent=11 // pred_check
        %p153 = pneg %p84
      $region14: #{srfbn_forward.25} parent=11 // pred_check_branch
        %155 = sbr.rel (%p153) target = $region16
      $region15: #{srfbn_forward.25} parent=11 // pred_region
        %p156 = scmp.lt.s32.totalorder %s21, 0
        %s157 = scalar_select %p156, %s21, 0
        %p158 = scmp.lt.s32.totalorder %s20, 0
        %s159 = scalar_select %p158, %s20, 0
        %s160 = sadd.s32 %s159, %s157
        %s161 = smul.addr %s160, 4
        %s162 = scalar_lea.vmem %s1, %s161
      $region16: #{srfbn_forward.25} parent=11 // pred_fallthru
        _
      // Predicated region
      $region17: #{srfbn_forward.25} parent=11 // pred_check
        %p163 = pneg %p110
      $region18: #{srfbn_forward.25} parent=11 // pred_check_branch
        %165 = sbr.rel (%p163) target = $region20
      $region19: #{srfbn_forward.25} parent=11 // pred_region
        %p166 = scmp.lt.s32.totalorder %s20, 0
        %s167 = scalar_select %p166, %s20, 0
        %s168 = scalar_lea.vmem %s2, %s167
      $region20: #{srfbn_forward.25} parent=11 // pred_fallthru
        _
    $region12: #{srfbn_forward.25} parent=5 // pred_fallthru
      _
    %p169 = scmp.lt.s32.totalorder %s9, 2
    // Predicated region
    $region21: #{srfbn_forward.25} parent=5 // pred_check
      %p170 = pneg %p169
    $region22: #{srfbn_forward.25} parent=5 // pred_check_branch
      %172 = sbr.rel (%p170) target = $region24
    $region23: #{srfbn_forward.25} parent=5 // pred_region
      // Predicated region
      $region25: #{srfbn_forward.25} parent=23 // pred_check
        %p173 = pneg %p50
      $region26: #{srfbn_forward.25} parent=23 // pred_check_branch
        %175 = sbr.rel (%p173) target = $region28
      $region27: #{srfbn_forward.25} parent=23 // pred_region
        %s176 = smul.u32 8, %s16
        %p177 = scmp.lt.s32.totalorder %s176, 15
        %s178 = scalar_select %p177, %s176, 15
        %p179 = scmp.lt.s32.totalorder %s18, 0
        %s180 = scalar_select %p179, %s18, 0
        %s181 = sadd.s32 %s180, %s178
        %s182 = smul.addr %s181, 8
        %s183 = scalar_lea.vmem %s0, %s182
        %s184 = smul.u32 8, %s16
      $region28: #{srfbn_forward.25} parent=23 // pred_fallthru
        _
    $region24: #{srfbn_forward.25} parent=5 // pred_fallthru
      _
    %p185 = scmp.le.s32.totalorder 1, %s9
    %p186 = scmp.lt.s32.totalorder %s9, 3
    %p187 = pnand %p185, %p186
    %p188 = pneg %p187
    // Predicated region
    $region29: #{srfbn_forward.25} parent=5 // pred_check
      _
    $region30: #{srfbn_forward.25} parent=5 // pred_check_branch
      %190 = sbr.rel (%p187) target = $region32
    $region31: #{srfbn_forward.25} parent=5 // pred_region
      %s191 = ssub.s32 %s9, 1
      %s192 = smul.u32 8, %s19
      %p193 = scmp.lt.s32.totalorder %s192, 15
      %s194 = scalar_select %p193, %s192, 15
      %p195 = scmp.lt.s32.totalorder %s21, 0
      %s196 = scalar_select %p195, %s21, 0
      %s197 = sadd.s32 %s196, %s194
      %s198 = smul.addr %s197, 8
      %s199 = scalar_lea.vmem %s0, %s198
      %p200 = pneg %p56
      %p201 = pneg %p53
      %p202 = scmp.lt.s32.totalorder %s21, 0
      %s203 = scalar_select %p202, %s21, 0
      %p204 = scmp.lt.s32.totalorder %s20, 0
      %s205 = scalar_select %p204, %s20, 0
      %s206 = sadd.s32 %s205, %s203
      %s207 = smul.addr %s206, 4
      %s208 = scalar_lea.vmem %s1, %s207
      %p209 = pneg %p84
      %p210 = pneg %p81
      %p211 = scmp.lt.s32.totalorder %s20, 0
      %s212 = scalar_select %p211, %s20, 0
      %s213 = scalar_lea.vmem %s2, %s212
      %p214 = pneg %p110
      %p215 = pneg %p107
      %p216 = pneg %p138
      %p217 = pneg %p135
      %s218 = smul.u32 8, %s19
      %p219 = scmp.lt.s32.totalorder %s218, 15
      %s220 = scalar_select %p219, %s218, 15
      %p221 = scmp.lt.s32.totalorder %s20, 0
      %s222 = scalar_select %p221, %s20, 0
      %s223 = sadd.s32 %s222, %s220
      %s224 = smul.addr %s223, 8
      %s225 = scalar_lea.vmem %s3, %s224
      %s226 = smul.u32 8, %s19
      %p227 = scmp.lt.s32.totalorder %s226, 15
      %s228 = scalar_select %p227, %s226, 15
      %p229 = scmp.lt.s32.totalorder %s21, 0
      %s230 = scalar_select %p229, %s21, 0
      %s231 = sadd.s32 %s230, %s228
      %s232 = smul.addr %s231, 8
      %s233 = scalar_lea.vmem %s0, %s232
      %s234 = smul.u32 8, %s19
      %p235 = scmp.lt.s32.totalorder %s21, 0
      %s236 = scalar_select %p235, %s21, 0
      %p237 = scmp.lt.s32.totalorder %s20, 0
      %s238 = scalar_select %p237, %s20, 0
      %s239 = sadd.s32 %s238, %s236
      %s240 = smul.addr %s239, 4
      %s241 = scalar_lea.vmem %s1, %s240
      %p242 = scmp.lt.s32.totalorder %s20, 0
      %s243 = scalar_select %p242, %s20, 0
      %s244 = scalar_lea.vmem %s2, %s243
      %s245 = smul.u32 8, %s19
      %p246 = scmp.lt.s32.totalorder %s245, 15
      %s247 = scalar_select %p246, %s245, 15
      %p248 = scmp.lt.s32.totalorder %s20, 0
      %s249 = scalar_select %p248, %s20, 0
      %s250 = sadd.s32 %s249, %s247
      %s251 = smul.addr %s250, 8
      %s252 = scalar_lea.vmem %s3, %s251
      %s253 = smul.u32 8, %s19
      %p254 = scmp.eq.s32.totalorder %s21, 0
      // Predicated region
      $region33: #{srfbn_forward.25} parent=31 // pred_check
        %p255 = pneg %p254
      $region34: #{srfbn_forward.25} parent=31 // pred_check_branch
        %257 = sbr.rel (%p255) target = $region36
      $region35: #{srfbn_forward.25} parent=31 // pred_region
        %258 = vst [vmem:[#allocation2] sm:$0xff] 0.0
        %259 = vst [vmem:[#allocation2 + $0x8] sm:$0xff] 0.0
        %260 = vst [vmem:[#allocation2 + $0x10] sm:$0xff] 0.0
        %261 = vst [vmem:[#allocation2 + $0x18] sm:$0xff] 0.0
        %262 = vst [vmem:[#allocation2 + $0x20] sm:$0xff] 0.0
        %263 = vst [vmem:[#allocation2 + $0x28] sm:$0xff] 0.0
        %264 = vst [vmem:[#allocation2 + $0x30] sm:$0xff] 0.0
        %265 = vst [vmem:[#allocation2 + $0x38] sm:$0xff] 0.0
      $region36: #{srfbn_forward.25} parent=31 // pred_fallthru
        _
      %v266 = vld [vmem:[#allocation2] sm:$0xff]
      %v267 = vld [vmem:[#allocation2 + $0x8] sm:$0xff]
      %v268 = vld [vmem:[#allocation2 + $0x10] sm:$0xff]
      %v269 = vld [vmem:[#allocation2 + $0x18] sm:$0xff]
      %v270 = vld [vmem:[#allocation2 + $0x20] sm:$0xff]
      %v271 = vld [vmem:[#allocation2 + $0x28] sm:$0xff]
      %v272 = vld [vmem:[#allocation2 + $0x30] sm:$0xff]
      %v273 = vld [vmem:[#allocation2 + $0x38] sm:$0xff]
      %v274 = vld [vmem:[%s233] sm:$0xff]
      %v275 = vld [vmem:[%s233 + $0x8] sm:$0xff]
      %v276 = vld [vmem:[%s233 + $0x10] sm:$0xff]
      %v277 = vld [vmem:[%s233 + $0x18] sm:$0xff]
      %v278 = vld [vmem:[%s233 + $0x20] sm:$0xff]
      %v279 = vld [vmem:[%s233 + $0x28] sm:$0xff]
      %v280 = vld [vmem:[%s233 + $0x30] sm:$0xff]
      %v281 = vld [vmem:[%s233 + $0x38] sm:$0xff]
      %v282 = vld [vmem:[%s241] sm:$0x7]
      %vm283 = vcmask 23552
      %v285 = vsel %vm283, %v274, 0
      %v288 = vsel %vm283, %v275, 0
      %v291 = vsel %vm283, %v276, 0
      %v294 = vsel %vm283, %v277, 0
      %v297 = vsel %vm283, %v278, 0
      %v300 = vsel %vm283, %v279, 0
      %v303 = vsel %vm283, %v280, 0
      %v306 = vsel %vm283, %v281, 0
      %vm308 = vcmask 1042432
      %v310 = vsel %vm308, %v282, 0
      %312 = vmatprep.subr.mxu0 0.0
      %313 = vmatpush1.msra.mxu0 %v310
      %314 = vmatprep.subr.mxu0 0.0
      %315 = vmatpush1.msra.mxu0 0.0
      %316 = vmatprep.subr.mxu0 0.0
      %317 = vmatpush1.msra.mxu0 0.0
      %318 = vmatprep.subr.mxu0 0.0
      %319 = vmatpush1.msra.mxu0 0.0
      %320 = vmatprep.subr.mxu0 0.0
      %321 = vmatpush1.msra.mxu0 0.0
      %322 = vmatprep.subr.mxu0 0.0
      %323 = vmatpush1.msra.mxu0 0.0
      %324 = vmatprep.subr.mxu0 0.0
      %325 = vmatpush1.msra.mxu0 0.0
      %326 = vmatprep.subr.mxu0 0.0
      %327 = vmatpush1.msra.mxu0 0.0
      %328 = vmatprep.subr.mxu0 0.0
      %329 = vmatpush1.msra.mxu0 0.0
      %330 = vmatprep.subr.mxu0 0.0
      %331 = vmatpush1.msra.mxu0 0.0
      %332 = vmatprep.subr.mxu0 0.0
      %333 = vmatpush1.msra.mxu0 0.0
      %334 = vmatprep.subr.mxu0 0.0
      %335 = vmatpush1.msra.mxu0 0.0
      %336 = vmatprep.subr.mxu0 0.0
      %337 = vmatpush1.msra.mxu0 0.0
      %338 = vmatprep.subr.mxu0 0.0
      %339 = vmatpush1.msra.mxu0 0.0
      %340 = vmatprep.subr.mxu0 0.0
      %341 = vmatpush1.msra.mxu0 0.0
      %342 = vmatprep.subr.mxu0 0.0
      %343 = vmatpush1.msra.mxu0 0.0
      %344 = vmatprep.subr.mxu0 0.0
      %345 = vmatpush1.msra.mxu0 0.0
      %346 = vmatprep.subr.mxu0 0.0
      %347 = vmatpush1.msra.mxu0 0.0
      %348 = vmatprep.subr.mxu0 0.0
      %349 = vmatpush1.msra.mxu0 0.0
      %350 = vmatprep.subr.mxu0 0.0
      %351 = vmatpush1.msra.mxu0 0.0
      %352 = vmatprep.subr.mxu0 0.0
      %353 = vmatpush1.msra.mxu0 0.0
      %354 = vmatprep.subr.mxu0 0.0
      %355 = vmatpush1.msra.mxu0 0.0
      %356 = vmatprep.subr.mxu0 0.0
      %357 = vmatpush1.msra.mxu0 0.0
      %358 = vmatprep.subr.mxu0 0.0
      %359 = vmatpush1.msra.mxu0 0.0
      %360 = vmatprep.subr.mxu0 0.0
      %361 = vmatpush1.msra.mxu0 0.0
      %362 = vmatprep.subr.mxu0 0.0
      %363 = vmatpush1.msra.mxu0 0.0
      %364 = vmatprep.subr.mxu0 0.0
      %365 = vmatpush1.msra.mxu0 0.0
      %366 = vmatprep.subr.mxu0 0.0
      %367 = vmatpush1.msra.mxu0 0.0
      %368 = vmatprep.subr.mxu0 0.0
      %369 = vmatpush1.msra.mxu0 0.0
      %370 = vmatprep.subr.mxu0 0.0
      %371 = vmatpush1.msra.mxu0 0.0
      %372 = vmatprep.subr.mxu0 0.0
      %373 = vmatpush1.msra.mxu0 0.0
      %374 = vmatprep.subr.mxu0 0.0
      %375 = vmatpush1.msra.mxu0 0.0
      %376 = vmatprep.mubr.f32.mxu0 0.0
      %377 = vmatmul.mubr.f32.gmra.mrb[0].mxu0 %v285
      %v378 = vpop.f32.mrb[0].mxu0
      %v379 = vadd.f32 0.0, %v378
      %v380 = vpop.f32.mrb[0].mxu0
      %381 = vmatprep.mubr.f32.mxu0 0.0
      %382 = vmatmul.mubr.f32.gmra.mrb[0].mxu0 %v288
      %v383 = vpop.f32.mrb[0].mxu0
      %v384 = vadd.f32 0.0, %v383
      %v385 = vpop.f32.mrb[0].mxu0
      %386 = vmatprep.mubr.f32.mxu0 0.0
      %387 = vmatmul.mubr.f32.gmra.mrb[0].mxu0 %v291
      %v388 = vpop.f32.mrb[0].mxu0
      %v389 = vadd.f32 0.0, %v388
      %v390 = vpop.f32.mrb[0].mxu0
      %391 = vmatprep.mubr.f32.mxu0 0.0
      %392 = vmatmul.mubr.f32.gmra.mrb[0].mxu0 %v294
      %v393 = vpop.f32.mrb[0].mxu0
      %v394 = vadd.f32 0.0, %v393
      %v395 = vpop.f32.mrb[0].mxu0
      %396 = vmatprep.mubr.f32.mxu0 0.0
      %397 = vmatmul.mubr.f32.gmra.mrb[0].mxu0 %v297
      %v398 = vpop.f32.mrb[0].mxu0
      %v399 = vadd.f32 0.0, %v398
      %v400 = vpop.f32.mrb[0].mxu0
      %401 = vmatprep.mubr.f32.mxu0 0.0
      %402 = vmatmul.mubr.f32.gmra.mrb[0].mxu0 %v300
      %v403 = vpop.f32.mrb[0].mxu0
      %v404 = vadd.f32 0.0, %v403
      %v405 = vpop.f32.mrb[0].mxu0
      %406 = vmatprep.mubr.f32.mxu0 0.0
      %407 = vmatmul.mubr.f32.gmra.mrb[0].mxu0 %v303
      %v408 = vpop.f32.mrb[0].mxu0
      %v409 = vadd.f32 0.0, %v408
      %v410 = vpop.f32.mrb[0].mxu0
      %411 = vmatprep.mubr.f32.mxu0 0.0
      %412 = vmatmul.mubr.f32.gmra.mrb[0].mxu0 %v306
      %v413 = vpop.f32.mrb[0].mxu0
      %v414 = vadd.f32 0.0, %v413
      %v415 = vpop.f32.mrb[0].mxu0
      %416 = vdwg.mxu0
      %v417 = vadd.f32 %v266, %v379
      %v418 = vadd.f32 %v267, %v384
      %v419 = vadd.f32 %v268, %v389
      %v420 = vadd.f32 %v269, %v394
      %v421 = vadd.f32 %v270, %v399
      %v422 = vadd.f32 %v271, %v404
      %v423 = vadd.f32 %v272, %v409
      %v424 = vadd.f32 %v273, %v414
      %425 = vst [vmem:[#allocation2] sm:$0xff] %v417
      %426 = vst [vmem:[#allocation2 + $0x8] sm:$0xff] %v418
      %427 = vst [vmem:[#allocation2 + $0x10] sm:$0xff] %v419
      %428 = vst [vmem:[#allocation2 + $0x18] sm:$0xff] %v420
      %429 = vst [vmem:[#allocation2 + $0x20] sm:$0xff] %v421
      %430 = vst [vmem:[#allocation2 + $0x28] sm:$0xff] %v422
      %431 = vst [vmem:[#allocation2 + $0x30] sm:$0xff] %v423
      %432 = vst [vmem:[#allocation2 + $0x38] sm:$0xff] %v424
      // Predicated region
      $region37: #{srfbn_forward.25} parent=31 // pred_check
        %p433 = pneg %p254
      $region38: #{srfbn_forward.25} parent=31 // pred_check_branch
        %435 = sbr.rel (%p433) target = $region40
      $region39: #{srfbn_forward.25} parent=31 // pred_region
        %v436 = vld [vmem:[#allocation2] sm:$0xff]
        %v437 = vld [vmem:[#allocation2 + $0x8] sm:$0xff]
        %v438 = vld [vmem:[#allocation2 + $0x10] sm:$0xff]
        %v439 = vld [vmem:[#allocation2 + $0x18] sm:$0xff]
        %v440 = vld [vmem:[#allocation2 + $0x20] sm:$0xff]
        %v441 = vld [vmem:[#allocation2 + $0x28] sm:$0xff]
        %v442 = vld [vmem:[#allocation2 + $0x30] sm:$0xff]
        %v443 = vld [vmem:[#allocation2 + $0x38] sm:$0xff]
        %v444 = vld [vmem:[%s244] sm:$0x1]
        %v446 = vlaneseq
        %v447 = vshrl.u32 %v446, 7
        %v448 = vsub.s32 0, %v447
        %v449 = vrot.slane %v444, %v448
        %v451 = vadd.f32 %v436, %v449
        %v452 = vadd.f32 %v437, %v449
        %v453 = vadd.f32 %v438, %v449
        %v454 = vadd.f32 %v439, %v449
        %v455 = vadd.f32 %v440, %v449
        %v456 = vadd.f32 %v441, %v449
        %v457 = vadd.f32 %v442, %v449
        %v458 = vadd.f32 %v443, %v449
        %459 = vst [vmem:[%s252] sm:$0xff] %v451
        %460 = vst [vmem:[%s252 + $0x8] sm:$0xff] %v452
        %461 = vst [vmem:[%s252 + $0x10] sm:$0xff] %v453
        %462 = vst [vmem:[%s252 + $0x18] sm:$0xff] %v454
        %463 = vst [vmem:[%s252 + $0x20] sm:$0xff] %v455
        %464 = vst [vmem:[%s252 + $0x28] sm:$0xff] %v456
        %465 = vst [vmem:[%s252 + $0x30] sm:$0xff] %v457
        %466 = vst [vmem:[%s252 + $0x38] sm:$0xff] %v458
      $region40: #{srfbn_forward.25} parent=31 // pred_fallthru
        _
      %s467 = smul.u32 8, %s19
      %p468 = scmp.lt.s32.totalorder %s467, 15
      %s469 = scalar_select %p468, %s467, 15
      %p470 = scmp.lt.s32.totalorder %s20, 0
      %s471 = scalar_select %p470, %s20, 0
      %s472 = sadd.s32 %s471, %s469
      %s473 = smul.addr %s472, 8
      %s474 = scalar_lea.vmem %s3, %s473
      // Predicated region
      $region41: #{srfbn_forward.25} parent=31 // pred_check
        %p475 = pneg %p135
      $region42: #{srfbn_forward.25} parent=31 // pred_check_branch
        %477 = sbr.rel (%p475) target = $region44
      $region43: #{srfbn_forward.25} parent=31 // pred_region
        %s478 = smul.u32 8, %s19
      $region44: #{srfbn_forward.25} parent=31 // pred_fallthru
        _
    $region32: #{srfbn_forward.25} parent=5 // pred_fallthru
      _
    %p479 = scmp.le.s32.totalorder 2, %s9
    // Predicated region
    $region45: #{srfbn_forward.25} parent=5 // pred_check
      %p480 = pneg %p479
    $region46: #{srfbn_forward.25} parent=5 // pred_check_branch
      %482 = sbr.rel (%p480) target = $region48
    $region47: #{srfbn_forward.25} parent=5 // pred_region
      %s483 = ssub.s32 %s9, 2
      // Predicated region
      $region49: #{srfbn_forward.25} parent=47 // pred_check
        %p484 = pneg %p141
      $region50: #{srfbn_forward.25} parent=47 // pred_check_branch
        %486 = sbr.rel (%p484) target = $region52
      $region51: #{srfbn_forward.25} parent=47 // pred_region
        %s487 = smul.u32 8, %s22
        %p488 = scmp.lt.s32.totalorder %s487, 15
        %s489 = scalar_select %p488, %s487, 15
        %p490 = scmp.lt.s32.totalorder %s23, 0
        %s491 = scalar_select %p490, %s23, 0
        %s492 = sadd.s32 %s491, %s489
        %s493 = smul.addr %s492, 8
        %s494 = scalar_lea.vmem %s3, %s493
      $region52: #{srfbn_forward.25} parent=47 // pred_fallthru
        _
    $region48: #{srfbn_forward.25} parent=5 // pred_fallthru
      _
  $region6: #{srfbn_forward.25} parent=0 // loop_footer
    %s13 = sadd.s32 1, %s9
  $region7: #{srfbn_forward.25} parent=0 // loop_footer_branch
    %8 = sbr.rel target = $region3
  $region8: #{srfbn_forward.25} parent=0 // loop_exit
    _

// kernel: srfbn_forward.28
$region0: #{srfbn_forward.28}
  #allocation0 [shape = 'u32[]', space=smem, size = 0x4, offset = 0x4, fixed_abs, tag = 'smem constant byte address 0x4 - core index']
  #allocation1 [shape = 'u32[144,128]{1,0:T(1,128)}', space=vmem, size = 0x12000, scoped, tag = 'internal scratch']
  #allocation2 [shape = 'f32[64,128]{1,0:T(8,128)}', space=vmem, size = 0x8000, scoped, tag = 'scratch operand']
  #allocation3 [shape = 'f32[1]{0:T(128)S(6)}', space=smem, size = 0x200, scoped, tag = 'scoped memory for srfbn_forward.28']
  %s0 = inlined_call_operand.vmem [shape: bf16[128,27], index: 0, kind: input, shape index: {}]
  %s1 = inlined_call_operand.vmem [shape: bf16[27,128], index: 1, kind: input, shape index: {}]
  %s2 = inlined_call_operand.vmem [shape: f32[1,128], index: 2, kind: input, shape index: {}]
  %s3 = inlined_call_operand.<no memory space> [shape: f32[1], index: 3, kind: input, shape index: {}]
  %s4 = inlined_call_operand.vmem [shape: bf16[128,128], index: 4, kind: output, shape index: {}]
  %s5 = sld [smem:[#allocation0]]
  $region57: #{srfbn_forward.28} parent=0
    _
  %s7 = ssub.s32 1, %s5
  %s8 = scalar_select 0, %s7, %s5
  %9 = sst [smem:[#allocation3]] %s3
  loop: start=0, step=1, limit=4
  $region2: #{srfbn_forward.28} parent=0 // loop_pre_header
    _
  $region3: #{srfbn_forward.28} parent=0 // loop_header
    %s11 = sphi 0, %s15
    %p12 = scmp.ge.s32.totalorder %s11, 4
    %s18 = sphi 0, %s37
    %s19 = sphi 0, %s33
    %s20 = sphi 0, %s29
    %s21 = sphi 0, %s18
    %s22 = sphi 0, %s19
    %s23 = sphi 0, %s20
    %s24 = sphi 0, %s21
    %s25 = sphi 0, %s22
    %s26 = sphi 0, %s23
    %s42 = sphi 0, %s44
    %s45 = sphi 0, %s42
    %s46 = sphi 0, %s45
    %s62 = sphi 0, %s46
    %s70 = sphi 0, %s72
    %s73 = sphi 0, %s70
    %s74 = sphi 0, %s73
    %s90 = sphi 0, %s74
    %s96 = sphi 0, %s98
    %s99 = sphi 0, %s96
    %s100 = sphi 0, %s99
    %s116 = sphi 0, %s100
    %s120 = sphi 0, %s120
    %s122 = sphi 0, %s120
    %s123 = sphi 0, %s122
    %s137 = sphi 0, %s123
    %s145 = sphi 0, %s147
    %s148 = sphi 0, %s145
    %s149 = sphi 0, %s148
    %s165 = sphi 0, %s149
  $region4: #{srfbn_forward.28} parent=0 // loop_header_branch
    %14 = sbr.rel (%p12) target = $region8
  $region5: #{srfbn_forward.28} parent=0 // loop_body
    %s16 = ssub.s32 %s11, 1
    %s17 = ssub.s32 %s11, 2
    %s27 = sadd.s32 1, %s20
    %p28 = scmp.ge.s32.totalorder %s27, 1
    %s29 = scalar_select %p28, 0, %s27
    %s30 = sadd.s32 1, %s19
    %s31 = scalar_select %p28, %s30, %s19
    %p32 = scmp.ge.s32.totalorder %s31, 1
    %s33 = scalar_select %p32, 0, %s31
    %s34 = sadd.s32 1, %s18
    %s35 = scalar_select %p32, %s34, %s18
    %p36 = scmp.ge.s32.totalorder %s35, 2
    %s37 = scalar_select %p36, 0, %s35
    %s38 = ssub.s32 %s18, %s37
    %s39 = ssub.s32 %s20, %s29
    %s40 = sor.u32 %s38, %s39
    %p41 = scmp.eq.s32.totalorder %s40, 0
    %s43 = sadd.s32 %s42, 1
    %s44 = scalar_select %p41, %s42, %s43
    %p47 = pneg %p41
    %p48 = scmp.eq.s32.totalorder %s11, 1
    %p49 = por %p47, %p48
    %p50 = scmp.ne.s32.totalorder %s42, %s45
    %p51 = scmp.eq.s32.totalorder %s11, 0
    %p52 = por %p50, %p51
    %p53 = scmp.ne.s32.totalorder %s42, %s45
    %p54 = scmp.eq.s32.totalorder %s16, 1
    %p55 = por %p53, %p54
    %p56 = scmp.ne.s32.totalorder %s45, %s46
    %p57 = scmp.eq.s32.totalorder %s16, 0
    %p58 = por %p56, %p57
    %p59 = scmp.ne.s32.totalorder %s45, %s46
    %p60 = scmp.eq.s32.totalorder %s17, 1
    %p61 = por %p59, %p60
    %p63 = scmp.ne.s32.totalorder %s46, %s62
    %p64 = scmp.eq.s32.totalorder %s17, 0
    %p65 = por %p63, %p64
    %s66 = ssub.s32 %s20, %s29
    %s67 = ssub.s32 %s19, %s33
    %s68 = sor.u32 %s66, %s67
    %p69 = scmp.eq.s32.totalorder %s68, 0
    %s71 = sadd.s32 %s70, 1
    %s72 = scalar_select %p69, %s70, %s71
    %p75 = pneg %p69
    %p76 = scmp.eq.s32.totalorder %s11, 1
    %p77 = por %p75, %p76
    %p78 = scmp.ne.s32.totalorder %s70, %s73
    %p79 = scmp.eq.s32.totalorder %s11, 0
    %p80 = por %p78, %p79
    %p81 = scmp.ne.s32.totalorder %s70, %s73
    %p82 = scmp.eq.s32.totalorder %s16, 1
    %p83 = por %p81, %p82
    %p84 = scmp.ne.s32.totalorder %s73, %s74
    %p85 = scmp.eq.s32.totalorder %s16, 0
    %p86 = por %p84, %p85
    %p87 = scmp.ne.s32.totalorder %s73, %s74
    %p88 = scmp.eq.s32.totalorder %s17, 1
    %p89 = por %p87, %p88
    %p91 = scmp.ne.s32.totalorder %s74, %s90
    %p92 = scmp.eq.s32.totalorder %s17, 0
    %p93 = por %p91, %p92
    %s94 = ssub.s32 %s19, %s33
    %p95 = scmp.eq.s32.totalorder %s94, 0
    %s97 = sadd.s32 %s96, 1
    %s98 = scalar_select %p95, %s96, %s97
    %p101 = pneg %p95
    %p102 = scmp.eq.s32.totalorder %s11, 1
    %p103 = por %p101, %p102
    %p104 = scmp.ne.s32.totalorder %s96, %s99
    %p105 = scmp.eq.s32.totalorder %s11, 0
    %p106 = por %p104, %p105
    %p107 = scmp.ne.s32.totalorder %s96, %s99
    %p108 = scmp.eq.s32.totalorder %s16, 1
    %p109 = por %p107, %p108
    %p110 = scmp.ne.s32.totalorder %s99, %s100
    %p111 = scmp.eq.s32.totalorder %s16, 0
    %p112 = por %p110, %p111
    %p113 = scmp.ne.s32.totalorder %s99, %s100
    %p114 = scmp.eq.s32.totalorder %s17, 1
    %p115 = por %p113, %p114
    %p117 = scmp.ne.s32.totalorder %s100, %s116
    %p118 = scmp.eq.s32.totalorder %s17, 0
    %p119 = por %p117, %p118
    %s121 = sadd.s32 %s120, 1
    %p124 = scmp.eq.s32.totalorder %s11, 1
    %p125 = scmp.ne.s32.totalorder %s120, %s122
    %p126 = scmp.eq.s32.totalorder %s11, 0
    %p127 = por %p125, %p126
    %p128 = scmp.ne.s32.totalorder %s120, %s122
    %p129 = scmp.eq.s32.totalorder %s16, 1
    %p130 = por %p128, %p129
    %p131 = scmp.ne.s32.totalorder %s122, %s123
    %p132 = scmp.eq.s32.totalorder %s16, 0
    %p133 = por %p131, %p132
    %p134 = scmp.ne.s32.totalorder %s122, %s123
    %p135 = scmp.eq.s32.totalorder %s17, 1
    %p136 = por %p134, %p135
    %p138 = scmp.ne.s32.totalorder %s123, %s137
    %p139 = scmp.eq.s32.totalorder %s17, 0
    %p140 = por %p138, %p139
    %s141 = ssub.s32 %s18, %s37
    %s142 = ssub.s32 %s19, %s33
    %s143 = sor.u32 %s141, %s142
    %p144 = scmp.eq.s32.totalorder %s143, 0
    %s146 = sadd.s32 %s145, 1
    %s147 = scalar_select %p144, %s145, %s146
    %p150 = pneg %p144
    %p151 = scmp.eq.s32.totalorder %s11, 1
    %p152 = por %p150, %p151
    %p153 = scmp.ne.s32.totalorder %s145, %s148
    %p154 = scmp.eq.s32.totalorder %s11, 0
    %p155 = por %p153, %p154
    %p156 = scmp.ne.s32.totalorder %s145, %s148
    %p157 = scmp.eq.s32.totalorder %s16, 1
    %p158 = por %p156, %p157
    %p159 = scmp.ne.s32.totalorder %s148, %s149
    %p160 = scmp.eq.s32.totalorder %s16, 0
    %p161 = por %p159, %p160
    %p162 = scmp.ne.s32.totalorder %s148, %s149
    %p163 = scmp.eq.s32.totalorder %s17, 1
    %p164 = por %p162, %p163
    %p166 = scmp.ne.s32.totalorder %s149, %s165
    %p167 = scmp.eq.s32.totalorder %s17, 0
    %p168 = por %p166, %p167
    %p169 = scmp.le.s32.totalorder 1, %s11
    %p170 = scmp.lt.s32.totalorder %s11, 3
    %p171 = pnand %p169, %p170
    %p172 = pneg %p171
    // Predicated region
    $region9: #{srfbn_forward.28} parent=5 // pred_check
      _
    $region10: #{srfbn_forward.28} parent=5 // pred_check_branch
      %174 = sbr.rel (%p171) target = $region12
    $region11: #{srfbn_forward.28} parent=5 // pred_region
      %s175 = ssub.s32 %s11, 1
      // Predicated region
      $region13: #{srfbn_forward.28} parent=11 // pred_check
        %p176 = pneg %p86
      $region14: #{srfbn_forward.28} parent=11 // pred_check_branch
        %178 = sbr.rel (%p176) target = $region16
      $region15: #{srfbn_forward.28} parent=11 // pred_region
        %s179 = smul.u32 4, %s23
        %p180 = scmp.lt.s32.totalorder %s179, 3
        %s181 = scalar_select %p180, %s179, 3
        %p182 = scmp.lt.s32.totalorder %s22, 0
        %s183 = scalar_select %p182, %s22, 0
        %s184 = sadd.s32 %s183, %s181
        %s185 = smul.addr %s184, 4
        %s186 = scalar_lea.vmem %s1, %s185
        %s187 = smul.u32 4, %s23
      $region16: #{srfbn_forward.28} parent=11 // pred_fallthru
        _
      // Predicated region
      $region17: #{srfbn_forward.28} parent=11 // pred_check
        %p188 = pneg %p112
      $region18: #{srfbn_forward.28} parent=11 // pred_check_branch
        %190 = sbr.rel (%p188) target = $region20
      $region19: #{srfbn_forward.28} parent=11 // pred_region
        %p191 = scmp.lt.s32.totalorder %s22, 0
        %s192 = scalar_select %p191, %s22, 0
        %s193 = scalar_lea.vmem %s2, %s192
      $region20: #{srfbn_forward.28} parent=11 // pred_fallthru
        _
      // Predicated region
      $region21: #{srfbn_forward.28} parent=11 // pred_check
        %p194 = pneg %p133
      $region22: #{srfbn_forward.28} parent=11 // pred_check_branch
        %196 = sbr.rel (%p194) target = $region24
      $region23: #{srfbn_forward.28} parent=11 // pred_region
        _
      $region24: #{srfbn_forward.28} parent=11 // pred_fallthru
        _
    $region12: #{srfbn_forward.28} parent=5 // pred_fallthru
      _
    %p197 = scmp.lt.s32.totalorder %s11, 2
    // Predicated region
    $region25: #{srfbn_forward.28} parent=5 // pred_check
      %p198 = pneg %p197
    $region26: #{srfbn_forward.28} parent=5 // pred_check_branch
      %200 = sbr.rel (%p198) target = $region28
    $region27: #{srfbn_forward.28} parent=5 // pred_region
      // Predicated region
      $region29: #{srfbn_forward.28} parent=27 // pred_check
        %p201 = pneg %p52
      $region30: #{srfbn_forward.28} parent=27 // pred_check_branch
        %203 = sbr.rel (%p201) target = $region32
      $region31: #{srfbn_forward.28} parent=27 // pred_region
        %s204 = smul.u32 8, %s18
        %p205 = scmp.lt.s32.totalorder %s204, 15
        %s206 = scalar_select %p205, %s204, 15
        %p207 = scmp.lt.s32.totalorder %s20, 0
        %s208 = scalar_select %p207, %s20, 0
        %s209 = sadd.s32 %s208, %s206
        %s210 = smul.addr %s209, 4
        %s211 = scalar_lea.vmem %s0, %s210
        %s212 = smul.u32 8, %s18
      $region32: #{srfbn_forward.28} parent=27 // pred_fallthru
        _
    $region28: #{srfbn_forward.28} parent=5 // pred_fallthru
      _
    %p213 = scmp.le.s32.totalorder 1, %s11
    %p214 = scmp.lt.s32.totalorder %s11, 3
    %p215 = pnand %p213, %p214
    %p216 = pneg %p215
    // Predicated region
    $region33: #{srfbn_forward.28} parent=5 // pred_check
      _
    $region34: #{srfbn_forward.28} parent=5 // pred_check_branch
      %218 = sbr.rel (%p215) target = $region36
    $region35: #{srfbn_forward.28} parent=5 // pred_region
      %s219 = ssub.s32 %s11, 1
      %s220 = smul.u32 8, %s21
      %p221 = scmp.lt.s32.totalorder %s220, 15
      %s222 = scalar_select %p221, %s220, 15
      %p223 = scmp.lt.s32.totalorder %s23, 0
      %s224 = scalar_select %p223, %s23, 0
      %s225 = sadd.s32 %s224, %s222
      %s226 = smul.addr %s225, 4
      %s227 = scalar_lea.vmem %s0, %s226
      %p228 = pneg %p58
      %p229 = pneg %p55
      %s230 = smul.u32 4, %s23
      %p231 = scmp.lt.s32.totalorder %s230, 3
      %s232 = scalar_select %p231, %s230, 3
      %p233 = scmp.lt.s32.totalorder %s22, 0
      %s234 = scalar_select %p233, %s22, 0
      %s235 = sadd.s32 %s234, %s232
      %s236 = smul.addr %s235, 4
      %s237 = scalar_lea.vmem %s1, %s236
      %p238 = pneg %p86
      %p239 = pneg %p83
      %p240 = scmp.lt.s32.totalorder %s22, 0
      %s241 = scalar_select %p240, %s22, 0
      %s242 = scalar_lea.vmem %s2, %s241
      %p243 = pneg %p112
      %p244 = pneg %p109
      %p245 = pneg %p133
      %p246 = pneg %p130
      %p247 = pneg %p161
      %p248 = pneg %p158
      %s249 = smul.u32 8, %s21
      %p250 = scmp.lt.s32.totalorder %s249, 15
      %s251 = scalar_select %p250, %s249, 15
      %p252 = scmp.lt.s32.totalorder %s22, 0
      %s253 = scalar_select %p252, %s22, 0
      %s254 = sadd.s32 %s253, %s251
      %s255 = smul.addr %s254, 4
      %s256 = scalar_lea.vmem %s4, %s255
      %s257 = smul.u32 8, %s21
      %p258 = scmp.lt.s32.totalorder %s257, 15
      %s259 = scalar_select %p258, %s257, 15
      %p260 = scmp.lt.s32.totalorder %s23, 0
      %s261 = scalar_select %p260, %s23, 0
      %s262 = sadd.s32 %s261, %s259
      %s263 = smul.addr %s262, 4
      %s264 = scalar_lea.vmem %s0, %s263
      %s265 = smul.u32 8, %s21
      %s266 = smul.u32 4, %s23
      %p267 = scmp.lt.s32.totalorder %s266, 3
      %s268 = scalar_select %p267, %s266, 3
      %p269 = scmp.lt.s32.totalorder %s22, 0
      %s270 = scalar_select %p269, %s22, 0
      %s271 = sadd.s32 %s270, %s268
      %s272 = smul.addr %s271, 4
      %s273 = scalar_lea.vmem %s1, %s272
      %s274 = smul.u32 4, %s23
      %p275 = scmp.lt.s32.totalorder %s22, 0
      %s276 = scalar_select %p275, %s22, 0
      %s277 = scalar_lea.vmem %s2, %s276
      %s278 = smul.u32 8, %s21
      %p279 = scmp.lt.s32.totalorder %s278, 15
      %s280 = scalar_select %p279, %s278, 15
      %p281 = scmp.lt.s32.totalorder %s22, 0
      %s282 = scalar_select %p281, %s22, 0
      %s283 = sadd.s32 %s282, %s280
      %s284 = smul.addr %s283, 4
      %s285 = scalar_lea.vmem %s4, %s284
      %s286 = smul.u32 8, %s21
      %p288 = scmp.eq.s32.totalorder %s23, 0
      // Predicated region
      $region37: #{srfbn_forward.28} parent=35 // pred_check
        %p289 = pneg %p288
      $region38: #{srfbn_forward.28} parent=35 // pred_check_branch
        %291 = sbr.rel (%p289) target = $region40
      $region39: #{srfbn_forward.28} parent=35 // pred_region
        %292 = vst [vmem:[#allocation2] sm:$0xff] 0.0
        %293 = vst [vmem:[#allocation2 + $0x8] sm:$0xff] 0.0
        %294 = vst [vmem:[#allocation2 + $0x10] sm:$0xff] 0.0
        %295 = vst [vmem:[#allocation2 + $0x18] sm:$0xff] 0.0
        %296 = vst [vmem:[#allocation2 + $0x20] sm:$0xff] 0.0
        %297 = vst [vmem:[#allocation2 + $0x28] sm:$0xff] 0.0
        %298 = vst [vmem:[#allocation2 + $0x30] sm:$0xff] 0.0
        %299 = vst [vmem:[#allocation2 + $0x38] sm:$0xff] 0.0
      $region40: #{srfbn_forward.28} parent=35 // pred_fallthru
        _
      %v300 = vld [vmem:[#allocation2] sm:$0xff]
      %v301 = vld [vmem:[#allocation2 + $0x8] sm:$0xff]
      %v302 = vld [vmem:[#allocation2 + $0x10] sm:$0xff]
      %v303 = vld [vmem:[#allocation2 + $0x18] sm:$0xff]
      %v304 = vld [vmem:[#allocation2 + $0x20] sm:$0xff]
      %v305 = vld [vmem:[#allocation2 + $0x28] sm:$0xff]
      %v306 = vld [vmem:[#allocation2 + $0x30] sm:$0xff]
      %v307 = vld [vmem:[#allocation2 + $0x38] sm:$0xff]
      %v308 = vld [vmem:[%s264] sm:$0xf]
      %v309 = vld [vmem:[%s264 + $0x4] sm:$0xf]
      %v310 = vld [vmem:[%s264 + $0x8] sm:$0xf]
      %v311 = vld [vmem:[%s264 + $0xc] sm:$0xf]
      %v312 = vld [vmem:[%s264 + $0x10] sm:$0xf]
      %v313 = vld [vmem:[%s264 + $0x14] sm:$0xf]
      %v314 = vld [vmem:[%s264 + $0x18] sm:$0xf]
      %v315 = vld [vmem:[%s264 + $0x1c] sm:$0xf]
      %v316 = vld [vmem:[%s273] sm:$0xf]
      %v317 = vld [vmem:[%s273 + $0x4] sm:$0xf]
      %v318 = vld [vmem:[%s273 + $0x8] sm:$0xf]
      %v319 = vld [vmem:[%s273 + $0xc] sm:$0x3]
      %v328 = vunpack.c.l.b16 %v308
      %v329 = vunpack.c.l.b16 %v309
      %v330 = vunpack.c.l.b16 %v310
      %v331 = vunpack.c.l.b16 %v311
      %v332 = vunpack.c.l.b16 %v312
      %v333 = vunpack.c.l.b16 %v313
      %v334 = vunpack.c.l.b16 %v314
      %v335 = vunpack.c.l.b16 %v315
      %v336 = vpack.c.b16 %v329, %v328
      %v337 = vpack.c.b16 %v331, %v330
      %v338 = vpack.c.b16 %v333, %v332
      %v339 = vpack.c.b16 %v335, %v334
      %v344 = vunpack.c.l.b16 %v316
      %v345 = vunpack.c.l.b16 %v317
      %v346 = vunpack.c.l.b16 %v318
      %v347 = vunpack.c.l.b16 %v319
      %v348 = vpack.c.b16 %v345, %v344
      %v349 = vpack.c.b16 %v347, %v346
      %vm351 = vcmask 220160
      %v353 = vsel %vm351, %v336, 0
      %v356 = vsel %vm351, %v337, 0
      %v359 = vsel %vm351, %v338, 0
      %v362 = vsel %vm351, %v339, 0
      %vm364 = vcmask 1044480
      %vm365 = vcmask 1045504
      %v366 = vsel %vm364, 4294967295, 65535
      %v367 = vsel %vm365, %v366, 0
      %v369 = vand.u32 %v349, %v367
      %371 = vmatprep.subr.bf16.mxu0 0
      %372 = vmatpush1.bf16.msra.mxu0 %v348
      %373 = vmatprep.subr.bf16.mxu0 0
      %374 = vmatpush1.bf16.msra.mxu0 %v369
      %375 = vmatprep.subr.bf16.mxu0 0
      %376 = vmatpush1.bf16.msra.mxu0 0
      %377 = vmatprep.subr.bf16.mxu0 0
      %378 = vmatpush1.bf16.msra.mxu0 0
      %379 = vmatprep.subr.bf16.mxu0 0
      %380 = vmatpush1.bf16.msra.mxu0 0
      %381 = vmatprep.subr.bf16.mxu0 0
      %382 = vmatpush1.bf16.msra.mxu0 0
      %383 = vmatprep.subr.bf16.mxu0 0
      %384 = vmatpush1.bf16.msra.mxu0 0
      %385 = vmatprep.subr.bf16.mxu0 0
      %386 = vmatpush1.bf16.msra.mxu0 0
      %387 = vmatprep.subr.bf16.mxu0 0
      %388 = vmatpush1.bf16.msra.mxu0 0
      %389 = vmatprep.subr.bf16.mxu0 0
      %390 = vmatpush1.bf16.msra.mxu0 0
      %391 = vmatprep.subr.bf16.mxu0 0
      %392 = vmatpush1.bf16.msra.mxu0 0
      %393 = vmatprep.subr.bf16.mxu0 0
      %394 = vmatpush1.bf16.msra.mxu0 0
      %395 = vmatprep.subr.bf16.mxu0 0
      %396 = vmatpush1.bf16.msra.mxu0 0
      %397 = vmatprep.subr.bf16.mxu0 0
      %398 = vmatpush1.bf16.msra.mxu0 0
      %399 = vmatprep.subr.bf16.mxu0 0
      %400 = vmatpush1.bf16.msra.mxu0 0
      %401 = vmatprep.subr.bf16.mxu0 0
      %402 = vmatpush1.bf16.msra.mxu0 0
      %403 = vmatprep.mubr.bf16.mxu0 0
      %404 = vmatmul.mubr.bf16.gmra.mrb[0].mxu0 %v353
      %v405 = vpop.f32.mrb[0].mxu0
      %v406 = vadd.f32 0.0, %v405
      %v407 = vpop.f32.mrb[0].mxu0
      %v408 = vpop.f32.mrb[0].mxu0
      %v409 = vadd.f32 0.0, %v408
      %v410 = vpop.f32.mrb[0].mxu0
      %411 = vmatprep.mubr.bf16.mxu0 0
      %412 = vmatmul.mubr.bf16.gmra.mrb[0].mxu0 %v356
      %v413 = vpop.f32.mrb[0].mxu0
      %v414 = vadd.f32 0.0, %v413
      %v415 = vpop.f32.mrb[0].mxu0
      %v416 = vpop.f32.mrb[0].mxu0
      %v417 = vadd.f32 0.0, %v416
      %v418 = vpop.f32.mrb[0].mxu0
      %419 = vmatprep.mubr.bf16.mxu0 0
      %420 = vmatmul.mubr.bf16.gmra.mrb[0].mxu0 %v359
      %v421 = vpop.f32.mrb[0].mxu0
      %v422 = vadd.f32 0.0, %v421
      %v423 = vpop.f32.mrb[0].mxu0
      %v424 = vpop.f32.mrb[0].mxu0
      %v425 = vadd.f32 0.0, %v424
      %v426 = vpop.f32.mrb[0].mxu0
      %427 = vmatprep.mubr.bf16.mxu0 0
      %428 = vmatmul.mubr.bf16.gmra.mrb[0].mxu0 %v362
      %v429 = vpop.f32.mrb[0].mxu0
      %v430 = vadd.f32 0.0, %v429
      %v431 = vpop.f32.mrb[0].mxu0
      %v432 = vpop.f32.mrb[0].mxu0
      %v433 = vadd.f32 0.0, %v432
      %v434 = vpop.f32.mrb[0].mxu0
      %435 = vdwg.mxu0
      %v436 = vadd.f32 %v300, %v406
      %v437 = vadd.f32 %v301, %v409
      %v438 = vadd.f32 %v302, %v414
      %v439 = vadd.f32 %v303, %v417
      %v440 = vadd.f32 %v304, %v422
      %v441 = vadd.f32 %v305, %v425
      %v442 = vadd.f32 %v306, %v430
      %v443 = vadd.f32 %v307, %v433
      %444 = vst [vmem:[#allocation2] sm:$0xff] %v436
      %445 = vst [vmem:[#allocation2 + $0x8] sm:$0xff] %v437
      %446 = vst [vmem:[#allocation2 + $0x10] sm:$0xff] %v438
      %447 = vst [vmem:[#allocation2 + $0x18] sm:$0xff] %v439
      %448 = vst [vmem:[#allocation2 + $0x20] sm:$0xff] %v440
      %449 = vst [vmem:[#allocation2 + $0x28] sm:$0xff] %v441
      %450 = vst [vmem:[#allocation2 + $0x30] sm:$0xff] %v442
      %451 = vst [vmem:[#allocation2 + $0x38] sm:$0xff] %v443
      // Predicated region
      $region41: #{srfbn_forward.28} parent=35 // pred_check
        %p452 = pneg %p288
      $region42: #{srfbn_forward.28} parent=35 // pred_check_branch
        %454 = sbr.rel (%p452) target = $region44
      $region43: #{srfbn_forward.28} parent=35 // pred_region
        %v455 = vld [vmem:[#allocation2] sm:$0xff]
        %v456 = vld [vmem:[#allocation2 + $0x8] sm:$0xff]
        %v457 = vld [vmem:[#allocation2 + $0x10] sm:$0xff]
        %v458 = vld [vmem:[#allocation2 + $0x18] sm:$0xff]
        %v459 = vld [vmem:[#allocation2 + $0x20] sm:$0xff]
        %v460 = vld [vmem:[#allocation2 + $0x28] sm:$0xff]
        %v461 = vld [vmem:[#allocation2 + $0x30] sm:$0xff]
        %v462 = vld [vmem:[#allocation2 + $0x38] sm:$0xff]
        %v463 = vld [vmem:[%s277] sm:$0x1]
        %v465 = vlaneseq
        %v466 = vshrl.u32 %v465, 7
        %v467 = vsub.s32 0, %v466
        %v468 = vrot.slane %v463, %v467
        %v470 = vadd.f32 %v455, %v468
        %v471 = vadd.f32 %v456, %v468
        %v472 = vadd.f32 %v457, %v468
        %v473 = vadd.f32 %v458, %v468
        %v474 = vadd.f32 %v459, %v468
        %v475 = vadd.f32 %v460, %v468
        %v476 = vadd.f32 %v461, %v468
        %v477 = vadd.f32 %v462, %v468
        %s478 = sld [smem:[#allocation3]]
        %vm479 = vcmp.gt.f32.partialorder %v470, 0.0
        %vm480 = vcmp.gt.f32.partialorder %v471, 0.0
        %vm481 = vcmp.gt.f32.partialorder %v472, 0.0
        %vm482 = vcmp.gt.f32.partialorder %v473, 0.0
        %vm483 = vcmp.gt.f32.partialorder %v474, 0.0
        %vm484 = vcmp.gt.f32.partialorder %v475, 0.0
        %vm485 = vcmp.gt.f32.partialorder %v476, 0.0
        %vm486 = vcmp.gt.f32.partialorder %v477, 0.0
        %v487 = vstv %s478
        %v488 = vmul.f32 %v487, %v470
        %v489 = vmul.f32 %v487, %v471
        %v490 = vmul.f32 %v487, %v472
        %v491 = vmul.f32 %v487, %v473
        %v492 = vmul.f32 %v487, %v474
        %v493 = vmul.f32 %v487, %v475
        %v494 = vmul.f32 %v487, %v476
        %v495 = vmul.f32 %v487, %v477
        %v496 = vsel %vm479, %v470, %v488
        %v497 = vsel %vm480, %v471, %v489
        %v498 = vsel %vm481, %v472, %v490
        %v499 = vsel %vm482, %v473, %v491
        %v500 = vsel %vm483, %v474, %v492
        %v501 = vsel %vm484, %v475, %v493
        %v502 = vsel %vm485, %v476, %v494
        %v503 = vsel %vm486, %v477, %v495
        %v504 = vpack.c.bf16 %v497, %v496
        %v505 = vpack.c.bf16 %v499, %v498
        %v506 = vpack.c.bf16 %v501, %v500
        %v507 = vpack.c.bf16 %v503, %v502
        %v512 = vunpack.c.l.b16 %v504
        %v513 = vunpack.c.h.b16 %v504
        %v514 = vunpack.c.l.b16 %v505
        %v515 = vunpack.c.h.b16 %v505
        %v516 = vunpack.c.l.b16 %v506
        %v517 = vunpack.c.h.b16 %v506
        %v518 = vunpack.c.l.b16 %v507
        %v519 = vunpack.c.h.b16 %v507
        %v520 = vpack.c.b16 %v512, %v512
        %v521 = vpack.c.b16 %v513, %v513
        %v522 = vpack.c.b16 %v514, %v514
        %v523 = vpack.c.b16 %v515, %v515
        %v524 = vpack.c.b16 %v516, %v516
        %v525 = vpack.c.b16 %v517, %v517
        %v526 = vpack.c.b16 %v518, %v518
        %v527 = vpack.c.b16 %v519, %v519
        %536 = vst [vmem:[%s285] sm:$0xf] %v520
        %537 = vst [vmem:[%s285 + $0x4] sm:$0xf] %v521
        %538 = vst [vmem:[%s285 + $0x8] sm:$0xf] %v522
        %539 = vst [vmem:[%s285 + $0xc] sm:$0xf] %v523
        %540 = vst [vmem:[%s285 + $0x10] sm:$0xf] %v524
        %541 = vst [vmem:[%s285 + $0x14] sm:$0xf] %v525
        %542 = vst [vmem:[%s285 + $0x18] sm:$0xf] %v526
        %543 = vst [vmem:[%s285 + $0x1c] sm:$0xf] %v527
      $region44: #{srfbn_forward.28} parent=35 // pred_fallthru
        _
      %s544 = smul.u32 8, %s21
      %p545 = scmp.lt.s32.totalorder %s544, 15
      %s546 = scalar_select %p545, %s544, 15
      %p547 = scmp.lt.s32.totalorder %s22, 0
      %s548 = scalar_select %p547, %s22, 0
      %s549 = sadd.s32 %s548, %s546
      %s550 = smul.addr %s549, 4
      %s551 = scalar_lea.vmem %s4, %s550
      // Predicated region
      $region45: #{srfbn_forward.28} parent=35 // pred_check
        %p552 = pneg %p158
      $region46: #{srfbn_forward.28} parent=35 // pred_check_branch
        %554 = sbr.rel (%p552) target = $region48
      $region47: #{srfbn_forward.28} parent=35 // pred_region
        %s555 = smul.u32 8, %s21
      $region48: #{srfbn_forward.28} parent=35 // pred_fallthru
        _
    $region36: #{srfbn_forward.28} parent=5 // pred_fallthru
      _
    %p556 = scmp.le.s32.totalorder 2, %s11
    // Predicated region
    $region49: #{srfbn_forward.28} parent=5 // pred_check
      %p557 = pneg %p556
    $region50: #{srfbn_forward.28} parent=5 // pred_check_branch
      %559 = sbr.rel (%p557) target = $region52
    $region51: #{srfbn_forward.28} parent=5 // pred_region
      %s560 = ssub.s32 %s11, 2
      // Predicated region
      $region53: #{srfbn_forward.28} parent=51 // pred_check
        %p561 = pneg %p164
      $region54: #{srfbn_forward.28} parent=51 // pred_check_branch
        %563 = sbr.rel (%p561) target = $region56
      $region55: #{srfbn_forward.28} parent=51 // pred_region
        %s564 = smul.u32 8, %s24
        %p565 = scmp.lt.s32.totalorder %s564, 15
        %s566 = scalar_select %p565, %s564, 15
        %p567 = scmp.lt.s32.totalorder %s25, 0
        %s568 = scalar_select %p567, %s25, 0
        %s569 = sadd.s32 %s568, %s566
        %s570 = smul.addr %s569, 4
        %s571 = scalar_lea.vmem %s4, %s570
      $region56: #{srfbn_forward.28} parent=51 // pred_fallthru
        _
    $region52: #{srfbn_forward.28} parent=5 // pred_fallthru
      _
  $region6: #{srfbn_forward.28} parent=0 // loop_footer
    %s15 = sadd.s32 1, %s11
  $region7: #{srfbn_forward.28} parent=0 // loop_footer_branch
    %10 = sbr.rel target = $region3
  $region8: #{srfbn_forward.28} parent=0 // loop_exit
    _

// kernel: srfbn_forward.29
$region0: #{srfbn_forward.29}
  #allocation0 [shape = 'u32[]', space=smem, size = 0x4, offset = 0x4, fixed_abs, tag = 'smem constant byte address 0x4 - core index']
  #allocation1 [shape = 'u32[144,128]{1,0:T(1,128)}', space=vmem, size = 0x12000, scoped, tag = 'internal scratch']
  #allocation2 [shape = 'f32[64,128]{1,0:T(8,128)}', space=vmem, size = 0x8000, scoped, tag = 'scratch operand']
  #allocation3 [shape = 'f32[1]{0:T(128)S(6)}', space=smem, size = 0x200, scoped, tag = 'scoped memory for srfbn_forward.29']
  %s0 = inlined_call_operand.vmem [shape: bf16[128,32], index: 0, kind: input, shape index: {}]
  %s1 = inlined_call_operand.vmem [shape: bf16[32,128], index: 1, kind: input, shape index: {}]
  %s2 = inlined_call_operand.vmem [shape: f32[1,128], index: 2, kind: input, shape index: {}]
  %s3 = inlined_call_operand.<no memory space> [shape: f32[1], index: 3, kind: input, shape index: {}]
  %s4 = inlined_call_operand.vmem [shape: bf16[128,128], index: 4, kind: output, shape index: {}]
  %s5 = sld [smem:[#allocation0]]
  $region57: #{srfbn_forward.29} parent=0
    _
  %s7 = ssub.s32 1, %s5
  %s8 = scalar_select 0, %s7, %s5
  %9 = sst [smem:[#allocation3]] %s3
  loop: start=0, step=1, limit=4
  $region2: #{srfbn_forward.29} parent=0 // loop_pre_header
    _
  $region3: #{srfbn_forward.29} parent=0 // loop_header
    %s11 = sphi 0, %s15
    %p12 = scmp.ge.s32.totalorder %s11, 4
    %s18 = sphi 0, %s37
    %s19 = sphi 0, %s33
    %s20 = sphi 0, %s29
    %s21 = sphi 0, %s18
    %s22 = sphi 0, %s19
    %s23 = sphi 0, %s20
    %s24 = sphi 0, %s21
    %s25 = sphi 0, %s22
    %s26 = sphi 0, %s23
    %s42 = sphi 0, %s44
    %s45 = sphi 0, %s42
    %s46 = sphi 0, %s45
    %s62 = sphi 0, %s46
    %s70 = sphi 0, %s72
    %s73 = sphi 0, %s70
    %s74 = sphi 0, %s73
    %s90 = sphi 0, %s74
    %s96 = sphi 0, %s98
    %s99 = sphi 0, %s96
    %s100 = sphi 0, %s99
    %s116 = sphi 0, %s100
    %s120 = sphi 0, %s120
    %s122 = sphi 0, %s120
    %s123 = sphi 0, %s122
    %s137 = sphi 0, %s123
    %s145 = sphi 0, %s147
    %s148 = sphi 0, %s145
    %s149 = sphi 0, %s148
    %s165 = sphi 0, %s149
  $region4: #{srfbn_forward.29} parent=0 // loop_header_branch
    %14 = sbr.rel (%p12) target = $region8
  $region5: #{srfbn_forward.29} parent=0 // loop_body
    %s16 = ssub.s32 %s11, 1
    %s17 = ssub.s32 %s11, 2
    %s27 = sadd.s32 1, %s20
    %p28 = scmp.ge.s32.totalorder %s27, 1
    %s29 = scalar_select %p28, 0, %s27
    %s30 = sadd.s32 1, %s19
    %s31 = scalar_select %p28, %s30, %s19
    %p32 = scmp.ge.s32.totalorder %s31, 1
    %s33 = scalar_select %p32, 0, %s31
    %s34 = sadd.s32 1, %s18
    %s35 = scalar_select %p32, %s34, %s18
    %p36 = scmp.ge.s32.totalorder %s35, 2
    %s37 = scalar_select %p36, 0, %s35
    %s38 = ssub.s32 %s18, %s37
    %s39 = ssub.s32 %s20, %s29
    %s40 = sor.u32 %s38, %s39
    %p41 = scmp.eq.s32.totalorder %s40, 0
    %s43 = sadd.s32 %s42, 1
    %s44 = scalar_select %p41, %s42, %s43
    %p47 = pneg %p41
    %p48 = scmp.eq.s32.totalorder %s11, 1
    %p49 = por %p47, %p48
    %p50 = scmp.ne.s32.totalorder %s42, %s45
    %p51 = scmp.eq.s32.totalorder %s11, 0
    %p52 = por %p50, %p51
    %p53 = scmp.ne.s32.totalorder %s42, %s45
    %p54 = scmp.eq.s32.totalorder %s16, 1
    %p55 = por %p53, %p54
    %p56 = scmp.ne.s32.totalorder %s45, %s46
    %p57 = scmp.eq.s32.totalorder %s16, 0
    %p58 = por %p56, %p57
    %p59 = scmp.ne.s32.totalorder %s45, %s46
    %p60 = scmp.eq.s32.totalorder %s17, 1
    %p61 = por %p59, %p60
    %p63 = scmp.ne.s32.totalorder %s46, %s62
    %p64 = scmp.eq.s32.totalorder %s17, 0
    %p65 = por %p63, %p64
    %s66 = ssub.s32 %s20, %s29
    %s67 = ssub.s32 %s19, %s33
    %s68 = sor.u32 %s66, %s67
    %p69 = scmp.eq.s32.totalorder %s68, 0
    %s71 = sadd.s32 %s70, 1
    %s72 = scalar_select %p69, %s70, %s71
    %p75 = pneg %p69
    %p76 = scmp.eq.s32.totalorder %s11, 1
    %p77 = por %p75, %p76
    %p78 = scmp.ne.s32.totalorder %s70, %s73
    %p79 = scmp.eq.s32.totalorder %s11, 0
    %p80 = por %p78, %p79
    %p81 = scmp.ne.s32.totalorder %s70, %s73
    %p82 = scmp.eq.s32.totalorder %s16, 1
    %p83 = por %p81, %p82
    %p84 = scmp.ne.s32.totalorder %s73, %s74
    %p85 = scmp.eq.s32.totalorder %s16, 0
    %p86 = por %p84, %p85
    %p87 = scmp.ne.s32.totalorder %s73, %s74
    %p88 = scmp.eq.s32.totalorder %s17, 1
    %p89 = por %p87, %p88
    %p91 = scmp.ne.s32.totalorder %s74, %s90
    %p92 = scmp.eq.s32.totalorder %s17, 0
    %p93 = por %p91, %p92
    %s94 = ssub.s32 %s19, %s33
    %p95 = scmp.eq.s32.totalorder %s94, 0
    %s97 = sadd.s32 %s96, 1
    %s98 = scalar_select %p95, %s96, %s97
    %p101 = pneg %p95
    %p102 = scmp.eq.s32.totalorder %s11, 1
    %p103 = por %p101, %p102
    %p104 = scmp.ne.s32.totalorder %s96, %s99
    %p105 = scmp.eq.s32.totalorder %s11, 0
    %p106 = por %p104, %p105
    %p107 = scmp.ne.s32.totalorder %s96, %s99
    %p108 = scmp.eq.s32.totalorder %s16, 1
    %p109 = por %p107, %p108
    %p110 = scmp.ne.s32.totalorder %s99, %s100
    %p111 = scmp.eq.s32.totalorder %s16, 0
    %p112 = por %p110, %p111
    %p113 = scmp.ne.s32.totalorder %s99, %s100
    %p114 = scmp.eq.s32.totalorder %s17, 1
    %p115 = por %p113, %p114
    %p117 = scmp.ne.s32.totalorder %s100, %s116
    %p118 = scmp.eq.s32.totalorder %s17, 0
    %p119 = por %p117, %p118
    %s121 = sadd.s32 %s120, 1
    %p124 = scmp.eq.s32.totalorder %s11, 1
    %p125 = scmp.ne.s32.totalorder %s120, %s122
    %p126 = scmp.eq.s32.totalorder %s11, 0
    %p127 = por %p125, %p126
    %p128 = scmp.ne.s32.totalorder %s120, %s122
    %p129 = scmp.eq.s32.totalorder %s16, 1
    %p130 = por %p128, %p129
    %p131 = scmp.ne.s32.totalorder %s122, %s123
    %p132 = scmp.eq.s32.totalorder %s16, 0
    %p133 = por %p131, %p132
    %p134 = scmp.ne.s32.totalorder %s122, %s123
    %p135 = scmp.eq.s32.totalorder %s17, 1
    %p136 = por %p134, %p135
    %p138 = scmp.ne.s32.totalorder %s123, %s137
    %p139 = scmp.eq.s32.totalorder %s17, 0
    %p140 = por %p138, %p139
    %s141 = ssub.s32 %s18, %s37
    %s142 = ssub.s32 %s19, %s33
    %s143 = sor.u32 %s141, %s142
    %p144 = scmp.eq.s32.totalorder %s143, 0
    %s146 = sadd.s32 %s145, 1
    %s147 = scalar_select %p144, %s145, %s146
    %p150 = pneg %p144
    %p151 = scmp.eq.s32.totalorder %s11, 1
    %p152 = por %p150, %p151
    %p153 = scmp.ne.s32.totalorder %s145, %s148
    %p154 = scmp.eq.s32.totalorder %s11, 0
    %p155 = por %p153, %p154
    %p156 = scmp.ne.s32.totalorder %s145, %s148
    %p157 = scmp.eq.s32.totalorder %s16, 1
    %p158 = por %p156, %p157
    %p159 = scmp.ne.s32.totalorder %s148, %s149
    %p160 = scmp.eq.s32.totalorder %s16, 0
    %p161 = por %p159, %p160
    %p162 = scmp.ne.s32.totalorder %s148, %s149
    %p163 = scmp.eq.s32.totalorder %s17, 1
    %p164 = por %p162, %p163
    %p166 = scmp.ne.s32.totalorder %s149, %s165
    %p167 = scmp.eq.s32.totalorder %s17, 0
    %p168 = por %p166, %p167
    %p169 = scmp.le.s32.totalorder 1, %s11
    %p170 = scmp.lt.s32.totalorder %s11, 3
    %p171 = pnand %p169, %p170
    %p172 = pneg %p171
    // Predicated region
    $region9: #{srfbn_forward.29} parent=5 // pred_check
      _
    $region10: #{srfbn_forward.29} parent=5 // pred_check_branch
      %174 = sbr.rel (%p171) target = $region12
    $region11: #{srfbn_forward.29} parent=5 // pred_region
      %s175 = ssub.s32 %s11, 1
      // Predicated region
      $region13: #{srfbn_forward.29} parent=11 // pred_check
        %p176 = pneg %p86
      $region14: #{srfbn_forward.29} parent=11 // pred_check_branch
        %178 = sbr.rel (%p176) target = $region16
      $region15: #{srfbn_forward.29} parent=11 // pred_region
        %s179 = smul.u32 4, %s23
        %p180 = scmp.lt.s32.totalorder %s179, 3
        %s181 = scalar_select %p180, %s179, 3
        %p182 = scmp.lt.s32.totalorder %s22, 0
        %s183 = scalar_select %p182, %s22, 0
        %s184 = sadd.s32 %s183, %s181
        %s185 = smul.addr %s184, 4
        %s186 = scalar_lea.vmem %s1, %s185
        %s187 = smul.u32 4, %s23
      $region16: #{srfbn_forward.29} parent=11 // pred_fallthru
        _
      // Predicated region
      $region17: #{srfbn_forward.29} parent=11 // pred_check
        %p188 = pneg %p112
      $region18: #{srfbn_forward.29} parent=11 // pred_check_branch
        %190 = sbr.rel (%p188) target = $region20
      $region19: #{srfbn_forward.29} parent=11 // pred_region
        %p191 = scmp.lt.s32.totalorder %s22, 0
        %s192 = scalar_select %p191, %s22, 0
        %s193 = scalar_lea.vmem %s2, %s192
      $region20: #{srfbn_forward.29} parent=11 // pred_fallthru
        _
      // Predicated region
      $region21: #{srfbn_forward.29} parent=11 // pred_check
        %p194 = pneg %p133
      $region22: #{srfbn_forward.29} parent=11 // pred_check_branch
        %196 = sbr.rel (%p194) target = $region24
      $region23: #{srfbn_forward.29} parent=11 // pred_region
        _
      $region24: #{srfbn_forward.29} parent=11 // pred_fallthru
        _
    $region12: #{srfbn_forward.29} parent=5 // pred_fallthru
      _
    %p197 = scmp.lt.s32.totalorder %s11, 2
    // Predicated region
    $region25: #{srfbn_forward.29} parent=5 // pred_check
      %p198 = pneg %p197
    $region26: #{srfbn_forward.29} parent=5 // pred_check_branch
      %200 = sbr.rel (%p198) target = $region28
    $region27: #{srfbn_forward.29} parent=5 // pred_region
      // Predicated region
      $region29: #{srfbn_forward.29} parent=27 // pred_check
        %p201 = pneg %p52
      $region30: #{srfbn_forward.29} parent=27 // pred_check_branch
        %203 = sbr.rel (%p201) target = $region32
      $region31: #{srfbn_forward.29} parent=27 // pred_region
        %s204 = smul.u32 8, %s18
        %p205 = scmp.lt.s32.totalorder %s204, 15
        %s206 = scalar_select %p205, %s204, 15
        %p207 = scmp.lt.s32.totalorder %s20, 0
        %s208 = scalar_select %p207, %s20, 0
        %s209 = sadd.s32 %s208, %s206
        %s210 = smul.addr %s209, 4
        %s211 = scalar_lea.vmem %s0, %s210
        %s212 = smul.u32 8, %s18
      $region32: #{srfbn_forward.29} parent=27 // pred_fallthru
        _
    $region28: #{srfbn_forward.29} parent=5 // pred_fallthru
      _
    %p213 = scmp.le.s32.totalorder 1, %s11
    %p214 = scmp.lt.s32.totalorder %s11, 3
    %p215 = pnand %p213, %p214
    %p216 = pneg %p215
    // Predicated region
    $region33: #{srfbn_forward.29} parent=5 // pred_check
      _
    $region34: #{srfbn_forward.29} parent=5 // pred_check_branch
      %218 = sbr.rel (%p215) target = $region36
    $region35: #{srfbn_forward.29} parent=5 // pred_region
      %s219 = ssub.s32 %s11, 1
      %s220 = smul.u32 8, %s21
      %p221 = scmp.lt.s32.totalorder %s220, 15
      %s222 = scalar_select %p221, %s220, 15
      %p223 = scmp.lt.s32.totalorder %s23, 0
      %s224 = scalar_select %p223, %s23, 0
      %s225 = sadd.s32 %s224, %s222
      %s226 = smul.addr %s225, 4
      %s227 = scalar_lea.vmem %s0, %s226
      %p228 = pneg %p58
      %p229 = pneg %p55
      %s230 = smul.u32 4, %s23
      %p231 = scmp.lt.s32.totalorder %s230, 3
      %s232 = scalar_select %p231, %s230, 3
      %p233 = scmp.lt.s32.totalorder %s22, 0
      %s234 = scalar_select %p233, %s22, 0
      %s235 = sadd.s32 %s234, %s232
      %s236 = smul.addr %s235, 4
      %s237 = scalar_lea.vmem %s1, %s236
      %p238 = pneg %p86
      %p239 = pneg %p83
      %p240 = scmp.lt.s32.totalorder %s22, 0
      %s241 = scalar_select %p240, %s22, 0
      %s242 = scalar_lea.vmem %s2, %s241
      %p243 = pneg %p112
      %p244 = pneg %p109
      %p245 = pneg %p133
      %p246 = pneg %p130
      %p247 = pneg %p161
      %p248 = pneg %p158
      %s249 = smul.u32 8, %s21
      %p250 = scmp.lt.s32.totalorder %s249, 15
      %s251 = scalar_select %p250, %s249, 15
      %p252 = scmp.lt.s32.totalorder %s22, 0
      %s253 = scalar_select %p252, %s22, 0
      %s254 = sadd.s32 %s253, %s251
      %s255 = smul.addr %s254, 4
      %s256 = scalar_lea.vmem %s4, %s255
      %s257 = smul.u32 8, %s21
      %p258 = scmp.lt.s32.totalorder %s257, 15
      %s259 = scalar_select %p258, %s257, 15
      %p260 = scmp.lt.s32.totalorder %s23, 0
      %s261 = scalar_select %p260, %s23, 0
      %s262 = sadd.s32 %s261, %s259
      %s263 = smul.addr %s262, 4
      %s264 = scalar_lea.vmem %s0, %s263
      %s265 = smul.u32 8, %s21
      %s266 = smul.u32 4, %s23
      %p267 = scmp.lt.s32.totalorder %s266, 3
      %s268 = scalar_select %p267, %s266, 3
      %p269 = scmp.lt.s32.totalorder %s22, 0
      %s270 = scalar_select %p269, %s22, 0
      %s271 = sadd.s32 %s270, %s268
      %s272 = smul.addr %s271, 4
      %s273 = scalar_lea.vmem %s1, %s272
      %s274 = smul.u32 4, %s23
      %p275 = scmp.lt.s32.totalorder %s22, 0
      %s276 = scalar_select %p275, %s22, 0
      %s277 = scalar_lea.vmem %s2, %s276
      %s278 = smul.u32 8, %s21
      %p279 = scmp.lt.s32.totalorder %s278, 15
      %s280 = scalar_select %p279, %s278, 15
      %p281 = scmp.lt.s32.totalorder %s22, 0
      %s282 = scalar_select %p281, %s22, 0
      %s283 = sadd.s32 %s282, %s280
      %s284 = smul.addr %s283, 4
      %s285 = scalar_lea.vmem %s4, %s284
      %s286 = smul.u32 8, %s21
      %p288 = scmp.eq.s32.totalorder %s23, 0
      // Predicated region
      $region37: #{srfbn_forward.29} parent=35 // pred_check
        %p289 = pneg %p288
      $region38: #{srfbn_forward.29} parent=35 // pred_check_branch
        %291 = sbr.rel (%p289) target = $region40
      $region39: #{srfbn_forward.29} parent=35 // pred_region
        %292 = vst [vmem:[#allocation2] sm:$0xff] 0.0
        %293 = vst [vmem:[#allocation2 + $0x8] sm:$0xff] 0.0
        %294 = vst [vmem:[#allocation2 + $0x10] sm:$0xff] 0.0
        %295 = vst [vmem:[#allocation2 + $0x18] sm:$0xff] 0.0
        %296 = vst [vmem:[#allocation2 + $0x20] sm:$0xff] 0.0
        %297 = vst [vmem:[#allocation2 + $0x28] sm:$0xff] 0.0
        %298 = vst [vmem:[#allocation2 + $0x30] sm:$0xff] 0.0
        %299 = vst [vmem:[#allocation2 + $0x38] sm:$0xff] 0.0
      $region40: #{srfbn_forward.29} parent=35 // pred_fallthru
        _
      %v300 = vld [vmem:[#allocation2] sm:$0xff]
      %v301 = vld [vmem:[#allocation2 + $0x8] sm:$0xff]
      %v302 = vld [vmem:[#allocation2 + $0x10] sm:$0xff]
      %v303 = vld [vmem:[#allocation2 + $0x18] sm:$0xff]
      %v304 = vld [vmem:[#allocation2 + $0x20] sm:$0xff]
      %v305 = vld [vmem:[#allocation2 + $0x28] sm:$0xff]
      %v306 = vld [vmem:[#allocation2 + $0x30] sm:$0xff]
      %v307 = vld [vmem:[#allocation2 + $0x38] sm:$0xff]
      %v308 = vld [vmem:[%s264] sm:$0xf]
      %v309 = vld [vmem:[%s264 + $0x4] sm:$0xf]
      %v310 = vld [vmem:[%s264 + $0x8] sm:$0xf]
      %v311 = vld [vmem:[%s264 + $0xc] sm:$0xf]
      %v312 = vld [vmem:[%s264 + $0x10] sm:$0xf]
      %v313 = vld [vmem:[%s264 + $0x14] sm:$0xf]
      %v314 = vld [vmem:[%s264 + $0x18] sm:$0xf]
      %v315 = vld [vmem:[%s264 + $0x1c] sm:$0xf]
      %v316 = vld [vmem:[%s273] sm:$0xf]
      %v317 = vld [vmem:[%s273 + $0x4] sm:$0xf]
      %v318 = vld [vmem:[%s273 + $0x8] sm:$0xf]
      %v319 = vld [vmem:[%s273 + $0xc] sm:$0xf]
      %v328 = vunpack.c.l.b16 %v308
      %v329 = vunpack.c.l.b16 %v309
      %v330 = vunpack.c.l.b16 %v310
      %v331 = vunpack.c.l.b16 %v311
      %v332 = vunpack.c.l.b16 %v312
      %v333 = vunpack.c.l.b16 %v313
      %v334 = vunpack.c.l.b16 %v314
      %v335 = vunpack.c.l.b16 %v315
      %v336 = vpack.c.b16 %v329, %v328
      %v337 = vpack.c.b16 %v331, %v330
      %v338 = vpack.c.b16 %v333, %v332
      %v339 = vpack.c.b16 %v335, %v334
      %v344 = vunpack.c.l.b16 %v316
      %v345 = vunpack.c.l.b16 %v317
      %v346 = vunpack.c.l.b16 %v318
      %v347 = vunpack.c.l.b16 %v319
      %v348 = vpack.c.b16 %v345, %v344
      %v349 = vpack.c.b16 %v347, %v346
      %vm352 = vcmask 261120
      %v354 = vsel %vm352, %v336, 0
      %v357 = vsel %vm352, %v337, 0
      %v360 = vsel %vm352, %v338, 0
      %v363 = vsel %vm352, %v339, 0
      %365 = vmatprep.subr.bf16.mxu0 0
      %366 = vmatpush1.bf16.msra.mxu0 %v348
      %367 = vmatprep.subr.bf16.mxu0 0
      %368 = vmatpush1.bf16.msra.mxu0 %v349
      %369 = vmatprep.subr.bf16.mxu0 0
      %370 = vmatpush1.bf16.msra.mxu0 0
      %371 = vmatprep.subr.bf16.mxu0 0
      %372 = vmatpush1.bf16.msra.mxu0 0
      %373 = vmatprep.subr.bf16.mxu0 0
      %374 = vmatpush1.bf16.msra.mxu0 0
      %375 = vmatprep.subr.bf16.mxu0 0
      %376 = vmatpush1.bf16.msra.mxu0 0
      %377 = vmatprep.subr.bf16.mxu0 0
      %378 = vmatpush1.bf16.msra.mxu0 0
      %379 = vmatprep.subr.bf16.mxu0 0
      %380 = vmatpush1.bf16.msra.mxu0 0
      %381 = vmatprep.subr.bf16.mxu0 0
      %382 = vmatpush1.bf16.msra.mxu0 0
      %383 = vmatprep.subr.bf16.mxu0 0
      %384 = vmatpush1.bf16.msra.mxu0 0
      %385 = vmatprep.subr.bf16.mxu0 0
      %386 = vmatpush1.bf16.msra.mxu0 0
      %387 = vmatprep.subr.bf16.mxu0 0
      %388 = vmatpush1.bf16.msra.mxu0 0
      %389 = vmatprep.subr.bf16.mxu0 0
      %390 = vmatpush1.bf16.msra.mxu0 0
      %391 = vmatprep.subr.bf16.mxu0 0
      %392 = vmatpush1.bf16.msra.mxu0 0
      %393 = vmatprep.subr.bf16.mxu0 0
      %394 = vmatpush1.bf16.msra.mxu0 0
      %395 = vmatprep.subr.bf16.mxu0 0
      %396 = vmatpush1.bf16.msra.mxu0 0
      %397 = vmatprep.mubr.bf16.mxu0 0
      %398 = vmatmul.mubr.bf16.gmra.mrb[0].mxu0 %v354
      %v399 = vpop.f32.mrb[0].mxu0
      %v400 = vadd.f32 0.0, %v399
      %v401 = vpop.f32.mrb[0].mxu0
      %v402 = vpop.f32.mrb[0].mxu0
      %v403 = vadd.f32 0.0, %v402
      %v404 = vpop.f32.mrb[0].mxu0
      %405 = vmatprep.mubr.bf16.mxu0 0
      %406 = vmatmul.mubr.bf16.gmra.mrb[0].mxu0 %v357
      %v407 = vpop.f32.mrb[0].mxu0
      %v408 = vadd.f32 0.0, %v407
      %v409 = vpop.f32.mrb[0].mxu0
      %v410 = vpop.f32.mrb[0].mxu0
      %v411 = vadd.f32 0.0, %v410
      %v412 = vpop.f32.mrb[0].mxu0
      %413 = vmatprep.mubr.bf16.mxu0 0
      %414 = vmatmul.mubr.bf16.gmra.mrb[0].mxu0 %v360
      %v415 = vpop.f32.mrb[0].mxu0
      %v416 = vadd.f32 0.0, %v415
      %v417 = vpop.f32.mrb[0].mxu0
      %v418 = vpop.f32.mrb[0].mxu0
      %v419 = vadd.f32 0.0, %v418
      %v420 = vpop.f32.mrb[0].mxu0
      %421 = vmatprep.mubr.bf16.mxu0 0
      %422 = vmatmul.mubr.bf16.gmra.mrb[0].mxu0 %v363
      %v423 = vpop.f32.mrb[0].mxu0
      %v424 = vadd.f32 0.0, %v423
      %v425 = vpop.f32.mrb[0].mxu0
      %v426 = vpop.f32.mrb[0].mxu0
      %v427 = vadd.f32 0.0, %v426
      %v428 = vpop.f32.mrb[0].mxu0
      %429 = vdwg.mxu0
      %v430 = vadd.f32 %v300, %v400
      %v431 = vadd.f32 %v301, %v403
      %v432 = vadd.f32 %v302, %v408
      %v433 = vadd.f32 %v303, %v411
      %v434 = vadd.f32 %v304, %v416
      %v435 = vadd.f32 %v305, %v419
      %v436 = vadd.f32 %v306, %v424
      %v437 = vadd.f32 %v307, %v427
      %438 = vst [vmem:[#allocation2] sm:$0xff] %v430
      %439 = vst [vmem:[#allocation2 + $0x8] sm:$0xff] %v431
      %440 = vst [vmem:[#allocation2 + $0x10] sm:$0xff] %v432
      %441 = vst [vmem:[#allocation2 + $0x18] sm:$0xff] %v433
      %442 = vst [vmem:[#allocation2 + $0x20] sm:$0xff] %v434
      %443 = vst [vmem:[#allocation2 + $0x28] sm:$0xff] %v435
      %444 = vst [vmem:[#allocation2 + $0x30] sm:$0xff] %v436
      %445 = vst [vmem:[#allocation2 + $0x38] sm:$0xff] %v437
      // Predicated region
      $region41: #{srfbn_forward.29} parent=35 // pred_check
        %p446 = pneg %p288
      $region42: #{srfbn_forward.29} parent=35 // pred_check_branch
        %448 = sbr.rel (%p446) target = $region44
      $region43: #{srfbn_forward.29} parent=35 // pred_region
        %v449 = vld [vmem:[#allocation2] sm:$0xff]
        %v450 = vld [vmem:[#allocation2 + $0x8] sm:$0xff]
        %v451 = vld [vmem:[#allocation2 + $0x10] sm:$0xff]
        %v452 = vld [vmem:[#allocation2 + $0x18] sm:$0xff]
        %v453 = vld [vmem:[#allocation2 + $0x20] sm:$0xff]
        %v454 = vld [vmem:[#allocation2 + $0x28] sm:$0xff]
        %v455 = vld [vmem:[#allocation2 + $0x30] sm:$0xff]
        %v456 = vld [vmem:[#allocation2 + $0x38] sm:$0xff]
        %v457 = vld [vmem:[%s277] sm:$0x1]
        %v459 = vlaneseq
        %v460 = vshrl.u32 %v459, 7
        %v461 = vsub.s32 0, %v460
        %v462 = vrot.slane %v457, %v461
        %v464 = vadd.f32 %v449, %v462
        %v465 = vadd.f32 %v450, %v462
        %v466 = vadd.f32 %v451, %v462
        %v467 = vadd.f32 %v452, %v462
        %v468 = vadd.f32 %v453, %v462
        %v469 = vadd.f32 %v454, %v462
        %v470 = vadd.f32 %v455, %v462
        %v471 = vadd.f32 %v456, %v462
        %s472 = sld [smem:[#allocation3]]
        %vm473 = vcmp.gt.f32.partialorder %v464, 0.0
        %vm474 = vcmp.gt.f32.partialorder %v465, 0.0
        %vm475 = vcmp.gt.f32.partialorder %v466, 0.0
        %vm476 = vcmp.gt.f32.partialorder %v467, 0.0
        %vm477 = vcmp.gt.f32.partialorder %v468, 0.0
        %vm478 = vcmp.gt.f32.partialorder %v469, 0.0
        %vm479 = vcmp.gt.f32.partialorder %v470, 0.0
        %vm480 = vcmp.gt.f32.partialorder %v471, 0.0
        %v481 = vstv %s472
        %v482 = vmul.f32 %v481, %v464
        %v483 = vmul.f32 %v481, %v465
        %v484 = vmul.f32 %v481, %v466
        %v485 = vmul.f32 %v481, %v467
        %v486 = vmul.f32 %v481, %v468
        %v487 = vmul.f32 %v481, %v469
        %v488 = vmul.f32 %v481, %v470
        %v489 = vmul.f32 %v481, %v471
        %v490 = vsel %vm473, %v464, %v482
        %v491 = vsel %vm474, %v465, %v483
        %v492 = vsel %vm475, %v466, %v484
        %v493 = vsel %vm476, %v467, %v485
        %v494 = vsel %vm477, %v468, %v486
        %v495 = vsel %vm478, %v469, %v487
        %v496 = vsel %vm479, %v470, %v488
        %v497 = vsel %vm480, %v471, %v489
        %v498 = vpack.c.bf16 %v491, %v490
        %v499 = vpack.c.bf16 %v493, %v492
        %v500 = vpack.c.bf16 %v495, %v494
        %v501 = vpack.c.bf16 %v497, %v496
        %v506 = vunpack.c.l.b16 %v498
        %v507 = vunpack.c.h.b16 %v498
        %v508 = vunpack.c.l.b16 %v499
        %v509 = vunpack.c.h.b16 %v499
        %v510 = vunpack.c.l.b16 %v500
        %v511 = vunpack.c.h.b16 %v500
        %v512 = vunpack.c.l.b16 %v501
        %v513 = vunpack.c.h.b16 %v501
        %v514 = vpack.c.b16 %v506, %v506
        %v515 = vpack.c.b16 %v507, %v507
        %v516 = vpack.c.b16 %v508, %v508
        %v517 = vpack.c.b16 %v509, %v509
        %v518 = vpack.c.b16 %v510, %v510
        %v519 = vpack.c.b16 %v511, %v511
        %v520 = vpack.c.b16 %v512, %v512
        %v521 = vpack.c.b16 %v513, %v513
        %530 = vst [vmem:[%s285] sm:$0xf] %v514
        %531 = vst [vmem:[%s285 + $0x4] sm:$0xf] %v515
        %532 = vst [vmem:[%s285 + $0x8] sm:$0xf] %v516
        %533 = vst [vmem:[%s285 + $0xc] sm:$0xf] %v517
        %534 = vst [vmem:[%s285 + $0x10] sm:$0xf] %v518
        %535 = vst [vmem:[%s285 + $0x14] sm:$0xf] %v519
        %536 = vst [vmem:[%s285 + $0x18] sm:$0xf] %v520
        %537 = vst [vmem:[%s285 + $0x1c] sm:$0xf] %v521
      $region44: #{srfbn_forward.29} parent=35 // pred_fallthru
        _
      %s538 = smul.u32 8, %s21
      %p539 = scmp.lt.s32.totalorder %s538, 15
      %s540 = scalar_select %p539, %s538, 15
      %p541 = scmp.lt.s32.totalorder %s22, 0
      %s542 = scalar_select %p541, %s22, 0
      %s543 = sadd.s32 %s542, %s540
      %s544 = smul.addr %s543, 4
      %s545 = scalar_lea.vmem %s4, %s544
      // Predicated region
      $region45: #{srfbn_forward.29} parent=35 // pred_check
        %p546 = pneg %p158
      $region46: #{srfbn_forward.29} parent=35 // pred_check_branch
        %548 = sbr.rel (%p546) target = $region48
      $region47: #{srfbn_forward.29} parent=35 // pred_region
        %s549 = smul.u32 8, %s21
      $region48: #{srfbn_forward.29} parent=35 // pred_fallthru
        _
    $region36: #{srfbn_forward.29} parent=5 // pred_fallthru
      _
    %p550 = scmp.le.s32.totalorder 2, %s11
    // Predicated region
    $region49: #{srfbn_forward.29} parent=5 // pred_check
      %p551 = pneg %p550
    $region50: #{srfbn_forward.29} parent=5 // pred_check_branch
      %553 = sbr.rel (%p551) target = $region52
    $region51: #{srfbn_forward.29} parent=5 // pred_region
      %s554 = ssub.s32 %s11, 2
      // Predicated region
      $region53: #{srfbn_forward.29} parent=51 // pred_check
        %p555 = pneg %p164
      $region54: #{srfbn_forward.29} parent=51 // pred_check_branch
        %557 = sbr.rel (%p555) target = $region56
      $region55: #{srfbn_forward.29} parent=51 // pred_region
        %s558 = smul.u32 8, %s24
        %p559 = scmp.lt.s32.totalorder %s558, 15
        %s560 = scalar_select %p559, %s558, 15
        %p561 = scmp.lt.s32.totalorder %s25, 0
        %s562 = scalar_select %p561, %s25, 0
        %s563 = sadd.s32 %s562, %s560
        %s564 = smul.addr %s563, 4
        %s565 = scalar_lea.vmem %s4, %s564
      $region56: #{srfbn_forward.29} parent=51 // pred_fallthru
        _
    $region52: #{srfbn_forward.29} parent=5 // pred_fallthru
      _
  $region6: #{srfbn_forward.29} parent=0 // loop_footer
    %s15 = sadd.s32 1, %s11
  $region7: #{srfbn_forward.29} parent=0 // loop_footer_branch
    %10 = sbr.rel target = $region3
  $region8: #{srfbn_forward.29} parent=0 // loop_exit
    _

// kernel: srfbn_forward.30
$region0: #{srfbn_forward.30}
  #allocation0 [shape = 'u32[]', space=smem, size = 0x4, offset = 0x4, fixed_abs, tag = 'smem constant byte address 0x4 - core index']
  #allocation1 [shape = 'u32[144,128]{1,0:T(1,128)}', space=vmem, size = 0x12000, scoped, tag = 'internal scratch']
  #allocation2 [shape = 'f32[64,128]{1,0:T(8,128)}', space=vmem, size = 0x8000, scoped, tag = 'scratch operand']
  #allocation3 [shape = 'f32[1]{0:T(128)S(6)}', space=smem, size = 0x200, scoped, tag = 'scoped memory for srfbn_forward.30']
  %s0 = inlined_call_operand.vmem [shape: bf16[128,16], index: 0, kind: input, shape index: {}]
  %s1 = inlined_call_operand.vmem [shape: bf16[16,128], index: 1, kind: input, shape index: {}]
  %s2 = inlined_call_operand.vmem [shape: f32[1,128], index: 2, kind: input, shape index: {}]
  %s3 = inlined_call_operand.<no memory space> [shape: f32[1], index: 3, kind: input, shape index: {}]
  %s4 = inlined_call_operand.vmem [shape: bf16[128,128], index: 4, kind: output, shape index: {}]
  %s5 = sld [smem:[#allocation0]]
  $region57: #{srfbn_forward.30} parent=0
    _
  %s7 = ssub.s32 1, %s5
  %s8 = scalar_select 0, %s7, %s5
  %9 = sst [smem:[#allocation3]] %s3
  loop: start=0, step=1, limit=4
  $region2: #{srfbn_forward.30} parent=0 // loop_pre_header
    _
  $region3: #{srfbn_forward.30} parent=0 // loop_header
    %s11 = sphi 0, %s15
    %p12 = scmp.ge.s32.totalorder %s11, 4
    %s18 = sphi 0, %s37
    %s19 = sphi 0, %s33
    %s20 = sphi 0, %s29
    %s21 = sphi 0, %s18
    %s22 = sphi 0, %s19
    %s23 = sphi 0, %s20
    %s24 = sphi 0, %s21
    %s25 = sphi 0, %s22
    %s26 = sphi 0, %s23
    %s42 = sphi 0, %s44
    %s45 = sphi 0, %s42
    %s46 = sphi 0, %s45
    %s62 = sphi 0, %s46
    %s70 = sphi 0, %s72
    %s73 = sphi 0, %s70
    %s74 = sphi 0, %s73
    %s90 = sphi 0, %s74
    %s96 = sphi 0, %s98
    %s99 = sphi 0, %s96
    %s100 = sphi 0, %s99
    %s116 = sphi 0, %s100
    %s120 = sphi 0, %s120
    %s122 = sphi 0, %s120
    %s123 = sphi 0, %s122
    %s137 = sphi 0, %s123
    %s145 = sphi 0, %s147
    %s148 = sphi 0, %s145
    %s149 = sphi 0, %s148
    %s165 = sphi 0, %s149
  $region4: #{srfbn_forward.30} parent=0 // loop_header_branch
    %14 = sbr.rel (%p12) target = $region8
  $region5: #{srfbn_forward.30} parent=0 // loop_body
    %s16 = ssub.s32 %s11, 1
    %s17 = ssub.s32 %s11, 2
    %s27 = sadd.s32 1, %s20
    %p28 = scmp.ge.s32.totalorder %s27, 1
    %s29 = scalar_select %p28, 0, %s27
    %s30 = sadd.s32 1, %s19
    %s31 = scalar_select %p28, %s30, %s19
    %p32 = scmp.ge.s32.totalorder %s31, 1
    %s33 = scalar_select %p32, 0, %s31
    %s34 = sadd.s32 1, %s18
    %s35 = scalar_select %p32, %s34, %s18
    %p36 = scmp.ge.s32.totalorder %s35, 2
    %s37 = scalar_select %p36, 0, %s35
    %s38 = ssub.s32 %s18, %s37
    %s39 = ssub.s32 %s20, %s29
    %s40 = sor.u32 %s38, %s39
    %p41 = scmp.eq.s32.totalorder %s40, 0
    %s43 = sadd.s32 %s42, 1
    %s44 = scalar_select %p41, %s42, %s43
    %p47 = pneg %p41
    %p48 = scmp.eq.s32.totalorder %s11, 1
    %p49 = por %p47, %p48
    %p50 = scmp.ne.s32.totalorder %s42, %s45
    %p51 = scmp.eq.s32.totalorder %s11, 0
    %p52 = por %p50, %p51
    %p53 = scmp.ne.s32.totalorder %s42, %s45
    %p54 = scmp.eq.s32.totalorder %s16, 1
    %p55 = por %p53, %p54
    %p56 = scmp.ne.s32.totalorder %s45, %s46
    %p57 = scmp.eq.s32.totalorder %s16, 0
    %p58 = por %p56, %p57
    %p59 = scmp.ne.s32.totalorder %s45, %s46
    %p60 = scmp.eq.s32.totalorder %s17, 1
    %p61 = por %p59, %p60
    %p63 = scmp.ne.s32.totalorder %s46, %s62
    %p64 = scmp.eq.s32.totalorder %s17, 0
    %p65 = por %p63, %p64
    %s66 = ssub.s32 %s20, %s29
    %s67 = ssub.s32 %s19, %s33
    %s68 = sor.u32 %s66, %s67
    %p69 = scmp.eq.s32.totalorder %s68, 0
    %s71 = sadd.s32 %s70, 1
    %s72 = scalar_select %p69, %s70, %s71
    %p75 = pneg %p69
    %p76 = scmp.eq.s32.totalorder %s11, 1
    %p77 = por %p75, %p76
    %p78 = scmp.ne.s32.totalorder %s70, %s73
    %p79 = scmp.eq.s32.totalorder %s11, 0
    %p80 = por %p78, %p79
    %p81 = scmp.ne.s32.totalorder %s70, %s73
    %p82 = scmp.eq.s32.totalorder %s16, 1
    %p83 = por %p81, %p82
    %p84 = scmp.ne.s32.totalorder %s73, %s74
    %p85 = scmp.eq.s32.totalorder %s16, 0
    %p86 = por %p84, %p85
    %p87 = scmp.ne.s32.totalorder %s73, %s74
    %p88 = scmp.eq.s32.totalorder %s17, 1
    %p89 = por %p87, %p88
    %p91 = scmp.ne.s32.totalorder %s74, %s90
    %p92 = scmp.eq.s32.totalorder %s17, 0
    %p93 = por %p91, %p92
    %s94 = ssub.s32 %s19, %s33
    %p95 = scmp.eq.s32.totalorder %s94, 0
    %s97 = sadd.s32 %s96, 1
    %s98 = scalar_select %p95, %s96, %s97
    %p101 = pneg %p95
    %p102 = scmp.eq.s32.totalorder %s11, 1
    %p103 = por %p101, %p102
    %p104 = scmp.ne.s32.totalorder %s96, %s99
    %p105 = scmp.eq.s32.totalorder %s11, 0
    %p106 = por %p104, %p105
    %p107 = scmp.ne.s32.totalorder %s96, %s99
    %p108 = scmp.eq.s32.totalorder %s16, 1
    %p109 = por %p107, %p108
    %p110 = scmp.ne.s32.totalorder %s99, %s100
    %p111 = scmp.eq.s32.totalorder %s16, 0
    %p112 = por %p110, %p111
    %p113 = scmp.ne.s32.totalorder %s99, %s100
    %p114 = scmp.eq.s32.totalorder %s17, 1
    %p115 = por %p113, %p114
    %p117 = scmp.ne.s32.totalorder %s100, %s116
    %p118 = scmp.eq.s32.totalorder %s17, 0
    %p119 = por %p117, %p118
    %s121 = sadd.s32 %s120, 1
    %p124 = scmp.eq.s32.totalorder %s11, 1
    %p125 = scmp.ne.s32.totalorder %s120, %s122
    %p126 = scmp.eq.s32.totalorder %s11, 0
    %p127 = por %p125, %p126
    %p128 = scmp.ne.s32.totalorder %s120, %s122
    %p129 = scmp.eq.s32.totalorder %s16, 1
    %p130 = por %p128, %p129
    %p131 = scmp.ne.s32.totalorder %s122, %s123
    %p132 = scmp.eq.s32.totalorder %s16, 0
    %p133 = por %p131, %p132
    %p134 = scmp.ne.s32.totalorder %s122, %s123
    %p135 = scmp.eq.s32.totalorder %s17, 1
    %p136 = por %p134, %p135
    %p138 = scmp.ne.s32.totalorder %s123, %s137
    %p139 = scmp.eq.s32.totalorder %s17, 0
    %p140 = por %p138, %p139
    %s141 = ssub.s32 %s18, %s37
    %s142 = ssub.s32 %s19, %s33
    %s143 = sor.u32 %s141, %s142
    %p144 = scmp.eq.s32.totalorder %s143, 0
    %s146 = sadd.s32 %s145, 1
    %s147 = scalar_select %p144, %s145, %s146
    %p150 = pneg %p144
    %p151 = scmp.eq.s32.totalorder %s11, 1
    %p152 = por %p150, %p151
    %p153 = scmp.ne.s32.totalorder %s145, %s148
    %p154 = scmp.eq.s32.totalorder %s11, 0
    %p155 = por %p153, %p154
    %p156 = scmp.ne.s32.totalorder %s145, %s148
    %p157 = scmp.eq.s32.totalorder %s16, 1
    %p158 = por %p156, %p157
    %p159 = scmp.ne.s32.totalorder %s148, %s149
    %p160 = scmp.eq.s32.totalorder %s16, 0
    %p161 = por %p159, %p160
    %p162 = scmp.ne.s32.totalorder %s148, %s149
    %p163 = scmp.eq.s32.totalorder %s17, 1
    %p164 = por %p162, %p163
    %p166 = scmp.ne.s32.totalorder %s149, %s165
    %p167 = scmp.eq.s32.totalorder %s17, 0
    %p168 = por %p166, %p167
    %p169 = scmp.le.s32.totalorder 1, %s11
    %p170 = scmp.lt.s32.totalorder %s11, 3
    %p171 = pnand %p169, %p170
    %p172 = pneg %p171
    // Predicated region
    $region9: #{srfbn_forward.30} parent=5 // pred_check
      _
    $region10: #{srfbn_forward.30} parent=5 // pred_check_branch
      %174 = sbr.rel (%p171) target = $region12
    $region11: #{srfbn_forward.30} parent=5 // pred_region
      %s175 = ssub.s32 %s11, 1
      // Predicated region
      $region13: #{srfbn_forward.30} parent=11 // pred_check
        %p176 = pneg %p86
      $region14: #{srfbn_forward.30} parent=11 // pred_check_branch
        %178 = sbr.rel (%p176) target = $region16
      $region15: #{srfbn_forward.30} parent=11 // pred_region
        %s179 = smul.u32 2, %s23
        %p180 = scmp.lt.s32.totalorder %s179, 1
        %s181 = scalar_select %p180, %s179, 1
        %p182 = scmp.lt.s32.totalorder %s22, 0
        %s183 = scalar_select %p182, %s22, 0
        %s184 = sadd.s32 %s183, %s181
        %s185 = smul.addr %s184, 4
        %s186 = scalar_lea.vmem %s1, %s185
        %s187 = smul.u32 2, %s23
      $region16: #{srfbn_forward.30} parent=11 // pred_fallthru
        _
      // Predicated region
      $region17: #{srfbn_forward.30} parent=11 // pred_check
        %p188 = pneg %p112
      $region18: #{srfbn_forward.30} parent=11 // pred_check_branch
        %190 = sbr.rel (%p188) target = $region20
      $region19: #{srfbn_forward.30} parent=11 // pred_region
        %p191 = scmp.lt.s32.totalorder %s22, 0
        %s192 = scalar_select %p191, %s22, 0
        %s193 = scalar_lea.vmem %s2, %s192
      $region20: #{srfbn_forward.30} parent=11 // pred_fallthru
        _
      // Predicated region
      $region21: #{srfbn_forward.30} parent=11 // pred_check
        %p194 = pneg %p133
      $region22: #{srfbn_forward.30} parent=11 // pred_check_branch
        %196 = sbr.rel (%p194) target = $region24
      $region23: #{srfbn_forward.30} parent=11 // pred_region
        _
      $region24: #{srfbn_forward.30} parent=11 // pred_fallthru
        _
    $region12: #{srfbn_forward.30} parent=5 // pred_fallthru
      _
    %p197 = scmp.lt.s32.totalorder %s11, 2
    // Predicated region
    $region25: #{srfbn_forward.30} parent=5 // pred_check
      %p198 = pneg %p197
    $region26: #{srfbn_forward.30} parent=5 // pred_check_branch
      %200 = sbr.rel (%p198) target = $region28
    $region27: #{srfbn_forward.30} parent=5 // pred_region
      // Predicated region
      $region29: #{srfbn_forward.30} parent=27 // pred_check
        %p201 = pneg %p52
      $region30: #{srfbn_forward.30} parent=27 // pred_check_branch
        %203 = sbr.rel (%p201) target = $region32
      $region31: #{srfbn_forward.30} parent=27 // pred_region
        %s204 = smul.u32 8, %s18
        %p205 = scmp.lt.s32.totalorder %s204, 15
        %s206 = scalar_select %p205, %s204, 15
        %p207 = scmp.lt.s32.totalorder %s20, 0
        %s208 = scalar_select %p207, %s20, 0
        %s209 = sadd.s32 %s208, %s206
        %s210 = smul.addr %s209, 4
        %s211 = scalar_lea.vmem %s0, %s210
        %s212 = smul.u32 8, %s18
      $region32: #{srfbn_forward.30} parent=27 // pred_fallthru
        _
    $region28: #{srfbn_forward.30} parent=5 // pred_fallthru
      _
    %p213 = scmp.le.s32.totalorder 1, %s11
    %p214 = scmp.lt.s32.totalorder %s11, 3
    %p215 = pnand %p213, %p214
    %p216 = pneg %p215
    // Predicated region
    $region33: #{srfbn_forward.30} parent=5 // pred_check
      _
    $region34: #{srfbn_forward.30} parent=5 // pred_check_branch
      %218 = sbr.rel (%p215) target = $region36
    $region35: #{srfbn_forward.30} parent=5 // pred_region
      %s219 = ssub.s32 %s11, 1
      %s220 = smul.u32 8, %s21
      %p221 = scmp.lt.s32.totalorder %s220, 15
      %s222 = scalar_select %p221, %s220, 15
      %p223 = scmp.lt.s32.totalorder %s23, 0
      %s224 = scalar_select %p223, %s23, 0
      %s225 = sadd.s32 %s224, %s222
      %s226 = smul.addr %s225, 4
      %s227 = scalar_lea.vmem %s0, %s226
      %p228 = pneg %p58
      %p229 = pneg %p55
      %s230 = smul.u32 2, %s23
      %p231 = scmp.lt.s32.totalorder %s230, 1
      %s232 = scalar_select %p231, %s230, 1
      %p233 = scmp.lt.s32.totalorder %s22, 0
      %s234 = scalar_select %p233, %s22, 0
      %s235 = sadd.s32 %s234, %s232
      %s236 = smul.addr %s235, 4
      %s237 = scalar_lea.vmem %s1, %s236
      %p238 = pneg %p86
      %p239 = pneg %p83
      %p240 = scmp.lt.s32.totalorder %s22, 0
      %s241 = scalar_select %p240, %s22, 0
      %s242 = scalar_lea.vmem %s2, %s241
      %p243 = pneg %p112
      %p244 = pneg %p109
      %p245 = pneg %p133
      %p246 = pneg %p130
      %p247 = pneg %p161
      %p248 = pneg %p158
      %s249 = smul.u32 8, %s21
      %p250 = scmp.lt.s32.totalorder %s249, 15
      %s251 = scalar_select %p250, %s249, 15
      %p252 = scmp.lt.s32.totalorder %s22, 0
      %s253 = scalar_select %p252, %s22, 0
      %s254 = sadd.s32 %s253, %s251
      %s255 = smul.addr %s254, 4
      %s256 = scalar_lea.vmem %s4, %s255
      %s257 = smul.u32 8, %s21
      %p258 = scmp.lt.s32.totalorder %s257, 15
      %s259 = scalar_select %p258, %s257, 15
      %p260 = scmp.lt.s32.totalorder %s23, 0
      %s261 = scalar_select %p260, %s23, 0
      %s262 = sadd.s32 %s261, %s259
      %s263 = smul.addr %s262, 4
      %s264 = scalar_lea.vmem %s0, %s263
      %s265 = smul.u32 8, %s21
      %s266 = smul.u32 2, %s23
      %p267 = scmp.lt.s32.totalorder %s266, 1
      %s268 = scalar_select %p267, %s266, 1
      %p269 = scmp.lt.s32.totalorder %s22, 0
      %s270 = scalar_select %p269, %s22, 0
      %s271 = sadd.s32 %s270, %s268
      %s272 = smul.addr %s271, 4
      %s273 = scalar_lea.vmem %s1, %s272
      %s274 = smul.u32 2, %s23
      %p275 = scmp.lt.s32.totalorder %s22, 0
      %s276 = scalar_select %p275, %s22, 0
      %s277 = scalar_lea.vmem %s2, %s276
      %s278 = smul.u32 8, %s21
      %p279 = scmp.lt.s32.totalorder %s278, 15
      %s280 = scalar_select %p279, %s278, 15
      %p281 = scmp.lt.s32.totalorder %s22, 0
      %s282 = scalar_select %p281, %s22, 0
      %s283 = sadd.s32 %s282, %s280
      %s284 = smul.addr %s283, 4
      %s285 = scalar_lea.vmem %s4, %s284
      %s286 = smul.u32 8, %s21
      %p288 = scmp.eq.s32.totalorder %s23, 0
      // Predicated region
      $region37: #{srfbn_forward.30} parent=35 // pred_check
        %p289 = pneg %p288
      $region38: #{srfbn_forward.30} parent=35 // pred_check_branch
        %291 = sbr.rel (%p289) target = $region40
      $region39: #{srfbn_forward.30} parent=35 // pred_region
        %292 = vst [vmem:[#allocation2] sm:$0xff] 0.0
        %293 = vst [vmem:[#allocation2 + $0x8] sm:$0xff] 0.0
        %294 = vst [vmem:[#allocation2 + $0x10] sm:$0xff] 0.0
        %295 = vst [vmem:[#allocation2 + $0x18] sm:$0xff] 0.0
        %296 = vst [vmem:[#allocation2 + $0x20] sm:$0xff] 0.0
        %297 = vst [vmem:[#allocation2 + $0x28] sm:$0xff] 0.0
        %298 = vst [vmem:[#allocation2 + $0x30] sm:$0xff] 0.0
        %299 = vst [vmem:[#allocation2 + $0x38] sm:$0xff] 0.0
      $region40: #{srfbn_forward.30} parent=35 // pred_fallthru
        _
      %v300 = vld [vmem:[#allocation2] sm:$0xff]
      %v301 = vld [vmem:[#allocation2 + $0x8] sm:$0xff]
      %v302 = vld [vmem:[#allocation2 + $0x10] sm:$0xff]
      %v303 = vld [vmem:[#allocation2 + $0x18] sm:$0xff]
      %v304 = vld [vmem:[#allocation2 + $0x20] sm:$0xff]
      %v305 = vld [vmem:[#allocation2 + $0x28] sm:$0xff]
      %v306 = vld [vmem:[#allocation2 + $0x30] sm:$0xff]
      %v307 = vld [vmem:[#allocation2 + $0x38] sm:$0xff]
      %v308 = vld [vmem:[%s264] sm:$0xf]
      %v309 = vld [vmem:[%s264 + $0x4] sm:$0xf]
      %v310 = vld [vmem:[%s264 + $0x8] sm:$0xf]
      %v311 = vld [vmem:[%s264 + $0xc] sm:$0xf]
      %v312 = vld [vmem:[%s264 + $0x10] sm:$0xf]
      %v313 = vld [vmem:[%s264 + $0x14] sm:$0xf]
      %v314 = vld [vmem:[%s264 + $0x18] sm:$0xf]
      %v315 = vld [vmem:[%s264 + $0x1c] sm:$0xf]
      %v316 = vld [vmem:[%s273] sm:$0xf]
      %v317 = vld [vmem:[%s273 + $0x4] sm:$0xf]
      %v326 = vunpack.c.l.b16 %v308
      %v327 = vunpack.c.l.b16 %v309
      %v328 = vunpack.c.l.b16 %v310
      %v329 = vunpack.c.l.b16 %v311
      %v330 = vunpack.c.l.b16 %v312
      %v331 = vunpack.c.l.b16 %v313
      %v332 = vunpack.c.l.b16 %v314
      %v333 = vunpack.c.l.b16 %v315
      %v334 = vpack.c.b16 %v327, %v326
      %v335 = vpack.c.b16 %v329, %v328
      %v336 = vpack.c.b16 %v331, %v330
      %v337 = vpack.c.b16 %v333, %v332
      %v340 = vunpack.c.l.b16 %v316
      %v341 = vunpack.c.l.b16 %v317
      %v342 = vpack.c.b16 %v341, %v340
      %vm344 = vcmask 130048
      %v346 = vsel %vm344, %v334, 0
      %v349 = vsel %vm344, %v335, 0
      %v352 = vsel %vm344, %v336, 0
      %v355 = vsel %vm344, %v337, 0
      %357 = vmatprep.subr.bf16.mxu0 0
      %358 = vmatpush1.bf16.msra.mxu0 %v342
      %359 = vmatprep.subr.bf16.mxu0 0
      %360 = vmatpush1.bf16.msra.mxu0 0
      %361 = vmatprep.subr.bf16.mxu0 0
      %362 = vmatpush1.bf16.msra.mxu0 0
      %363 = vmatprep.subr.bf16.mxu0 0
      %364 = vmatpush1.bf16.msra.mxu0 0
      %365 = vmatprep.subr.bf16.mxu0 0
      %366 = vmatpush1.bf16.msra.mxu0 0
      %367 = vmatprep.subr.bf16.mxu0 0
      %368 = vmatpush1.bf16.msra.mxu0 0
      %369 = vmatprep.subr.bf16.mxu0 0
      %370 = vmatpush1.bf16.msra.mxu0 0
      %371 = vmatprep.subr.bf16.mxu0 0
      %372 = vmatpush1.bf16.msra.mxu0 0
      %373 = vmatprep.subr.bf16.mxu0 0
      %374 = vmatpush1.bf16.msra.mxu0 0
      %375 = vmatprep.subr.bf16.mxu0 0
      %376 = vmatpush1.bf16.msra.mxu0 0
      %377 = vmatprep.subr.bf16.mxu0 0
      %378 = vmatpush1.bf16.msra.mxu0 0
      %379 = vmatprep.subr.bf16.mxu0 0
      %380 = vmatpush1.bf16.msra.mxu0 0
      %381 = vmatprep.subr.bf16.mxu0 0
      %382 = vmatpush1.bf16.msra.mxu0 0
      %383 = vmatprep.subr.bf16.mxu0 0
      %384 = vmatpush1.bf16.msra.mxu0 0
      %385 = vmatprep.subr.bf16.mxu0 0
      %386 = vmatpush1.bf16.msra.mxu0 0
      %387 = vmatprep.subr.bf16.mxu0 0
      %388 = vmatpush1.bf16.msra.mxu0 0
      %389 = vmatprep.mubr.bf16.mxu0 0
      %390 = vmatmul.mubr.bf16.gmra.mrb[0].mxu0 %v346
      %v391 = vpop.f32.mrb[0].mxu0
      %v392 = vadd.f32 0.0, %v391
      %v393 = vpop.f32.mrb[0].mxu0
      %v394 = vpop.f32.mrb[0].mxu0
      %v395 = vadd.f32 0.0, %v394
      %v396 = vpop.f32.mrb[0].mxu0
      %397 = vmatprep.mubr.bf16.mxu0 0
      %398 = vmatmul.mubr.bf16.gmra.mrb[0].mxu0 %v349
      %v399 = vpop.f32.mrb[0].mxu0
      %v400 = vadd.f32 0.0, %v399
      %v401 = vpop.f32.mrb[0].mxu0
      %v402 = vpop.f32.mrb[0].mxu0
      %v403 = vadd.f32 0.0, %v402
      %v404 = vpop.f32.mrb[0].mxu0
      %405 = vmatprep.mubr.bf16.mxu0 0
      %406 = vmatmul.mubr.bf16.gmra.mrb[0].mxu0 %v352
      %v407 = vpop.f32.mrb[0].mxu0
      %v408 = vadd.f32 0.0, %v407
      %v409 = vpop.f32.mrb[0].mxu0
      %v410 = vpop.f32.mrb[0].mxu0
      %v411 = vadd.f32 0.0, %v410
      %v412 = vpop.f32.mrb[0].mxu0
      %413 = vmatprep.mubr.bf16.mxu0 0
      %414 = vmatmul.mubr.bf16.gmra.mrb[0].mxu0 %v355
      %v415 = vpop.f32.mrb[0].mxu0
      %v416 = vadd.f32 0.0, %v415
      %v417 = vpop.f32.mrb[0].mxu0
      %v418 = vpop.f32.mrb[0].mxu0
      %v419 = vadd.f32 0.0, %v418
      %v420 = vpop.f32.mrb[0].mxu0
      %421 = vdwg.mxu0
      %v422 = vadd.f32 %v300, %v392
      %v423 = vadd.f32 %v301, %v395
      %v424 = vadd.f32 %v302, %v400
      %v425 = vadd.f32 %v303, %v403
      %v426 = vadd.f32 %v304, %v408
      %v427 = vadd.f32 %v305, %v411
      %v428 = vadd.f32 %v306, %v416
      %v429 = vadd.f32 %v307, %v419
      %430 = vst [vmem:[#allocation2] sm:$0xff] %v422
      %431 = vst [vmem:[#allocation2 + $0x8] sm:$0xff] %v423
      %432 = vst [vmem:[#allocation2 + $0x10] sm:$0xff] %v424
      %433 = vst [vmem:[#allocation2 + $0x18] sm:$0xff] %v425
      %434 = vst [vmem:[#allocation2 + $0x20] sm:$0xff] %v426
      %435 = vst [vmem:[#allocation2 + $0x28] sm:$0xff] %v427
      %436 = vst [vmem:[#allocation2 + $0x30] sm:$0xff] %v428
      %437 = vst [vmem:[#allocation2 + $0x38] sm:$0xff] %v429
      // Predicated region
      $region41: #{srfbn_forward.30} parent=35 // pred_check
        %p438 = pneg %p288
      $region42: #{srfbn_forward.30} parent=35 // pred_check_branch
        %440 = sbr.rel (%p438) target = $region44
      $region43: #{srfbn_forward.30} parent=35 // pred_region
        %v441 = vld [vmem:[#allocation2] sm:$0xff]
        %v442 = vld [vmem:[#allocation2 + $0x8] sm:$0xff]
        %v443 = vld [vmem:[#allocation2 + $0x10] sm:$0xff]
        %v444 = vld [vmem:[#allocation2 + $0x18] sm:$0xff]
        %v445 = vld [vmem:[#allocation2 + $0x20] sm:$0xff]
        %v446 = vld [vmem:[#allocation2 + $0x28] sm:$0xff]
        %v447 = vld [vmem:[#allocation2 + $0x30] sm:$0xff]
        %v448 = vld [vmem:[#allocation2 + $0x38] sm:$0xff]
        %v449 = vld [vmem:[%s277] sm:$0x1]
        %v451 = vlaneseq
        %v452 = vshrl.u32 %v451, 7
        %v453 = vsub.s32 0, %v452
        %v454 = vrot.slane %v449, %v453
        %v456 = vadd.f32 %v441, %v454
        %v457 = vadd.f32 %v442, %v454
        %v458 = vadd.f32 %v443, %v454
        %v459 = vadd.f32 %v444, %v454
        %v460 = vadd.f32 %v445, %v454
        %v461 = vadd.f32 %v446, %v454
        %v462 = vadd.f32 %v447, %v454
        %v463 = vadd.f32 %v448, %v454
        %s464 = sld [smem:[#allocation3]]
        %vm465 = vcmp.gt.f32.partialorder %v456, 0.0
        %vm466 = vcmp.gt.f32.partialorder %v457, 0.0
        %vm467 = vcmp.gt.f32.partialorder %v458, 0.0
        %vm468 = vcmp.gt.f32.partialorder %v459, 0.0
        %vm469 = vcmp.gt.f32.partialorder %v460, 0.0
        %vm470 = vcmp.gt.f32.partialorder %v461, 0.0
        %vm471 = vcmp.gt.f32.partialorder %v462, 0.0
        %vm472 = vcmp.gt.f32.partialorder %v463, 0.0
        %v473 = vstv %s464
        %v474 = vmul.f32 %v473, %v456
        %v475 = vmul.f32 %v473, %v457
        %v476 = vmul.f32 %v473, %v458
        %v477 = vmul.f32 %v473, %v459
        %v478 = vmul.f32 %v473, %v460
        %v479 = vmul.f32 %v473, %v461
        %v480 = vmul.f32 %v473, %v462
        %v481 = vmul.f32 %v473, %v463
        %v482 = vsel %vm465, %v456, %v474
        %v483 = vsel %vm466, %v457, %v475
        %v484 = vsel %vm467, %v458, %v476
        %v485 = vsel %vm468, %v459, %v477
        %v486 = vsel %vm469, %v460, %v478
        %v487 = vsel %vm470, %v461, %v479
        %v488 = vsel %vm471, %v462, %v480
        %v489 = vsel %vm472, %v463, %v481
        %v490 = vpack.c.bf16 %v483, %v482
        %v491 = vpack.c.bf16 %v485, %v484
        %v492 = vpack.c.bf16 %v487, %v486
        %v493 = vpack.c.bf16 %v489, %v488
        %v498 = vunpack.c.l.b16 %v490
        %v499 = vunpack.c.h.b16 %v490
        %v500 = vunpack.c.l.b16 %v491
        %v501 = vunpack.c.h.b16 %v491
        %v502 = vunpack.c.l.b16 %v492
        %v503 = vunpack.c.h.b16 %v492
        %v504 = vunpack.c.l.b16 %v493
        %v505 = vunpack.c.h.b16 %v493
        %v506 = vpack.c.b16 %v498, %v498
        %v507 = vpack.c.b16 %v499, %v499
        %v508 = vpack.c.b16 %v500, %v500
        %v509 = vpack.c.b16 %v501, %v501
        %v510 = vpack.c.b16 %v502, %v502
        %v511 = vpack.c.b16 %v503, %v503
        %v512 = vpack.c.b16 %v504, %v504
        %v513 = vpack.c.b16 %v505, %v505
        %522 = vst [vmem:[%s285] sm:$0xf] %v506
        %523 = vst [vmem:[%s285 + $0x4] sm:$0xf] %v507
        %524 = vst [vmem:[%s285 + $0x8] sm:$0xf] %v508
        %525 = vst [vmem:[%s285 + $0xc] sm:$0xf] %v509
        %526 = vst [vmem:[%s285 + $0x10] sm:$0xf] %v510
        %527 = vst [vmem:[%s285 + $0x14] sm:$0xf] %v511
        %528 = vst [vmem:[%s285 + $0x18] sm:$0xf] %v512
        %529 = vst [vmem:[%s285 + $0x1c] sm:$0xf] %v513
      $region44: #{srfbn_forward.30} parent=35 // pred_fallthru
        _
      %s530 = smul.u32 8, %s21
      %p531 = scmp.lt.s32.totalorder %s530, 15
      %s532 = scalar_select %p531, %s530, 15
      %p533 = scmp.lt.s32.totalorder %s22, 0
      %s534 = scalar_select %p533, %s22, 0
      %s535 = sadd.s32 %s534, %s532
      %s536 = smul.addr %s535, 4
      %s537 = scalar_lea.vmem %s4, %s536
      // Predicated region
      $region45: #{srfbn_forward.30} parent=35 // pred_check
        %p538 = pneg %p158
      $region46: #{srfbn_forward.30} parent=35 // pred_check_branch
        %540 = sbr.rel (%p538) target = $region48
      $region47: #{srfbn_forward.30} parent=35 // pred_region
        %s541 = smul.u32 8, %s21
      $region48: #{srfbn_forward.30} parent=35 // pred_fallthru
        _
    $region36: #{srfbn_forward.30} parent=5 // pred_fallthru
      _
    %p542 = scmp.le.s32.totalorder 2, %s11
    // Predicated region
    $region49: #{srfbn_forward.30} parent=5 // pred_check
      %p543 = pneg %p542
    $region50: #{srfbn_forward.30} parent=5 // pred_check_branch
      %545 = sbr.rel (%p543) target = $region52
    $region51: #{srfbn_forward.30} parent=5 // pred_region
      %s546 = ssub.s32 %s11, 2
      // Predicated region
      $region53: #{srfbn_forward.30} parent=51 // pred_check
        %p547 = pneg %p164
      $region54: #{srfbn_forward.30} parent=51 // pred_check_branch
        %549 = sbr.rel (%p547) target = $region56
      $region55: #{srfbn_forward.30} parent=51 // pred_region
        %s550 = smul.u32 8, %s24
        %p551 = scmp.lt.s32.totalorder %s550, 15
        %s552 = scalar_select %p551, %s550, 15
        %p553 = scmp.lt.s32.totalorder %s25, 0
        %s554 = scalar_select %p553, %s25, 0
        %s555 = sadd.s32 %s554, %s552
        %s556 = smul.addr %s555, 4
        %s557 = scalar_lea.vmem %s4, %s556
      $region56: #{srfbn_forward.30} parent=51 // pred_fallthru
        _
    $region52: #{srfbn_forward.30} parent=5 // pred_fallthru
      _
  $region6: #{srfbn_forward.30} parent=0 // loop_footer
    %s15 = sadd.s32 1, %s11
  $region7: #{srfbn_forward.30} parent=0 // loop_footer_branch
    %10 = sbr.rel target = $region3
  $region8: #{srfbn_forward.30} parent=0 // loop_exit
    _

// kernel: tile.33
$region0: #{tile.33}
  #allocation0 [shape = 's32[1]{0}', space=sflag, size = 0x4, scoped, tag = 'scoped memory for tile.33']
  %s0 = inlined_call_operand.vmem [shape: f32[8], index: 0, kind: input, shape index: {}]
  %s1 = inlined_call_operand.vmem [shape: f32[4,8], index: 1, kind: output, shape index: {}]
  // Predicated region
  $region2: #{tile.33} parent=0 // pred_check
    _
  $region3: #{tile.33} parent=0 // pred_check_branch
    %3 = sbr.rel (0) target = $region5
  $region4: #{tile.33} parent=0 // pred_region
    _
  $region5: #{tile.33} parent=0 // pred_fallthru
    _
  %v4 = vld [vmem:[%s0] ss:$0 sm:$0xff]
  %5 = vst [vmem:[%s1] sm:$0xf] %v4

// kernel: tile.34
$region0: #{tile.34}
  %s0 = inlined_call_operand.vmem [shape: f32[4,8], index: 0, kind: input, shape index: {}]
  %s1 = inlined_call_operand.vmem [shape: f32[32], index: 1, kind: output, shape index: {}]
  $region1: #{tile.34} parent=0
    #allocation0 [shape = 'u8[4096]{0}', space=vmem, size = 0x1000, scoped, tag = 'scoped mem for output reshape']
    #allocation1 [shape = 'u8[4096]{0}', space=vmem, size = 0x1000, scoped, tag = 'scoped mem for input reshape']
    %s3 = sshllo.u32 0, 4
    %v4 = vld [vmem:[%s0] sm:%s3]
    %5 = vst [vmem:[#allocation1] sm:%s3] %v4
    %v6 = vld [vmem:[#allocation1] sm:$0x1]
    %vm7 = vcmask 64512
    %8 = vst.msk [vmem:[#allocation0] sm:$0x1] %vm7, %v6
    %s9 = scalar_lea.vmem [#allocation1], 3
    %v10 = vld [vmem:[%s9] sm:$0x1]
    %11 = vrot.lane.b32.xlu0 %v10, 24
    %v12 = vpop.permute.xlu0 %11
    %vm13 = vcmask 261312
    %14 = vst.msk [vmem:[#allocation0] sm:$0x1] %vm13, %v12
    %s15 = scalar_lea.vmem [#allocation1], 2
    %v16 = vld [vmem:[%s15] sm:$0x1]
    %17 = vrot.lane.b32.xlu0 %v16, 16
    %v18 = vpop.permute.xlu0 %17
    %vm19 = vcmask 195712
    %20 = vst.msk [vmem:[#allocation0] sm:$0x1] %vm19, %v18
    %s21 = scalar_lea.vmem [#allocation1], 1
    %v22 = vld [vmem:[%s21] sm:$0x1]
    %23 = vrot.lane.b32.xlu0 %v22, 8
    %v24 = vpop.permute.xlu0 %23
    %vm25 = vcmask 130112
    %26 = vst.msk [vmem:[#allocation0] sm:$0x1] %vm25, %v24
    %s28 = sshllo.u32 0, 1
    %v30 = vld [vmem:[#allocation0] sm:%s28]
    %s31 = sshllo.u32 0, 1
    %32 = vst [vmem:[%s1] sm:%s31] %v30

// kernel: srfbn_forward.31
$region0: #{srfbn_forward.31}
  #allocation0 [shape = 'u32[]', space=smem, size = 0x4, offset = 0x4, fixed_abs, tag = 'smem constant byte address 0x4 - core index']
  #allocation1 [shape = 'u32[144,128]{1,0:T(1,128)}', space=vmem, size = 0x12000, scoped, tag = 'internal scratch']
  #allocation2 [shape = 'f32[64,128]{1,0:T(8,128)}', space=vmem, size = 0x8000, scoped, tag = 'scratch operand']
  #allocation3 [shape = 'f32[1]{0:T(128)S(6)}', space=smem, size = 0x200, scoped, tag = 'scoped memory for srfbn_forward.31']
  %s0 = inlined_call_operand.vmem [shape: bf16[128,72], index: 0, kind: input, shape index: {}]
  %s1 = inlined_call_operand.vmem [shape: bf16[72,128], index: 1, kind: input, shape index: {}]
  %s2 = inlined_call_operand.vmem [shape: f32[1,128], index: 2, kind: input, shape index: {}]
  %s3 = inlined_call_operand.<no memory space> [shape: f32[1], index: 3, kind: input, shape index: {}]
  %s4 = inlined_call_operand.vmem [shape: bf16[128,128], index: 4, kind: output, shape index: {}]
  %s5 = sld [smem:[#allocation0]]
  $region57: #{srfbn_forward.31} parent=0
    _
  %s7 = ssub.s32 1, %s5
  %s8 = scalar_select 0, %s7, %s5
  %9 = sst [smem:[#allocation3]] %s3
  loop: start=0, step=1, limit=4
  $region2: #{srfbn_forward.31} parent=0 // loop_pre_header
    _
  $region3: #{srfbn_forward.31} parent=0 // loop_header
    %s11 = sphi 0, %s15
    %p12 = scmp.ge.s32.totalorder %s11, 4
    %s18 = sphi 0, %s37
    %s19 = sphi 0, %s33
    %s20 = sphi 0, %s29
    %s21 = sphi 0, %s18
    %s22 = sphi 0, %s19
    %s23 = sphi 0, %s20
    %s24 = sphi 0, %s21
    %s25 = sphi 0, %s22
    %s26 = sphi 0, %s23
    %s42 = sphi 0, %s44
    %s45 = sphi 0, %s42
    %s46 = sphi 0, %s45
    %s62 = sphi 0, %s46
    %s70 = sphi 0, %s72
    %s73 = sphi 0, %s70
    %s74 = sphi 0, %s73
    %s90 = sphi 0, %s74
    %s96 = sphi 0, %s98
    %s99 = sphi 0, %s96
    %s100 = sphi 0, %s99
    %s116 = sphi 0, %s100
    %s120 = sphi 0, %s120
    %s122 = sphi 0, %s120
    %s123 = sphi 0, %s122
    %s137 = sphi 0, %s123
    %s145 = sphi 0, %s147
    %s148 = sphi 0, %s145
    %s149 = sphi 0, %s148
    %s165 = sphi 0, %s149
  $region4: #{srfbn_forward.31} parent=0 // loop_header_branch
    %14 = sbr.rel (%p12) target = $region8
  $region5: #{srfbn_forward.31} parent=0 // loop_body
    %s16 = ssub.s32 %s11, 1
    %s17 = ssub.s32 %s11, 2
    %s27 = sadd.s32 1, %s20
    %p28 = scmp.ge.s32.totalorder %s27, 1
    %s29 = scalar_select %p28, 0, %s27
    %s30 = sadd.s32 1, %s19
    %s31 = scalar_select %p28, %s30, %s19
    %p32 = scmp.ge.s32.totalorder %s31, 1
    %s33 = scalar_select %p32, 0, %s31
    %s34 = sadd.s32 1, %s18
    %s35 = scalar_select %p32, %s34, %s18
    %p36 = scmp.ge.s32.totalorder %s35, 2
    %s37 = scalar_select %p36, 0, %s35
    %s38 = ssub.s32 %s18, %s37
    %s39 = ssub.s32 %s20, %s29
    %s40 = sor.u32 %s38, %s39
    %p41 = scmp.eq.s32.totalorder %s40, 0
    %s43 = sadd.s32 %s42, 1
    %s44 = scalar_select %p41, %s42, %s43
    %p47 = pneg %p41
    %p48 = scmp.eq.s32.totalorder %s11, 1
    %p49 = por %p47, %p48
    %p50 = scmp.ne.s32.totalorder %s42, %s45
    %p51 = scmp.eq.s32.totalorder %s11, 0
    %p52 = por %p50, %p51
    %p53 = scmp.ne.s32.totalorder %s42, %s45
    %p54 = scmp.eq.s32.totalorder %s16, 1
    %p55 = por %p53, %p54
    %p56 = scmp.ne.s32.totalorder %s45, %s46
    %p57 = scmp.eq.s32.totalorder %s16, 0
    %p58 = por %p56, %p57
    %p59 = scmp.ne.s32.totalorder %s45, %s46
    %p60 = scmp.eq.s32.totalorder %s17, 1
    %p61 = por %p59, %p60
    %p63 = scmp.ne.s32.totalorder %s46, %s62
    %p64 = scmp.eq.s32.totalorder %s17, 0
    %p65 = por %p63, %p64
    %s66 = ssub.s32 %s20, %s29
    %s67 = ssub.s32 %s19, %s33
    %s68 = sor.u32 %s66, %s67
    %p69 = scmp.eq.s32.totalorder %s68, 0
    %s71 = sadd.s32 %s70, 1
    %s72 = scalar_select %p69, %s70, %s71
    %p75 = pneg %p69
    %p76 = scmp.eq.s32.totalorder %s11, 1
    %p77 = por %p75, %p76
    %p78 = scmp.ne.s32.totalorder %s70, %s73
    %p79 = scmp.eq.s32.totalorder %s11, 0
    %p80 = por %p78, %p79
    %p81 = scmp.ne.s32.totalorder %s70, %s73
    %p82 = scmp.eq.s32.totalorder %s16, 1
    %p83 = por %p81, %p82
    %p84 = scmp.ne.s32.totalorder %s73, %s74
    %p85 = scmp.eq.s32.totalorder %s16, 0
    %p86 = por %p84, %p85
    %p87 = scmp.ne.s32.totalorder %s73, %s74
    %p88 = scmp.eq.s32.totalorder %s17, 1
    %p89 = por %p87, %p88
    %p91 = scmp.ne.s32.totalorder %s74, %s90
    %p92 = scmp.eq.s32.totalorder %s17, 0
    %p93 = por %p91, %p92
    %s94 = ssub.s32 %s19, %s33
    %p95 = scmp.eq.s32.totalorder %s94, 0
    %s97 = sadd.s32 %s96, 1
    %s98 = scalar_select %p95, %s96, %s97
    %p101 = pneg %p95
    %p102 = scmp.eq.s32.totalorder %s11, 1
    %p103 = por %p101, %p102
    %p104 = scmp.ne.s32.totalorder %s96, %s99
    %p105 = scmp.eq.s32.totalorder %s11, 0
    %p106 = por %p104, %p105
    %p107 = scmp.ne.s32.totalorder %s96, %s99
    %p108 = scmp.eq.s32.totalorder %s16, 1
    %p109 = por %p107, %p108
    %p110 = scmp.ne.s32.totalorder %s99, %s100
    %p111 = scmp.eq.s32.totalorder %s16, 0
    %p112 = por %p110, %p111
    %p113 = scmp.ne.s32.totalorder %s99, %s100
    %p114 = scmp.eq.s32.totalorder %s17, 1
    %p115 = por %p113, %p114
    %p117 = scmp.ne.s32.totalorder %s100, %s116
    %p118 = scmp.eq.s32.totalorder %s17, 0
    %p119 = por %p117, %p118
    %s121 = sadd.s32 %s120, 1
    %p124 = scmp.eq.s32.totalorder %s11, 1
    %p125 = scmp.ne.s32.totalorder %s120, %s122
    %p126 = scmp.eq.s32.totalorder %s11, 0
    %p127 = por %p125, %p126
    %p128 = scmp.ne.s32.totalorder %s120, %s122
    %p129 = scmp.eq.s32.totalorder %s16, 1
    %p130 = por %p128, %p129
    %p131 = scmp.ne.s32.totalorder %s122, %s123
    %p132 = scmp.eq.s32.totalorder %s16, 0
    %p133 = por %p131, %p132
    %p134 = scmp.ne.s32.totalorder %s122, %s123
    %p135 = scmp.eq.s32.totalorder %s17, 1
    %p136 = por %p134, %p135
    %p138 = scmp.ne.s32.totalorder %s123, %s137
    %p139 = scmp.eq.s32.totalorder %s17, 0
    %p140 = por %p138, %p139
    %s141 = ssub.s32 %s18, %s37
    %s142 = ssub.s32 %s19, %s33
    %s143 = sor.u32 %s141, %s142
    %p144 = scmp.eq.s32.totalorder %s143, 0
    %s146 = sadd.s32 %s145, 1
    %s147 = scalar_select %p144, %s145, %s146
    %p150 = pneg %p144
    %p151 = scmp.eq.s32.totalorder %s11, 1
    %p152 = por %p150, %p151
    %p153 = scmp.ne.s32.totalorder %s145, %s148
    %p154 = scmp.eq.s32.totalorder %s11, 0
    %p155 = por %p153, %p154
    %p156 = scmp.ne.s32.totalorder %s145, %s148
    %p157 = scmp.eq.s32.totalorder %s16, 1
    %p158 = por %p156, %p157
    %p159 = scmp.ne.s32.totalorder %s148, %s149
    %p160 = scmp.eq.s32.totalorder %s16, 0
    %p161 = por %p159, %p160
    %p162 = scmp.ne.s32.totalorder %s148, %s149
    %p163 = scmp.eq.s32.totalorder %s17, 1
    %p164 = por %p162, %p163
    %p166 = scmp.ne.s32.totalorder %s149, %s165
    %p167 = scmp.eq.s32.totalorder %s17, 0
    %p168 = por %p166, %p167
    %p169 = scmp.le.s32.totalorder 1, %s11
    %p170 = scmp.lt.s32.totalorder %s11, 3
    %p171 = pnand %p169, %p170
    %p172 = pneg %p171
    // Predicated region
    $region9: #{srfbn_forward.31} parent=5 // pred_check
      _
    $region10: #{srfbn_forward.31} parent=5 // pred_check_branch
      %174 = sbr.rel (%p171) target = $region12
    $region11: #{srfbn_forward.31} parent=5 // pred_region
      %s175 = ssub.s32 %s11, 1
      // Predicated region
      $region13: #{srfbn_forward.31} parent=11 // pred_check
        %p176 = pneg %p86
      $region14: #{srfbn_forward.31} parent=11 // pred_check_branch
        %178 = sbr.rel (%p176) target = $region16
      $region15: #{srfbn_forward.31} parent=11 // pred_region
        %s179 = smul.u32 9, %s23
        %p180 = scmp.lt.s32.totalorder %s179, 8
        %s181 = scalar_select %p180, %s179, 8
        %p182 = scmp.lt.s32.totalorder %s22, 0
        %s183 = scalar_select %p182, %s22, 0
        %s184 = sadd.s32 %s183, %s181
        %s185 = smul.addr %s184, 4
        %s186 = scalar_lea.vmem %s1, %s185
        %s187 = smul.u32 9, %s23
      $region16: #{srfbn_forward.31} parent=11 // pred_fallthru
        _
      // Predicated region
      $region17: #{srfbn_forward.31} parent=11 // pred_check
        %p188 = pneg %p112
      $region18: #{srfbn_forward.31} parent=11 // pred_check_branch
        %190 = sbr.rel (%p188) target = $region20
      $region19: #{srfbn_forward.31} parent=11 // pred_region
        %p191 = scmp.lt.s32.totalorder %s22, 0
        %s192 = scalar_select %p191, %s22, 0
        %s193 = scalar_lea.vmem %s2, %s192
      $region20: #{srfbn_forward.31} parent=11 // pred_fallthru
        _
      // Predicated region
      $region21: #{srfbn_forward.31} parent=11 // pred_check
        %p194 = pneg %p133
      $region22: #{srfbn_forward.31} parent=11 // pred_check_branch
        %196 = sbr.rel (%p194) target = $region24
      $region23: #{srfbn_forward.31} parent=11 // pred_region
        _
      $region24: #{srfbn_forward.31} parent=11 // pred_fallthru
        _
    $region12: #{srfbn_forward.31} parent=5 // pred_fallthru
      _
    %p197 = scmp.lt.s32.totalorder %s11, 2
    // Predicated region
    $region25: #{srfbn_forward.31} parent=5 // pred_check
      %p198 = pneg %p197
    $region26: #{srfbn_forward.31} parent=5 // pred_check_branch
      %200 = sbr.rel (%p198) target = $region28
    $region27: #{srfbn_forward.31} parent=5 // pred_region
      // Predicated region
      $region29: #{srfbn_forward.31} parent=27 // pred_check
        %p201 = pneg %p52
      $region30: #{srfbn_forward.31} parent=27 // pred_check_branch
        %203 = sbr.rel (%p201) target = $region32
      $region31: #{srfbn_forward.31} parent=27 // pred_region
        %s204 = smul.u32 8, %s18
        %p205 = scmp.lt.s32.totalorder %s204, 15
        %s206 = scalar_select %p205, %s204, 15
        %p207 = scmp.lt.s32.totalorder %s20, 0
        %s208 = scalar_select %p207, %s20, 0
        %s209 = sadd.s32 %s208, %s206
        %s210 = smul.addr %s209, 4
        %s211 = scalar_lea.vmem %s0, %s210
        %s212 = smul.u32 8, %s18
      $region32: #{srfbn_forward.31} parent=27 // pred_fallthru
        _
    $region28: #{srfbn_forward.31} parent=5 // pred_fallthru
      _
    %p213 = scmp.le.s32.totalorder 1, %s11
    %p214 = scmp.lt.s32.totalorder %s11, 3
    %p215 = pnand %p213, %p214
    %p216 = pneg %p215
    // Predicated region
    $region33: #{srfbn_forward.31} parent=5 // pred_check
      _
    $region34: #{srfbn_forward.31} parent=5 // pred_check_branch
      %218 = sbr.rel (%p215) target = $region36
    $region35: #{srfbn_forward.31} parent=5 // pred_region
      %s219 = ssub.s32 %s11, 1
      %s220 = smul.u32 8, %s21
      %p221 = scmp.lt.s32.totalorder %s220, 15
      %s222 = scalar_select %p221, %s220, 15
      %p223 = scmp.lt.s32.totalorder %s23, 0
      %s224 = scalar_select %p223, %s23, 0
      %s225 = sadd.s32 %s224, %s222
      %s226 = smul.addr %s225, 4
      %s227 = scalar_lea.vmem %s0, %s226
      %p228 = pneg %p58
      %p229 = pneg %p55
      %s230 = smul.u32 9, %s23
      %p231 = scmp.lt.s32.totalorder %s230, 8
      %s232 = scalar_select %p231, %s230, 8
      %p233 = scmp.lt.s32.totalorder %s22, 0
      %s234 = scalar_select %p233, %s22, 0
      %s235 = sadd.s32 %s234, %s232
      %s236 = smul.addr %s235, 4
      %s237 = scalar_lea.vmem %s1, %s236
      %p238 = pneg %p86
      %p239 = pneg %p83
      %p240 = scmp.lt.s32.totalorder %s22, 0
      %s241 = scalar_select %p240, %s22, 0
      %s242 = scalar_lea.vmem %s2, %s241
      %p243 = pneg %p112
      %p244 = pneg %p109
      %p245 = pneg %p133
      %p246 = pneg %p130
      %p247 = pneg %p161
      %p248 = pneg %p158
      %s249 = smul.u32 8, %s21
      %p250 = scmp.lt.s32.totalorder %s249, 15
      %s251 = scalar_select %p250, %s249, 15
      %p252 = scmp.lt.s32.totalorder %s22, 0
      %s253 = scalar_select %p252, %s22, 0
      %s254 = sadd.s32 %s253, %s251
      %s255 = smul.addr %s254, 4
      %s256 = scalar_lea.vmem %s4, %s255
      %s257 = smul.u32 8, %s21
      %p258 = scmp.lt.s32.totalorder %s257, 15
      %s259 = scalar_select %p258, %s257, 15
      %p260 = scmp.lt.s32.totalorder %s23, 0
      %s261 = scalar_select %p260, %s23, 0
      %s262 = sadd.s32 %s261, %s259
      %s263 = smul.addr %s262, 4
      %s264 = scalar_lea.vmem %s0, %s263
      %s265 = smul.u32 8, %s21
      %s266 = smul.u32 9, %s23
      %p267 = scmp.lt.s32.totalorder %s266, 8
      %s268 = scalar_select %p267, %s266, 8
      %p269 = scmp.lt.s32.totalorder %s22, 0
      %s270 = scalar_select %p269, %s22, 0
      %s271 = sadd.s32 %s270, %s268
      %s272 = smul.addr %s271, 4
      %s273 = scalar_lea.vmem %s1, %s272
      %s274 = smul.u32 9, %s23
      %p275 = scmp.lt.s32.totalorder %s22, 0
      %s276 = scalar_select %p275, %s22, 0
      %s277 = scalar_lea.vmem %s2, %s276
      %s278 = smul.u32 8, %s21
      %p279 = scmp.lt.s32.totalorder %s278, 15
      %s280 = scalar_select %p279, %s278, 15
      %p281 = scmp.lt.s32.totalorder %s22, 0
      %s282 = scalar_select %p281, %s22, 0
      %s283 = sadd.s32 %s282, %s280
      %s284 = smul.addr %s283, 4
      %s285 = scalar_lea.vmem %s4, %s284
      %s286 = smul.u32 8, %s21
      %p288 = scmp.eq.s32.totalorder %s23, 0
      // Predicated region
      $region37: #{srfbn_forward.31} parent=35 // pred_check
        %p289 = pneg %p288
      $region38: #{srfbn_forward.31} parent=35 // pred_check_branch
        %291 = sbr.rel (%p289) target = $region40
      $region39: #{srfbn_forward.31} parent=35 // pred_region
        %292 = vst [vmem:[#allocation2] sm:$0xff] 0.0
        %293 = vst [vmem:[#allocation2 + $0x8] sm:$0xff] 0.0
        %294 = vst [vmem:[#allocation2 + $0x10] sm:$0xff] 0.0
        %295 = vst [vmem:[#allocation2 + $0x18] sm:$0xff] 0.0
        %296 = vst [vmem:[#allocation2 + $0x20] sm:$0xff] 0.0
        %297 = vst [vmem:[#allocation2 + $0x28] sm:$0xff] 0.0
        %298 = vst [vmem:[#allocation2 + $0x30] sm:$0xff] 0.0
        %299 = vst [vmem:[#allocation2 + $0x38] sm:$0xff] 0.0
      $region40: #{srfbn_forward.31} parent=35 // pred_fallthru
        _
      %v300 = vld [vmem:[#allocation2] sm:$0xff]
      %v301 = vld [vmem:[#allocation2 + $0x8] sm:$0xff]
      %v302 = vld [vmem:[#allocation2 + $0x10] sm:$0xff]
      %v303 = vld [vmem:[#allocation2 + $0x18] sm:$0xff]
      %v304 = vld [vmem:[#allocation2 + $0x20] sm:$0xff]
      %v305 = vld [vmem:[#allocation2 + $0x28] sm:$0xff]
      %v306 = vld [vmem:[#allocation2 + $0x30] sm:$0xff]
      %v307 = vld [vmem:[#allocation2 + $0x38] sm:$0xff]
      %v308 = vld [vmem:[%s264] sm:$0xf]
      %v309 = vld [vmem:[%s264 + $0x4] sm:$0xf]
      %v310 = vld [vmem:[%s264 + $0x8] sm:$0xf]
      %v311 = vld [vmem:[%s264 + $0xc] sm:$0xf]
      %v312 = vld [vmem:[%s264 + $0x10] sm:$0xf]
      %v313 = vld [vmem:[%s264 + $0x14] sm:$0xf]
      %v314 = vld [vmem:[%s264 + $0x18] sm:$0xf]
      %v315 = vld [vmem:[%s264 + $0x1c] sm:$0xf]
      %v316 = vld [vmem:[%s273] sm:$0xf]
      %v317 = vld [vmem:[%s273 + $0x4] sm:$0xf]
      %v318 = vld [vmem:[%s273 + $0x8] sm:$0xf]
      %v319 = vld [vmem:[%s273 + $0xc] sm:$0xf]
      %v320 = vld [vmem:[%s273 + $0x10] sm:$0xf]
      %v321 = vld [vmem:[%s273 + $0x14] sm:$0xf]
      %v322 = vld [vmem:[%s273 + $0x18] sm:$0xf]
      %v323 = vld [vmem:[%s273 + $0x1c] sm:$0xf]
      %v324 = vld [vmem:[%s273 + $0x20] sm:$0xf]
      %v333 = vunpack.c.l.b16 %v308
      %v334 = vunpack.c.l.b16 %v309
      %v335 = vunpack.c.l.b16 %v310
      %v336 = vunpack.c.l.b16 %v311
      %v337 = vunpack.c.l.b16 %v312
      %v338 = vunpack.c.l.b16 %v313
      %v339 = vunpack.c.l.b16 %v314
      %v340 = vunpack.c.l.b16 %v315
      %v341 = vpack.c.b16 %v334, %v333
      %v342 = vpack.c.b16 %v336, %v335
      %v343 = vpack.c.b16 %v338, %v337
      %v344 = vpack.c.b16 %v340, %v339
      %v354 = vunpack.c.l.b16 %v316
      %v355 = vunpack.c.l.b16 %v317
      %v356 = vunpack.c.l.b16 %v318
      %v357 = vunpack.c.l.b16 %v319
      %v358 = vunpack.c.l.b16 %v320
      %v359 = vunpack.c.l.b16 %v321
      %v360 = vunpack.c.l.b16 %v322
      %v361 = vunpack.c.l.b16 %v323
      %v362 = vunpack.c.l.b16 %v324
      %v363 = vpack.c.b16 %v355, %v354
      %v364 = vpack.c.b16 %v357, %v356
      %v365 = vpack.c.b16 %v359, %v358
      %v366 = vpack.c.b16 %v361, %v360
      %v367 = vpack.c.b16 %v362, %v362
      %vm372 = vcmask 588800
      %v374 = vsel %vm372, %v341, 0
      %v377 = vsel %vm372, %v342, 0
      %v380 = vsel %vm372, %v343, 0
      %v383 = vsel %vm372, %v344, 0
      %vm385 = vcmask 1043456
      %v387 = vsel %vm385, %v367, 0
      %389 = vmatprep.subr.bf16.mxu0 0
      %390 = vmatpush1.bf16.msra.mxu0 %v363
      %391 = vmatprep.subr.bf16.mxu0 0
      %392 = vmatpush1.bf16.msra.mxu0 %v364
      %393 = vmatprep.subr.bf16.mxu0 0
      %394 = vmatpush1.bf16.msra.mxu0 %v365
      %395 = vmatprep.subr.bf16.mxu0 0
      %396 = vmatpush1.bf16.msra.mxu0 %v366
      %397 = vmatprep.subr.bf16.mxu0 0
      %398 = vmatpush1.bf16.msra.mxu0 %v387
      %399 = vmatprep.subr.bf16.mxu0 0
      %400 = vmatpush1.bf16.msra.mxu0 0
      %401 = vmatprep.subr.bf16.mxu0 0
      %402 = vmatpush1.bf16.msra.mxu0 0
      %403 = vmatprep.subr.bf16.mxu0 0
      %404 = vmatpush1.bf16.msra.mxu0 0
      %405 = vmatprep.subr.bf16.mxu0 0
      %406 = vmatpush1.bf16.msra.mxu0 0
      %407 = vmatprep.subr.bf16.mxu0 0
      %408 = vmatpush1.bf16.msra.mxu0 0
      %409 = vmatprep.subr.bf16.mxu0 0
      %410 = vmatpush1.bf16.msra.mxu0 0
      %411 = vmatprep.subr.bf16.mxu0 0
      %412 = vmatpush1.bf16.msra.mxu0 0
      %413 = vmatprep.subr.bf16.mxu0 0
      %414 = vmatpush1.bf16.msra.mxu0 0
      %415 = vmatprep.subr.bf16.mxu0 0
      %416 = vmatpush1.bf16.msra.mxu0 0
      %417 = vmatprep.subr.bf16.mxu0 0
      %418 = vmatpush1.bf16.msra.mxu0 0
      %419 = vmatprep.subr.bf16.mxu0 0
      %420 = vmatpush1.bf16.msra.mxu0 0
      %421 = vmatprep.mubr.bf16.mxu0 0
      %422 = vmatmul.mubr.bf16.gmra.mrb[0].mxu0 %v374
      %v423 = vpop.f32.mrb[0].mxu0
      %v424 = vadd.f32 0.0, %v423
      %v425 = vpop.f32.mrb[0].mxu0
      %v426 = vpop.f32.mrb[0].mxu0
      %v427 = vadd.f32 0.0, %v426
      %v428 = vpop.f32.mrb[0].mxu0
      %429 = vmatprep.mubr.bf16.mxu0 0
      %430 = vmatmul.mubr.bf16.gmra.mrb[0].mxu0 %v377
      %v431 = vpop.f32.mrb[0].mxu0
      %v432 = vadd.f32 0.0, %v431
      %v433 = vpop.f32.mrb[0].mxu0
      %v434 = vpop.f32.mrb[0].mxu0
      %v435 = vadd.f32 0.0, %v434
      %v436 = vpop.f32.mrb[0].mxu0
      %437 = vmatprep.mubr.bf16.mxu0 0
      %438 = vmatmul.mubr.bf16.gmra.mrb[0].mxu0 %v380
      %v439 = vpop.f32.mrb[0].mxu0
      %v440 = vadd.f32 0.0, %v439
      %v441 = vpop.f32.mrb[0].mxu0
      %v442 = vpop.f32.mrb[0].mxu0
      %v443 = vadd.f32 0.0, %v442
      %v444 = vpop.f32.mrb[0].mxu0
      %445 = vmatprep.mubr.bf16.mxu0 0
      %446 = vmatmul.mubr.bf16.gmra.mrb[0].mxu0 %v383
      %v447 = vpop.f32.mrb[0].mxu0
      %v448 = vadd.f32 0.0, %v447
      %v449 = vpop.f32.mrb[0].mxu0
      %v450 = vpop.f32.mrb[0].mxu0
      %v451 = vadd.f32 0.0, %v450
      %v452 = vpop.f32.mrb[0].mxu0
      %453 = vdwg.mxu0
      %v454 = vadd.f32 %v300, %v424
      %v455 = vadd.f32 %v301, %v427
      %v456 = vadd.f32 %v302, %v432
      %v457 = vadd.f32 %v303, %v435
      %v458 = vadd.f32 %v304, %v440
      %v459 = vadd.f32 %v305, %v443
      %v460 = vadd.f32 %v306, %v448
      %v461 = vadd.f32 %v307, %v451
      %462 = vst [vmem:[#allocation2] sm:$0xff] %v454
      %463 = vst [vmem:[#allocation2 + $0x8] sm:$0xff] %v455
      %464 = vst [vmem:[#allocation2 + $0x10] sm:$0xff] %v456
      %465 = vst [vmem:[#allocation2 + $0x18] sm:$0xff] %v457
      %466 = vst [vmem:[#allocation2 + $0x20] sm:$0xff] %v458
      %467 = vst [vmem:[#allocation2 + $0x28] sm:$0xff] %v459
      %468 = vst [vmem:[#allocation2 + $0x30] sm:$0xff] %v460
      %469 = vst [vmem:[#allocation2 + $0x38] sm:$0xff] %v461
      // Predicated region
      $region41: #{srfbn_forward.31} parent=35 // pred_check
        %p470 = pneg %p288
      $region42: #{srfbn_forward.31} parent=35 // pred_check_branch
        %472 = sbr.rel (%p470) target = $region44
      $region43: #{srfbn_forward.31} parent=35 // pred_region
        %v473 = vld [vmem:[#allocation2] sm:$0xff]
        %v474 = vld [vmem:[#allocation2 + $0x8] sm:$0xff]
        %v475 = vld [vmem:[#allocation2 + $0x10] sm:$0xff]
        %v476 = vld [vmem:[#allocation2 + $0x18] sm:$0xff]
        %v477 = vld [vmem:[#allocation2 + $0x20] sm:$0xff]
        %v478 = vld [vmem:[#allocation2 + $0x28] sm:$0xff]
        %v479 = vld [vmem:[#allocation2 + $0x30] sm:$0xff]
        %v480 = vld [vmem:[#allocation2 + $0x38] sm:$0xff]
        %v481 = vld [vmem:[%s277] sm:$0x1]
        %v483 = vlaneseq
        %v484 = vshrl.u32 %v483, 7
        %v485 = vsub.s32 0, %v484
        %v486 = vrot.slane %v481, %v485
        %v488 = vadd.f32 %v473, %v486
        %v489 = vadd.f32 %v474, %v486
        %v490 = vadd.f32 %v475, %v486
        %v491 = vadd.f32 %v476, %v486
        %v492 = vadd.f32 %v477, %v486
        %v493 = vadd.f32 %v478, %v486
        %v494 = vadd.f32 %v479, %v486
        %v495 = vadd.f32 %v480, %v486
        %s496 = sld [smem:[#allocation3]]
        %vm497 = vcmp.gt.f32.partialorder %v488, 0.0
        %vm498 = vcmp.gt.f32.partialorder %v489, 0.0
        %vm499 = vcmp.gt.f32.partialorder %v490, 0.0
        %vm500 = vcmp.gt.f32.partialorder %v491, 0.0
        %vm501 = vcmp.gt.f32.partialorder %v492, 0.0
        %vm502 = vcmp.gt.f32.partialorder %v493, 0.0
        %vm503 = vcmp.gt.f32.partialorder %v494, 0.0
        %vm504 = vcmp.gt.f32.partialorder %v495, 0.0
        %v505 = vstv %s496
        %v506 = vmul.f32 %v505, %v488
        %v507 = vmul.f32 %v505, %v489
        %v508 = vmul.f32 %v505, %v490
        %v509 = vmul.f32 %v505, %v491
        %v510 = vmul.f32 %v505, %v492
        %v511 = vmul.f32 %v505, %v493
        %v512 = vmul.f32 %v505, %v494
        %v513 = vmul.f32 %v505, %v495
        %v514 = vsel %vm497, %v488, %v506
        %v515 = vsel %vm498, %v489, %v507
        %v516 = vsel %vm499, %v490, %v508
        %v517 = vsel %vm500, %v491, %v509
        %v518 = vsel %vm501, %v492, %v510
        %v519 = vsel %vm502, %v493, %v511
        %v520 = vsel %vm503, %v494, %v512
        %v521 = vsel %vm504, %v495, %v513
        %v522 = vpack.c.bf16 %v515, %v514
        %v523 = vpack.c.bf16 %v517, %v516
        %v524 = vpack.c.bf16 %v519, %v518
        %v525 = vpack.c.bf16 %v521, %v520
        %v530 = vunpack.c.l.b16 %v522
        %v531 = vunpack.c.h.b16 %v522
        %v532 = vunpack.c.l.b16 %v523
        %v533 = vunpack.c.h.b16 %v523
        %v534 = vunpack.c.l.b16 %v524
        %v535 = vunpack.c.h.b16 %v524
        %v536 = vunpack.c.l.b16 %v525
        %v537 = vunpack.c.h.b16 %v525
        %v538 = vpack.c.b16 %v530, %v530
        %v539 = vpack.c.b16 %v531, %v531
        %v540 = vpack.c.b16 %v532, %v532
        %v541 = vpack.c.b16 %v533, %v533
        %v542 = vpack.c.b16 %v534, %v534
        %v543 = vpack.c.b16 %v535, %v535
        %v544 = vpack.c.b16 %v536, %v536
        %v545 = vpack.c.b16 %v537, %v537
        %554 = vst [vmem:[%s285] sm:$0xf] %v538
        %555 = vst [vmem:[%s285 + $0x4] sm:$0xf] %v539
        %556 = vst [vmem:[%s285 + $0x8] sm:$0xf] %v540
        %557 = vst [vmem:[%s285 + $0xc] sm:$0xf] %v541
        %558 = vst [vmem:[%s285 + $0x10] sm:$0xf] %v542
        %559 = vst [vmem:[%s285 + $0x14] sm:$0xf] %v543
        %560 = vst [vmem:[%s285 + $0x18] sm:$0xf] %v544
        %561 = vst [vmem:[%s285 + $0x1c] sm:$0xf] %v545
      $region44: #{srfbn_forward.31} parent=35 // pred_fallthru
        _
      %s562 = smul.u32 8, %s21
      %p563 = scmp.lt.s32.totalorder %s562, 15
      %s564 = scalar_select %p563, %s562, 15
      %p565 = scmp.lt.s32.totalorder %s22, 0
      %s566 = scalar_select %p565, %s22, 0
      %s567 = sadd.s32 %s566, %s564
      %s568 = smul.addr %s567, 4
      %s569 = scalar_lea.vmem %s4, %s568
      // Predicated region
      $region45: #{srfbn_forward.31} parent=35 // pred_check
        %p570 = pneg %p158
      $region46: #{srfbn_forward.31} parent=35 // pred_check_branch
        %572 = sbr.rel (%p570) target = $region48
      $region47: #{srfbn_forward.31} parent=35 // pred_region
        %s573 = smul.u32 8, %s21
      $region48: #{srfbn_forward.31} parent=35 // pred_fallthru
        _
    $region36: #{srfbn_forward.31} parent=5 // pred_fallthru
      _
    %p574 = scmp.le.s32.totalorder 2, %s11
    // Predicated region
    $region49: #{srfbn_forward.31} parent=5 // pred_check
      %p575 = pneg %p574
    $region50: #{srfbn_forward.31} parent=5 // pred_check_branch
      %577 = sbr.rel (%p575) target = $region52
    $region51: #{srfbn_forward.31} parent=5 // pred_region
      %s578 = ssub.s32 %s11, 2
      // Predicated region
      $region53: #{srfbn_forward.31} parent=51 // pred_check
        %p579 = pneg %p164
      $region54: #{srfbn_forward.31} parent=51 // pred_check_branch
        %581 = sbr.rel (%p579) target = $region56
      $region55: #{srfbn_forward.31} parent=51 // pred_region
        %s582 = smul.u32 8, %s24
        %p583 = scmp.lt.s32.totalorder %s582, 15
        %s584 = scalar_select %p583, %s582, 15
        %p585 = scmp.lt.s32.totalorder %s25, 0
        %s586 = scalar_select %p585, %s25, 0
        %s587 = sadd.s32 %s586, %s584
        %s588 = smul.addr %s587, 4
        %s589 = scalar_lea.vmem %s4, %s588
      $region56: #{srfbn_forward.31} parent=51 // pred_fallthru
        _
    $region52: #{srfbn_forward.31} parent=5 // pred_fallthru
      _
  $region6: #{srfbn_forward.31} parent=0 // loop_footer
    %s15 = sadd.s32 1, %s11
  $region7: #{srfbn_forward.31} parent=0 // loop_footer_branch
    %10 = sbr.rel target = $region3
  $region8: #{srfbn_forward.31} parent=0 // loop_exit
    _

// kernel: srfbn_forward.32
$region0: #{srfbn_forward.32}
  #allocation0 [shape = 'u32[]', space=smem, size = 0x4, offset = 0x4, fixed_abs, tag = 'smem constant byte address 0x4 - core index']
  #allocation1 [shape = 'u32[144,128]{1,0:T(1,128)}', space=vmem, size = 0x12000, scoped, tag = 'internal scratch']
  #allocation2 [shape = 'f32[64,128]{1,0:T(8,128)}', space=vmem, size = 0x8000, scoped, tag = 'scratch operand']
  #allocation3 [shape = 'f32[1]{0:T(128)S(6)}', space=smem, size = 0x200, scoped, tag = 'scoped memory for srfbn_forward.32']
  %s0 = inlined_call_operand.vmem [shape: bf16[128,288], index: 0, kind: input, shape index: {}]
  %s1 = inlined_call_operand.vmem [shape: bf16[288,128], index: 1, kind: input, shape index: {}]
  %s2 = inlined_call_operand.vmem [shape: f32[1,128], index: 2, kind: input, shape index: {}]
  %s3 = inlined_call_operand.<no memory space> [shape: f32[1], index: 3, kind: input, shape index: {}]
  %s4 = inlined_call_operand.vmem [shape: bf16[128,128], index: 4, kind: output, shape index: {}]
  %s5 = sld [smem:[#allocation0]]
  $region57: #{srfbn_forward.32} parent=0
    _
  %s7 = ssub.s32 1, %s5
  %s8 = scalar_select 0, %s7, %s5
  %9 = sst [smem:[#allocation3]] %s3
  loop: start=0, step=1, limit=4
  $region2: #{srfbn_forward.32} parent=0 // loop_pre_header
    _
  $region3: #{srfbn_forward.32} parent=0 // loop_header
    %s11 = sphi 0, %s15
    %p12 = scmp.ge.s32.totalorder %s11, 4
    %s18 = sphi 0, %s37
    %s19 = sphi 0, %s33
    %s20 = sphi 0, %s29
    %s21 = sphi 0, %s18
    %s22 = sphi 0, %s19
    %s23 = sphi 0, %s20
    %s24 = sphi 0, %s21
    %s25 = sphi 0, %s22
    %s26 = sphi 0, %s23
    %s42 = sphi 0, %s44
    %s45 = sphi 0, %s42
    %s46 = sphi 0, %s45
    %s62 = sphi 0, %s46
    %s70 = sphi 0, %s72
    %s73 = sphi 0, %s70
    %s74 = sphi 0, %s73
    %s90 = sphi 0, %s74
    %s96 = sphi 0, %s98
    %s99 = sphi 0, %s96
    %s100 = sphi 0, %s99
    %s116 = sphi 0, %s100
    %s120 = sphi 0, %s120
    %s122 = sphi 0, %s120
    %s123 = sphi 0, %s122
    %s137 = sphi 0, %s123
    %s145 = sphi 0, %s147
    %s148 = sphi 0, %s145
    %s149 = sphi 0, %s148
    %s165 = sphi 0, %s149
  $region4: #{srfbn_forward.32} parent=0 // loop_header_branch
    %14 = sbr.rel (%p12) target = $region8
  $region5: #{srfbn_forward.32} parent=0 // loop_body
    %s16 = ssub.s32 %s11, 1
    %s17 = ssub.s32 %s11, 2
    %s27 = sadd.s32 1, %s20
    %p28 = scmp.ge.s32.totalorder %s27, 1
    %s29 = scalar_select %p28, 0, %s27
    %s30 = sadd.s32 1, %s19
    %s31 = scalar_select %p28, %s30, %s19
    %p32 = scmp.ge.s32.totalorder %s31, 1
    %s33 = scalar_select %p32, 0, %s31
    %s34 = sadd.s32 1, %s18
    %s35 = scalar_select %p32, %s34, %s18
    %p36 = scmp.ge.s32.totalorder %s35, 2
    %s37 = scalar_select %p36, 0, %s35
    %s38 = ssub.s32 %s18, %s37
    %s39 = ssub.s32 %s20, %s29
    %s40 = sor.u32 %s38, %s39
    %p41 = scmp.eq.s32.totalorder %s40, 0
    %s43 = sadd.s32 %s42, 1
    %s44 = scalar_select %p41, %s42, %s43
    %p47 = pneg %p41
    %p48 = scmp.eq.s32.totalorder %s11, 1
    %p49 = por %p47, %p48
    %p50 = scmp.ne.s32.totalorder %s42, %s45
    %p51 = scmp.eq.s32.totalorder %s11, 0
    %p52 = por %p50, %p51
    %p53 = scmp.ne.s32.totalorder %s42, %s45
    %p54 = scmp.eq.s32.totalorder %s16, 1
    %p55 = por %p53, %p54
    %p56 = scmp.ne.s32.totalorder %s45, %s46
    %p57 = scmp.eq.s32.totalorder %s16, 0
    %p58 = por %p56, %p57
    %p59 = scmp.ne.s32.totalorder %s45, %s46
    %p60 = scmp.eq.s32.totalorder %s17, 1
    %p61 = por %p59, %p60
    %p63 = scmp.ne.s32.totalorder %s46, %s62
    %p64 = scmp.eq.s32.totalorder %s17, 0
    %p65 = por %p63, %p64
    %s66 = ssub.s32 %s20, %s29
    %s67 = ssub.s32 %s19, %s33
    %s68 = sor.u32 %s66, %s67
    %p69 = scmp.eq.s32.totalorder %s68, 0
    %s71 = sadd.s32 %s70, 1
    %s72 = scalar_select %p69, %s70, %s71
    %p75 = pneg %p69
    %p76 = scmp.eq.s32.totalorder %s11, 1
    %p77 = por %p75, %p76
    %p78 = scmp.ne.s32.totalorder %s70, %s73
    %p79 = scmp.eq.s32.totalorder %s11, 0
    %p80 = por %p78, %p79
    %p81 = scmp.ne.s32.totalorder %s70, %s73
    %p82 = scmp.eq.s32.totalorder %s16, 1
    %p83 = por %p81, %p82
    %p84 = scmp.ne.s32.totalorder %s73, %s74
    %p85 = scmp.eq.s32.totalorder %s16, 0
    %p86 = por %p84, %p85
    %p87 = scmp.ne.s32.totalorder %s73, %s74
    %p88 = scmp.eq.s32.totalorder %s17, 1
    %p89 = por %p87, %p88
    %p91 = scmp.ne.s32.totalorder %s74, %s90
    %p92 = scmp.eq.s32.totalorder %s17, 0
    %p93 = por %p91, %p92
    %s94 = ssub.s32 %s19, %s33
    %p95 = scmp.eq.s32.totalorder %s94, 0
    %s97 = sadd.s32 %s96, 1
    %s98 = scalar_select %p95, %s96, %s97
    %p101 = pneg %p95
    %p102 = scmp.eq.s32.totalorder %s11, 1
    %p103 = por %p101, %p102
    %p104 = scmp.ne.s32.totalorder %s96, %s99
    %p105 = scmp.eq.s32.totalorder %s11, 0
    %p106 = por %p104, %p105
    %p107 = scmp.ne.s32.totalorder %s96, %s99
    %p108 = scmp.eq.s32.totalorder %s16, 1
    %p109 = por %p107, %p108
    %p110 = scmp.ne.s32.totalorder %s99, %s100
    %p111 = scmp.eq.s32.totalorder %s16, 0
    %p112 = por %p110, %p111
    %p113 = scmp.ne.s32.totalorder %s99, %s100
    %p114 = scmp.eq.s32.totalorder %s17, 1
    %p115 = por %p113, %p114
    %p117 = scmp.ne.s32.totalorder %s100, %s116
    %p118 = scmp.eq.s32.totalorder %s17, 0
    %p119 = por %p117, %p118
    %s121 = sadd.s32 %s120, 1
    %p124 = scmp.eq.s32.totalorder %s11, 1
    %p125 = scmp.ne.s32.totalorder %s120, %s122
    %p126 = scmp.eq.s32.totalorder %s11, 0
    %p127 = por %p125, %p126
    %p128 = scmp.ne.s32.totalorder %s120, %s122
    %p129 = scmp.eq.s32.totalorder %s16, 1
    %p130 = por %p128, %p129
    %p131 = scmp.ne.s32.totalorder %s122, %s123
    %p132 = scmp.eq.s32.totalorder %s16, 0
    %p133 = por %p131, %p132
    %p134 = scmp.ne.s32.totalorder %s122, %s123
    %p135 = scmp.eq.s32.totalorder %s17, 1
    %p136 = por %p134, %p135
    %p138 = scmp.ne.s32.totalorder %s123, %s137
    %p139 = scmp.eq.s32.totalorder %s17, 0
    %p140 = por %p138, %p139
    %s141 = ssub.s32 %s18, %s37
    %s142 = ssub.s32 %s19, %s33
    %s143 = sor.u32 %s141, %s142
    %p144 = scmp.eq.s32.totalorder %s143, 0
    %s146 = sadd.s32 %s145, 1
    %s147 = scalar_select %p144, %s145, %s146
    %p150 = pneg %p144
    %p151 = scmp.eq.s32.totalorder %s11, 1
    %p152 = por %p150, %p151
    %p153 = scmp.ne.s32.totalorder %s145, %s148
    %p154 = scmp.eq.s32.totalorder %s11, 0
    %p155 = por %p153, %p154
    %p156 = scmp.ne.s32.totalorder %s145, %s148
    %p157 = scmp.eq.s32.totalorder %s16, 1
    %p158 = por %p156, %p157
    %p159 = scmp.ne.s32.totalorder %s148, %s149
    %p160 = scmp.eq.s32.totalorder %s16, 0
    %p161 = por %p159, %p160
    %p162 = scmp.ne.s32.totalorder %s148, %s149
    %p163 = scmp.eq.s32.totalorder %s17, 1
    %p164 = por %p162, %p163
    %p166 = scmp.ne.s32.totalorder %s149, %s165
    %p167 = scmp.eq.s32.totalorder %s17, 0
    %p168 = por %p166, %p167
    %p169 = scmp.le.s32.totalorder 1, %s11
    %p170 = scmp.lt.s32.totalorder %s11, 3
    %p171 = pnand %p169, %p170
    %p172 = pneg %p171
    // Predicated region
    $region9: #{srfbn_forward.32} parent=5 // pred_check
      _
    $region10: #{srfbn_forward.32} parent=5 // pred_check_branch
      %174 = sbr.rel (%p171) target = $region12
    $region11: #{srfbn_forward.32} parent=5 // pred_region
      %s175 = ssub.s32 %s11, 1
      // Predicated region
      $region13: #{srfbn_forward.32} parent=11 // pred_check
        %p176 = pneg %p86
      $region14: #{srfbn_forward.32} parent=11 // pred_check_branch
        %178 = sbr.rel (%p176) target = $region16
      $region15: #{srfbn_forward.32} parent=11 // pred_region
        %s179 = smul.u32 36, %s23
        %p180 = scmp.lt.s32.totalorder %s179, 35
        %s181 = scalar_select %p180, %s179, 35
        %p182 = scmp.lt.s32.totalorder %s22, 0
        %s183 = scalar_select %p182, %s22, 0
        %s184 = sadd.s32 %s183, %s181
        %s185 = smul.addr %s184, 4
        %s186 = scalar_lea.vmem %s1, %s185
        %s187 = smul.u32 36, %s23
      $region16: #{srfbn_forward.32} parent=11 // pred_fallthru
        _
      // Predicated region
      $region17: #{srfbn_forward.32} parent=11 // pred_check
        %p188 = pneg %p112
      $region18: #{srfbn_forward.32} parent=11 // pred_check_branch
        %190 = sbr.rel (%p188) target = $region20
      $region19: #{srfbn_forward.32} parent=11 // pred_region
        %p191 = scmp.lt.s32.totalorder %s22, 0
        %s192 = scalar_select %p191, %s22, 0
        %s193 = scalar_lea.vmem %s2, %s192
      $region20: #{srfbn_forward.32} parent=11 // pred_fallthru
        _
      // Predicated region
      $region21: #{srfbn_forward.32} parent=11 // pred_check
        %p194 = pneg %p133
      $region22: #{srfbn_forward.32} parent=11 // pred_check_branch
        %196 = sbr.rel (%p194) target = $region24
      $region23: #{srfbn_forward.32} parent=11 // pred_region
        _
      $region24: #{srfbn_forward.32} parent=11 // pred_fallthru
        _
    $region12: #{srfbn_forward.32} parent=5 // pred_fallthru
      _
    %p197 = scmp.lt.s32.totalorder %s11, 2
    // Predicated region
    $region25: #{srfbn_forward.32} parent=5 // pred_check
      %p198 = pneg %p197
    $region26: #{srfbn_forward.32} parent=5 // pred_check_branch
      %200 = sbr.rel (%p198) target = $region28
    $region27: #{srfbn_forward.32} parent=5 // pred_region
      // Predicated region
      $region29: #{srfbn_forward.32} parent=27 // pred_check
        %p201 = pneg %p52
      $region30: #{srfbn_forward.32} parent=27 // pred_check_branch
        %203 = sbr.rel (%p201) target = $region32
      $region31: #{srfbn_forward.32} parent=27 // pred_region
        %s204 = smul.u32 8, %s18
        %s205 = smul.u32 3, %s20
        %p206 = scmp.lt.s32.totalorder %s204, 15
        %s207 = scalar_select %p206, %s204, 15
        %p208 = scmp.lt.s32.totalorder %s205, 2
        %s209 = scalar_select %p208, %s205, 2
        %s210 = smul.addr %s207, 3
        %s211 = sadd.s32 %s209, %s210
        %s212 = smul.addr %s211, 4
        %s213 = scalar_lea.vmem %s0, %s212
        %s214 = smul.u32 8, %s18
        %s215 = smul.u32 3, %s20
      $region32: #{srfbn_forward.32} parent=27 // pred_fallthru
        _
    $region28: #{srfbn_forward.32} parent=5 // pred_fallthru
      _
    %p216 = scmp.le.s32.totalorder 1, %s11
    %p217 = scmp.lt.s32.totalorder %s11, 3
    %p218 = pnand %p216, %p217
    %p219 = pneg %p218
    // Predicated region
    $region33: #{srfbn_forward.32} parent=5 // pred_check
      _
    $region34: #{srfbn_forward.32} parent=5 // pred_check_branch
      %221 = sbr.rel (%p218) target = $region36
    $region35: #{srfbn_forward.32} parent=5 // pred_region
      %s222 = ssub.s32 %s11, 1
      %s223 = smul.u32 8, %s21
      %s224 = smul.u32 3, %s23
      %p225 = scmp.lt.s32.totalorder %s223, 15
      %s226 = scalar_select %p225, %s223, 15
      %p227 = scmp.lt.s32.totalorder %s224, 2
      %s228 = scalar_select %p227, %s224, 2
      %s229 = smul.addr %s226, 3
      %s230 = sadd.s32 %s228, %s229
      %s231 = smul.addr %s230, 4
      %s232 = scalar_lea.vmem %s0, %s231
      %p233 = pneg %p58
      %p234 = pneg %p55
      %s235 = smul.u32 36, %s23
      %p236 = scmp.lt.s32.totalorder %s235, 35
      %s237 = scalar_select %p236, %s235, 35
      %p238 = scmp.lt.s32.totalorder %s22, 0
      %s239 = scalar_select %p238, %s22, 0
      %s240 = sadd.s32 %s239, %s237
      %s241 = smul.addr %s240, 4
      %s242 = scalar_lea.vmem %s1, %s241
      %p243 = pneg %p86
      %p244 = pneg %p83
      %p245 = scmp.lt.s32.totalorder %s22, 0
      %s246 = scalar_select %p245, %s22, 0
      %s247 = scalar_lea.vmem %s2, %s246
      %p248 = pneg %p112
      %p249 = pneg %p109
      %p250 = pneg %p133
      %p251 = pneg %p130
      %p252 = pneg %p161
      %p253 = pneg %p158
      %s254 = smul.u32 8, %s21
      %p255 = scmp.lt.s32.totalorder %s254, 15
      %s256 = scalar_select %p255, %s254, 15
      %p257 = scmp.lt.s32.totalorder %s22, 0
      %s258 = scalar_select %p257, %s22, 0
      %s259 = sadd.s32 %s258, %s256
      %s260 = smul.addr %s259, 4
      %s261 = scalar_lea.vmem %s4, %s260
      %s262 = smul.u32 8, %s21
      %s263 = smul.u32 3, %s23
      %p264 = scmp.lt.s32.totalorder %s262, 15
      %s265 = scalar_select %p264, %s262, 15
      %p266 = scmp.lt.s32.totalorder %s263, 2
      %s267 = scalar_select %p266, %s263, 2
      %s268 = smul.addr %s265, 3
      %s269 = sadd.s32 %s267, %s268
      %s270 = smul.addr %s269, 4
      %s271 = scalar_lea.vmem %s0, %s270
      %s272 = smul.u32 8, %s21
      %s273 = smul.u32 3, %s23
      %s274 = smul.u32 36, %s23
      %p275 = scmp.lt.s32.totalorder %s274, 35
      %s276 = scalar_select %p275, %s274, 35
      %p277 = scmp.lt.s32.totalorder %s22, 0
      %s278 = scalar_select %p277, %s22, 0
      %s279 = sadd.s32 %s278, %s276
      %s280 = smul.addr %s279, 4
      %s281 = scalar_lea.vmem %s1, %s280
      %s282 = smul.u32 36, %s23
      %p283 = scmp.lt.s32.totalorder %s22, 0
      %s284 = scalar_select %p283, %s22, 0
      %s285 = scalar_lea.vmem %s2, %s284
      %s286 = smul.u32 8, %s21
      %p287 = scmp.lt.s32.totalorder %s286, 15
      %s288 = scalar_select %p287, %s286, 15
      %p289 = scmp.lt.s32.totalorder %s22, 0
      %s290 = scalar_select %p289, %s22, 0
      %s291 = sadd.s32 %s290, %s288
      %s292 = smul.addr %s291, 4
      %s293 = scalar_lea.vmem %s4, %s292
      %s294 = smul.u32 8, %s21
      %p296 = scmp.eq.s32.totalorder %s23, 0
      // Predicated region
      $region37: #{srfbn_forward.32} parent=35 // pred_check
        %p297 = pneg %p296
      $region38: #{srfbn_forward.32} parent=35 // pred_check_branch
        %299 = sbr.rel (%p297) target = $region40
      $region39: #{srfbn_forward.32} parent=35 // pred_region
        %300 = vst [vmem:[#allocation2] sm:$0xff] 0.0
        %301 = vst [vmem:[#allocation2 + $0x8] sm:$0xff] 0.0
        %302 = vst [vmem:[#allocation2 + $0x10] sm:$0xff] 0.0
        %303 = vst [vmem:[#allocation2 + $0x18] sm:$0xff] 0.0
        %304 = vst [vmem:[#allocation2 + $0x20] sm:$0xff] 0.0
        %305 = vst [vmem:[#allocation2 + $0x28] sm:$0xff] 0.0
        %306 = vst [vmem:[#allocation2 + $0x30] sm:$0xff] 0.0
        %307 = vst [vmem:[#allocation2 + $0x38] sm:$0xff] 0.0
      $region40: #{srfbn_forward.32} parent=35 // pred_fallthru
        _
      %v308 = vld [vmem:[#allocation2] sm:$0xff]
      %v309 = vld [vmem:[#allocation2 + $0x8] sm:$0xff]
      %v310 = vld [vmem:[#allocation2 + $0x10] sm:$0xff]
      %v311 = vld [vmem:[#allocation2 + $0x18] sm:$0xff]
      %v312 = vld [vmem:[#allocation2 + $0x20] sm:$0xff]
      %v313 = vld [vmem:[#allocation2 + $0x28] sm:$0xff]
      %v314 = vld [vmem:[#allocation2 + $0x30] sm:$0xff]
      %v315 = vld [vmem:[#allocation2 + $0x38] sm:$0xff]
      %v316 = vld [vmem:[%s271] sm:$0xff]
      %v317 = vld [vmem:[%s271 + $0x8] sm:$0xf]
      %v318 = vld [vmem:[%s271 + $0xc] sm:$0xff]
      %v319 = vld [vmem:[%s271 + $0x14] sm:$0xf]
      %v320 = vld [vmem:[%s271 + $0x18] sm:$0xff]
      %v321 = vld [vmem:[%s271 + $0x20] sm:$0xf]
      %v322 = vld [vmem:[%s271 + $0x24] sm:$0xff]
      %v323 = vld [vmem:[%s271 + $0x2c] sm:$0xf]
      %v324 = vld [vmem:[%s271 + $0x30] sm:$0xff]
      %v325 = vld [vmem:[%s271 + $0x38] sm:$0xf]
      %v326 = vld [vmem:[%s271 + $0x3c] sm:$0xff]
      %v327 = vld [vmem:[%s271 + $0x44] sm:$0xf]
      %v328 = vld [vmem:[%s271 + $0x48] sm:$0xff]
      %v329 = vld [vmem:[%s271 + $0x50] sm:$0xf]
      %v330 = vld [vmem:[%s271 + $0x54] sm:$0xff]
      %v331 = vld [vmem:[%s271 + $0x5c] sm:$0xf]
      %v332 = vld [vmem:[%s281] sm:$0xf]
      %v333 = vld [vmem:[%s281 + $0x4] sm:$0xf]
      %v334 = vld [vmem:[%s281 + $0x8] sm:$0xf]
      %v335 = vld [vmem:[%s281 + $0xc] sm:$0xf]
      %v336 = vld [vmem:[%s281 + $0x10] sm:$0xf]
      %v337 = vld [vmem:[%s281 + $0x14] sm:$0xf]
      %v338 = vld [vmem:[%s281 + $0x18] sm:$0xf]
      %v339 = vld [vmem:[%s281 + $0x1c] sm:$0xf]
      %v340 = vld [vmem:[%s281 + $0x20] sm:$0xf]
      %v341 = vld [vmem:[%s281 + $0x24] sm:$0xf]
      %v342 = vld [vmem:[%s281 + $0x28] sm:$0xf]
      %v343 = vld [vmem:[%s281 + $0x2c] sm:$0xf]
      %v344 = vld [vmem:[%s281 + $0x30] sm:$0xf]
      %v345 = vld [vmem:[%s281 + $0x34] sm:$0xf]
      %v346 = vld [vmem:[%s281 + $0x38] sm:$0xf]
      %v347 = vld [vmem:[%s281 + $0x3c] sm:$0xf]
      %v348 = vld [vmem:[%s281 + $0x40] sm:$0xf]
      %v349 = vld [vmem:[%s281 + $0x44] sm:$0xf]
      %v350 = vld [vmem:[%s281 + $0x48] sm:$0xf]
      %v351 = vld [vmem:[%s281 + $0x4c] sm:$0xf]
      %v352 = vld [vmem:[%s281 + $0x50] sm:$0xf]
      %v353 = vld [vmem:[%s281 + $0x54] sm:$0xf]
      %v354 = vld [vmem:[%s281 + $0x58] sm:$0xf]
      %v355 = vld [vmem:[%s281 + $0x5c] sm:$0xf]
      %v356 = vld [vmem:[%s281 + $0x60] sm:$0xf]
      %v357 = vld [vmem:[%s281 + $0x64] sm:$0xf]
      %v358 = vld [vmem:[%s281 + $0x68] sm:$0xf]
      %v359 = vld [vmem:[%s281 + $0x6c] sm:$0xf]
      %v360 = vld [vmem:[%s281 + $0x70] sm:$0xf]
      %v361 = vld [vmem:[%s281 + $0x74] sm:$0xf]
      %v362 = vld [vmem:[%s281 + $0x78] sm:$0xf]
      %v363 = vld [vmem:[%s281 + $0x7c] sm:$0xf]
      %v364 = vld [vmem:[%s281 + $0x80] sm:$0xf]
      %v365 = vld [vmem:[%s281 + $0x84] sm:$0xf]
      %v366 = vld [vmem:[%s281 + $0x88] sm:$0xf]
      %v367 = vld [vmem:[%s281 + $0x8c] sm:$0xf]
      %v384 = vunpack.c.l.b16 %v316
      %v385 = vunpack.c.h.b16 %v316
      %v386 = vunpack.c.l.b16 %v317
      %v387 = vunpack.c.l.b16 %v318
      %v388 = vunpack.c.h.b16 %v318
      %v389 = vunpack.c.l.b16 %v319
      %v390 = vunpack.c.l.b16 %v320
      %v391 = vunpack.c.h.b16 %v320
      %v392 = vunpack.c.l.b16 %v321
      %v393 = vunpack.c.l.b16 %v322
      %v394 = vunpack.c.h.b16 %v322
      %v395 = vunpack.c.l.b16 %v323
      %v396 = vunpack.c.l.b16 %v324
      %v397 = vunpack.c.h.b16 %v324
      %v398 = vunpack.c.l.b16 %v325
      %v399 = vunpack.c.l.b16 %v326
      %v400 = vunpack.c.h.b16 %v326
      %v401 = vunpack.c.l.b16 %v327
      %v402 = vunpack.c.l.b16 %v328
      %v403 = vunpack.c.h.b16 %v328
      %v404 = vunpack.c.l.b16 %v329
      %v405 = vunpack.c.l.b16 %v330
      %v406 = vunpack.c.h.b16 %v330
      %v407 = vunpack.c.l.b16 %v331
      %v408 = vpack.c.b16 %v387, %v384
      %v409 = vpack.c.b16 %v388, %v385
      %v410 = vpack.c.b16 %v389, %v386
      %v411 = vpack.c.b16 %v393, %v390
      %v412 = vpack.c.b16 %v394, %v391
      %v413 = vpack.c.b16 %v395, %v392
      %v414 = vpack.c.b16 %v399, %v396
      %v415 = vpack.c.b16 %v400, %v397
      %v416 = vpack.c.b16 %v401, %v398
      %v417 = vpack.c.b16 %v405, %v402
      %v418 = vpack.c.b16 %v406, %v403
      %v419 = vpack.c.b16 %v407, %v404
      %v464 = vunpack.c.l.b16 %v332
      %v465 = vunpack.c.l.b16 %v333
      %v466 = vunpack.c.l.b16 %v334
      %v467 = vunpack.c.l.b16 %v335
      %v468 = vunpack.c.l.b16 %v336
      %v469 = vunpack.c.l.b16 %v337
      %v470 = vunpack.c.l.b16 %v338
      %v471 = vunpack.c.l.b16 %v339
      %v472 = vunpack.c.l.b16 %v340
      %v473 = vunpack.c.l.b16 %v341
      %v474 = vunpack.c.l.b16 %v342
      %v475 = vunpack.c.l.b16 %v343
      %v476 = vunpack.c.l.b16 %v344
      %v477 = vunpack.c.l.b16 %v345
      %v478 = vunpack.c.l.b16 %v346
      %v479 = vunpack.c.l.b16 %v347
      %v480 = vunpack.c.l.b16 %v348
      %v481 = vunpack.c.l.b16 %v349
      %v482 = vunpack.c.l.b16 %v350
      %v483 = vunpack.c.l.b16 %v351
      %v484 = vunpack.c.l.b16 %v352
      %v485 = vunpack.c.l.b16 %v353
      %v486 = vunpack.c.l.b16 %v354
      %v487 = vunpack.c.l.b16 %v355
      %v488 = vunpack.c.l.b16 %v356
      %v489 = vunpack.c.l.b16 %v357
      %v490 = vunpack.c.l.b16 %v358
      %v491 = vunpack.c.l.b16 %v359
      %v492 = vunpack.c.l.b16 %v360
      %v493 = vunpack.c.l.b16 %v361
      %v494 = vunpack.c.l.b16 %v362
      %v495 = vunpack.c.l.b16 %v363
      %v496 = vunpack.c.l.b16 %v364
      %v497 = vunpack.c.l.b16 %v365
      %v498 = vunpack.c.l.b16 %v366
      %v499 = vunpack.c.l.b16 %v367
      %v500 = vpack.c.b16 %v465, %v464
      %v501 = vpack.c.b16 %v467, %v466
      %v502 = vpack.c.b16 %v469, %v468
      %v503 = vpack.c.b16 %v471, %v470
      %v504 = vpack.c.b16 %v473, %v472
      %v505 = vpack.c.b16 %v475, %v474
      %v506 = vpack.c.b16 %v477, %v476
      %v507 = vpack.c.b16 %v479, %v478
      %v508 = vpack.c.b16 %v481, %v480
      %v509 = vpack.c.b16 %v483, %v482
      %v510 = vpack.c.b16 %v485, %v484
      %v511 = vpack.c.b16 %v487, %v486
      %v512 = vpack.c.b16 %v489, %v488
      %v513 = vpack.c.b16 %v491, %v490
      %v514 = vpack.c.b16 %v493, %v492
      %v515 = vpack.c.b16 %v495, %v494
      %v516 = vpack.c.b16 %v497, %v496
      %v517 = vpack.c.b16 %v499, %v498
      %vm536 = vcmask 261120
      %v538 = vsel %vm536, %v410, 0
      %v541 = vsel %vm536, %v413, 0
      %v544 = vsel %vm536, %v416, 0
      %v547 = vsel %vm536, %v419, 0
      %549 = vmatprep.subr.bf16.mxu0 0
      %550 = vmatpush1.bf16.msra.mxu0 %v500
      %551 = vmatprep.subr.bf16.mxu0 0
      %552 = vmatpush1.bf16.msra.mxu0 %v501
      %553 = vmatprep.subr.bf16.mxu0 0
      %554 = vmatpush1.bf16.msra.mxu0 %v502
      %555 = vmatprep.subr.bf16.mxu0 0
      %556 = vmatpush1.bf16.msra.mxu0 %v503
      %557 = vmatprep.subr.bf16.mxu0 0
      %558 = vmatpush1.bf16.msra.mxu0 %v504
      %559 = vmatprep.subr.bf16.mxu0 0
      %560 = vmatpush1.bf16.msra.mxu0 %v505
      %561 = vmatprep.subr.bf16.mxu0 0
      %562 = vmatpush1.bf16.msra.mxu0 %v506
      %563 = vmatprep.subr.bf16.mxu0 0
      %564 = vmatpush1.bf16.msra.mxu0 %v507
      %565 = vmatprep.subr.bf16.mxu0 0
      %566 = vmatpush1.bf16.msra.mxu0 %v508
      %567 = vmatprep.subr.bf16.mxu0 0
      %568 = vmatpush1.bf16.msra.mxu0 %v509
      %569 = vmatprep.subr.bf16.mxu0 0
      %570 = vmatpush1.bf16.msra.mxu0 %v510
      %571 = vmatprep.subr.bf16.mxu0 0
      %572 = vmatpush1.bf16.msra.mxu0 %v511
      %573 = vmatprep.subr.bf16.mxu0 0
      %574 = vmatpush1.bf16.msra.mxu0 %v512
      %575 = vmatprep.subr.bf16.mxu0 0
      %576 = vmatpush1.bf16.msra.mxu0 %v513
      %577 = vmatprep.subr.bf16.mxu0 0
      %578 = vmatpush1.bf16.msra.mxu0 %v514
      %579 = vmatprep.subr.bf16.mxu0 0
      %580 = vmatpush1.bf16.msra.mxu0 %v515
      %581 = vmatprep.mubr.bf16.mxu0 %v409
      %582 = vmatmul.mubr.bf16.gmra.mrb[0].mxu0 %v408
      %v583 = vpop.f32.mrb[0].mxu0
      %v584 = vadd.f32 0.0, %v583
      %v585 = vpop.f32.mrb[0].mxu0
      %v586 = vpop.f32.mrb[0].mxu0
      %v587 = vadd.f32 0.0, %v586
      %v588 = vpop.f32.mrb[0].mxu0
      %589 = vmatprep.mubr.bf16.mxu0 %v412
      %590 = vmatmul.mubr.bf16.gmra.mrb[0].mxu0 %v411
      %v591 = vpop.f32.mrb[0].mxu0
      %v592 = vadd.f32 0.0, %v591
      %v593 = vpop.f32.mrb[0].mxu0
      %v594 = vpop.f32.mrb[0].mxu0
      %v595 = vadd.f32 0.0, %v594
      %v596 = vpop.f32.mrb[0].mxu0
      %597 = vmatprep.mubr.bf16.mxu0 %v415
      %598 = vmatmul.mubr.bf16.gmra.mrb[0].mxu0 %v414
      %v599 = vpop.f32.mrb[0].mxu0
      %v600 = vadd.f32 0.0, %v599
      %v601 = vpop.f32.mrb[0].mxu0
      %v602 = vpop.f32.mrb[0].mxu0
      %v603 = vadd.f32 0.0, %v602
      %v604 = vpop.f32.mrb[0].mxu0
      %605 = vmatprep.mubr.bf16.mxu0 %v418
      %606 = vmatmul.mubr.bf16.gmra.mrb[0].mxu0 %v417
      %v607 = vpop.f32.mrb[0].mxu0
      %v608 = vadd.f32 0.0, %v607
      %v609 = vpop.f32.mrb[0].mxu0
      %v610 = vpop.f32.mrb[0].mxu0
      %v611 = vadd.f32 0.0, %v610
      %v612 = vpop.f32.mrb[0].mxu0
      %613 = vdwg.mxu0
      %614 = vmatprep.subr.bf16.mxu0 0
      %615 = vmatpush1.bf16.msra.mxu0 %v516
      %616 = vmatprep.subr.bf16.mxu0 0
      %617 = vmatpush1.bf16.msra.mxu0 %v517
      %618 = vmatprep.subr.bf16.mxu0 0
      %619 = vmatpush1.bf16.msra.mxu0 0
      %620 = vmatprep.subr.bf16.mxu0 0
      %621 = vmatpush1.bf16.msra.mxu0 0
      %622 = vmatprep.subr.bf16.mxu0 0
      %623 = vmatpush1.bf16.msra.mxu0 0
      %624 = vmatprep.subr.bf16.mxu0 0
      %625 = vmatpush1.bf16.msra.mxu0 0
      %626 = vmatprep.subr.bf16.mxu0 0
      %627 = vmatpush1.bf16.msra.mxu0 0
      %628 = vmatprep.subr.bf16.mxu0 0
      %629 = vmatpush1.bf16.msra.mxu0 0
      %630 = vmatprep.subr.bf16.mxu0 0
      %631 = vmatpush1.bf16.msra.mxu0 0
      %632 = vmatprep.subr.bf16.mxu0 0
      %633 = vmatpush1.bf16.msra.mxu0 0
      %634 = vmatprep.subr.bf16.mxu0 0
      %635 = vmatpush1.bf16.msra.mxu0 0
      %636 = vmatprep.subr.bf16.mxu0 0
      %637 = vmatpush1.bf16.msra.mxu0 0
      %638 = vmatprep.subr.bf16.mxu0 0
      %639 = vmatpush1.bf16.msra.mxu0 0
      %640 = vmatprep.subr.bf16.mxu0 0
      %641 = vmatpush1.bf16.msra.mxu0 0
      %642 = vmatprep.subr.bf16.mxu0 0
      %643 = vmatpush1.bf16.msra.mxu0 0
      %644 = vmatprep.subr.bf16.mxu0 0
      %645 = vmatpush1.bf16.msra.mxu0 0
      %646 = vmatprep.mubr.bf16.mxu0 0
      %647 = vmatmul.mubr.bf16.gmra.mrb[0].mxu0 %v538
      %v648 = vpop.f32.mrb[0].mxu0
      %v649 = vadd.f32 %v584, %v648
      %v650 = vpop.f32.mrb[0].mxu0
      %v651 = vpop.f32.mrb[0].mxu0
      %v652 = vadd.f32 %v587, %v651
      %v653 = vpop.f32.mrb[0].mxu0
      %654 = vmatprep.mubr.bf16.mxu0 0
      %655 = vmatmul.mubr.bf16.gmra.mrb[0].mxu0 %v541
      %v656 = vpop.f32.mrb[0].mxu0
      %v657 = vadd.f32 %v592, %v656
      %v658 = vpop.f32.mrb[0].mxu0
      %v659 = vpop.f32.mrb[0].mxu0
      %v660 = vadd.f32 %v595, %v659
      %v661 = vpop.f32.mrb[0].mxu0
      %662 = vmatprep.mubr.bf16.mxu0 0
      %663 = vmatmul.mubr.bf16.gmra.mrb[0].mxu0 %v544
      %v664 = vpop.f32.mrb[0].mxu0
      %v665 = vadd.f32 %v600, %v664
      %v666 = vpop.f32.mrb[0].mxu0
      %v667 = vpop.f32.mrb[0].mxu0
      %v668 = vadd.f32 %v603, %v667
      %v669 = vpop.f32.mrb[0].mxu0
      %670 = vmatprep.mubr.bf16.mxu0 0
      %671 = vmatmul.mubr.bf16.gmra.mrb[0].mxu0 %v547
      %v672 = vpop.f32.mrb[0].mxu0
      %v673 = vadd.f32 %v608, %v672
      %v674 = vpop.f32.mrb[0].mxu0
      %v675 = vpop.f32.mrb[0].mxu0
      %v676 = vadd.f32 %v611, %v675
      %v677 = vpop.f32.mrb[0].mxu0
      %678 = vdwg.mxu0
      %v679 = vadd.f32 %v308, %v649
      %v680 = vadd.f32 %v309, %v652
      %v681 = vadd.f32 %v310, %v657
      %v682 = vadd.f32 %v311, %v660
      %v683 = vadd.f32 %v312, %v665
      %v684 = vadd.f32 %v313, %v668
      %v685 = vadd.f32 %v314, %v673
      %v686 = vadd.f32 %v315, %v676
      %687 = vst [vmem:[#allocation2] sm:$0xff] %v679
      %688 = vst [vmem:[#allocation2 + $0x8] sm:$0xff] %v680
      %689 = vst [vmem:[#allocation2 + $0x10] sm:$0xff] %v681
      %690 = vst [vmem:[#allocation2 + $0x18] sm:$0xff] %v682
      %691 = vst [vmem:[#allocation2 + $0x20] sm:$0xff] %v683
      %692 = vst [vmem:[#allocation2 + $0x28] sm:$0xff] %v684
      %693 = vst [vmem:[#allocation2 + $0x30] sm:$0xff] %v685
      %694 = vst [vmem:[#allocation2 + $0x38] sm:$0xff] %v686
      // Predicated region
      $region41: #{srfbn_forward.32} parent=35 // pred_check
        %p695 = pneg %p296
      $region42: #{srfbn_forward.32} parent=35 // pred_check_branch
        %697 = sbr.rel (%p695) target = $region44
      $region43: #{srfbn_forward.32} parent=35 // pred_region
        %v698 = vld [vmem:[#allocation2] sm:$0xff]
        %v699 = vld [vmem:[#allocation2 + $0x8] sm:$0xff]
        %v700 = vld [vmem:[#allocation2 + $0x10] sm:$0xff]
        %v701 = vld [vmem:[#allocation2 + $0x18] sm:$0xff]
        %v702 = vld [vmem:[#allocation2 + $0x20] sm:$0xff]
        %v703 = vld [vmem:[#allocation2 + $0x28] sm:$0xff]
        %v704 = vld [vmem:[#allocation2 + $0x30] sm:$0xff]
        %v705 = vld [vmem:[#allocation2 + $0x38] sm:$0xff]
        %v706 = vld [vmem:[%s285] sm:$0x1]
        %v708 = vlaneseq
        %v709 = vshrl.u32 %v708, 7
        %v710 = vsub.s32 0, %v709
        %v711 = vrot.slane %v706, %v710
        %v713 = vadd.f32 %v698, %v711
        %v714 = vadd.f32 %v699, %v711
        %v715 = vadd.f32 %v700, %v711
        %v716 = vadd.f32 %v701, %v711
        %v717 = vadd.f32 %v702, %v711
        %v718 = vadd.f32 %v703, %v711
        %v719 = vadd.f32 %v704, %v711
        %v720 = vadd.f32 %v705, %v711
        %s721 = sld [smem:[#allocation3]]
        %vm722 = vcmp.gt.f32.partialorder %v713, 0.0
        %vm723 = vcmp.gt.f32.partialorder %v714, 0.0
        %vm724 = vcmp.gt.f32.partialorder %v715, 0.0
        %vm725 = vcmp.gt.f32.partialorder %v716, 0.0
        %vm726 = vcmp.gt.f32.partialorder %v717, 0.0
        %vm727 = vcmp.gt.f32.partialorder %v718, 0.0
        %vm728 = vcmp.gt.f32.partialorder %v719, 0.0
        %vm729 = vcmp.gt.f32.partialorder %v720, 0.0
        %v730 = vstv %s721
        %v731 = vmul.f32 %v730, %v713
        %v732 = vmul.f32 %v730, %v714
        %v733 = vmul.f32 %v730, %v715
        %v734 = vmul.f32 %v730, %v716
        %v735 = vmul.f32 %v730, %v717
        %v736 = vmul.f32 %v730, %v718
        %v737 = vmul.f32 %v730, %v719
        %v738 = vmul.f32 %v730, %v720
        %v739 = vsel %vm722, %v713, %v731
        %v740 = vsel %vm723, %v714, %v732
        %v741 = vsel %vm724, %v715, %v733
        %v742 = vsel %vm725, %v716, %v734
        %v743 = vsel %vm726, %v717, %v735
        %v744 = vsel %vm727, %v718, %v736
        %v745 = vsel %vm728, %v719, %v737
        %v746 = vsel %vm729, %v720, %v738
        %v747 = vpack.c.bf16 %v740, %v739
        %v748 = vpack.c.bf16 %v742, %v741
        %v749 = vpack.c.bf16 %v744, %v743
        %v750 = vpack.c.bf16 %v746, %v745
        %v755 = vunpack.c.l.b16 %v747
        %v756 = vunpack.c.h.b16 %v747
        %v757 = vunpack.c.l.b16 %v748
        %v758 = vunpack.c.h.b16 %v748
        %v759 = vunpack.c.l.b16 %v749
        %v760 = vunpack.c.h.b16 %v749
        %v761 = vunpack.c.l.b16 %v750
        %v762 = vunpack.c.h.b16 %v750
        %v763 = vpack.c.b16 %v755, %v755
        %v764 = vpack.c.b16 %v756, %v756
        %v765 = vpack.c.b16 %v757, %v757
        %v766 = vpack.c.b16 %v758, %v758
        %v767 = vpack.c.b16 %v759, %v759
        %v768 = vpack.c.b16 %v760, %v760
        %v769 = vpack.c.b16 %v761, %v761
        %v770 = vpack.c.b16 %v762, %v762
        %779 = vst [vmem:[%s293] sm:$0xf] %v763
        %780 = vst [vmem:[%s293 + $0x4] sm:$0xf] %v764
        %781 = vst [vmem:[%s293 + $0x8] sm:$0xf] %v765
        %782 = vst [vmem:[%s293 + $0xc] sm:$0xf] %v766
        %783 = vst [vmem:[%s293 + $0x10] sm:$0xf] %v767
        %784 = vst [vmem:[%s293 + $0x14] sm:$0xf] %v768
        %785 = vst [vmem:[%s293 + $0x18] sm:$0xf] %v769
        %786 = vst [vmem:[%s293 + $0x1c] sm:$0xf] %v770
      $region44: #{srfbn_forward.32} parent=35 // pred_fallthru
        _
      %s787 = smul.u32 8, %s21
      %p788 = scmp.lt.s32.totalorder %s787, 15
      %s789 = scalar_select %p788, %s787, 15
      %p790 = scmp.lt.s32.totalorder %s22, 0
      %s791 = scalar_select %p790, %s22, 0
      %s792 = sadd.s32 %s791, %s789
      %s793 = smul.addr %s792, 4
      %s794 = scalar_lea.vmem %s4, %s793
      // Predicated region
      $region45: #{srfbn_forward.32} parent=35 // pred_check
        %p795 = pneg %p158
      $region46: #{srfbn_forward.32} parent=35 // pred_check_branch
        %797 = sbr.rel (%p795) target = $region48
      $region47: #{srfbn_forward.32} parent=35 // pred_region
        %s798 = smul.u32 8, %s21
      $region48: #{srfbn_forward.32} parent=35 // pred_fallthru
        _
    $region36: #{srfbn_forward.32} parent=5 // pred_fallthru
      _
    %p799 = scmp.le.s32.totalorder 2, %s11
    // Predicated region
    $region49: #{srfbn_forward.32} parent=5 // pred_check
      %p800 = pneg %p799
    $region50: #{srfbn_forward.32} parent=5 // pred_check_branch
      %802 = sbr.rel (%p800) target = $region52
    $region51: #{srfbn_forward.32} parent=5 // pred_region
      %s803 = ssub.s32 %s11, 2
      // Predicated region
      $region53: #{srfbn_forward.32} parent=51 // pred_check
        %p804 = pneg %p164
      $region54: #{srfbn_forward.32} parent=51 // pred_check_branch
        %806 = sbr.rel (%p804) target = $region56
      $region55: #{srfbn_forward.32} parent=51 // pred_region
        %s807 = smul.u32 8, %s24
        %p808 = scmp.lt.s32.totalorder %s807, 15
        %s809 = scalar_select %p808, %s807, 15
        %p810 = scmp.lt.s32.totalorder %s25, 0
        %s811 = scalar_select %p810, %s25, 0
        %s812 = sadd.s32 %s811, %s809
        %s813 = smul.addr %s812, 4
        %s814 = scalar_lea.vmem %s4, %s813
      $region56: #{srfbn_forward.32} parent=51 // pred_fallthru
        _
    $region52: #{srfbn_forward.32} parent=5 // pred_fallthru
      _
  $region6: #{srfbn_forward.32} parent=0 // loop_footer
    %s15 = sadd.s32 1, %s11
  $region7: #{srfbn_forward.32} parent=0 // loop_footer_branch
    %10 = sbr.rel target = $region3
  $region8: #{srfbn_forward.32} parent=0 // loop_exit
    _

// kernel: srfbn_forward.35
$region0: #{srfbn_forward.35}
  #allocation0 [shape = 'u32[]', space=smem, size = 0x4, offset = 0x4, fixed_abs, tag = 'smem constant byte address 0x4 - core index']
  #allocation1 [shape = 'u32[144,128]{1,0:T(1,128)}', space=vmem, size = 0x12000, scoped, tag = 'internal scratch']
  #allocation2 [shape = 'f32[256,128]{1,0:T(8,128)}', space=vmem, size = 0x20000, scoped, tag = 'scratch operand']
  #allocation3 [shape = 'f32[1]{0:T(128)S(6)}', space=smem, size = 0x200, scoped, tag = 'scoped memory for srfbn_forward.35']
  %s0 = inlined_call_operand.vmem [shape: bf16[512,16], index: 0, kind: input, shape index: {}]
  %s1 = inlined_call_operand.vmem [shape: bf16[16,128], index: 1, kind: input, shape index: {}]
  %s2 = inlined_call_operand.vmem [shape: f32[1,128], index: 2, kind: input, shape index: {}]
  %s3 = inlined_call_operand.<no memory space> [shape: f32[1], index: 3, kind: input, shape index: {}]
  %s4 = inlined_call_operand.vmem [shape: bf16[512,128], index: 4, kind: output, shape index: {}]
  %s5 = sld [smem:[#allocation0]]
  $region57: #{srfbn_forward.35} parent=0
    _
  %s7 = ssub.s32 1, %s5
  %s8 = scalar_select 0, %s7, %s5
  %9 = sst [smem:[#allocation3]] %s3
  loop: start=0, step=1, limit=4
  $region2: #{srfbn_forward.35} parent=0 // loop_pre_header
    _
  $region3: #{srfbn_forward.35} parent=0 // loop_header
    %s11 = sphi 0, %s15
    %p12 = scmp.ge.s32.totalorder %s11, 4
    %s18 = sphi 0, %s37
    %s19 = sphi 0, %s33
    %s20 = sphi 0, %s29
    %s21 = sphi 0, %s18
    %s22 = sphi 0, %s19
    %s23 = sphi 0, %s20
    %s24 = sphi 0, %s21
    %s25 = sphi 0, %s22
    %s26 = sphi 0, %s23
    %s42 = sphi 0, %s44
    %s45 = sphi 0, %s42
    %s46 = sphi 0, %s45
    %s62 = sphi 0, %s46
    %s70 = sphi 0, %s72
    %s73 = sphi 0, %s70
    %s74 = sphi 0, %s73
    %s90 = sphi 0, %s74
    %s96 = sphi 0, %s98
    %s99 = sphi 0, %s96
    %s100 = sphi 0, %s99
    %s116 = sphi 0, %s100
    %s120 = sphi 0, %s120
    %s122 = sphi 0, %s120
    %s123 = sphi 0, %s122
    %s137 = sphi 0, %s123
    %s145 = sphi 0, %s147
    %s148 = sphi 0, %s145
    %s149 = sphi 0, %s148
    %s165 = sphi 0, %s149
  $region4: #{srfbn_forward.35} parent=0 // loop_header_branch
    %14 = sbr.rel (%p12) target = $region8
  $region5: #{srfbn_forward.35} parent=0 // loop_body
    %s16 = ssub.s32 %s11, 1
    %s17 = ssub.s32 %s11, 2
    %s27 = sadd.s32 1, %s20
    %p28 = scmp.ge.s32.totalorder %s27, 1
    %s29 = scalar_select %p28, 0, %s27
    %s30 = sadd.s32 1, %s19
    %s31 = scalar_select %p28, %s30, %s19
    %p32 = scmp.ge.s32.totalorder %s31, 1
    %s33 = scalar_select %p32, 0, %s31
    %s34 = sadd.s32 1, %s18
    %s35 = scalar_select %p32, %s34, %s18
    %p36 = scmp.ge.s32.totalorder %s35, 2
    %s37 = scalar_select %p36, 0, %s35
    %s38 = ssub.s32 %s18, %s37
    %s39 = ssub.s32 %s20, %s29
    %s40 = sor.u32 %s38, %s39
    %p41 = scmp.eq.s32.totalorder %s40, 0
    %s43 = sadd.s32 %s42, 1
    %s44 = scalar_select %p41, %s42, %s43
    %p47 = pneg %p41
    %p48 = scmp.eq.s32.totalorder %s11, 1
    %p49 = por %p47, %p48
    %p50 = scmp.ne.s32.totalorder %s42, %s45
    %p51 = scmp.eq.s32.totalorder %s11, 0
    %p52 = por %p50, %p51
    %p53 = scmp.ne.s32.totalorder %s42, %s45
    %p54 = scmp.eq.s32.totalorder %s16, 1
    %p55 = por %p53, %p54
    %p56 = scmp.ne.s32.totalorder %s45, %s46
    %p57 = scmp.eq.s32.totalorder %s16, 0
    %p58 = por %p56, %p57
    %p59 = scmp.ne.s32.totalorder %s45, %s46
    %p60 = scmp.eq.s32.totalorder %s17, 1
    %p61 = por %p59, %p60
    %p63 = scmp.ne.s32.totalorder %s46, %s62
    %p64 = scmp.eq.s32.totalorder %s17, 0
    %p65 = por %p63, %p64
    %s66 = ssub.s32 %s20, %s29
    %s67 = ssub.s32 %s19, %s33
    %s68 = sor.u32 %s66, %s67
    %p69 = scmp.eq.s32.totalorder %s68, 0
    %s71 = sadd.s32 %s70, 1
    %s72 = scalar_select %p69, %s70, %s71
    %p75 = pneg %p69
    %p76 = scmp.eq.s32.totalorder %s11, 1
    %p77 = por %p75, %p76
    %p78 = scmp.ne.s32.totalorder %s70, %s73
    %p79 = scmp.eq.s32.totalorder %s11, 0
    %p80 = por %p78, %p79
    %p81 = scmp.ne.s32.totalorder %s70, %s73
    %p82 = scmp.eq.s32.totalorder %s16, 1
    %p83 = por %p81, %p82
    %p84 = scmp.ne.s32.totalorder %s73, %s74
    %p85 = scmp.eq.s32.totalorder %s16, 0
    %p86 = por %p84, %p85
    %p87 = scmp.ne.s32.totalorder %s73, %s74
    %p88 = scmp.eq.s32.totalorder %s17, 1
    %p89 = por %p87, %p88
    %p91 = scmp.ne.s32.totalorder %s74, %s90
    %p92 = scmp.eq.s32.totalorder %s17, 0
    %p93 = por %p91, %p92
    %s94 = ssub.s32 %s19, %s33
    %p95 = scmp.eq.s32.totalorder %s94, 0
    %s97 = sadd.s32 %s96, 1
    %s98 = scalar_select %p95, %s96, %s97
    %p101 = pneg %p95
    %p102 = scmp.eq.s32.totalorder %s11, 1
    %p103 = por %p101, %p102
    %p104 = scmp.ne.s32.totalorder %s96, %s99
    %p105 = scmp.eq.s32.totalorder %s11, 0
    %p106 = por %p104, %p105
    %p107 = scmp.ne.s32.totalorder %s96, %s99
    %p108 = scmp.eq.s32.totalorder %s16, 1
    %p109 = por %p107, %p108
    %p110 = scmp.ne.s32.totalorder %s99, %s100
    %p111 = scmp.eq.s32.totalorder %s16, 0
    %p112 = por %p110, %p111
    %p113 = scmp.ne.s32.totalorder %s99, %s100
    %p114 = scmp.eq.s32.totalorder %s17, 1
    %p115 = por %p113, %p114
    %p117 = scmp.ne.s32.totalorder %s100, %s116
    %p118 = scmp.eq.s32.totalorder %s17, 0
    %p119 = por %p117, %p118
    %s121 = sadd.s32 %s120, 1
    %p124 = scmp.eq.s32.totalorder %s11, 1
    %p125 = scmp.ne.s32.totalorder %s120, %s122
    %p126 = scmp.eq.s32.totalorder %s11, 0
    %p127 = por %p125, %p126
    %p128 = scmp.ne.s32.totalorder %s120, %s122
    %p129 = scmp.eq.s32.totalorder %s16, 1
    %p130 = por %p128, %p129
    %p131 = scmp.ne.s32.totalorder %s122, %s123
    %p132 = scmp.eq.s32.totalorder %s16, 0
    %p133 = por %p131, %p132
    %p134 = scmp.ne.s32.totalorder %s122, %s123
    %p135 = scmp.eq.s32.totalorder %s17, 1
    %p136 = por %p134, %p135
    %p138 = scmp.ne.s32.totalorder %s123, %s137
    %p139 = scmp.eq.s32.totalorder %s17, 0
    %p140 = por %p138, %p139
    %s141 = ssub.s32 %s18, %s37
    %s142 = ssub.s32 %s19, %s33
    %s143 = sor.u32 %s141, %s142
    %p144 = scmp.eq.s32.totalorder %s143, 0
    %s146 = sadd.s32 %s145, 1
    %s147 = scalar_select %p144, %s145, %s146
    %p150 = pneg %p144
    %p151 = scmp.eq.s32.totalorder %s11, 1
    %p152 = por %p150, %p151
    %p153 = scmp.ne.s32.totalorder %s145, %s148
    %p154 = scmp.eq.s32.totalorder %s11, 0
    %p155 = por %p153, %p154
    %p156 = scmp.ne.s32.totalorder %s145, %s148
    %p157 = scmp.eq.s32.totalorder %s16, 1
    %p158 = por %p156, %p157
    %p159 = scmp.ne.s32.totalorder %s148, %s149
    %p160 = scmp.eq.s32.totalorder %s16, 0
    %p161 = por %p159, %p160
    %p162 = scmp.ne.s32.totalorder %s148, %s149
    %p163 = scmp.eq.s32.totalorder %s17, 1
    %p164 = por %p162, %p163
    %p166 = scmp.ne.s32.totalorder %s149, %s165
    %p167 = scmp.eq.s32.totalorder %s17, 0
    %p168 = por %p166, %p167
    %p169 = scmp.le.s32.totalorder 1, %s11
    %p170 = scmp.lt.s32.totalorder %s11, 3
    %p171 = pnand %p169, %p170
    %p172 = pneg %p171
    // Predicated region
    $region9: #{srfbn_forward.35} parent=5 // pred_check
      _
    $region10: #{srfbn_forward.35} parent=5 // pred_check_branch
      %174 = sbr.rel (%p171) target = $region12
    $region11: #{srfbn_forward.35} parent=5 // pred_region
      %s175 = ssub.s32 %s11, 1
      // Predicated region
      $region13: #{srfbn_forward.35} parent=11 // pred_check
        %p176 = pneg %p86
      $region14: #{srfbn_forward.35} parent=11 // pred_check_branch
        %178 = sbr.rel (%p176) target = $region16
      $region15: #{srfbn_forward.35} parent=11 // pred_region
        %s179 = smul.u32 2, %s23
        %p180 = scmp.lt.s32.totalorder %s179, 1
        %s181 = scalar_select %p180, %s179, 1
        %p182 = scmp.lt.s32.totalorder %s22, 0
        %s183 = scalar_select %p182, %s22, 0
        %s184 = sadd.s32 %s183, %s181
        %s185 = smul.addr %s184, 4
        %s186 = scalar_lea.vmem %s1, %s185
        %s187 = smul.u32 2, %s23
      $region16: #{srfbn_forward.35} parent=11 // pred_fallthru
        _
      // Predicated region
      $region17: #{srfbn_forward.35} parent=11 // pred_check
        %p188 = pneg %p112
      $region18: #{srfbn_forward.35} parent=11 // pred_check_branch
        %190 = sbr.rel (%p188) target = $region20
      $region19: #{srfbn_forward.35} parent=11 // pred_region
        %p191 = scmp.lt.s32.totalorder %s22, 0
        %s192 = scalar_select %p191, %s22, 0
        %s193 = scalar_lea.vmem %s2, %s192
      $region20: #{srfbn_forward.35} parent=11 // pred_fallthru
        _
      // Predicated region
      $region21: #{srfbn_forward.35} parent=11 // pred_check
        %p194 = pneg %p133
      $region22: #{srfbn_forward.35} parent=11 // pred_check_branch
        %196 = sbr.rel (%p194) target = $region24
      $region23: #{srfbn_forward.35} parent=11 // pred_region
        _
      $region24: #{srfbn_forward.35} parent=11 // pred_fallthru
        _
    $region12: #{srfbn_forward.35} parent=5 // pred_fallthru
      _
    %p197 = scmp.lt.s32.totalorder %s11, 2
    // Predicated region
    $region25: #{srfbn_forward.35} parent=5 // pred_check
      %p198 = pneg %p197
    $region26: #{srfbn_forward.35} parent=5 // pred_check_branch
      %200 = sbr.rel (%p198) target = $region28
    $region27: #{srfbn_forward.35} parent=5 // pred_region
      // Predicated region
      $region29: #{srfbn_forward.35} parent=27 // pred_check
        %p201 = pneg %p52
      $region30: #{srfbn_forward.35} parent=27 // pred_check_branch
        %203 = sbr.rel (%p201) target = $region32
      $region31: #{srfbn_forward.35} parent=27 // pred_region
        %s204 = smul.u32 32, %s18
        %p205 = scmp.lt.s32.totalorder %s204, 63
        %s206 = scalar_select %p205, %s204, 63
        %p207 = scmp.lt.s32.totalorder %s20, 0
        %s208 = scalar_select %p207, %s20, 0
        %s209 = sadd.s32 %s208, %s206
        %s210 = smul.addr %s209, 4
        %s211 = scalar_lea.vmem %s0, %s210
        %s212 = smul.u32 32, %s18
      $region32: #{srfbn_forward.35} parent=27 // pred_fallthru
        _
    $region28: #{srfbn_forward.35} parent=5 // pred_fallthru
      _
    %p213 = scmp.le.s32.totalorder 1, %s11
    %p214 = scmp.lt.s32.totalorder %s11, 3
    %p215 = pnand %p213, %p214
    %p216 = pneg %p215
    // Predicated region
    $region33: #{srfbn_forward.35} parent=5 // pred_check
      _
    $region34: #{srfbn_forward.35} parent=5 // pred_check_branch
      %218 = sbr.rel (%p215) target = $region36
    $region35: #{srfbn_forward.35} parent=5 // pred_region
      %s219 = ssub.s32 %s11, 1
      %s220 = smul.u32 32, %s21
      %p221 = scmp.lt.s32.totalorder %s220, 63
      %s222 = scalar_select %p221, %s220, 63
      %p223 = scmp.lt.s32.totalorder %s23, 0
      %s224 = scalar_select %p223, %s23, 0
      %s225 = sadd.s32 %s224, %s222
      %s226 = smul.addr %s225, 4
      %s227 = scalar_lea.vmem %s0, %s226
      %p228 = pneg %p58
      %p229 = pneg %p55
      %s230 = smul.u32 2, %s23
      %p231 = scmp.lt.s32.totalorder %s230, 1
      %s232 = scalar_select %p231, %s230, 1
      %p233 = scmp.lt.s32.totalorder %s22, 0
      %s234 = scalar_select %p233, %s22, 0
      %s235 = sadd.s32 %s234, %s232
      %s236 = smul.addr %s235, 4
      %s237 = scalar_lea.vmem %s1, %s236
      %p238 = pneg %p86
      %p239 = pneg %p83
      %p240 = scmp.lt.s32.totalorder %s22, 0
      %s241 = scalar_select %p240, %s22, 0
      %s242 = scalar_lea.vmem %s2, %s241
      %p243 = pneg %p112
      %p244 = pneg %p109
      %p245 = pneg %p133
      %p246 = pneg %p130
      %p247 = pneg %p161
      %p248 = pneg %p158
      %s249 = smul.u32 32, %s21
      %p250 = scmp.lt.s32.totalorder %s249, 63
      %s251 = scalar_select %p250, %s249, 63
      %p252 = scmp.lt.s32.totalorder %s22, 0
      %s253 = scalar_select %p252, %s22, 0
      %s254 = sadd.s32 %s253, %s251
      %s255 = smul.addr %s254, 4
      %s256 = scalar_lea.vmem %s4, %s255
      %s257 = smul.u32 32, %s21
      %p258 = scmp.lt.s32.totalorder %s257, 63
      %s259 = scalar_select %p258, %s257, 63
      %p260 = scmp.lt.s32.totalorder %s23, 0
      %s261 = scalar_select %p260, %s23, 0
      %s262 = sadd.s32 %s261, %s259
      %s263 = smul.addr %s262, 4
      %s264 = scalar_lea.vmem %s0, %s263
      %s265 = smul.u32 32, %s21
      %s266 = smul.u32 2, %s23
      %p267 = scmp.lt.s32.totalorder %s266, 1
      %s268 = scalar_select %p267, %s266, 1
      %p269 = scmp.lt.s32.totalorder %s22, 0
      %s270 = scalar_select %p269, %s22, 0
      %s271 = sadd.s32 %s270, %s268
      %s272 = smul.addr %s271, 4
      %s273 = scalar_lea.vmem %s1, %s272
      %s274 = smul.u32 2, %s23
      %p275 = scmp.lt.s32.totalorder %s22, 0
      %s276 = scalar_select %p275, %s22, 0
      %s277 = scalar_lea.vmem %s2, %s276
      %s278 = smul.u32 32, %s21
      %p279 = scmp.lt.s32.totalorder %s278, 63
      %s280 = scalar_select %p279, %s278, 63
      %p281 = scmp.lt.s32.totalorder %s22, 0
      %s282 = scalar_select %p281, %s22, 0
      %s283 = sadd.s32 %s282, %s280
      %s284 = smul.addr %s283, 4
      %s285 = scalar_lea.vmem %s4, %s284
      %s286 = smul.u32 32, %s21
      %p288 = scmp.eq.s32.totalorder %s23, 0
      // Predicated region
      $region37: #{srfbn_forward.35} parent=35 // pred_check
        %p289 = pneg %p288
      $region38: #{srfbn_forward.35} parent=35 // pred_check_branch
        %291 = sbr.rel (%p289) target = $region40
      $region39: #{srfbn_forward.35} parent=35 // pred_region
        %292 = vst [vmem:[#allocation2] sm:$0xff] 0.0
        %293 = vst [vmem:[#allocation2 + $0x8] sm:$0xff] 0.0
        %294 = vst [vmem:[#allocation2 + $0x10] sm:$0xff] 0.0
        %295 = vst [vmem:[#allocation2 + $0x18] sm:$0xff] 0.0
        %296 = vst [vmem:[#allocation2 + $0x20] sm:$0xff] 0.0
        %297 = vst [vmem:[#allocation2 + $0x28] sm:$0xff] 0.0
        %298 = vst [vmem:[#allocation2 + $0x30] sm:$0xff] 0.0
        %299 = vst [vmem:[#allocation2 + $0x38] sm:$0xff] 0.0
        %300 = vst [vmem:[#allocation2 + $0x40] sm:$0xff] 0.0
        %301 = vst [vmem:[#allocation2 + $0x48] sm:$0xff] 0.0
        %302 = vst [vmem:[#allocation2 + $0x50] sm:$0xff] 0.0
        %303 = vst [vmem:[#allocation2 + $0x58] sm:$0xff] 0.0
        %304 = vst [vmem:[#allocation2 + $0x60] sm:$0xff] 0.0
        %305 = vst [vmem:[#allocation2 + $0x68] sm:$0xff] 0.0
        %306 = vst [vmem:[#allocation2 + $0x70] sm:$0xff] 0.0
        %307 = vst [vmem:[#allocation2 + $0x78] sm:$0xff] 0.0
        %308 = vst [vmem:[#allocation2 + $0x80] sm:$0xff] 0.0
        %309 = vst [vmem:[#allocation2 + $0x88] sm:$0xff] 0.0
        %310 = vst [vmem:[#allocation2 + $0x90] sm:$0xff] 0.0
        %311 = vst [vmem:[#allocation2 + $0x98] sm:$0xff] 0.0
        %312 = vst [vmem:[#allocation2 + $0xa0] sm:$0xff] 0.0
        %313 = vst [vmem:[#allocation2 + $0xa8] sm:$0xff] 0.0
        %314 = vst [vmem:[#allocation2 + $0xb0] sm:$0xff] 0.0
        %315 = vst [vmem:[#allocation2 + $0xb8] sm:$0xff] 0.0
        %316 = vst [vmem:[#allocation2 + $0xc0] sm:$0xff] 0.0
        %317 = vst [vmem:[#allocation2 + $0xc8] sm:$0xff] 0.0
        %318 = vst [vmem:[#allocation2 + $0xd0] sm:$0xff] 0.0
        %319 = vst [vmem:[#allocation2 + $0xd8] sm:$0xff] 0.0
        %320 = vst [vmem:[#allocation2 + $0xe0] sm:$0xff] 0.0
        %321 = vst [vmem:[#allocation2 + $0xe8] sm:$0xff] 0.0
        %322 = vst [vmem:[#allocation2 + $0xf0] sm:$0xff] 0.0
        %323 = vst [vmem:[#allocation2 + $0xf8] sm:$0xff] 0.0
      $region40: #{srfbn_forward.35} parent=35 // pred_fallthru
        _
      %v324 = vld [vmem:[#allocation2] sm:$0xff]
      %v325 = vld [vmem:[#allocation2 + $0x8] sm:$0xff]
      %v326 = vld [vmem:[#allocation2 + $0x10] sm:$0xff]
      %v327 = vld [vmem:[#allocation2 + $0x18] sm:$0xff]
      %v328 = vld [vmem:[#allocation2 + $0x20] sm:$0xff]
      %v329 = vld [vmem:[#allocation2 + $0x28] sm:$0xff]
      %v330 = vld [vmem:[#allocation2 + $0x30] sm:$0xff]
      %v331 = vld [vmem:[#allocation2 + $0x38] sm:$0xff]
      %v332 = vld [vmem:[#allocation2 + $0x40] sm:$0xff]
      %v333 = vld [vmem:[#allocation2 + $0x48] sm:$0xff]
      %v334 = vld [vmem:[#allocation2 + $0x50] sm:$0xff]
      %v335 = vld [vmem:[#allocation2 + $0x58] sm:$0xff]
      %v336 = vld [vmem:[#allocation2 + $0x60] sm:$0xff]
      %v337 = vld [vmem:[#allocation2 + $0x68] sm:$0xff]
      %v338 = vld [vmem:[#allocation2 + $0x70] sm:$0xff]
      %v339 = vld [vmem:[#allocation2 + $0x78] sm:$0xff]
      %v340 = vld [vmem:[#allocation2 + $0x80] sm:$0xff]
      %v341 = vld [vmem:[#allocation2 + $0x88] sm:$0xff]
      %v342 = vld [vmem:[#allocation2 + $0x90] sm:$0xff]
      %v343 = vld [vmem:[#allocation2 + $0x98] sm:$0xff]
      %v344 = vld [vmem:[#allocation2 + $0xa0] sm:$0xff]
      %v345 = vld [vmem:[#allocation2 + $0xa8] sm:$0xff]
      %v346 = vld [vmem:[#allocation2 + $0xb0] sm:$0xff]
      %v347 = vld [vmem:[#allocation2 + $0xb8] sm:$0xff]
      %v348 = vld [vmem:[#allocation2 + $0xc0] sm:$0xff]
      %v349 = vld [vmem:[#allocation2 + $0xc8] sm:$0xff]
      %v350 = vld [vmem:[#allocation2 + $0xd0] sm:$0xff]
      %v351 = vld [vmem:[#allocation2 + $0xd8] sm:$0xff]
      %v352 = vld [vmem:[#allocation2 + $0xe0] sm:$0xff]
      %v353 = vld [vmem:[#allocation2 + $0xe8] sm:$0xff]
      %v354 = vld [vmem:[#allocation2 + $0xf0] sm:$0xff]
      %v355 = vld [vmem:[#allocation2 + $0xf8] sm:$0xff]
      %v356 = vld [vmem:[%s264] sm:$0xf]
      %v357 = vld [vmem:[%s264 + $0x4] sm:$0xf]
      %v358 = vld [vmem:[%s264 + $0x8] sm:$0xf]
      %v359 = vld [vmem:[%s264 + $0xc] sm:$0xf]
      %v360 = vld [vmem:[%s264 + $0x10] sm:$0xf]
      %v361 = vld [vmem:[%s264 + $0x14] sm:$0xf]
      %v362 = vld [vmem:[%s264 + $0x18] sm:$0xf]
      %v363 = vld [vmem:[%s264 + $0x1c] sm:$0xf]
      %v364 = vld [vmem:[%s264 + $0x20] sm:$0xf]
      %v365 = vld [vmem:[%s264 + $0x24] sm:$0xf]
      %v366 = vld [vmem:[%s264 + $0x28] sm:$0xf]
      %v367 = vld [vmem:[%s264 + $0x2c] sm:$0xf]
      %v368 = vld [vmem:[%s264 + $0x30] sm:$0xf]
      %v369 = vld [vmem:[%s264 + $0x34] sm:$0xf]
      %v370 = vld [vmem:[%s264 + $0x38] sm:$0xf]
      %v371 = vld [vmem:[%s264 + $0x3c] sm:$0xf]
      %v372 = vld [vmem:[%s264 + $0x40] sm:$0xf]
      %v373 = vld [vmem:[%s264 + $0x44] sm:$0xf]
      %v374 = vld [vmem:[%s264 + $0x48] sm:$0xf]
      %v375 = vld [vmem:[%s264 + $0x4c] sm:$0xf]
      %v376 = vld [vmem:[%s264 + $0x50] sm:$0xf]
      %v377 = vld [vmem:[%s264 + $0x54] sm:$0xf]
      %v378 = vld [vmem:[%s264 + $0x58] sm:$0xf]
      %v379 = vld [vmem:[%s264 + $0x5c] sm:$0xf]
      %v380 = vld [vmem:[%s264 + $0x60] sm:$0xf]
      %v381 = vld [vmem:[%s264 + $0x64] sm:$0xf]
      %v382 = vld [vmem:[%s264 + $0x68] sm:$0xf]
      %v383 = vld [vmem:[%s264 + $0x6c] sm:$0xf]
      %v384 = vld [vmem:[%s264 + $0x70] sm:$0xf]
      %v385 = vld [vmem:[%s264 + $0x74] sm:$0xf]
      %v386 = vld [vmem:[%s264 + $0x78] sm:$0xf]
      %v387 = vld [vmem:[%s264 + $0x7c] sm:$0xf]
      %v388 = vld [vmem:[%s273] sm:$0xf]
      %v389 = vld [vmem:[%s273 + $0x4] sm:$0xf]
      %v422 = vunpack.c.l.b16 %v356
      %v423 = vunpack.c.l.b16 %v357
      %v424 = vunpack.c.l.b16 %v358
      %v425 = vunpack.c.l.b16 %v359
      %v426 = vunpack.c.l.b16 %v360
      %v427 = vunpack.c.l.b16 %v361
      %v428 = vunpack.c.l.b16 %v362
      %v429 = vunpack.c.l.b16 %v363
      %v430 = vunpack.c.l.b16 %v364
      %v431 = vunpack.c.l.b16 %v365
      %v432 = vunpack.c.l.b16 %v366
      %v433 = vunpack.c.l.b16 %v367
      %v434 = vunpack.c.l.b16 %v368
      %v435 = vunpack.c.l.b16 %v369
      %v436 = vunpack.c.l.b16 %v370
      %v437 = vunpack.c.l.b16 %v371
      %v438 = vunpack.c.l.b16 %v372
      %v439 = vunpack.c.l.b16 %v373
      %v440 = vunpack.c.l.b16 %v374
      %v441 = vunpack.c.l.b16 %v375
      %v442 = vunpack.c.l.b16 %v376
      %v443 = vunpack.c.l.b16 %v377
      %v444 = vunpack.c.l.b16 %v378
      %v445 = vunpack.c.l.b16 %v379
      %v446 = vunpack.c.l.b16 %v380
      %v447 = vunpack.c.l.b16 %v381
      %v448 = vunpack.c.l.b16 %v382
      %v449 = vunpack.c.l.b16 %v383
      %v450 = vunpack.c.l.b16 %v384
      %v451 = vunpack.c.l.b16 %v385
      %v452 = vunpack.c.l.b16 %v386
      %v453 = vunpack.c.l.b16 %v387
      %v454 = vpack.c.b16 %v423, %v422
      %v455 = vpack.c.b16 %v425, %v424
      %v456 = vpack.c.b16 %v427, %v426
      %v457 = vpack.c.b16 %v429, %v428
      %v458 = vpack.c.b16 %v431, %v430
      %v459 = vpack.c.b16 %v433, %v432
      %v460 = vpack.c.b16 %v435, %v434
      %v461 = vpack.c.b16 %v437, %v436
      %v462 = vpack.c.b16 %v439, %v438
      %v463 = vpack.c.b16 %v441, %v440
      %v464 = vpack.c.b16 %v443, %v442
      %v465 = vpack.c.b16 %v445, %v444
      %v466 = vpack.c.b16 %v447, %v446
      %v467 = vpack.c.b16 %v449, %v448
      %v468 = vpack.c.b16 %v451, %v450
      %v469 = vpack.c.b16 %v453, %v452
      %v472 = vunpack.c.l.b16 %v388
      %v473 = vunpack.c.l.b16 %v389
      %v474 = vpack.c.b16 %v473, %v472
      %vm476 = vcmask 130048
      %v478 = vsel %vm476, %v454, 0
      %v481 = vsel %vm476, %v455, 0
      %v484 = vsel %vm476, %v456, 0
      %v487 = vsel %vm476, %v457, 0
      %v490 = vsel %vm476, %v458, 0
      %v493 = vsel %vm476, %v459, 0
      %v496 = vsel %vm476, %v460, 0
      %v499 = vsel %vm476, %v461, 0
      %v502 = vsel %vm476, %v462, 0
      %v505 = vsel %vm476, %v463, 0
      %v508 = vsel %vm476, %v464, 0
      %v511 = vsel %vm476, %v465, 0
      %v514 = vsel %vm476, %v466, 0
      %v517 = vsel %vm476, %v467, 0
      %v520 = vsel %vm476, %v468, 0
      %v523 = vsel %vm476, %v469, 0
      %525 = vmatprep.subr.bf16.mxu0 0
      %526 = vmatpush1.bf16.msra.mxu0 %v474
      %527 = vmatprep.subr.bf16.mxu0 0
      %528 = vmatpush1.bf16.msra.mxu0 0
      %529 = vmatprep.subr.bf16.mxu0 0
      %530 = vmatpush1.bf16.msra.mxu0 0
      %531 = vmatprep.subr.bf16.mxu0 0
      %532 = vmatpush1.bf16.msra.mxu0 0
      %533 = vmatprep.subr.bf16.mxu0 0
      %534 = vmatpush1.bf16.msra.mxu0 0
      %535 = vmatprep.subr.bf16.mxu0 0
      %536 = vmatpush1.bf16.msra.mxu0 0
      %537 = vmatprep.subr.bf16.mxu0 0
      %538 = vmatpush1.bf16.msra.mxu0 0
      %539 = vmatprep.subr.bf16.mxu0 0
      %540 = vmatpush1.bf16.msra.mxu0 0
      %541 = vmatprep.subr.bf16.mxu0 0
      %542 = vmatpush1.bf16.msra.mxu0 0
      %543 = vmatprep.subr.bf16.mxu0 0
      %544 = vmatpush1.bf16.msra.mxu0 0
      %545 = vmatprep.subr.bf16.mxu0 0
      %546 = vmatpush1.bf16.msra.mxu0 0
      %547 = vmatprep.subr.bf16.mxu0 0
      %548 = vmatpush1.bf16.msra.mxu0 0
      %549 = vmatprep.subr.bf16.mxu0 0
      %550 = vmatpush1.bf16.msra.mxu0 0
      %551 = vmatprep.subr.bf16.mxu0 0
      %552 = vmatpush1.bf16.msra.mxu0 0
      %553 = vmatprep.subr.bf16.mxu0 0
      %554 = vmatpush1.bf16.msra.mxu0 0
      %555 = vmatprep.subr.bf16.mxu0 0
      %556 = vmatpush1.bf16.msra.mxu0 0
      %557 = vmatprep.mubr.bf16.mxu0 0
      %558 = vmatmul.mubr.bf16.gmra.mrb[0].mxu0 %v478
      %v559 = vpop.f32.mrb[0].mxu0
      %v560 = vadd.f32 0.0, %v559
      %v561 = vpop.f32.mrb[0].mxu0
      %v562 = vpop.f32.mrb[0].mxu0
      %v563 = vadd.f32 0.0, %v562
      %v564 = vpop.f32.mrb[0].mxu0
      %565 = vmatprep.mubr.bf16.mxu0 0
      %566 = vmatmul.mubr.bf16.gmra.mrb[0].mxu0 %v481
      %v567 = vpop.f32.mrb[0].mxu0
      %v568 = vadd.f32 0.0, %v567
      %v569 = vpop.f32.mrb[0].mxu0
      %v570 = vpop.f32.mrb[0].mxu0
      %v571 = vadd.f32 0.0, %v570
      %v572 = vpop.f32.mrb[0].mxu0
      %573 = vmatprep.mubr.bf16.mxu0 0
      %574 = vmatmul.mubr.bf16.gmra.mrb[0].mxu0 %v484
      %v575 = vpop.f32.mrb[0].mxu0
      %v576 = vadd.f32 0.0, %v575
      %v577 = vpop.f32.mrb[0].mxu0
      %v578 = vpop.f32.mrb[0].mxu0
      %v579 = vadd.f32 0.0, %v578
      %v580 = vpop.f32.mrb[0].mxu0
      %581 = vmatprep.mubr.bf16.mxu0 0
      %582 = vmatmul.mubr.bf16.gmra.mrb[0].mxu0 %v487
      %v583 = vpop.f32.mrb[0].mxu0
      %v584 = vadd.f32 0.0, %v583
      %v585 = vpop.f32.mrb[0].mxu0
      %v586 = vpop.f32.mrb[0].mxu0
      %v587 = vadd.f32 0.0, %v586
      %v588 = vpop.f32.mrb[0].mxu0
      %589 = vmatprep.mubr.bf16.mxu0 0
      %590 = vmatmul.mubr.bf16.gmra.mrb[0].mxu0 %v490
      %v591 = vpop.f32.mrb[0].mxu0
      %v592 = vadd.f32 0.0, %v591
      %v593 = vpop.f32.mrb[0].mxu0
      %v594 = vpop.f32.mrb[0].mxu0
      %v595 = vadd.f32 0.0, %v594
      %v596 = vpop.f32.mrb[0].mxu0
      %597 = vmatprep.mubr.bf16.mxu0 0
      %598 = vmatmul.mubr.bf16.gmra.mrb[0].mxu0 %v493
      %v599 = vpop.f32.mrb[0].mxu0
      %v600 = vadd.f32 0.0, %v599
      %v601 = vpop.f32.mrb[0].mxu0
      %v602 = vpop.f32.mrb[0].mxu0
      %v603 = vadd.f32 0.0, %v602
      %v604 = vpop.f32.mrb[0].mxu0
      %605 = vmatprep.mubr.bf16.mxu0 0
      %606 = vmatmul.mubr.bf16.gmra.mrb[0].mxu0 %v496
      %v607 = vpop.f32.mrb[0].mxu0
      %v608 = vadd.f32 0.0, %v607
      %v609 = vpop.f32.mrb[0].mxu0
      %v610 = vpop.f32.mrb[0].mxu0
      %v611 = vadd.f32 0.0, %v610
      %v612 = vpop.f32.mrb[0].mxu0
      %613 = vmatprep.mubr.bf16.mxu0 0
      %614 = vmatmul.mubr.bf16.gmra.mrb[0].mxu0 %v499
      %v615 = vpop.f32.mrb[0].mxu0
      %v616 = vadd.f32 0.0, %v615
      %v617 = vpop.f32.mrb[0].mxu0
      %v618 = vpop.f32.mrb[0].mxu0
      %v619 = vadd.f32 0.0, %v618
      %v620 = vpop.f32.mrb[0].mxu0
      %621 = vmatprep.mubr.bf16.mxu0 0
      %622 = vmatmul.mubr.bf16.gmra.mrb[0].mxu0 %v502
      %v623 = vpop.f32.mrb[0].mxu0
      %v624 = vadd.f32 0.0, %v623
      %v625 = vpop.f32.mrb[0].mxu0
      %v626 = vpop.f32.mrb[0].mxu0
      %v627 = vadd.f32 0.0, %v626
      %v628 = vpop.f32.mrb[0].mxu0
      %629 = vmatprep.mubr.bf16.mxu0 0
      %630 = vmatmul.mubr.bf16.gmra.mrb[0].mxu0 %v505
      %v631 = vpop.f32.mrb[0].mxu0
      %v632 = vadd.f32 0.0, %v631
      %v633 = vpop.f32.mrb[0].mxu0
      %v634 = vpop.f32.mrb[0].mxu0
      %v635 = vadd.f32 0.0, %v634
      %v636 = vpop.f32.mrb[0].mxu0
      %637 = vmatprep.mubr.bf16.mxu0 0
      %638 = vmatmul.mubr.bf16.gmra.mrb[0].mxu0 %v508
      %v639 = vpop.f32.mrb[0].mxu0
      %v640 = vadd.f32 0.0, %v639
      %v641 = vpop.f32.mrb[0].mxu0
      %v642 = vpop.f32.mrb[0].mxu0
      %v643 = vadd.f32 0.0, %v642
      %v644 = vpop.f32.mrb[0].mxu0
      %645 = vmatprep.mubr.bf16.mxu0 0
      %646 = vmatmul.mubr.bf16.gmra.mrb[0].mxu0 %v511
      %v647 = vpop.f32.mrb[0].mxu0
      %v648 = vadd.f32 0.0, %v647
      %v649 = vpop.f32.mrb[0].mxu0
      %v650 = vpop.f32.mrb[0].mxu0
      %v651 = vadd.f32 0.0, %v650
      %v652 = vpop.f32.mrb[0].mxu0
      %653 = vmatprep.mubr.bf16.mxu0 0
      %654 = vmatmul.mubr.bf16.gmra.mrb[0].mxu0 %v514
      %v655 = vpop.f32.mrb[0].mxu0
      %v656 = vadd.f32 0.0, %v655
      %v657 = vpop.f32.mrb[0].mxu0
      %v658 = vpop.f32.mrb[0].mxu0
      %v659 = vadd.f32 0.0, %v658
      %v660 = vpop.f32.mrb[0].mxu0
      %661 = vmatprep.mubr.bf16.mxu0 0
      %662 = vmatmul.mubr.bf16.gmra.mrb[0].mxu0 %v517
      %v663 = vpop.f32.mrb[0].mxu0
      %v664 = vadd.f32 0.0, %v663
      %v665 = vpop.f32.mrb[0].mxu0
      %v666 = vpop.f32.mrb[0].mxu0
      %v667 = vadd.f32 0.0, %v666
      %v668 = vpop.f32.mrb[0].mxu0
      %669 = vmatprep.mubr.bf16.mxu0 0
      %670 = vmatmul.mubr.bf16.gmra.mrb[0].mxu0 %v520
      %v671 = vpop.f32.mrb[0].mxu0
      %v672 = vadd.f32 0.0, %v671
      %v673 = vpop.f32.mrb[0].mxu0
      %v674 = vpop.f32.mrb[0].mxu0
      %v675 = vadd.f32 0.0, %v674
      %v676 = vpop.f32.mrb[0].mxu0
      %677 = vmatprep.mubr.bf16.mxu0 0
      %678 = vmatmul.mubr.bf16.gmra.mrb[0].mxu0 %v523
      %v679 = vpop.f32.mrb[0].mxu0
      %v680 = vadd.f32 0.0, %v679
      %v681 = vpop.f32.mrb[0].mxu0
      %v682 = vpop.f32.mrb[0].mxu0
      %v683 = vadd.f32 0.0, %v682
      %v684 = vpop.f32.mrb[0].mxu0
      %685 = vdwg.mxu0
      %v686 = vadd.f32 %v324, %v560
      %v687 = vadd.f32 %v325, %v563
      %v688 = vadd.f32 %v326, %v568
      %v689 = vadd.f32 %v327, %v571
      %v690 = vadd.f32 %v328, %v576
      %v691 = vadd.f32 %v329, %v579
      %v692 = vadd.f32 %v330, %v584
      %v693 = vadd.f32 %v331, %v587
      %v694 = vadd.f32 %v332, %v592
      %v695 = vadd.f32 %v333, %v595
      %v696 = vadd.f32 %v334, %v600
      %v697 = vadd.f32 %v335, %v603
      %v698 = vadd.f32 %v336, %v608
      %v699 = vadd.f32 %v337, %v611
      %v700 = vadd.f32 %v338, %v616
      %v701 = vadd.f32 %v339, %v619
      %v702 = vadd.f32 %v340, %v624
      %v703 = vadd.f32 %v341, %v627
      %v704 = vadd.f32 %v342, %v632
      %v705 = vadd.f32 %v343, %v635
      %v706 = vadd.f32 %v344, %v640
      %v707 = vadd.f32 %v345, %v643
      %v708 = vadd.f32 %v346, %v648
      %v709 = vadd.f32 %v347, %v651
      %v710 = vadd.f32 %v348, %v656
      %v711 = vadd.f32 %v349, %v659
      %v712 = vadd.f32 %v350, %v664
      %v713 = vadd.f32 %v351, %v667
      %v714 = vadd.f32 %v352, %v672
      %v715 = vadd.f32 %v353, %v675
      %v716 = vadd.f32 %v354, %v680
      %v717 = vadd.f32 %v355, %v683
      %718 = vst [vmem:[#allocation2] sm:$0xff] %v686
      %719 = vst [vmem:[#allocation2 + $0x8] sm:$0xff] %v687
      %720 = vst [vmem:[#allocation2 + $0x10] sm:$0xff] %v688
      %721 = vst [vmem:[#allocation2 + $0x18] sm:$0xff] %v689
      %722 = vst [vmem:[#allocation2 + $0x20] sm:$0xff] %v690
      %723 = vst [vmem:[#allocation2 + $0x28] sm:$0xff] %v691
      %724 = vst [vmem:[#allocation2 + $0x30] sm:$0xff] %v692
      %725 = vst [vmem:[#allocation2 + $0x38] sm:$0xff] %v693
      %726 = vst [vmem:[#allocation2 + $0x40] sm:$0xff] %v694
      %727 = vst [vmem:[#allocation2 + $0x48] sm:$0xff] %v695
      %728 = vst [vmem:[#allocation2 + $0x50] sm:$0xff] %v696
      %729 = vst [vmem:[#allocation2 + $0x58] sm:$0xff] %v697
      %730 = vst [vmem:[#allocation2 + $0x60] sm:$0xff] %v698
      %731 = vst [vmem:[#allocation2 + $0x68] sm:$0xff] %v699
      %732 = vst [vmem:[#allocation2 + $0x70] sm:$0xff] %v700
      %733 = vst [vmem:[#allocation2 + $0x78] sm:$0xff] %v701
      %734 = vst [vmem:[#allocation2 + $0x80] sm:$0xff] %v702
      %735 = vst [vmem:[#allocation2 + $0x88] sm:$0xff] %v703
      %736 = vst [vmem:[#allocation2 + $0x90] sm:$0xff] %v704
      %737 = vst [vmem:[#allocation2 + $0x98] sm:$0xff] %v705
      %738 = vst [vmem:[#allocation2 + $0xa0] sm:$0xff] %v706
      %739 = vst [vmem:[#allocation2 + $0xa8] sm:$0xff] %v707
      %740 = vst [vmem:[#allocation2 + $0xb0] sm:$0xff] %v708
      %741 = vst [vmem:[#allocation2 + $0xb8] sm:$0xff] %v709
      %742 = vst [vmem:[#allocation2 + $0xc0] sm:$0xff] %v710
      %743 = vst [vmem:[#allocation2 + $0xc8] sm:$0xff] %v711
      %744 = vst [vmem:[#allocation2 + $0xd0] sm:$0xff] %v712
      %745 = vst [vmem:[#allocation2 + $0xd8] sm:$0xff] %v713
      %746 = vst [vmem:[#allocation2 + $0xe0] sm:$0xff] %v714
      %747 = vst [vmem:[#allocation2 + $0xe8] sm:$0xff] %v715
      %748 = vst [vmem:[#allocation2 + $0xf0] sm:$0xff] %v716
      %749 = vst [vmem:[#allocation2 + $0xf8] sm:$0xff] %v717
      // Predicated region
      $region41: #{srfbn_forward.35} parent=35 // pred_check
        %p750 = pneg %p288
      $region42: #{srfbn_forward.35} parent=35 // pred_check_branch
        %752 = sbr.rel (%p750) target = $region44
      $region43: #{srfbn_forward.35} parent=35 // pred_region
        %v753 = vld [vmem:[#allocation2] sm:$0xff]
        %v754 = vld [vmem:[#allocation2 + $0x8] sm:$0xff]
        %v755 = vld [vmem:[#allocation2 + $0x10] sm:$0xff]
        %v756 = vld [vmem:[#allocation2 + $0x18] sm:$0xff]
        %v757 = vld [vmem:[#allocation2 + $0x20] sm:$0xff]
        %v758 = vld [vmem:[#allocation2 + $0x28] sm:$0xff]
        %v759 = vld [vmem:[#allocation2 + $0x30] sm:$0xff]
        %v760 = vld [vmem:[#allocation2 + $0x38] sm:$0xff]
        %v761 = vld [vmem:[#allocation2 + $0x40] sm:$0xff]
        %v762 = vld [vmem:[#allocation2 + $0x48] sm:$0xff]
        %v763 = vld [vmem:[#allocation2 + $0x50] sm:$0xff]
        %v764 = vld [vmem:[#allocation2 + $0x58] sm:$0xff]
        %v765 = vld [vmem:[#allocation2 + $0x60] sm:$0xff]
        %v766 = vld [vmem:[#allocation2 + $0x68] sm:$0xff]
        %v767 = vld [vmem:[#allocation2 + $0x70] sm:$0xff]
        %v768 = vld [vmem:[#allocation2 + $0x78] sm:$0xff]
        %v769 = vld [vmem:[#allocation2 + $0x80] sm:$0xff]
        %v770 = vld [vmem:[#allocation2 + $0x88] sm:$0xff]
        %v771 = vld [vmem:[#allocation2 + $0x90] sm:$0xff]
        %v772 = vld [vmem:[#allocation2 + $0x98] sm:$0xff]
        %v773 = vld [vmem:[#allocation2 + $0xa0] sm:$0xff]
        %v774 = vld [vmem:[#allocation2 + $0xa8] sm:$0xff]
        %v775 = vld [vmem:[#allocation2 + $0xb0] sm:$0xff]
        %v776 = vld [vmem:[#allocation2 + $0xb8] sm:$0xff]
        %v777 = vld [vmem:[#allocation2 + $0xc0] sm:$0xff]
        %v778 = vld [vmem:[#allocation2 + $0xc8] sm:$0xff]
        %v779 = vld [vmem:[#allocation2 + $0xd0] sm:$0xff]
        %v780 = vld [vmem:[#allocation2 + $0xd8] sm:$0xff]
        %v781 = vld [vmem:[#allocation2 + $0xe0] sm:$0xff]
        %v782 = vld [vmem:[#allocation2 + $0xe8] sm:$0xff]
        %v783 = vld [vmem:[#allocation2 + $0xf0] sm:$0xff]
        %v784 = vld [vmem:[#allocation2 + $0xf8] sm:$0xff]
        %v785 = vld [vmem:[%s277] sm:$0x1]
        %v787 = vlaneseq
        %v788 = vshrl.u32 %v787, 7
        %v789 = vsub.s32 0, %v788
        %v790 = vrot.slane %v785, %v789
        %v792 = vadd.f32 %v753, %v790
        %v793 = vadd.f32 %v754, %v790
        %v794 = vadd.f32 %v755, %v790
        %v795 = vadd.f32 %v756, %v790
        %v796 = vadd.f32 %v757, %v790
        %v797 = vadd.f32 %v758, %v790
        %v798 = vadd.f32 %v759, %v790
        %v799 = vadd.f32 %v760, %v790
        %v800 = vadd.f32 %v761, %v790
        %v801 = vadd.f32 %v762, %v790
        %v802 = vadd.f32 %v763, %v790
        %v803 = vadd.f32 %v764, %v790
        %v804 = vadd.f32 %v765, %v790
        %v805 = vadd.f32 %v766, %v790
        %v806 = vadd.f32 %v767, %v790
        %v807 = vadd.f32 %v768, %v790
        %v808 = vadd.f32 %v769, %v790
        %v809 = vadd.f32 %v770, %v790
        %v810 = vadd.f32 %v771, %v790
        %v811 = vadd.f32 %v772, %v790
        %v812 = vadd.f32 %v773, %v790
        %v813 = vadd.f32 %v774, %v790
        %v814 = vadd.f32 %v775, %v790
        %v815 = vadd.f32 %v776, %v790
        %v816 = vadd.f32 %v777, %v790
        %v817 = vadd.f32 %v778, %v790
        %v818 = vadd.f32 %v779, %v790
        %v819 = vadd.f32 %v780, %v790
        %v820 = vadd.f32 %v781, %v790
        %v821 = vadd.f32 %v782, %v790
        %v822 = vadd.f32 %v783, %v790
        %v823 = vadd.f32 %v784, %v790
        %s824 = sld [smem:[#allocation3]]
        %vm825 = vcmp.gt.f32.partialorder %v792, 0.0
        %vm826 = vcmp.gt.f32.partialorder %v793, 0.0
        %vm827 = vcmp.gt.f32.partialorder %v794, 0.0
        %vm828 = vcmp.gt.f32.partialorder %v795, 0.0
        %vm829 = vcmp.gt.f32.partialorder %v796, 0.0
        %vm830 = vcmp.gt.f32.partialorder %v797, 0.0
        %vm831 = vcmp.gt.f32.partialorder %v798, 0.0
        %vm832 = vcmp.gt.f32.partialorder %v799, 0.0
        %vm833 = vcmp.gt.f32.partialorder %v800, 0.0
        %vm834 = vcmp.gt.f32.partialorder %v801, 0.0
        %vm835 = vcmp.gt.f32.partialorder %v802, 0.0
        %vm836 = vcmp.gt.f32.partialorder %v803, 0.0
        %vm837 = vcmp.gt.f32.partialorder %v804, 0.0
        %vm838 = vcmp.gt.f32.partialorder %v805, 0.0
        %vm839 = vcmp.gt.f32.partialorder %v806, 0.0
        %vm840 = vcmp.gt.f32.partialorder %v807, 0.0
        %vm841 = vcmp.gt.f32.partialorder %v808, 0.0
        %vm842 = vcmp.gt.f32.partialorder %v809, 0.0
        %vm843 = vcmp.gt.f32.partialorder %v810, 0.0
        %vm844 = vcmp.gt.f32.partialorder %v811, 0.0
        %vm845 = vcmp.gt.f32.partialorder %v812, 0.0
        %vm846 = vcmp.gt.f32.partialorder %v813, 0.0
        %vm847 = vcmp.gt.f32.partialorder %v814, 0.0
        %vm848 = vcmp.gt.f32.partialorder %v815, 0.0
        %vm849 = vcmp.gt.f32.partialorder %v816, 0.0
        %vm850 = vcmp.gt.f32.partialorder %v817, 0.0
        %vm851 = vcmp.gt.f32.partialorder %v818, 0.0
        %vm852 = vcmp.gt.f32.partialorder %v819, 0.0
        %vm853 = vcmp.gt.f32.partialorder %v820, 0.0
        %vm854 = vcmp.gt.f32.partialorder %v821, 0.0
        %vm855 = vcmp.gt.f32.partialorder %v822, 0.0
        %vm856 = vcmp.gt.f32.partialorder %v823, 0.0
        %v857 = vstv %s824
        %v858 = vmul.f32 %v857, %v792
        %v859 = vmul.f32 %v857, %v793
        %v860 = vmul.f32 %v857, %v794
        %v861 = vmul.f32 %v857, %v795
        %v862 = vmul.f32 %v857, %v796
        %v863 = vmul.f32 %v857, %v797
        %v864 = vmul.f32 %v857, %v798
        %v865 = vmul.f32 %v857, %v799
        %v866 = vmul.f32 %v857, %v800
        %v867 = vmul.f32 %v857, %v801
        %v868 = vmul.f32 %v857, %v802
        %v869 = vmul.f32 %v857, %v803
        %v870 = vmul.f32 %v857, %v804
        %v871 = vmul.f32 %v857, %v805
        %v872 = vmul.f32 %v857, %v806
        %v873 = vmul.f32 %v857, %v807
        %v874 = vmul.f32 %v857, %v808
        %v875 = vmul.f32 %v857, %v809
        %v876 = vmul.f32 %v857, %v810
        %v877 = vmul.f32 %v857, %v811
        %v878 = vmul.f32 %v857, %v812
        %v879 = vmul.f32 %v857, %v813
        %v880 = vmul.f32 %v857, %v814
        %v881 = vmul.f32 %v857, %v815
        %v882 = vmul.f32 %v857, %v816
        %v883 = vmul.f32 %v857, %v817
        %v884 = vmul.f32 %v857, %v818
        %v885 = vmul.f32 %v857, %v819
        %v886 = vmul.f32 %v857, %v820
        %v887 = vmul.f32 %v857, %v821
        %v888 = vmul.f32 %v857, %v822
        %v889 = vmul.f32 %v857, %v823
        %v890 = vsel %vm825, %v792, %v858
        %v891 = vsel %vm826, %v793, %v859
        %v892 = vsel %vm827, %v794, %v860
        %v893 = vsel %vm828, %v795, %v861
        %v894 = vsel %vm829, %v796, %v862
        %v895 = vsel %vm830, %v797, %v863
        %v896 = vsel %vm831, %v798, %v864
        %v897 = vsel %vm832, %v799, %v865
        %v898 = vsel %vm833, %v800, %v866
        %v899 = vsel %vm834, %v801, %v867
        %v900 = vsel %vm835, %v802, %v868
        %v901 = vsel %vm836, %v803, %v869
        %v902 = vsel %vm837, %v804, %v870
        %v903 = vsel %vm838, %v805, %v871
        %v904 = vsel %vm839, %v806, %v872
        %v905 = vsel %vm840, %v807, %v873
        %v906 = vsel %vm841, %v808, %v874
        %v907 = vsel %vm842, %v809, %v875
        %v908 = vsel %vm843, %v810, %v876
        %v909 = vsel %vm844, %v811, %v877
        %v910 = vsel %vm845, %v812, %v878
        %v911 = vsel %vm846, %v813, %v879
        %v912 = vsel %vm847, %v814, %v880
        %v913 = vsel %vm848, %v815, %v881
        %v914 = vsel %vm849, %v816, %v882
        %v915 = vsel %vm850, %v817, %v883
        %v916 = vsel %vm851, %v818, %v884
        %v917 = vsel %vm852, %v819, %v885
        %v918 = vsel %vm853, %v820, %v886
        %v919 = vsel %vm854, %v821, %v887
        %v920 = vsel %vm855, %v822, %v888
        %v921 = vsel %vm856, %v823, %v889
        %v922 = vpack.c.bf16 %v891, %v890
        %v923 = vpack.c.bf16 %v893, %v892
        %v924 = vpack.c.bf16 %v895, %v894
        %v925 = vpack.c.bf16 %v897, %v896
        %v926 = vpack.c.bf16 %v899, %v898
        %v927 = vpack.c.bf16 %v901, %v900
        %v928 = vpack.c.bf16 %v903, %v902
        %v929 = vpack.c.bf16 %v905, %v904
        %v930 = vpack.c.bf16 %v907, %v906
        %v931 = vpack.c.bf16 %v909, %v908
        %v932 = vpack.c.bf16 %v911, %v910
        %v933 = vpack.c.bf16 %v913, %v912
        %v934 = vpack.c.bf16 %v915, %v914
        %v935 = vpack.c.bf16 %v917, %v916
        %v936 = vpack.c.bf16 %v919, %v918
        %v937 = vpack.c.bf16 %v921, %v920
        %v954 = vunpack.c.l.b16 %v922
        %v955 = vunpack.c.h.b16 %v922
        %v956 = vunpack.c.l.b16 %v923
        %v957 = vunpack.c.h.b16 %v923
        %v958 = vunpack.c.l.b16 %v924
        %v959 = vunpack.c.h.b16 %v924
        %v960 = vunpack.c.l.b16 %v925
        %v961 = vunpack.c.h.b16 %v925
        %v962 = vunpack.c.l.b16 %v926
        %v963 = vunpack.c.h.b16 %v926
        %v964 = vunpack.c.l.b16 %v927
        %v965 = vunpack.c.h.b16 %v927
        %v966 = vunpack.c.l.b16 %v928
        %v967 = vunpack.c.h.b16 %v928
        %v968 = vunpack.c.l.b16 %v929
        %v969 = vunpack.c.h.b16 %v929
        %v970 = vunpack.c.l.b16 %v930
        %v971 = vunpack.c.h.b16 %v930
        %v972 = vunpack.c.l.b16 %v931
        %v973 = vunpack.c.h.b16 %v931
        %v974 = vunpack.c.l.b16 %v932
        %v975 = vunpack.c.h.b16 %v932
        %v976 = vunpack.c.l.b16 %v933
        %v977 = vunpack.c.h.b16 %v933
        %v978 = vunpack.c.l.b16 %v934
        %v979 = vunpack.c.h.b16 %v934
        %v980 = vunpack.c.l.b16 %v935
        %v981 = vunpack.c.h.b16 %v935
        %v982 = vunpack.c.l.b16 %v936
        %v983 = vunpack.c.h.b16 %v936
        %v984 = vunpack.c.l.b16 %v937
        %v985 = vunpack.c.h.b16 %v937
        %v986 = vpack.c.b16 %v954, %v954
        %v987 = vpack.c.b16 %v955, %v955
        %v988 = vpack.c.b16 %v956, %v956
        %v989 = vpack.c.b16 %v957, %v957
        %v990 = vpack.c.b16 %v958, %v958
        %v991 = vpack.c.b16 %v959, %v959
        %v992 = vpack.c.b16 %v960, %v960
        %v993 = vpack.c.b16 %v961, %v961
        %v994 = vpack.c.b16 %v962, %v962
        %v995 = vpack.c.b16 %v963, %v963
        %v996 = vpack.c.b16 %v964, %v964
        %v997 = vpack.c.b16 %v965, %v965
        %v998 = vpack.c.b16 %v966, %v966
        %v999 = vpack.c.b16 %v967, %v967
        %v1000 = vpack.c.b16 %v968, %v968
        %v1001 = vpack.c.b16 %v969, %v969
        %v1002 = vpack.c.b16 %v970, %v970
        %v1003 = vpack.c.b16 %v971, %v971
        %v1004 = vpack.c.b16 %v972, %v972
        %v1005 = vpack.c.b16 %v973, %v973
        %v1006 = vpack.c.b16 %v974, %v974
        %v1007 = vpack.c.b16 %v975, %v975
        %v1008 = vpack.c.b16 %v976, %v976
        %v1009 = vpack.c.b16 %v977, %v977
        %v1010 = vpack.c.b16 %v978, %v978
        %v1011 = vpack.c.b16 %v979, %v979
        %v1012 = vpack.c.b16 %v980, %v980
        %v1013 = vpack.c.b16 %v981, %v981
        %v1014 = vpack.c.b16 %v982, %v982
        %v1015 = vpack.c.b16 %v983, %v983
        %v1016 = vpack.c.b16 %v984, %v984
        %v1017 = vpack.c.b16 %v985, %v985
        %1050 = vst [vmem:[%s285] sm:$0xf] %v986
        %1051 = vst [vmem:[%s285 + $0x4] sm:$0xf] %v987
        %1052 = vst [vmem:[%s285 + $0x8] sm:$0xf] %v988
        %1053 = vst [vmem:[%s285 + $0xc] sm:$0xf] %v989
        %1054 = vst [vmem:[%s285 + $0x10] sm:$0xf] %v990
        %1055 = vst [vmem:[%s285 + $0x14] sm:$0xf] %v991
        %1056 = vst [vmem:[%s285 + $0x18] sm:$0xf] %v992
        %1057 = vst [vmem:[%s285 + $0x1c] sm:$0xf] %v993
        %1058 = vst [vmem:[%s285 + $0x20] sm:$0xf] %v994
        %1059 = vst [vmem:[%s285 + $0x24] sm:$0xf] %v995
        %1060 = vst [vmem:[%s285 + $0x28] sm:$0xf] %v996
        %1061 = vst [vmem:[%s285 + $0x2c] sm:$0xf] %v997
        %1062 = vst [vmem:[%s285 + $0x30] sm:$0xf] %v998
        %1063 = vst [vmem:[%s285 + $0x34] sm:$0xf] %v999
        %1064 = vst [vmem:[%s285 + $0x38] sm:$0xf] %v1000
        %1065 = vst [vmem:[%s285 + $0x3c] sm:$0xf] %v1001
        %1066 = vst [vmem:[%s285 + $0x40] sm:$0xf] %v1002
        %1067 = vst [vmem:[%s285 + $0x44] sm:$0xf] %v1003
        %1068 = vst [vmem:[%s285 + $0x48] sm:$0xf] %v1004
        %1069 = vst [vmem:[%s285 + $0x4c] sm:$0xf] %v1005
        %1070 = vst [vmem:[%s285 + $0x50] sm:$0xf] %v1006
        %1071 = vst [vmem:[%s285 + $0x54] sm:$0xf] %v1007
        %1072 = vst [vmem:[%s285 + $0x58] sm:$0xf] %v1008
        %1073 = vst [vmem:[%s285 + $0x5c] sm:$0xf] %v1009
        %1074 = vst [vmem:[%s285 + $0x60] sm:$0xf] %v1010
        %1075 = vst [vmem:[%s285 + $0x64] sm:$0xf] %v1011
        %1076 = vst [vmem:[%s285 + $0x68] sm:$0xf] %v1012
        %1077 = vst [vmem:[%s285 + $0x6c] sm:$0xf] %v1013
        %1078 = vst [vmem:[%s285 + $0x70] sm:$0xf] %v1014
        %1079 = vst [vmem:[%s285 + $0x74] sm:$0xf] %v1015
        %1080 = vst [vmem:[%s285 + $0x78] sm:$0xf] %v1016
        %1081 = vst [vmem:[%s285 + $0x7c] sm:$0xf] %v1017
      $region44: #{srfbn_forward.35} parent=35 // pred_fallthru
        _
      %s1082 = smul.u32 32, %s21
      %p1083 = scmp.lt.s32.totalorder %s1082, 63
      %s1084 = scalar_select %p1083, %s1082, 63
      %p1085 = scmp.lt.s32.totalorder %s22, 0
      %s1086 = scalar_select %p1085, %s22, 0
      %s1087 = sadd.s32 %s1086, %s1084
      %s1088 = smul.addr %s1087, 4
      %s1089 = scalar_lea.vmem %s4, %s1088
      // Predicated region
      $region45: #{srfbn_forward.35} parent=35 // pred_check
        %p1090 = pneg %p158
      $region46: #{srfbn_forward.35} parent=35 // pred_check_branch
        %1092 = sbr.rel (%p1090) target = $region48
      $region47: #{srfbn_forward.35} parent=35 // pred_region
        %s1093 = smul.u32 32, %s21
      $region48: #{srfbn_forward.35} parent=35 // pred_fallthru
        _
    $region36: #{srfbn_forward.35} parent=5 // pred_fallthru
      _
    %p1094 = scmp.le.s32.totalorder 2, %s11
    // Predicated region
    $region49: #{srfbn_forward.35} parent=5 // pred_check
      %p1095 = pneg %p1094
    $region50: #{srfbn_forward.35} parent=5 // pred_check_branch
      %1097 = sbr.rel (%p1095) target = $region52
    $region51: #{srfbn_forward.35} parent=5 // pred_region
      %s1098 = ssub.s32 %s11, 2
      // Predicated region
      $region53: #{srfbn_forward.35} parent=51 // pred_check
        %p1099 = pneg %p164
      $region54: #{srfbn_forward.35} parent=51 // pred_check_branch
        %1101 = sbr.rel (%p1099) target = $region56
      $region55: #{srfbn_forward.35} parent=51 // pred_region
        %s1102 = smul.u32 32, %s24
        %p1103 = scmp.lt.s32.totalorder %s1102, 63
        %s1104 = scalar_select %p1103, %s1102, 63
        %p1105 = scmp.lt.s32.totalorder %s25, 0
        %s1106 = scalar_select %p1105, %s25, 0
        %s1107 = sadd.s32 %s1106, %s1104
        %s1108 = smul.addr %s1107, 4
        %s1109 = scalar_lea.vmem %s4, %s1108
      $region56: #{srfbn_forward.35} parent=51 // pred_fallthru
        _
    $region52: #{srfbn_forward.35} parent=5 // pred_fallthru
      _
  $region6: #{srfbn_forward.35} parent=0 // loop_footer
    %s15 = sadd.s32 1, %s11
  $region7: #{srfbn_forward.35} parent=0 // loop_footer_branch
    %10 = sbr.rel target = $region3
  $region8: #{srfbn_forward.35} parent=0 // loop_exit
    _

// kernel: srfbn_forward.49
$region0: #{srfbn_forward.49}
  #allocation0 [shape = 'u32[]', space=smem, size = 0x4, offset = 0x4, fixed_abs, tag = 'smem constant byte address 0x4 - core index']
  #allocation1 [shape = 'u32[144,128]{1,0:T(1,128)}', space=vmem, size = 0x12000, scoped, tag = 'internal scratch']
  #allocation2 [shape = 'f32[256,128]{1,0:T(8,128)}', space=vmem, size = 0x20000, scoped, tag = 'scratch operand']
  %s0 = inlined_call_operand.vmem [shape: bf16[512,72], index: 0, kind: input, shape index: {}]
  %s1 = inlined_call_operand.vmem [shape: bf16[72,128], index: 1, kind: input, shape index: {}]
  %s2 = inlined_call_operand.vmem [shape: f32[1,128], index: 2, kind: input, shape index: {}]
  %s3 = inlined_call_operand.vmem [shape: f32[512,128], index: 3, kind: output, shape index: {}]
  %s4 = sld [smem:[#allocation0]]
  $region53: #{srfbn_forward.49} parent=0
    _
  %s6 = ssub.s32 1, %s4
  %s7 = scalar_select 0, %s6, %s4
  loop: start=0, step=1, limit=4
  $region2: #{srfbn_forward.49} parent=0 // loop_pre_header
    _
  $region3: #{srfbn_forward.49} parent=0 // loop_header
    %s9 = sphi 0, %s13
    %p10 = scmp.ge.s32.totalorder %s9, 4
    %s16 = sphi 0, %s35
    %s17 = sphi 0, %s31
    %s18 = sphi 0, %s27
    %s19 = sphi 0, %s16
    %s20 = sphi 0, %s17
    %s21 = sphi 0, %s18
    %s22 = sphi 0, %s19
    %s23 = sphi 0, %s20
    %s24 = sphi 0, %s21
    %s40 = sphi 0, %s42
    %s43 = sphi 0, %s40
    %s44 = sphi 0, %s43
    %s60 = sphi 0, %s44
    %s68 = sphi 0, %s70
    %s71 = sphi 0, %s68
    %s72 = sphi 0, %s71
    %s88 = sphi 0, %s72
    %s94 = sphi 0, %s96
    %s97 = sphi 0, %s94
    %s98 = sphi 0, %s97
    %s114 = sphi 0, %s98
    %s122 = sphi 0, %s124
    %s125 = sphi 0, %s122
    %s126 = sphi 0, %s125
    %s142 = sphi 0, %s126
  $region4: #{srfbn_forward.49} parent=0 // loop_header_branch
    %12 = sbr.rel (%p10) target = $region8
  $region5: #{srfbn_forward.49} parent=0 // loop_body
    %s14 = ssub.s32 %s9, 1
    %s15 = ssub.s32 %s9, 2
    %s25 = sadd.s32 1, %s18
    %p26 = scmp.ge.s32.totalorder %s25, 1
    %s27 = scalar_select %p26, 0, %s25
    %s28 = sadd.s32 1, %s17
    %s29 = scalar_select %p26, %s28, %s17
    %p30 = scmp.ge.s32.totalorder %s29, 1
    %s31 = scalar_select %p30, 0, %s29
    %s32 = sadd.s32 1, %s16
    %s33 = scalar_select %p30, %s32, %s16
    %p34 = scmp.ge.s32.totalorder %s33, 2
    %s35 = scalar_select %p34, 0, %s33
    %s36 = ssub.s32 %s16, %s35
    %s37 = ssub.s32 %s18, %s27
    %s38 = sor.u32 %s36, %s37
    %p39 = scmp.eq.s32.totalorder %s38, 0
    %s41 = sadd.s32 %s40, 1
    %s42 = scalar_select %p39, %s40, %s41
    %p45 = pneg %p39
    %p46 = scmp.eq.s32.totalorder %s9, 1
    %p47 = por %p45, %p46
    %p48 = scmp.ne.s32.totalorder %s40, %s43
    %p49 = scmp.eq.s32.totalorder %s9, 0
    %p50 = por %p48, %p49
    %p51 = scmp.ne.s32.totalorder %s40, %s43
    %p52 = scmp.eq.s32.totalorder %s14, 1
    %p53 = por %p51, %p52
    %p54 = scmp.ne.s32.totalorder %s43, %s44
    %p55 = scmp.eq.s32.totalorder %s14, 0
    %p56 = por %p54, %p55
    %p57 = scmp.ne.s32.totalorder %s43, %s44
    %p58 = scmp.eq.s32.totalorder %s15, 1
    %p59 = por %p57, %p58
    %p61 = scmp.ne.s32.totalorder %s44, %s60
    %p62 = scmp.eq.s32.totalorder %s15, 0
    %p63 = por %p61, %p62
    %s64 = ssub.s32 %s18, %s27
    %s65 = ssub.s32 %s17, %s31
    %s66 = sor.u32 %s64, %s65
    %p67 = scmp.eq.s32.totalorder %s66, 0
    %s69 = sadd.s32 %s68, 1
    %s70 = scalar_select %p67, %s68, %s69
    %p73 = pneg %p67
    %p74 = scmp.eq.s32.totalorder %s9, 1
    %p75 = por %p73, %p74
    %p76 = scmp.ne.s32.totalorder %s68, %s71
    %p77 = scmp.eq.s32.totalorder %s9, 0
    %p78 = por %p76, %p77
    %p79 = scmp.ne.s32.totalorder %s68, %s71
    %p80 = scmp.eq.s32.totalorder %s14, 1
    %p81 = por %p79, %p80
    %p82 = scmp.ne.s32.totalorder %s71, %s72
    %p83 = scmp.eq.s32.totalorder %s14, 0
    %p84 = por %p82, %p83
    %p85 = scmp.ne.s32.totalorder %s71, %s72
    %p86 = scmp.eq.s32.totalorder %s15, 1
    %p87 = por %p85, %p86
    %p89 = scmp.ne.s32.totalorder %s72, %s88
    %p90 = scmp.eq.s32.totalorder %s15, 0
    %p91 = por %p89, %p90
    %s92 = ssub.s32 %s17, %s31
    %p93 = scmp.eq.s32.totalorder %s92, 0
    %s95 = sadd.s32 %s94, 1
    %s96 = scalar_select %p93, %s94, %s95
    %p99 = pneg %p93
    %p100 = scmp.eq.s32.totalorder %s9, 1
    %p101 = por %p99, %p100
    %p102 = scmp.ne.s32.totalorder %s94, %s97
    %p103 = scmp.eq.s32.totalorder %s9, 0
    %p104 = por %p102, %p103
    %p105 = scmp.ne.s32.totalorder %s94, %s97
    %p106 = scmp.eq.s32.totalorder %s14, 1
    %p107 = por %p105, %p106
    %p108 = scmp.ne.s32.totalorder %s97, %s98
    %p109 = scmp.eq.s32.totalorder %s14, 0
    %p110 = por %p108, %p109
    %p111 = scmp.ne.s32.totalorder %s97, %s98
    %p112 = scmp.eq.s32.totalorder %s15, 1
    %p113 = por %p111, %p112
    %p115 = scmp.ne.s32.totalorder %s98, %s114
    %p116 = scmp.eq.s32.totalorder %s15, 0
    %p117 = por %p115, %p116
    %s118 = ssub.s32 %s16, %s35
    %s119 = ssub.s32 %s17, %s31
    %s120 = sor.u32 %s118, %s119
    %p121 = scmp.eq.s32.totalorder %s120, 0
    %s123 = sadd.s32 %s122, 1
    %s124 = scalar_select %p121, %s122, %s123
    %p127 = pneg %p121
    %p128 = scmp.eq.s32.totalorder %s9, 1
    %p129 = por %p127, %p128
    %p130 = scmp.ne.s32.totalorder %s122, %s125
    %p131 = scmp.eq.s32.totalorder %s9, 0
    %p132 = por %p130, %p131
    %p133 = scmp.ne.s32.totalorder %s122, %s125
    %p134 = scmp.eq.s32.totalorder %s14, 1
    %p135 = por %p133, %p134
    %p136 = scmp.ne.s32.totalorder %s125, %s126
    %p137 = scmp.eq.s32.totalorder %s14, 0
    %p138 = por %p136, %p137
    %p139 = scmp.ne.s32.totalorder %s125, %s126
    %p140 = scmp.eq.s32.totalorder %s15, 1
    %p141 = por %p139, %p140
    %p143 = scmp.ne.s32.totalorder %s126, %s142
    %p144 = scmp.eq.s32.totalorder %s15, 0
    %p145 = por %p143, %p144
    %p146 = scmp.le.s32.totalorder 1, %s9
    %p147 = scmp.lt.s32.totalorder %s9, 3
    %p148 = pnand %p146, %p147
    %p149 = pneg %p148
    // Predicated region
    $region9: #{srfbn_forward.49} parent=5 // pred_check
      _
    $region10: #{srfbn_forward.49} parent=5 // pred_check_branch
      %151 = sbr.rel (%p148) target = $region12
    $region11: #{srfbn_forward.49} parent=5 // pred_region
      %s152 = ssub.s32 %s9, 1
      // Predicated region
      $region13: #{srfbn_forward.49} parent=11 // pred_check
        %p153 = pneg %p84
      $region14: #{srfbn_forward.49} parent=11 // pred_check_branch
        %155 = sbr.rel (%p153) target = $region16
      $region15: #{srfbn_forward.49} parent=11 // pred_region
        %s156 = smul.u32 9, %s21
        %p157 = scmp.lt.s32.totalorder %s156, 8
        %s158 = scalar_select %p157, %s156, 8
        %p159 = scmp.lt.s32.totalorder %s20, 0
        %s160 = scalar_select %p159, %s20, 0
        %s161 = sadd.s32 %s160, %s158
        %s162 = smul.addr %s161, 4
        %s163 = scalar_lea.vmem %s1, %s162
        %s164 = smul.u32 9, %s21
      $region16: #{srfbn_forward.49} parent=11 // pred_fallthru
        _
      // Predicated region
      $region17: #{srfbn_forward.49} parent=11 // pred_check
        %p165 = pneg %p110
      $region18: #{srfbn_forward.49} parent=11 // pred_check_branch
        %167 = sbr.rel (%p165) target = $region20
      $region19: #{srfbn_forward.49} parent=11 // pred_region
        %p168 = scmp.lt.s32.totalorder %s20, 0
        %s169 = scalar_select %p168, %s20, 0
        %s170 = scalar_lea.vmem %s2, %s169
      $region20: #{srfbn_forward.49} parent=11 // pred_fallthru
        _
    $region12: #{srfbn_forward.49} parent=5 // pred_fallthru
      _
    %p171 = scmp.lt.s32.totalorder %s9, 2
    // Predicated region
    $region21: #{srfbn_forward.49} parent=5 // pred_check
      %p172 = pneg %p171
    $region22: #{srfbn_forward.49} parent=5 // pred_check_branch
      %174 = sbr.rel (%p172) target = $region24
    $region23: #{srfbn_forward.49} parent=5 // pred_region
      // Predicated region
      $region25: #{srfbn_forward.49} parent=23 // pred_check
        %p175 = pneg %p50
      $region26: #{srfbn_forward.49} parent=23 // pred_check_branch
        %177 = sbr.rel (%p175) target = $region28
      $region27: #{srfbn_forward.49} parent=23 // pred_region
        %s178 = smul.u32 32, %s16
        %p179 = scmp.lt.s32.totalorder %s178, 63
        %s180 = scalar_select %p179, %s178, 63
        %p181 = scmp.lt.s32.totalorder %s18, 0
        %s182 = scalar_select %p181, %s18, 0
        %s183 = sadd.s32 %s182, %s180
        %s184 = smul.addr %s183, 4
        %s185 = scalar_lea.vmem %s0, %s184
        %s186 = smul.u32 32, %s16
      $region28: #{srfbn_forward.49} parent=23 // pred_fallthru
        _
    $region24: #{srfbn_forward.49} parent=5 // pred_fallthru
      _
    %p187 = scmp.le.s32.totalorder 1, %s9
    %p188 = scmp.lt.s32.totalorder %s9, 3
    %p189 = pnand %p187, %p188
    %p190 = pneg %p189
    // Predicated region
    $region29: #{srfbn_forward.49} parent=5 // pred_check
      _
    $region30: #{srfbn_forward.49} parent=5 // pred_check_branch
      %192 = sbr.rel (%p189) target = $region32
    $region31: #{srfbn_forward.49} parent=5 // pred_region
      %s193 = ssub.s32 %s9, 1
      %s194 = smul.u32 32, %s19
      %p195 = scmp.lt.s32.totalorder %s194, 63
      %s196 = scalar_select %p195, %s194, 63
      %p197 = scmp.lt.s32.totalorder %s21, 0
      %s198 = scalar_select %p197, %s21, 0
      %s199 = sadd.s32 %s198, %s196
      %s200 = smul.addr %s199, 4
      %s201 = scalar_lea.vmem %s0, %s200
      %p202 = pneg %p56
      %p203 = pneg %p53
      %s204 = smul.u32 9, %s21
      %p205 = scmp.lt.s32.totalorder %s204, 8
      %s206 = scalar_select %p205, %s204, 8
      %p207 = scmp.lt.s32.totalorder %s20, 0
      %s208 = scalar_select %p207, %s20, 0
      %s209 = sadd.s32 %s208, %s206
      %s210 = smul.addr %s209, 4
      %s211 = scalar_lea.vmem %s1, %s210
      %p212 = pneg %p84
      %p213 = pneg %p81
      %p214 = scmp.lt.s32.totalorder %s20, 0
      %s215 = scalar_select %p214, %s20, 0
      %s216 = scalar_lea.vmem %s2, %s215
      %p217 = pneg %p110
      %p218 = pneg %p107
      %p219 = pneg %p138
      %p220 = pneg %p135
      %s221 = smul.u32 32, %s19
      %p222 = scmp.lt.s32.totalorder %s221, 63
      %s223 = scalar_select %p222, %s221, 63
      %p224 = scmp.lt.s32.totalorder %s20, 0
      %s225 = scalar_select %p224, %s20, 0
      %s226 = sadd.s32 %s225, %s223
      %s227 = smul.addr %s226, 8
      %s228 = scalar_lea.vmem %s3, %s227
      %s229 = smul.u32 32, %s19
      %p230 = scmp.lt.s32.totalorder %s229, 63
      %s231 = scalar_select %p230, %s229, 63
      %p232 = scmp.lt.s32.totalorder %s21, 0
      %s233 = scalar_select %p232, %s21, 0
      %s234 = sadd.s32 %s233, %s231
      %s235 = smul.addr %s234, 4
      %s236 = scalar_lea.vmem %s0, %s235
      %s237 = smul.u32 32, %s19
      %s238 = smul.u32 9, %s21
      %p239 = scmp.lt.s32.totalorder %s238, 8
      %s240 = scalar_select %p239, %s238, 8
      %p241 = scmp.lt.s32.totalorder %s20, 0
      %s242 = scalar_select %p241, %s20, 0
      %s243 = sadd.s32 %s242, %s240
      %s244 = smul.addr %s243, 4
      %s245 = scalar_lea.vmem %s1, %s244
      %s246 = smul.u32 9, %s21
      %p247 = scmp.lt.s32.totalorder %s20, 0
      %s248 = scalar_select %p247, %s20, 0
      %s249 = scalar_lea.vmem %s2, %s248
      %s250 = smul.u32 32, %s19
      %p251 = scmp.lt.s32.totalorder %s250, 63
      %s252 = scalar_select %p251, %s250, 63
      %p253 = scmp.lt.s32.totalorder %s20, 0
      %s254 = scalar_select %p253, %s20, 0
      %s255 = sadd.s32 %s254, %s252
      %s256 = smul.addr %s255, 8
      %s257 = scalar_lea.vmem %s3, %s256
      %s258 = smul.u32 32, %s19
      %p260 = scmp.eq.s32.totalorder %s21, 0
      // Predicated region
      $region33: #{srfbn_forward.49} parent=31 // pred_check
        %p261 = pneg %p260
      $region34: #{srfbn_forward.49} parent=31 // pred_check_branch
        %263 = sbr.rel (%p261) target = $region36
      $region35: #{srfbn_forward.49} parent=31 // pred_region
        %264 = vst [vmem:[#allocation2] sm:$0xff] 0.0
        %265 = vst [vmem:[#allocation2 + $0x8] sm:$0xff] 0.0
        %266 = vst [vmem:[#allocation2 + $0x10] sm:$0xff] 0.0
        %267 = vst [vmem:[#allocation2 + $0x18] sm:$0xff] 0.0
        %268 = vst [vmem:[#allocation2 + $0x20] sm:$0xff] 0.0
        %269 = vst [vmem:[#allocation2 + $0x28] sm:$0xff] 0.0
        %270 = vst [vmem:[#allocation2 + $0x30] sm:$0xff] 0.0
        %271 = vst [vmem:[#allocation2 + $0x38] sm:$0xff] 0.0
        %272 = vst [vmem:[#allocation2 + $0x40] sm:$0xff] 0.0
        %273 = vst [vmem:[#allocation2 + $0x48] sm:$0xff] 0.0
        %274 = vst [vmem:[#allocation2 + $0x50] sm:$0xff] 0.0
        %275 = vst [vmem:[#allocation2 + $0x58] sm:$0xff] 0.0
        %276 = vst [vmem:[#allocation2 + $0x60] sm:$0xff] 0.0
        %277 = vst [vmem:[#allocation2 + $0x68] sm:$0xff] 0.0
        %278 = vst [vmem:[#allocation2 + $0x70] sm:$0xff] 0.0
        %279 = vst [vmem:[#allocation2 + $0x78] sm:$0xff] 0.0
        %280 = vst [vmem:[#allocation2 + $0x80] sm:$0xff] 0.0
        %281 = vst [vmem:[#allocation2 + $0x88] sm:$0xff] 0.0
        %282 = vst [vmem:[#allocation2 + $0x90] sm:$0xff] 0.0
        %283 = vst [vmem:[#allocation2 + $0x98] sm:$0xff] 0.0
        %284 = vst [vmem:[#allocation2 + $0xa0] sm:$0xff] 0.0
        %285 = vst [vmem:[#allocation2 + $0xa8] sm:$0xff] 0.0
        %286 = vst [vmem:[#allocation2 + $0xb0] sm:$0xff] 0.0
        %287 = vst [vmem:[#allocation2 + $0xb8] sm:$0xff] 0.0
        %288 = vst [vmem:[#allocation2 + $0xc0] sm:$0xff] 0.0
        %289 = vst [vmem:[#allocation2 + $0xc8] sm:$0xff] 0.0
        %290 = vst [vmem:[#allocation2 + $0xd0] sm:$0xff] 0.0
        %291 = vst [vmem:[#allocation2 + $0xd8] sm:$0xff] 0.0
        %292 = vst [vmem:[#allocation2 + $0xe0] sm:$0xff] 0.0
        %293 = vst [vmem:[#allocation2 + $0xe8] sm:$0xff] 0.0
        %294 = vst [vmem:[#allocation2 + $0xf0] sm:$0xff] 0.0
        %295 = vst [vmem:[#allocation2 + $0xf8] sm:$0xff] 0.0
      $region36: #{srfbn_forward.49} parent=31 // pred_fallthru
        _
      %v296 = vld [vmem:[#allocation2] sm:$0xff]
      %v297 = vld [vmem:[#allocation2 + $0x8] sm:$0xff]
      %v298 = vld [vmem:[#allocation2 + $0x10] sm:$0xff]
      %v299 = vld [vmem:[#allocation2 + $0x18] sm:$0xff]
      %v300 = vld [vmem:[#allocation2 + $0x20] sm:$0xff]
      %v301 = vld [vmem:[#allocation2 + $0x28] sm:$0xff]
      %v302 = vld [vmem:[#allocation2 + $0x30] sm:$0xff]
      %v303 = vld [vmem:[#allocation2 + $0x38] sm:$0xff]
      %v304 = vld [vmem:[#allocation2 + $0x40] sm:$0xff]
      %v305 = vld [vmem:[#allocation2 + $0x48] sm:$0xff]
      %v306 = vld [vmem:[#allocation2 + $0x50] sm:$0xff]
      %v307 = vld [vmem:[#allocation2 + $0x58] sm:$0xff]
      %v308 = vld [vmem:[#allocation2 + $0x60] sm:$0xff]
      %v309 = vld [vmem:[#allocation2 + $0x68] sm:$0xff]
      %v310 = vld [vmem:[#allocation2 + $0x70] sm:$0xff]
      %v311 = vld [vmem:[#allocation2 + $0x78] sm:$0xff]
      %v312 = vld [vmem:[#allocation2 + $0x80] sm:$0xff]
      %v313 = vld [vmem:[#allocation2 + $0x88] sm:$0xff]
      %v314 = vld [vmem:[#allocation2 + $0x90] sm:$0xff]
      %v315 = vld [vmem:[#allocation2 + $0x98] sm:$0xff]
      %v316 = vld [vmem:[#allocation2 + $0xa0] sm:$0xff]
      %v317 = vld [vmem:[#allocation2 + $0xa8] sm:$0xff]
      %v318 = vld [vmem:[#allocation2 + $0xb0] sm:$0xff]
      %v319 = vld [vmem:[#allocation2 + $0xb8] sm:$0xff]
      %v320 = vld [vmem:[#allocation2 + $0xc0] sm:$0xff]
      %v321 = vld [vmem:[#allocation2 + $0xc8] sm:$0xff]
      %v322 = vld [vmem:[#allocation2 + $0xd0] sm:$0xff]
      %v323 = vld [vmem:[#allocation2 + $0xd8] sm:$0xff]
      %v324 = vld [vmem:[#allocation2 + $0xe0] sm:$0xff]
      %v325 = vld [vmem:[#allocation2 + $0xe8] sm:$0xff]
      %v326 = vld [vmem:[#allocation2 + $0xf0] sm:$0xff]
      %v327 = vld [vmem:[#allocation2 + $0xf8] sm:$0xff]
      %v328 = vld [vmem:[%s236] sm:$0xf]
      %v329 = vld [vmem:[%s236 + $0x4] sm:$0xf]
      %v330 = vld [vmem:[%s236 + $0x8] sm:$0xf]
      %v331 = vld [vmem:[%s236 + $0xc] sm:$0xf]
      %v332 = vld [vmem:[%s236 + $0x10] sm:$0xf]
      %v333 = vld [vmem:[%s236 + $0x14] sm:$0xf]
      %v334 = vld [vmem:[%s236 + $0x18] sm:$0xf]
      %v335 = vld [vmem:[%s236 + $0x1c] sm:$0xf]
      %v336 = vld [vmem:[%s236 + $0x20] sm:$0xf]
      %v337 = vld [vmem:[%s236 + $0x24] sm:$0xf]
      %v338 = vld [vmem:[%s236 + $0x28] sm:$0xf]
      %v339 = vld [vmem:[%s236 + $0x2c] sm:$0xf]
      %v340 = vld [vmem:[%s236 + $0x30] sm:$0xf]
      %v341 = vld [vmem:[%s236 + $0x34] sm:$0xf]
      %v342 = vld [vmem:[%s236 + $0x38] sm:$0xf]
      %v343 = vld [vmem:[%s236 + $0x3c] sm:$0xf]
      %v344 = vld [vmem:[%s236 + $0x40] sm:$0xf]
      %v345 = vld [vmem:[%s236 + $0x44] sm:$0xf]
      %v346 = vld [vmem:[%s236 + $0x48] sm:$0xf]
      %v347 = vld [vmem:[%s236 + $0x4c] sm:$0xf]
      %v348 = vld [vmem:[%s236 + $0x50] sm:$0xf]
      %v349 = vld [vmem:[%s236 + $0x54] sm:$0xf]
      %v350 = vld [vmem:[%s236 + $0x58] sm:$0xf]
      %v351 = vld [vmem:[%s236 + $0x5c] sm:$0xf]
      %v352 = vld [vmem:[%s236 + $0x60] sm:$0xf]
      %v353 = vld [vmem:[%s236 + $0x64] sm:$0xf]
      %v354 = vld [vmem:[%s236 + $0x68] sm:$0xf]
      %v355 = vld [vmem:[%s236 + $0x6c] sm:$0xf]
      %v356 = vld [vmem:[%s236 + $0x70] sm:$0xf]
      %v357 = vld [vmem:[%s236 + $0x74] sm:$0xf]
      %v358 = vld [vmem:[%s236 + $0x78] sm:$0xf]
      %v359 = vld [vmem:[%s236 + $0x7c] sm:$0xf]
      %v360 = vld [vmem:[%s245] sm:$0xf]
      %v361 = vld [vmem:[%s245 + $0x4] sm:$0xf]
      %v362 = vld [vmem:[%s245 + $0x8] sm:$0xf]
      %v363 = vld [vmem:[%s245 + $0xc] sm:$0xf]
      %v364 = vld [vmem:[%s245 + $0x10] sm:$0xf]
      %v365 = vld [vmem:[%s245 + $0x14] sm:$0xf]
      %v366 = vld [vmem:[%s245 + $0x18] sm:$0xf]
      %v367 = vld [vmem:[%s245 + $0x1c] sm:$0xf]
      %v368 = vld [vmem:[%s245 + $0x20] sm:$0xf]
      %v401 = vunpack.c.l.b16 %v328
      %v402 = vunpack.c.l.b16 %v329
      %v403 = vunpack.c.l.b16 %v330
      %v404 = vunpack.c.l.b16 %v331
      %v405 = vunpack.c.l.b16 %v332
      %v406 = vunpack.c.l.b16 %v333
      %v407 = vunpack.c.l.b16 %v334
      %v408 = vunpack.c.l.b16 %v335
      %v409 = vunpack.c.l.b16 %v336
      %v410 = vunpack.c.l.b16 %v337
      %v411 = vunpack.c.l.b16 %v338
      %v412 = vunpack.c.l.b16 %v339
      %v413 = vunpack.c.l.b16 %v340
      %v414 = vunpack.c.l.b16 %v341
      %v415 = vunpack.c.l.b16 %v342
      %v416 = vunpack.c.l.b16 %v343
      %v417 = vunpack.c.l.b16 %v344
      %v418 = vunpack.c.l.b16 %v345
      %v419 = vunpack.c.l.b16 %v346
      %v420 = vunpack.c.l.b16 %v347
      %v421 = vunpack.c.l.b16 %v348
      %v422 = vunpack.c.l.b16 %v349
      %v423 = vunpack.c.l.b16 %v350
      %v424 = vunpack.c.l.b16 %v351
      %v425 = vunpack.c.l.b16 %v352
      %v426 = vunpack.c.l.b16 %v353
      %v427 = vunpack.c.l.b16 %v354
      %v428 = vunpack.c.l.b16 %v355
      %v429 = vunpack.c.l.b16 %v356
      %v430 = vunpack.c.l.b16 %v357
      %v431 = vunpack.c.l.b16 %v358
      %v432 = vunpack.c.l.b16 %v359
      %v433 = vpack.c.b16 %v402, %v401
      %v434 = vpack.c.b16 %v404, %v403
      %v435 = vpack.c.b16 %v406, %v405
      %v436 = vpack.c.b16 %v408, %v407
      %v437 = vpack.c.b16 %v410, %v409
      %v438 = vpack.c.b16 %v412, %v411
      %v439 = vpack.c.b16 %v414, %v413
      %v440 = vpack.c.b16 %v416, %v415
      %v441 = vpack.c.b16 %v418, %v417
      %v442 = vpack.c.b16 %v420, %v419
      %v443 = vpack.c.b16 %v422, %v421
      %v444 = vpack.c.b16 %v424, %v423
      %v445 = vpack.c.b16 %v426, %v425
      %v446 = vpack.c.b16 %v428, %v427
      %v447 = vpack.c.b16 %v430, %v429
      %v448 = vpack.c.b16 %v432, %v431
      %v458 = vunpack.c.l.b16 %v360
      %v459 = vunpack.c.l.b16 %v361
      %v460 = vunpack.c.l.b16 %v362
      %v461 = vunpack.c.l.b16 %v363
      %v462 = vunpack.c.l.b16 %v364
      %v463 = vunpack.c.l.b16 %v365
      %v464 = vunpack.c.l.b16 %v366
      %v465 = vunpack.c.l.b16 %v367
      %v466 = vunpack.c.l.b16 %v368
      %v467 = vpack.c.b16 %v459, %v458
      %v468 = vpack.c.b16 %v461, %v460
      %v469 = vpack.c.b16 %v463, %v462
      %v470 = vpack.c.b16 %v465, %v464
      %v471 = vpack.c.b16 %v466, %v466
      %vm476 = vcmask 588800
      %v478 = vsel %vm476, %v433, 0
      %v481 = vsel %vm476, %v434, 0
      %v484 = vsel %vm476, %v435, 0
      %v487 = vsel %vm476, %v436, 0
      %v490 = vsel %vm476, %v437, 0
      %v493 = vsel %vm476, %v438, 0
      %v496 = vsel %vm476, %v439, 0
      %v499 = vsel %vm476, %v440, 0
      %v502 = vsel %vm476, %v441, 0
      %v505 = vsel %vm476, %v442, 0
      %v508 = vsel %vm476, %v443, 0
      %v511 = vsel %vm476, %v444, 0
      %v514 = vsel %vm476, %v445, 0
      %v517 = vsel %vm476, %v446, 0
      %v520 = vsel %vm476, %v447, 0
      %v523 = vsel %vm476, %v448, 0
      %vm525 = vcmask 1043456
      %v527 = vsel %vm525, %v471, 0
      %529 = vmatprep.subr.bf16.mxu0 0
      %530 = vmatpush1.bf16.msra.mxu0 %v467
      %531 = vmatprep.subr.bf16.mxu0 0
      %532 = vmatpush1.bf16.msra.mxu0 %v468
      %533 = vmatprep.subr.bf16.mxu0 0
      %534 = vmatpush1.bf16.msra.mxu0 %v469
      %535 = vmatprep.subr.bf16.mxu0 0
      %536 = vmatpush1.bf16.msra.mxu0 %v470
      %537 = vmatprep.subr.bf16.mxu0 0
      %538 = vmatpush1.bf16.msra.mxu0 %v527
      %539 = vmatprep.subr.bf16.mxu0 0
      %540 = vmatpush1.bf16.msra.mxu0 0
      %541 = vmatprep.subr.bf16.mxu0 0
      %542 = vmatpush1.bf16.msra.mxu0 0
      %543 = vmatprep.subr.bf16.mxu0 0
      %544 = vmatpush1.bf16.msra.mxu0 0
      %545 = vmatprep.subr.bf16.mxu0 0
      %546 = vmatpush1.bf16.msra.mxu0 0
      %547 = vmatprep.subr.bf16.mxu0 0
      %548 = vmatpush1.bf16.msra.mxu0 0
      %549 = vmatprep.subr.bf16.mxu0 0
      %550 = vmatpush1.bf16.msra.mxu0 0
      %551 = vmatprep.subr.bf16.mxu0 0
      %552 = vmatpush1.bf16.msra.mxu0 0
      %553 = vmatprep.subr.bf16.mxu0 0
      %554 = vmatpush1.bf16.msra.mxu0 0
      %555 = vmatprep.subr.bf16.mxu0 0
      %556 = vmatpush1.bf16.msra.mxu0 0
      %557 = vmatprep.subr.bf16.mxu0 0
      %558 = vmatpush1.bf16.msra.mxu0 0
      %559 = vmatprep.subr.bf16.mxu0 0
      %560 = vmatpush1.bf16.msra.mxu0 0
      %561 = vmatprep.mubr.bf16.mxu0 0
      %562 = vmatmul.mubr.bf16.gmra.mrb[0].mxu0 %v478
      %v563 = vpop.f32.mrb[0].mxu0
      %v564 = vadd.f32 0.0, %v563
      %v565 = vpop.f32.mrb[0].mxu0
      %v566 = vpop.f32.mrb[0].mxu0
      %v567 = vadd.f32 0.0, %v566
      %v568 = vpop.f32.mrb[0].mxu0
      %569 = vmatprep.mubr.bf16.mxu0 0
      %570 = vmatmul.mubr.bf16.gmra.mrb[0].mxu0 %v481
      %v571 = vpop.f32.mrb[0].mxu0
      %v572 = vadd.f32 0.0, %v571
      %v573 = vpop.f32.mrb[0].mxu0
      %v574 = vpop.f32.mrb[0].mxu0
      %v575 = vadd.f32 0.0, %v574
      %v576 = vpop.f32.mrb[0].mxu0
      %577 = vmatprep.mubr.bf16.mxu0 0
      %578 = vmatmul.mubr.bf16.gmra.mrb[0].mxu0 %v484
      %v579 = vpop.f32.mrb[0].mxu0
      %v580 = vadd.f32 0.0, %v579
      %v581 = vpop.f32.mrb[0].mxu0
      %v582 = vpop.f32.mrb[0].mxu0
      %v583 = vadd.f32 0.0, %v582
      %v584 = vpop.f32.mrb[0].mxu0
      %585 = vmatprep.mubr.bf16.mxu0 0
      %586 = vmatmul.mubr.bf16.gmra.mrb[0].mxu0 %v487
      %v587 = vpop.f32.mrb[0].mxu0
      %v588 = vadd.f32 0.0, %v587
      %v589 = vpop.f32.mrb[0].mxu0
      %v590 = vpop.f32.mrb[0].mxu0
      %v591 = vadd.f32 0.0, %v590
      %v592 = vpop.f32.mrb[0].mxu0
      %593 = vmatprep.mubr.bf16.mxu0 0
      %594 = vmatmul.mubr.bf16.gmra.mrb[0].mxu0 %v490
      %v595 = vpop.f32.mrb[0].mxu0
      %v596 = vadd.f32 0.0, %v595
      %v597 = vpop.f32.mrb[0].mxu0
      %v598 = vpop.f32.mrb[0].mxu0
      %v599 = vadd.f32 0.0, %v598
      %v600 = vpop.f32.mrb[0].mxu0
      %601 = vmatprep.mubr.bf16.mxu0 0
      %602 = vmatmul.mubr.bf16.gmra.mrb[0].mxu0 %v493
      %v603 = vpop.f32.mrb[0].mxu0
      %v604 = vadd.f32 0.0, %v603
      %v605 = vpop.f32.mrb[0].mxu0
      %v606 = vpop.f32.mrb[0].mxu0
      %v607 = vadd.f32 0.0, %v606
      %v608 = vpop.f32.mrb[0].mxu0
      %609 = vmatprep.mubr.bf16.mxu0 0
      %610 = vmatmul.mubr.bf16.gmra.mrb[0].mxu0 %v496
      %v611 = vpop.f32.mrb[0].mxu0
      %v612 = vadd.f32 0.0, %v611
      %v613 = vpop.f32.mrb[0].mxu0
      %v614 = vpop.f32.mrb[0].mxu0
      %v615 = vadd.f32 0.0, %v614
      %v616 = vpop.f32.mrb[0].mxu0
      %617 = vmatprep.mubr.bf16.mxu0 0
      %618 = vmatmul.mubr.bf16.gmra.mrb[0].mxu0 %v499
      %v619 = vpop.f32.mrb[0].mxu0
      %v620 = vadd.f32 0.0, %v619
      %v621 = vpop.f32.mrb[0].mxu0
      %v622 = vpop.f32.mrb[0].mxu0
      %v623 = vadd.f32 0.0, %v622
      %v624 = vpop.f32.mrb[0].mxu0
      %625 = vmatprep.mubr.bf16.mxu0 0
      %626 = vmatmul.mubr.bf16.gmra.mrb[0].mxu0 %v502
      %v627 = vpop.f32.mrb[0].mxu0
      %v628 = vadd.f32 0.0, %v627
      %v629 = vpop.f32.mrb[0].mxu0
      %v630 = vpop.f32.mrb[0].mxu0
      %v631 = vadd.f32 0.0, %v630
      %v632 = vpop.f32.mrb[0].mxu0
      %633 = vmatprep.mubr.bf16.mxu0 0
      %634 = vmatmul.mubr.bf16.gmra.mrb[0].mxu0 %v505
      %v635 = vpop.f32.mrb[0].mxu0
      %v636 = vadd.f32 0.0, %v635
      %v637 = vpop.f32.mrb[0].mxu0
      %v638 = vpop.f32.mrb[0].mxu0
      %v639 = vadd.f32 0.0, %v638
      %v640 = vpop.f32.mrb[0].mxu0
      %641 = vmatprep.mubr.bf16.mxu0 0
      %642 = vmatmul.mubr.bf16.gmra.mrb[0].mxu0 %v508
      %v643 = vpop.f32.mrb[0].mxu0
      %v644 = vadd.f32 0.0, %v643
      %v645 = vpop.f32.mrb[0].mxu0
      %v646 = vpop.f32.mrb[0].mxu0
      %v647 = vadd.f32 0.0, %v646
      %v648 = vpop.f32.mrb[0].mxu0
      %649 = vmatprep.mubr.bf16.mxu0 0
      %650 = vmatmul.mubr.bf16.gmra.mrb[0].mxu0 %v511
      %v651 = vpop.f32.mrb[0].mxu0
      %v652 = vadd.f32 0.0, %v651
      %v653 = vpop.f32.mrb[0].mxu0
      %v654 = vpop.f32.mrb[0].mxu0
      %v655 = vadd.f32 0.0, %v654
      %v656 = vpop.f32.mrb[0].mxu0
      %657 = vmatprep.mubr.bf16.mxu0 0
      %658 = vmatmul.mubr.bf16.gmra.mrb[0].mxu0 %v514
      %v659 = vpop.f32.mrb[0].mxu0
      %v660 = vadd.f32 0.0, %v659
      %v661 = vpop.f32.mrb[0].mxu0
      %v662 = vpop.f32.mrb[0].mxu0
      %v663 = vadd.f32 0.0, %v662
      %v664 = vpop.f32.mrb[0].mxu0
      %665 = vmatprep.mubr.bf16.mxu0 0
      %666 = vmatmul.mubr.bf16.gmra.mrb[0].mxu0 %v517
      %v667 = vpop.f32.mrb[0].mxu0
      %v668 = vadd.f32 0.0, %v667
      %v669 = vpop.f32.mrb[0].mxu0
      %v670 = vpop.f32.mrb[0].mxu0
      %v671 = vadd.f32 0.0, %v670
      %v672 = vpop.f32.mrb[0].mxu0
      %673 = vmatprep.mubr.bf16.mxu0 0
      %674 = vmatmul.mubr.bf16.gmra.mrb[0].mxu0 %v520
      %v675 = vpop.f32.mrb[0].mxu0
      %v676 = vadd.f32 0.0, %v675
      %v677 = vpop.f32.mrb[0].mxu0
      %v678 = vpop.f32.mrb[0].mxu0
      %v679 = vadd.f32 0.0, %v678
      %v680 = vpop.f32.mrb[0].mxu0
      %681 = vmatprep.mubr.bf16.mxu0 0
      %682 = vmatmul.mubr.bf16.gmra.mrb[0].mxu0 %v523
      %v683 = vpop.f32.mrb[0].mxu0
      %v684 = vadd.f32 0.0, %v683
      %v685 = vpop.f32.mrb[0].mxu0
      %v686 = vpop.f32.mrb[0].mxu0
      %v687 = vadd.f32 0.0, %v686
      %v688 = vpop.f32.mrb[0].mxu0
      %689 = vdwg.mxu0
      %v690 = vadd.f32 %v296, %v564
      %v691 = vadd.f32 %v297, %v567
      %v692 = vadd.f32 %v298, %v572
      %v693 = vadd.f32 %v299, %v575
      %v694 = vadd.f32 %v300, %v580
      %v695 = vadd.f32 %v301, %v583
      %v696 = vadd.f32 %v302, %v588
      %v697 = vadd.f32 %v303, %v591
      %v698 = vadd.f32 %v304, %v596
      %v699 = vadd.f32 %v305, %v599
      %v700 = vadd.f32 %v306, %v604
      %v701 = vadd.f32 %v307, %v607
      %v702 = vadd.f32 %v308, %v612
      %v703 = vadd.f32 %v309, %v615
      %v704 = vadd.f32 %v310, %v620
      %v705 = vadd.f32 %v311, %v623
      %v706 = vadd.f32 %v312, %v628
      %v707 = vadd.f32 %v313, %v631
      %v708 = vadd.f32 %v314, %v636
      %v709 = vadd.f32 %v315, %v639
      %v710 = vadd.f32 %v316, %v644
      %v711 = vadd.f32 %v317, %v647
      %v712 = vadd.f32 %v318, %v652
      %v713 = vadd.f32 %v319, %v655
      %v714 = vadd.f32 %v320, %v660
      %v715 = vadd.f32 %v321, %v663
      %v716 = vadd.f32 %v322, %v668
      %v717 = vadd.f32 %v323, %v671
      %v718 = vadd.f32 %v324, %v676
      %v719 = vadd.f32 %v325, %v679
      %v720 = vadd.f32 %v326, %v684
      %v721 = vadd.f32 %v327, %v687
      %722 = vst [vmem:[#allocation2] sm:$0xff] %v690
      %723 = vst [vmem:[#allocation2 + $0x8] sm:$0xff] %v691
      %724 = vst [vmem:[#allocation2 + $0x10] sm:$0xff] %v692
      %725 = vst [vmem:[#allocation2 + $0x18] sm:$0xff] %v693
      %726 = vst [vmem:[#allocation2 + $0x20] sm:$0xff] %v694
      %727 = vst [vmem:[#allocation2 + $0x28] sm:$0xff] %v695
      %728 = vst [vmem:[#allocation2 + $0x30] sm:$0xff] %v696
      %729 = vst [vmem:[#allocation2 + $0x38] sm:$0xff] %v697
      %730 = vst [vmem:[#allocation2 + $0x40] sm:$0xff] %v698
      %731 = vst [vmem:[#allocation2 + $0x48] sm:$0xff] %v699
      %732 = vst [vmem:[#allocation2 + $0x50] sm:$0xff] %v700
      %733 = vst [vmem:[#allocation2 + $0x58] sm:$0xff] %v701
      %734 = vst [vmem:[#allocation2 + $0x60] sm:$0xff] %v702
      %735 = vst [vmem:[#allocation2 + $0x68] sm:$0xff] %v703
      %736 = vst [vmem:[#allocation2 + $0x70] sm:$0xff] %v704
      %737 = vst [vmem:[#allocation2 + $0x78] sm:$0xff] %v705
      %738 = vst [vmem:[#allocation2 + $0x80] sm:$0xff] %v706
      %739 = vst [vmem:[#allocation2 + $0x88] sm:$0xff] %v707
      %740 = vst [vmem:[#allocation2 + $0x90] sm:$0xff] %v708
      %741 = vst [vmem:[#allocation2 + $0x98] sm:$0xff] %v709
      %742 = vst [vmem:[#allocation2 + $0xa0] sm:$0xff] %v710
      %743 = vst [vmem:[#allocation2 + $0xa8] sm:$0xff] %v711
      %744 = vst [vmem:[#allocation2 + $0xb0] sm:$0xff] %v712
      %745 = vst [vmem:[#allocation2 + $0xb8] sm:$0xff] %v713
      %746 = vst [vmem:[#allocation2 + $0xc0] sm:$0xff] %v714
      %747 = vst [vmem:[#allocation2 + $0xc8] sm:$0xff] %v715
      %748 = vst [vmem:[#allocation2 + $0xd0] sm:$0xff] %v716
      %749 = vst [vmem:[#allocation2 + $0xd8] sm:$0xff] %v717
      %750 = vst [vmem:[#allocation2 + $0xe0] sm:$0xff] %v718
      %751 = vst [vmem:[#allocation2 + $0xe8] sm:$0xff] %v719
      %752 = vst [vmem:[#allocation2 + $0xf0] sm:$0xff] %v720
      %753 = vst [vmem:[#allocation2 + $0xf8] sm:$0xff] %v721
      // Predicated region
      $region37: #{srfbn_forward.49} parent=31 // pred_check
        %p754 = pneg %p260
      $region38: #{srfbn_forward.49} parent=31 // pred_check_branch
        %756 = sbr.rel (%p754) target = $region40
      $region39: #{srfbn_forward.49} parent=31 // pred_region
        %v757 = vld [vmem:[#allocation2] sm:$0xff]
        %v758 = vld [vmem:[#allocation2 + $0x8] sm:$0xff]
        %v759 = vld [vmem:[#allocation2 + $0x10] sm:$0xff]
        %v760 = vld [vmem:[#allocation2 + $0x18] sm:$0xff]
        %v761 = vld [vmem:[#allocation2 + $0x20] sm:$0xff]
        %v762 = vld [vmem:[#allocation2 + $0x28] sm:$0xff]
        %v763 = vld [vmem:[#allocation2 + $0x30] sm:$0xff]
        %v764 = vld [vmem:[#allocation2 + $0x38] sm:$0xff]
        %v765 = vld [vmem:[#allocation2 + $0x40] sm:$0xff]
        %v766 = vld [vmem:[#allocation2 + $0x48] sm:$0xff]
        %v767 = vld [vmem:[#allocation2 + $0x50] sm:$0xff]
        %v768 = vld [vmem:[#allocation2 + $0x58] sm:$0xff]
        %v769 = vld [vmem:[#allocation2 + $0x60] sm:$0xff]
        %v770 = vld [vmem:[#allocation2 + $0x68] sm:$0xff]
        %v771 = vld [vmem:[#allocation2 + $0x70] sm:$0xff]
        %v772 = vld [vmem:[#allocation2 + $0x78] sm:$0xff]
        %v773 = vld [vmem:[#allocation2 + $0x80] sm:$0xff]
        %v774 = vld [vmem:[#allocation2 + $0x88] sm:$0xff]
        %v775 = vld [vmem:[#allocation2 + $0x90] sm:$0xff]
        %v776 = vld [vmem:[#allocation2 + $0x98] sm:$0xff]
        %v777 = vld [vmem:[#allocation2 + $0xa0] sm:$0xff]
        %v778 = vld [vmem:[#allocation2 + $0xa8] sm:$0xff]
        %v779 = vld [vmem:[#allocation2 + $0xb0] sm:$0xff]
        %v780 = vld [vmem:[#allocation2 + $0xb8] sm:$0xff]
        %v781 = vld [vmem:[#allocation2 + $0xc0] sm:$0xff]
        %v782 = vld [vmem:[#allocation2 + $0xc8] sm:$0xff]
        %v783 = vld [vmem:[#allocation2 + $0xd0] sm:$0xff]
        %v784 = vld [vmem:[#allocation2 + $0xd8] sm:$0xff]
        %v785 = vld [vmem:[#allocation2 + $0xe0] sm:$0xff]
        %v786 = vld [vmem:[#allocation2 + $0xe8] sm:$0xff]
        %v787 = vld [vmem:[#allocation2 + $0xf0] sm:$0xff]
        %v788 = vld [vmem:[#allocation2 + $0xf8] sm:$0xff]
        %v789 = vld [vmem:[%s249] sm:$0x1]
        %v791 = vlaneseq
        %v792 = vshrl.u32 %v791, 7
        %v793 = vsub.s32 0, %v792
        %v794 = vrot.slane %v789, %v793
        %v796 = vadd.f32 %v757, %v794
        %v797 = vadd.f32 %v758, %v794
        %v798 = vadd.f32 %v759, %v794
        %v799 = vadd.f32 %v760, %v794
        %v800 = vadd.f32 %v761, %v794
        %v801 = vadd.f32 %v762, %v794
        %v802 = vadd.f32 %v763, %v794
        %v803 = vadd.f32 %v764, %v794
        %v804 = vadd.f32 %v765, %v794
        %v805 = vadd.f32 %v766, %v794
        %v806 = vadd.f32 %v767, %v794
        %v807 = vadd.f32 %v768, %v794
        %v808 = vadd.f32 %v769, %v794
        %v809 = vadd.f32 %v770, %v794
        %v810 = vadd.f32 %v771, %v794
        %v811 = vadd.f32 %v772, %v794
        %v812 = vadd.f32 %v773, %v794
        %v813 = vadd.f32 %v774, %v794
        %v814 = vadd.f32 %v775, %v794
        %v815 = vadd.f32 %v776, %v794
        %v816 = vadd.f32 %v777, %v794
        %v817 = vadd.f32 %v778, %v794
        %v818 = vadd.f32 %v779, %v794
        %v819 = vadd.f32 %v780, %v794
        %v820 = vadd.f32 %v781, %v794
        %v821 = vadd.f32 %v782, %v794
        %v822 = vadd.f32 %v783, %v794
        %v823 = vadd.f32 %v784, %v794
        %v824 = vadd.f32 %v785, %v794
        %v825 = vadd.f32 %v786, %v794
        %v826 = vadd.f32 %v787, %v794
        %v827 = vadd.f32 %v788, %v794
        %828 = vst [vmem:[%s257] sm:$0xff] %v796
        %829 = vst [vmem:[%s257 + $0x8] sm:$0xff] %v797
        %830 = vst [vmem:[%s257 + $0x10] sm:$0xff] %v798
        %831 = vst [vmem:[%s257 + $0x18] sm:$0xff] %v799
        %832 = vst [vmem:[%s257 + $0x20] sm:$0xff] %v800
        %833 = vst [vmem:[%s257 + $0x28] sm:$0xff] %v801
        %834 = vst [vmem:[%s257 + $0x30] sm:$0xff] %v802
        %835 = vst [vmem:[%s257 + $0x38] sm:$0xff] %v803
        %836 = vst [vmem:[%s257 + $0x40] sm:$0xff] %v804
        %837 = vst [vmem:[%s257 + $0x48] sm:$0xff] %v805
        %838 = vst [vmem:[%s257 + $0x50] sm:$0xff] %v806
        %839 = vst [vmem:[%s257 + $0x58] sm:$0xff] %v807
        %840 = vst [vmem:[%s257 + $0x60] sm:$0xff] %v808
        %841 = vst [vmem:[%s257 + $0x68] sm:$0xff] %v809
        %842 = vst [vmem:[%s257 + $0x70] sm:$0xff] %v810
        %843 = vst [vmem:[%s257 + $0x78] sm:$0xff] %v811
        %844 = vst [vmem:[%s257 + $0x80] sm:$0xff] %v812
        %845 = vst [vmem:[%s257 + $0x88] sm:$0xff] %v813
        %846 = vst [vmem:[%s257 + $0x90] sm:$0xff] %v814
        %847 = vst [vmem:[%s257 + $0x98] sm:$0xff] %v815
        %848 = vst [vmem:[%s257 + $0xa0] sm:$0xff] %v816
        %849 = vst [vmem:[%s257 + $0xa8] sm:$0xff] %v817
        %850 = vst [vmem:[%s257 + $0xb0] sm:$0xff] %v818
        %851 = vst [vmem:[%s257 + $0xb8] sm:$0xff] %v819
        %852 = vst [vmem:[%s257 + $0xc0] sm:$0xff] %v820
        %853 = vst [vmem:[%s257 + $0xc8] sm:$0xff] %v821
        %854 = vst [vmem:[%s257 + $0xd0] sm:$0xff] %v822
        %855 = vst [vmem:[%s257 + $0xd8] sm:$0xff] %v823
        %856 = vst [vmem:[%s257 + $0xe0] sm:$0xff] %v824
        %857 = vst [vmem:[%s257 + $0xe8] sm:$0xff] %v825
        %858 = vst [vmem:[%s257 + $0xf0] sm:$0xff] %v826
        %859 = vst [vmem:[%s257 + $0xf8] sm:$0xff] %v827
      $region40: #{srfbn_forward.49} parent=31 // pred_fallthru
        _
      %s860 = smul.u32 32, %s19
      %p861 = scmp.lt.s32.totalorder %s860, 63
      %s862 = scalar_select %p861, %s860, 63
      %p863 = scmp.lt.s32.totalorder %s20, 0
      %s864 = scalar_select %p863, %s20, 0
      %s865 = sadd.s32 %s864, %s862
      %s866 = smul.addr %s865, 8
      %s867 = scalar_lea.vmem %s3, %s866
      // Predicated region
      $region41: #{srfbn_forward.49} parent=31 // pred_check
        %p868 = pneg %p135
      $region42: #{srfbn_forward.49} parent=31 // pred_check_branch
        %870 = sbr.rel (%p868) target = $region44
      $region43: #{srfbn_forward.49} parent=31 // pred_region
        %s871 = smul.u32 32, %s19
      $region44: #{srfbn_forward.49} parent=31 // pred_fallthru
        _
    $region32: #{srfbn_forward.49} parent=5 // pred_fallthru
      _
    %p872 = scmp.le.s32.totalorder 2, %s9
    // Predicated region
    $region45: #{srfbn_forward.49} parent=5 // pred_check
      %p873 = pneg %p872
    $region46: #{srfbn_forward.49} parent=5 // pred_check_branch
      %875 = sbr.rel (%p873) target = $region48
    $region47: #{srfbn_forward.49} parent=5 // pred_region
      %s876 = ssub.s32 %s9, 2
      // Predicated region
      $region49: #{srfbn_forward.49} parent=47 // pred_check
        %p877 = pneg %p141
      $region50: #{srfbn_forward.49} parent=47 // pred_check_branch
        %879 = sbr.rel (%p877) target = $region52
      $region51: #{srfbn_forward.49} parent=47 // pred_region
        %s880 = smul.u32 32, %s22
        %p881 = scmp.lt.s32.totalorder %s880, 63
        %s882 = scalar_select %p881, %s880, 63
        %p883 = scmp.lt.s32.totalorder %s23, 0
        %s884 = scalar_select %p883, %s23, 0
        %s885 = sadd.s32 %s884, %s882
        %s886 = smul.addr %s885, 8
        %s887 = scalar_lea.vmem %s3, %s886
      $region52: #{srfbn_forward.49} parent=47 // pred_fallthru
        _
    $region48: #{srfbn_forward.49} parent=5 // pred_fallthru
      _
  $region6: #{srfbn_forward.49} parent=0 // loop_footer
    %s13 = sadd.s32 1, %s9
  $region7: #{srfbn_forward.49} parent=0 // loop_footer_branch
    %8 = sbr.rel target = $region3
  $region8: #{srfbn_forward.49} parent=0 // loop_exit
    _

// kernel: srfbn_forward.26
$region0: #{srfbn_forward.26}
  #allocation0 [shape = 'u32[]', space=smem, size = 0x4, offset = 0x4, fixed_abs, tag = 'smem constant byte address 0x4 - core index']
  #allocation1 [shape = 'u32[144,128]{1,0:T(1,128)}', space=vmem, size = 0x12000, scoped, tag = 'internal scratch']
  #allocation2 [shape = 'f32[8,128]{1,0:T(8,128)}', space=vmem, size = 0x1000, scoped, tag = 'scratch operand']
  %s0 = inlined_call_operand.vmem [shape: f32[8,64], index: 0, kind: input, shape index: {}]
  %s1 = inlined_call_operand.vmem [shape: f32[64,256], index: 1, kind: input, shape index: {}]
  %s2 = inlined_call_operand.vmem [shape: f32[8,256], index: 2, kind: output, shape index: {}]
  %s3 = sld [smem:[#allocation0]]
  $region87: #{srfbn_forward.26} parent=0
    _
  %s5 = ssub.s32 1, %s3
  %s6 = scalar_select 0, %s5, %s3
  $region1: #{srfbn_forward.26} parent=0
    #allocation3 [shape = 'u8[65536]{0}', space=vmem, size = 0x10000, scoped, tag = 'input window, operand 1']
    loop: start=0, step=1, limit=4
    $region2: #{srfbn_forward.26} parent=1 // loop_pre_header
      _
    $region3: #{srfbn_forward.26} parent=1 // loop_header
      %s8 = sphi 0, %s12
      %p9 = scmp.ge.s32.totalorder %s8, 4
      %s15 = sphi 0, %s34
      %s16 = sphi 0, %s30
      %s17 = sphi 0, %s26
      %s18 = sphi 0, %s15
      %s19 = sphi 0, %s16
      %s20 = sphi 0, %s17
      %s21 = sphi 0, %s18
      %s22 = sphi 0, %s19
      %s23 = sphi 0, %s20
      %s39 = sphi 0, %s41
      %s42 = sphi 0, %s39
      %s43 = sphi 0, %s42
      %s59 = sphi 0, %s43
      %s67 = sphi 0, %s69
      %s70 = sphi 0, %s67
      %s71 = sphi 0, %s70
      %s87 = sphi 0, %s71
      %s95 = sphi 0, %s97
      %s98 = sphi 0, %s95
      %s99 = sphi 0, %s98
      %s115 = sphi 0, %s99
    $region4: #{srfbn_forward.26} parent=1 // loop_header_branch
      %11 = sbr.rel (%p9) target = $region8
    $region5: #{srfbn_forward.26} parent=1 // loop_body
      %s13 = ssub.s32 %s8, 1
      %s14 = ssub.s32 %s8, 2
      %s24 = sadd.s32 1, %s17
      %p25 = scmp.ge.s32.totalorder %s24, 1
      %s26 = scalar_select %p25, 0, %s24
      %s27 = sadd.s32 1, %s16
      %s28 = scalar_select %p25, %s27, %s16
      %p29 = scmp.ge.s32.totalorder %s28, 2
      %s30 = scalar_select %p29, 0, %s28
      %s31 = sadd.s32 1, %s15
      %s32 = scalar_select %p29, %s31, %s15
      %p33 = scmp.ge.s32.totalorder %s32, 1
      %s34 = scalar_select %p33, 0, %s32
      %s35 = ssub.s32 %s15, %s34
      %s36 = ssub.s32 %s17, %s26
      %s37 = sor.u32 %s35, %s36
      %p38 = scmp.eq.s32.totalorder %s37, 0
      %s40 = sadd.s32 %s39, 1
      %s41 = scalar_select %p38, %s39, %s40
      %p44 = pneg %p38
      %p45 = scmp.eq.s32.totalorder %s8, 1
      %p46 = por %p44, %p45
      %p47 = scmp.ne.s32.totalorder %s39, %s42
      %p48 = scmp.eq.s32.totalorder %s8, 0
      %p49 = por %p47, %p48
      %p50 = scmp.ne.s32.totalorder %s39, %s42
      %p51 = scmp.eq.s32.totalorder %s13, 1
      %p52 = por %p50, %p51
      %p53 = scmp.ne.s32.totalorder %s42, %s43
      %p54 = scmp.eq.s32.totalorder %s13, 0
      %p55 = por %p53, %p54
      %p56 = scmp.ne.s32.totalorder %s42, %s43
      %p57 = scmp.eq.s32.totalorder %s14, 1
      %p58 = por %p56, %p57
      %p60 = scmp.ne.s32.totalorder %s43, %s59
      %p61 = scmp.eq.s32.totalorder %s14, 0
      %p62 = por %p60, %p61
      %s63 = ssub.s32 %s17, %s26
      %s64 = ssub.s32 %s16, %s30
      %s65 = sor.u32 %s63, %s64
      %p66 = scmp.eq.s32.totalorder %s65, 0
      %s68 = sadd.s32 %s67, 1
      %s69 = scalar_select %p66, %s67, %s68
      %p72 = pneg %p66
      %p73 = scmp.eq.s32.totalorder %s8, 1
      %p74 = por %p72, %p73
      %p75 = scmp.ne.s32.totalorder %s67, %s70
      %p76 = scmp.eq.s32.totalorder %s8, 0
      %p77 = por %p75, %p76
      %p78 = scmp.ne.s32.totalorder %s67, %s70
      %p79 = scmp.eq.s32.totalorder %s13, 1
      %p80 = por %p78, %p79
      %p81 = scmp.ne.s32.totalorder %s70, %s71
      %p82 = scmp.eq.s32.totalorder %s13, 0
      %p83 = por %p81, %p82
      %p84 = scmp.ne.s32.totalorder %s70, %s71
      %p85 = scmp.eq.s32.totalorder %s14, 1
      %p86 = por %p84, %p85
      %p88 = scmp.ne.s32.totalorder %s71, %s87
      %p89 = scmp.eq.s32.totalorder %s14, 0
      %p90 = por %p88, %p89
      %s91 = ssub.s32 %s15, %s34
      %s92 = ssub.s32 %s16, %s30
      %s93 = sor.u32 %s91, %s92
      %p94 = scmp.eq.s32.totalorder %s93, 0
      %s96 = sadd.s32 %s95, 1
      %s97 = scalar_select %p94, %s95, %s96
      %p100 = pneg %p94
      %p101 = scmp.eq.s32.totalorder %s8, 1
      %p102 = por %p100, %p101
      %p103 = scmp.ne.s32.totalorder %s95, %s98
      %p104 = scmp.eq.s32.totalorder %s8, 0
      %p105 = por %p103, %p104
      %p106 = scmp.ne.s32.totalorder %s95, %s98
      %p107 = scmp.eq.s32.totalorder %s13, 1
      %p108 = por %p106, %p107
      %p109 = scmp.ne.s32.totalorder %s98, %s99
      %p110 = scmp.eq.s32.totalorder %s13, 0
      %p111 = por %p109, %p110
      %p112 = scmp.ne.s32.totalorder %s98, %s99
      %p113 = scmp.eq.s32.totalorder %s14, 1
      %p114 = por %p112, %p113
      %p116 = scmp.ne.s32.totalorder %s99, %s115
      %p117 = scmp.eq.s32.totalorder %s14, 0
      %p118 = por %p116, %p117
      %p119 = scmp.le.s32.totalorder 1, %s8
      %p120 = scmp.lt.s32.totalorder %s8, 3
      %p121 = pnand %p119, %p120
      %p122 = pneg %p121
      // Predicated region
      $region9: #{srfbn_forward.26} parent=5 // pred_check
        _
      $region10: #{srfbn_forward.26} parent=5 // pred_check_branch
        %124 = sbr.rel (%p121) target = $region12
      $region11: #{srfbn_forward.26} parent=5 // pred_region
        %s125 = ssub.s32 %s8, 1
        // Predicated region
        $region13: #{srfbn_forward.26} parent=11 // pred_check
          %p126 = pneg %p55
        $region14: #{srfbn_forward.26} parent=11 // pred_check_branch
          %128 = sbr.rel (%p126) target = $region16
        $region15: #{srfbn_forward.26} parent=11 // pred_region
          %p129 = scmp.lt.s32.totalorder %s18, 0
          %s130 = scalar_select %p129, %s18, 0
          %p131 = scmp.lt.s32.totalorder %s20, 0
          %s132 = scalar_select %p131, %s20, 0
          %s133 = sadd.s32 %s132, %s130
          %s134 = smul.addr %s133, 8
          %s135 = scalar_lea.vmem %s0, %s134
        $region16: #{srfbn_forward.26} parent=11 // pred_fallthru
          _
      $region12: #{srfbn_forward.26} parent=5 // pred_fallthru
        _
      %p136 = scmp.lt.s32.totalorder %s8, 2
      // Predicated region
      $region17: #{srfbn_forward.26} parent=5 // pred_check
        %p137 = pneg %p136
      $region18: #{srfbn_forward.26} parent=5 // pred_check_branch
        %139 = sbr.rel (%p137) target = $region20
      $region19: #{srfbn_forward.26} parent=5 // pred_region
        // Predicated region
        $region21: #{srfbn_forward.26} parent=19 // pred_check
          %p140 = pneg %p77
        $region22: #{srfbn_forward.26} parent=19 // pred_check_branch
          %142 = sbr.rel (%p140) target = $region24
        $region23: #{srfbn_forward.26} parent=19 // pred_region
          %s143 = sand.u32 %s67, 1
          %s144 = sand.u32 %s67, 1
          %s145 = smul.addr %s144, 64
          %s146 = scalar_lea.vmem [#allocation3], %s145
          %s147 = smul.u32 8, %s17
          %s148 = smul.addr %s147, 2
          %s149 = sadd.s32 %s16, %s148
          %s150 = smul.addr %s149, 8
          %s151 = scalar_lea.vmem %s1, %s150
          // Predicated region
          $region25: #{srfbn_forward.26} parent=23 // pred_check
            _
          $region26: #{srfbn_forward.26} parent=23 // pred_check_branch
            %153 = sbr.rel (0) target = $region28
          $region27: #{srfbn_forward.26} parent=23 // pred_region
            // Predicated region
            $region29: #{srfbn_forward.26} parent=27 // pred_check
              _
            $region30: #{srfbn_forward.26} parent=27 // pred_check_branch
              %155 = sbr.rel (0) target = $region32
            $region31: #{srfbn_forward.26} parent=27 // pred_region
              // Predicated region
              $region44: #{srfbn_forward.26} parent=31 // pred_check
                _
              $region45: #{srfbn_forward.26} parent=31 // pred_check_branch
                %184 = sbr.rel (0) target = $region47
              $region46: #{srfbn_forward.26} parent=31 // pred_region
                loop: start=0, step=1, limit=1
                $region48: #{srfbn_forward.26} parent=46 // loop_pre_header
                  _
                $region49: #{srfbn_forward.26} parent=46 // loop_header
                  %s186 = sphi 0, %s190
                  %p187 = scmp.ge.s32.totalorder %s186, 1
                  %s191 = sphi %s151, %s151
                  %s192 = sphi %s146, %s146
                $region50: #{srfbn_forward.26} parent=46 // loop_header_branch
                  %189 = sbr.rel (%p187) target = $region54
                $region51: #{srfbn_forward.26} parent=46 // loop_body
                  %v193 = vld [vmem:[%s191] sm:$0xff]
                  %194 = vst [vmem:[%s192] sm:$0xff] %v193
                  %v195 = vld [vmem:[%s191 + $0x10] sm:$0xff]
                  %196 = vst [vmem:[%s192 + $0x8] sm:$0xff] %v195
                  %v197 = vld [vmem:[%s191 + $0x20] sm:$0xff]
                  %198 = vst [vmem:[%s192 + $0x10] sm:$0xff] %v197
                  %v199 = vld [vmem:[%s191 + $0x30] sm:$0xff]
                  %200 = vst [vmem:[%s192 + $0x18] sm:$0xff] %v199
                  %v201 = vld [vmem:[%s191 + $0x40] sm:$0xff]
                  %202 = vst [vmem:[%s192 + $0x20] sm:$0xff] %v201
                  %v203 = vld [vmem:[%s191 + $0x50] sm:$0xff]
                  %204 = vst [vmem:[%s192 + $0x28] sm:$0xff] %v203
                  %v205 = vld [vmem:[%s191 + $0x60] sm:$0xff]
                  %206 = vst [vmem:[%s192 + $0x30] sm:$0xff] %v205
                  %v207 = vld [vmem:[%s191 + $0x70] sm:$0xff]
                  %208 = vst [vmem:[%s192 + $0x38] sm:$0xff] %v207
                $region52: #{srfbn_forward.26} parent=46 // loop_footer
                  %s190 = sadd.s32 1, %s186
                $region53: #{srfbn_forward.26} parent=46 // loop_footer_branch
                  %185 = sbr.rel target = $region49
                $region54: #{srfbn_forward.26} parent=46 // loop_exit
                  _
              $region47: #{srfbn_forward.26} parent=31 // pred_fallthru
                _
              // Predicated region
              $region55: #{srfbn_forward.26} parent=31 // pred_check
                _
              $region56: #{srfbn_forward.26} parent=31 // pred_check_branch
                %210 = sbr.rel target = $region58
              $region57: #{srfbn_forward.26} parent=31 // pred_region
                _
              $region58: #{srfbn_forward.26} parent=31 // pred_fallthru
                _
            $region32: #{srfbn_forward.26} parent=27 // pred_fallthru
              _
            // Predicated region
            $region33: #{srfbn_forward.26} parent=27 // pred_check
              _
            $region34: #{srfbn_forward.26} parent=27 // pred_check_branch
              %157 = sbr.rel target = $region36
            $region35: #{srfbn_forward.26} parent=27 // pred_region
              loop: start=0, step=1, limit=1
              $region37: #{srfbn_forward.26} parent=35 // loop_pre_header
                _
              $region38: #{srfbn_forward.26} parent=35 // loop_header
                %s160 = sphi 0, %s164
                %p161 = scmp.ge.s32.totalorder %s160, 1
                %s165 = sphi %s151, %s151
                %s166 = sphi %s146, %s146
              $region39: #{srfbn_forward.26} parent=35 // loop_header_branch
                %163 = sbr.rel (%p161) target = $region43
              $region40: #{srfbn_forward.26} parent=35 // loop_body
                %v167 = vld [vmem:[%s165] sm:$0xff]
                %168 = vst [vmem:[%s166] sm:$0xff] %v167
                %v169 = vld [vmem:[%s165 + $0x10] sm:$0xff]
                %170 = vst [vmem:[%s166 + $0x8] sm:$0xff] %v169
                %v171 = vld [vmem:[%s165 + $0x20] sm:$0xff]
                %172 = vst [vmem:[%s166 + $0x10] sm:$0xff] %v171
                %v173 = vld [vmem:[%s165 + $0x30] sm:$0xff]
                %174 = vst [vmem:[%s166 + $0x18] sm:$0xff] %v173
                %v175 = vld [vmem:[%s165 + $0x40] sm:$0xff]
                %176 = vst [vmem:[%s166 + $0x20] sm:$0xff] %v175
                %v177 = vld [vmem:[%s165 + $0x50] sm:$0xff]
                %178 = vst [vmem:[%s166 + $0x28] sm:$0xff] %v177
                %v179 = vld [vmem:[%s165 + $0x60] sm:$0xff]
                %180 = vst [vmem:[%s166 + $0x30] sm:$0xff] %v179
                %v181 = vld [vmem:[%s165 + $0x70] sm:$0xff]
                %182 = vst [vmem:[%s166 + $0x38] sm:$0xff] %v181
              $region41: #{srfbn_forward.26} parent=35 // loop_footer
                %s164 = sadd.s32 1, %s160
              $region42: #{srfbn_forward.26} parent=35 // loop_footer_branch
                %159 = sbr.rel target = $region38
              $region43: #{srfbn_forward.26} parent=35 // loop_exit
                _
            $region36: #{srfbn_forward.26} parent=27 // pred_fallthru
              _
          $region28: #{srfbn_forward.26} parent=23 // pred_fallthru
            _
          %211 = vnop
        $region24: #{srfbn_forward.26} parent=19 // pred_fallthru
          _
      $region20: #{srfbn_forward.26} parent=5 // pred_fallthru
        _
      %p212 = scmp.le.s32.totalorder 1, %s8
      %p213 = scmp.lt.s32.totalorder %s8, 3
      %p214 = pnand %p212, %p213
      %p215 = pneg %p214
      // Predicated region
      $region59: #{srfbn_forward.26} parent=5 // pred_check
        _
      $region60: #{srfbn_forward.26} parent=5 // pred_check_branch
        %217 = sbr.rel (%p214) target = $region62
      $region61: #{srfbn_forward.26} parent=5 // pred_region
        %s218 = ssub.s32 %s8, 1
        %s219 = sand.u32 %s70, 1
        %s220 = sand.u32 %s70, 1
        %s221 = smul.addr %s220, 64
        %s222 = scalar_lea.vmem [#allocation3], %s221
        // Predicated region
        $region63: #{srfbn_forward.26} parent=61 // pred_check
          %p223 = pneg %p83
        $region64: #{srfbn_forward.26} parent=61 // pred_check_branch
          %225 = sbr.rel (%p223) target = $region66
        $region65: #{srfbn_forward.26} parent=61 // pred_region
          _
        $region66: #{srfbn_forward.26} parent=61 // pred_fallthru
          _
        %p226 = scmp.lt.s32.totalorder %s18, 0
        %s227 = scalar_select %p226, %s18, 0
        %p228 = scmp.lt.s32.totalorder %s20, 0
        %s229 = scalar_select %p228, %s20, 0
        %s230 = sadd.s32 %s229, %s227
        %s231 = smul.addr %s230, 8
        %s232 = scalar_lea.vmem %s0, %s231
        %p233 = pneg %p55
        %p234 = pneg %p52
        %s235 = sand.u32 %s70, 1
        %s236 = sand.u32 %s70, 1
        %s237 = smul.addr %s236, 64
        %s238 = scalar_lea.vmem [#allocation3], %s237
        %p239 = pneg %p83
        %p240 = pneg %p80
        %p241 = pneg %p111
        %p242 = pneg %p108
        %p243 = scmp.lt.s32.totalorder %s18, 0
        %s244 = scalar_select %p243, %s18, 0
        %p245 = scmp.lt.s32.totalorder %s19, 1
        %s246 = scalar_select %p245, %s19, 1
        %s247 = smul.addr %s244, 2
        %s248 = sadd.s32 %s246, %s247
        %s249 = smul.addr %s248, 8
        %s250 = scalar_lea.vmem %s2, %s249
        %p251 = scmp.lt.s32.totalorder %s18, 0
        %s252 = scalar_select %p251, %s18, 0
        %p253 = scmp.lt.s32.totalorder %s20, 0
        %s254 = scalar_select %p253, %s20, 0
        %s255 = sadd.s32 %s254, %s252
        %s256 = smul.addr %s255, 8
        %s257 = scalar_lea.vmem %s0, %s256
        %s258 = smul.u32 8, %s20
        %p259 = scmp.lt.s32.totalorder %s18, 0
        %s260 = scalar_select %p259, %s18, 0
        %p261 = scmp.lt.s32.totalorder %s19, 1
        %s262 = scalar_select %p261, %s19, 1
        %s263 = smul.addr %s260, 2
        %s264 = sadd.s32 %s262, %s263
        %s265 = smul.addr %s264, 8
        %s266 = scalar_lea.vmem %s2, %s265
        %p267 = scmp.eq.s32.totalorder %s20, 0
        // Predicated region
        $region67: #{srfbn_forward.26} parent=61 // pred_check
          %p268 = pneg %p267
        $region68: #{srfbn_forward.26} parent=61 // pred_check_branch
          %270 = sbr.rel (%p268) target = $region70
        $region69: #{srfbn_forward.26} parent=61 // pred_region
          %271 = vst [vmem:[#allocation2] sm:$0xff] 0.0
        $region70: #{srfbn_forward.26} parent=61 // pred_fallthru
          _
        %v272 = vld [vmem:[#allocation2] sm:$0xff]
        %v273 = vld [vmem:[%s257] sm:$0xff]
        %v274 = vld [vmem:[%s222] sm:$0xff]
        %v275 = vld [vmem:[%s222 + $0x8] sm:$0xff]
        %v276 = vld [vmem:[%s222 + $0x10] sm:$0xff]
        %v277 = vld [vmem:[%s222 + $0x18] sm:$0xff]
        %v278 = vld [vmem:[%s222 + $0x20] sm:$0xff]
        %v279 = vld [vmem:[%s222 + $0x28] sm:$0xff]
        %v280 = vld [vmem:[%s222 + $0x30] sm:$0xff]
        %v281 = vld [vmem:[%s222 + $0x38] sm:$0xff]
        %vm282 = vcmask 523264
        %v284 = vsel %vm282, %v273, 0
        %286 = vmatprep.subr.mxu0 0.0
        %287 = vmatpush1.msra.mxu0 %v274
        %288 = vmatprep.subr.mxu0 0.0
        %289 = vmatpush1.msra.mxu0 %v275
        %290 = vmatprep.subr.mxu0 0.0
        %291 = vmatpush1.msra.mxu0 %v276
        %292 = vmatprep.subr.mxu0 0.0
        %293 = vmatpush1.msra.mxu0 %v277
        %294 = vmatprep.subr.mxu0 0.0
        %295 = vmatpush1.msra.mxu0 %v278
        %296 = vmatprep.subr.mxu0 0.0
        %297 = vmatpush1.msra.mxu0 %v279
        %298 = vmatprep.subr.mxu0 0.0
        %299 = vmatpush1.msra.mxu0 %v280
        %300 = vmatprep.subr.mxu0 0.0
        %301 = vmatpush1.msra.mxu0 %v281
        %302 = vmatprep.subr.mxu0 0.0
        %303 = vmatpush1.msra.mxu0 0.0
        %304 = vmatprep.subr.mxu0 0.0
        %305 = vmatpush1.msra.mxu0 0.0
        %306 = vmatprep.subr.mxu0 0.0
        %307 = vmatpush1.msra.mxu0 0.0
        %308 = vmatprep.subr.mxu0 0.0
        %309 = vmatpush1.msra.mxu0 0.0
        %310 = vmatprep.subr.mxu0 0.0
        %311 = vmatpush1.msra.mxu0 0.0
        %312 = vmatprep.subr.mxu0 0.0
        %313 = vmatpush1.msra.mxu0 0.0
        %314 = vmatprep.subr.mxu0 0.0
        %315 = vmatpush1.msra.mxu0 0.0
        %316 = vmatprep.subr.mxu0 0.0
        %317 = vmatpush1.msra.mxu0 0.0
        %318 = vmatprep.subr.mxu0 0.0
        %319 = vmatpush1.msra.mxu0 0.0
        %320 = vmatprep.subr.mxu0 0.0
        %321 = vmatpush1.msra.mxu0 0.0
        %322 = vmatprep.subr.mxu0 0.0
        %323 = vmatpush1.msra.mxu0 0.0
        %324 = vmatprep.subr.mxu0 0.0
        %325 = vmatpush1.msra.mxu0 0.0
        %326 = vmatprep.subr.mxu0 0.0
        %327 = vmatpush1.msra.mxu0 0.0
        %328 = vmatprep.subr.mxu0 0.0
        %329 = vmatpush1.msra.mxu0 0.0
        %330 = vmatprep.subr.mxu0 0.0
        %331 = vmatpush1.msra.mxu0 0.0
        %332 = vmatprep.subr.mxu0 0.0
        %333 = vmatpush1.msra.mxu0 0.0
        %334 = vmatprep.subr.mxu0 0.0
        %335 = vmatpush1.msra.mxu0 0.0
        %336 = vmatprep.subr.mxu0 0.0
        %337 = vmatpush1.msra.mxu0 0.0
        %338 = vmatprep.subr.mxu0 0.0
        %339 = vmatpush1.msra.mxu0 0.0
        %340 = vmatprep.subr.mxu0 0.0
        %341 = vmatpush1.msra.mxu0 0.0
        %342 = vmatprep.subr.mxu0 0.0
        %343 = vmatpush1.msra.mxu0 0.0
        %344 = vmatprep.subr.mxu0 0.0
        %345 = vmatpush1.msra.mxu0 0.0
        %346 = vmatprep.subr.mxu0 0.0
        %347 = vmatpush1.msra.mxu0 0.0
        %348 = vmatprep.subr.mxu0 0.0
        %349 = vmatpush1.msra.mxu0 0.0
        %350 = vmatprep.mubr.f32.mxu0 0.0
        %351 = vmatmul.mubr.f32.gmra.mrb[0].mxu0 %v284
        %v352 = vpop.f32.mrb[0].mxu0
        %v353 = vadd.f32 0.0, %v352
        %v354 = vpop.f32.mrb[0].mxu0
        %355 = vdwg.mxu0
        %v356 = vadd.f32 %v272, %v353
        %357 = vst [vmem:[#allocation2] sm:$0xff] %v356
        // Predicated region
        $region71: #{srfbn_forward.26} parent=61 // pred_check
          %p358 = pneg %p267
        $region72: #{srfbn_forward.26} parent=61 // pred_check_branch
          %360 = sbr.rel (%p358) target = $region74
        $region73: #{srfbn_forward.26} parent=61 // pred_region
          %v361 = vld [vmem:[#allocation2] sm:$0xff]
          %362 = vst [vmem:[%s266] sm:$0xff] %v361
        $region74: #{srfbn_forward.26} parent=61 // pred_fallthru
          _
        %p363 = scmp.lt.s32.totalorder %s18, 0
        %s364 = scalar_select %p363, %s18, 0
        %p365 = scmp.lt.s32.totalorder %s19, 1
        %s366 = scalar_select %p365, %s19, 1
        %s367 = smul.addr %s364, 2
        %s368 = sadd.s32 %s366, %s367
        %s369 = smul.addr %s368, 8
        %s370 = scalar_lea.vmem %s2, %s369
        // Predicated region
        $region75: #{srfbn_forward.26} parent=61 // pred_check
          %p371 = pneg %p108
        $region76: #{srfbn_forward.26} parent=61 // pred_check_branch
          %373 = sbr.rel (%p371) target = $region78
        $region77: #{srfbn_forward.26} parent=61 // pred_region
          _
        $region78: #{srfbn_forward.26} parent=61 // pred_fallthru
          _
      $region62: #{srfbn_forward.26} parent=5 // pred_fallthru
        _
      %p374 = scmp.le.s32.totalorder 2, %s8
      // Predicated region
      $region79: #{srfbn_forward.26} parent=5 // pred_check
        %p375 = pneg %p374
      $region80: #{srfbn_forward.26} parent=5 // pred_check_branch
        %377 = sbr.rel (%p375) target = $region82
      $region81: #{srfbn_forward.26} parent=5 // pred_region
        %s378 = ssub.s32 %s8, 2
        // Predicated region
        $region83: #{srfbn_forward.26} parent=81 // pred_check
          %p379 = pneg %p114
        $region84: #{srfbn_forward.26} parent=81 // pred_check_branch
          %381 = sbr.rel (%p379) target = $region86
        $region85: #{srfbn_forward.26} parent=81 // pred_region
          %p382 = scmp.lt.s32.totalorder %s21, 0
          %s383 = scalar_select %p382, %s21, 0
          %p384 = scmp.lt.s32.totalorder %s22, 1
          %s385 = scalar_select %p384, %s22, 1
          %s386 = smul.addr %s383, 2
          %s387 = sadd.s32 %s385, %s386
          %s388 = smul.addr %s387, 8
          %s389 = scalar_lea.vmem %s2, %s388
        $region86: #{srfbn_forward.26} parent=81 // pred_fallthru
          _
      $region82: #{srfbn_forward.26} parent=5 // pred_fallthru
        _
    $region6: #{srfbn_forward.26} parent=1 // loop_footer
      %s12 = sadd.s32 1, %s8
    $region7: #{srfbn_forward.26} parent=1 // loop_footer_branch
      %7 = sbr.rel target = $region3
    $region8: #{srfbn_forward.26} parent=1 // loop_exit
      _

// kernel: srfbn_forward.27
$region0: #{srfbn_forward.27}
  #allocation0 [shape = 'u32[]', space=smem, size = 0x4, offset = 0x4, fixed_abs, tag = 'smem constant byte address 0x4 - core index']
  #allocation1 [shape = 'u32[144,128]{1,0:T(1,128)}', space=vmem, size = 0x12000, scoped, tag = 'internal scratch']
  #allocation2 [shape = 'f32[256,128]{1,0:T(8,128)}', space=vmem, size = 0x20000, scoped, tag = 'scratch operand']
  %s0 = inlined_call_operand.vmem [shape: f32[512,3], index: 0, kind: input, shape index: {}]
  %s1 = inlined_call_operand.vmem [shape: f32[3,128], index: 1, kind: input, shape index: {}]
  %s2 = inlined_call_operand.vmem [shape: f32[1,128], index: 2, kind: input, shape index: {}]
  %s3 = inlined_call_operand.vmem [shape: f32[512,128], index: 3, kind: output, shape index: {}]
  %s4 = sld [smem:[#allocation0]]
  $region53: #{srfbn_forward.27} parent=0
    _
  %s6 = ssub.s32 1, %s4
  %s7 = scalar_select 0, %s6, %s4
  loop: start=0, step=1, limit=4
  $region2: #{srfbn_forward.27} parent=0 // loop_pre_header
    _
  $region3: #{srfbn_forward.27} parent=0 // loop_header
    %s9 = sphi 0, %s13
    %p10 = scmp.ge.s32.totalorder %s9, 4
    %s16 = sphi 0, %s35
    %s17 = sphi 0, %s31
    %s18 = sphi 0, %s27
    %s19 = sphi 0, %s16
    %s20 = sphi 0, %s17
    %s21 = sphi 0, %s18
    %s22 = sphi 0, %s19
    %s23 = sphi 0, %s20
    %s24 = sphi 0, %s21
    %s40 = sphi 0, %s42
    %s43 = sphi 0, %s40
    %s44 = sphi 0, %s43
    %s60 = sphi 0, %s44
    %s68 = sphi 0, %s70
    %s71 = sphi 0, %s68
    %s72 = sphi 0, %s71
    %s88 = sphi 0, %s72
    %s94 = sphi 0, %s96
    %s97 = sphi 0, %s94
    %s98 = sphi 0, %s97
    %s114 = sphi 0, %s98
    %s122 = sphi 0, %s124
    %s125 = sphi 0, %s122
    %s126 = sphi 0, %s125
    %s142 = sphi 0, %s126
  $region4: #{srfbn_forward.27} parent=0 // loop_header_branch
    %12 = sbr.rel (%p10) target = $region8
  $region5: #{srfbn_forward.27} parent=0 // loop_body
    %s14 = ssub.s32 %s9, 1
    %s15 = ssub.s32 %s9, 2
    %s25 = sadd.s32 1, %s18
    %p26 = scmp.ge.s32.totalorder %s25, 1
    %s27 = scalar_select %p26, 0, %s25
    %s28 = sadd.s32 1, %s17
    %s29 = scalar_select %p26, %s28, %s17
    %p30 = scmp.ge.s32.totalorder %s29, 1
    %s31 = scalar_select %p30, 0, %s29
    %s32 = sadd.s32 1, %s16
    %s33 = scalar_select %p30, %s32, %s16
    %p34 = scmp.ge.s32.totalorder %s33, 2
    %s35 = scalar_select %p34, 0, %s33
    %s36 = ssub.s32 %s16, %s35
    %s37 = ssub.s32 %s18, %s27
    %s38 = sor.u32 %s36, %s37
    %p39 = scmp.eq.s32.totalorder %s38, 0
    %s41 = sadd.s32 %s40, 1
    %s42 = scalar_select %p39, %s40, %s41
    %p45 = pneg %p39
    %p46 = scmp.eq.s32.totalorder %s9, 1
    %p47 = por %p45, %p46
    %p48 = scmp.ne.s32.totalorder %s40, %s43
    %p49 = scmp.eq.s32.totalorder %s9, 0
    %p50 = por %p48, %p49
    %p51 = scmp.ne.s32.totalorder %s40, %s43
    %p52 = scmp.eq.s32.totalorder %s14, 1
    %p53 = por %p51, %p52
    %p54 = scmp.ne.s32.totalorder %s43, %s44
    %p55 = scmp.eq.s32.totalorder %s14, 0
    %p56 = por %p54, %p55
    %p57 = scmp.ne.s32.totalorder %s43, %s44
    %p58 = scmp.eq.s32.totalorder %s15, 1
    %p59 = por %p57, %p58
    %p61 = scmp.ne.s32.totalorder %s44, %s60
    %p62 = scmp.eq.s32.totalorder %s15, 0
    %p63 = por %p61, %p62
    %s64 = ssub.s32 %s18, %s27
    %s65 = ssub.s32 %s17, %s31
    %s66 = sor.u32 %s64, %s65
    %p67 = scmp.eq.s32.totalorder %s66, 0
    %s69 = sadd.s32 %s68, 1
    %s70 = scalar_select %p67, %s68, %s69
    %p73 = pneg %p67
    %p74 = scmp.eq.s32.totalorder %s9, 1
    %p75 = por %p73, %p74
    %p76 = scmp.ne.s32.totalorder %s68, %s71
    %p77 = scmp.eq.s32.totalorder %s9, 0
    %p78 = por %p76, %p77
    %p79 = scmp.ne.s32.totalorder %s68, %s71
    %p80 = scmp.eq.s32.totalorder %s14, 1
    %p81 = por %p79, %p80
    %p82 = scmp.ne.s32.totalorder %s71, %s72
    %p83 = scmp.eq.s32.totalorder %s14, 0
    %p84 = por %p82, %p83
    %p85 = scmp.ne.s32.totalorder %s71, %s72
    %p86 = scmp.eq.s32.totalorder %s15, 1
    %p87 = por %p85, %p86
    %p89 = scmp.ne.s32.totalorder %s72, %s88
    %p90 = scmp.eq.s32.totalorder %s15, 0
    %p91 = por %p89, %p90
    %s92 = ssub.s32 %s17, %s31
    %p93 = scmp.eq.s32.totalorder %s92, 0
    %s95 = sadd.s32 %s94, 1
    %s96 = scalar_select %p93, %s94, %s95
    %p99 = pneg %p93
    %p100 = scmp.eq.s32.totalorder %s9, 1
    %p101 = por %p99, %p100
    %p102 = scmp.ne.s32.totalorder %s94, %s97
    %p103 = scmp.eq.s32.totalorder %s9, 0
    %p104 = por %p102, %p103
    %p105 = scmp.ne.s32.totalorder %s94, %s97
    %p106 = scmp.eq.s32.totalorder %s14, 1
    %p107 = por %p105, %p106
    %p108 = scmp.ne.s32.totalorder %s97, %s98
    %p109 = scmp.eq.s32.totalorder %s14, 0
    %p110 = por %p108, %p109
    %p111 = scmp.ne.s32.totalorder %s97, %s98
    %p112 = scmp.eq.s32.totalorder %s15, 1
    %p113 = por %p111, %p112
    %p115 = scmp.ne.s32.totalorder %s98, %s114
    %p116 = scmp.eq.s32.totalorder %s15, 0
    %p117 = por %p115, %p116
    %s118 = ssub.s32 %s16, %s35
    %s119 = ssub.s32 %s17, %s31
    %s120 = sor.u32 %s118, %s119
    %p121 = scmp.eq.s32.totalorder %s120, 0
    %s123 = sadd.s32 %s122, 1
    %s124 = scalar_select %p121, %s122, %s123
    %p127 = pneg %p121
    %p128 = scmp.eq.s32.totalorder %s9, 1
    %p129 = por %p127, %p128
    %p130 = scmp.ne.s32.totalorder %s122, %s125
    %p131 = scmp.eq.s32.totalorder %s9, 0
    %p132 = por %p130, %p131
    %p133 = scmp.ne.s32.totalorder %s122, %s125
    %p134 = scmp.eq.s32.totalorder %s14, 1
    %p135 = por %p133, %p134
    %p136 = scmp.ne.s32.totalorder %s125, %s126
    %p137 = scmp.eq.s32.totalorder %s14, 0
    %p138 = por %p136, %p137
    %p139 = scmp.ne.s32.totalorder %s125, %s126
    %p140 = scmp.eq.s32.totalorder %s15, 1
    %p141 = por %p139, %p140
    %p143 = scmp.ne.s32.totalorder %s126, %s142
    %p144 = scmp.eq.s32.totalorder %s15, 0
    %p145 = por %p143, %p144
    %p146 = scmp.le.s32.totalorder 1, %s9
    %p147 = scmp.lt.s32.totalorder %s9, 3
    %p148 = pnand %p146, %p147
    %p149 = pneg %p148
    // Predicated region
    $region9: #{srfbn_forward.27} parent=5 // pred_check
      _
    $region10: #{srfbn_forward.27} parent=5 // pred_check_branch
      %151 = sbr.rel (%p148) target = $region12
    $region11: #{srfbn_forward.27} parent=5 // pred_region
      %s152 = ssub.s32 %s9, 1
      // Predicated region
      $region13: #{srfbn_forward.27} parent=11 // pred_check
        %p153 = pneg %p84
      $region14: #{srfbn_forward.27} parent=11 // pred_check_branch
        %155 = sbr.rel (%p153) target = $region16
      $region15: #{srfbn_forward.27} parent=11 // pred_region
        %p156 = scmp.lt.s32.totalorder %s21, 0
        %s157 = scalar_select %p156, %s21, 0
        %p158 = scmp.lt.s32.totalorder %s20, 0
        %s159 = scalar_select %p158, %s20, 0
        %s160 = sadd.s32 %s159, %s157
        %s161 = smul.addr %s160, 4
        %s162 = scalar_lea.vmem %s1, %s161
      $region16: #{srfbn_forward.27} parent=11 // pred_fallthru
        _
      // Predicated region
      $region17: #{srfbn_forward.27} parent=11 // pred_check
        %p163 = pneg %p110
      $region18: #{srfbn_forward.27} parent=11 // pred_check_branch
        %165 = sbr.rel (%p163) target = $region20
      $region19: #{srfbn_forward.27} parent=11 // pred_region
        %p166 = scmp.lt.s32.totalorder %s20, 0
        %s167 = scalar_select %p166, %s20, 0
        %s168 = scalar_lea.vmem %s2, %s167
      $region20: #{srfbn_forward.27} parent=11 // pred_fallthru
        _
    $region12: #{srfbn_forward.27} parent=5 // pred_fallthru
      _
    %p169 = scmp.lt.s32.totalorder %s9, 2
    // Predicated region
    $region21: #{srfbn_forward.27} parent=5 // pred_check
      %p170 = pneg %p169
    $region22: #{srfbn_forward.27} parent=5 // pred_check_branch
      %172 = sbr.rel (%p170) target = $region24
    $region23: #{srfbn_forward.27} parent=5 // pred_region
      // Predicated region
      $region25: #{srfbn_forward.27} parent=23 // pred_check
        %p173 = pneg %p50
      $region26: #{srfbn_forward.27} parent=23 // pred_check_branch
        %175 = sbr.rel (%p173) target = $region28
      $region27: #{srfbn_forward.27} parent=23 // pred_region
        %s176 = smul.u32 32, %s16
        %p177 = scmp.lt.s32.totalorder %s176, 63
        %s178 = scalar_select %p177, %s176, 63
        %p179 = scmp.lt.s32.totalorder %s18, 0
        %s180 = scalar_select %p179, %s18, 0
        %s181 = sadd.s32 %s180, %s178
        %s182 = smul.addr %s181, 8
        %s183 = scalar_lea.vmem %s0, %s182
        %s184 = smul.u32 32, %s16
      $region28: #{srfbn_forward.27} parent=23 // pred_fallthru
        _
    $region24: #{srfbn_forward.27} parent=5 // pred_fallthru
      _
    %p185 = scmp.le.s32.totalorder 1, %s9
    %p186 = scmp.lt.s32.totalorder %s9, 3
    %p187 = pnand %p185, %p186
    %p188 = pneg %p187
    // Predicated region
    $region29: #{srfbn_forward.27} parent=5 // pred_check
      _
    $region30: #{srfbn_forward.27} parent=5 // pred_check_branch
      %190 = sbr.rel (%p187) target = $region32
    $region31: #{srfbn_forward.27} parent=5 // pred_region
      %s191 = ssub.s32 %s9, 1
      %s192 = smul.u32 32, %s19
      %p193 = scmp.lt.s32.totalorder %s192, 63
      %s194 = scalar_select %p193, %s192, 63
      %p195 = scmp.lt.s32.totalorder %s21, 0
      %s196 = scalar_select %p195, %s21, 0
      %s197 = sadd.s32 %s196, %s194
      %s198 = smul.addr %s197, 8
      %s199 = scalar_lea.vmem %s0, %s198
      %p200 = pneg %p56
      %p201 = pneg %p53
      %p202 = scmp.lt.s32.totalorder %s21, 0
      %s203 = scalar_select %p202, %s21, 0
      %p204 = scmp.lt.s32.totalorder %s20, 0
      %s205 = scalar_select %p204, %s20, 0
      %s206 = sadd.s32 %s205, %s203
      %s207 = smul.addr %s206, 4
      %s208 = scalar_lea.vmem %s1, %s207
      %p209 = pneg %p84
      %p210 = pneg %p81
      %p211 = scmp.lt.s32.totalorder %s20, 0
      %s212 = scalar_select %p211, %s20, 0
      %s213 = scalar_lea.vmem %s2, %s212
      %p214 = pneg %p110
      %p215 = pneg %p107
      %p216 = pneg %p138
      %p217 = pneg %p135
      %s218 = smul.u32 32, %s19
      %p219 = scmp.lt.s32.totalorder %s218, 63
      %s220 = scalar_select %p219, %s218, 63
      %p221 = scmp.lt.s32.totalorder %s20, 0
      %s222 = scalar_select %p221, %s20, 0
      %s223 = sadd.s32 %s222, %s220
      %s224 = smul.addr %s223, 8
      %s225 = scalar_lea.vmem %s3, %s224
      %s226 = smul.u32 32, %s19
      %p227 = scmp.lt.s32.totalorder %s226, 63
      %s228 = scalar_select %p227, %s226, 63
      %p229 = scmp.lt.s32.totalorder %s21, 0
      %s230 = scalar_select %p229, %s21, 0
      %s231 = sadd.s32 %s230, %s228
      %s232 = smul.addr %s231, 8
      %s233 = scalar_lea.vmem %s0, %s232
      %s234 = smul.u32 32, %s19
      %p235 = scmp.lt.s32.totalorder %s21, 0
      %s236 = scalar_select %p235, %s21, 0
      %p237 = scmp.lt.s32.totalorder %s20, 0
      %s238 = scalar_select %p237, %s20, 0
      %s239 = sadd.s32 %s238, %s236
      %s240 = smul.addr %s239, 4
      %s241 = scalar_lea.vmem %s1, %s240
      %p242 = scmp.lt.s32.totalorder %s20, 0
      %s243 = scalar_select %p242, %s20, 0
      %s244 = scalar_lea.vmem %s2, %s243
      %s245 = smul.u32 32, %s19
      %p246 = scmp.lt.s32.totalorder %s245, 63
      %s247 = scalar_select %p246, %s245, 63
      %p248 = scmp.lt.s32.totalorder %s20, 0
      %s249 = scalar_select %p248, %s20, 0
      %s250 = sadd.s32 %s249, %s247
      %s251 = smul.addr %s250, 8
      %s252 = scalar_lea.vmem %s3, %s251
      %s253 = smul.u32 32, %s19
      %p254 = scmp.eq.s32.totalorder %s21, 0
      // Predicated region
      $region33: #{srfbn_forward.27} parent=31 // pred_check
        %p255 = pneg %p254
      $region34: #{srfbn_forward.27} parent=31 // pred_check_branch
        %257 = sbr.rel (%p255) target = $region36
      $region35: #{srfbn_forward.27} parent=31 // pred_region
        %258 = vst [vmem:[#allocation2] sm:$0xff] 0.0
        %259 = vst [vmem:[#allocation2 + $0x8] sm:$0xff] 0.0
        %260 = vst [vmem:[#allocation2 + $0x10] sm:$0xff] 0.0
        %261 = vst [vmem:[#allocation2 + $0x18] sm:$0xff] 0.0
        %262 = vst [vmem:[#allocation2 + $0x20] sm:$0xff] 0.0
        %263 = vst [vmem:[#allocation2 + $0x28] sm:$0xff] 0.0
        %264 = vst [vmem:[#allocation2 + $0x30] sm:$0xff] 0.0
        %265 = vst [vmem:[#allocation2 + $0x38] sm:$0xff] 0.0
        %266 = vst [vmem:[#allocation2 + $0x40] sm:$0xff] 0.0
        %267 = vst [vmem:[#allocation2 + $0x48] sm:$0xff] 0.0
        %268 = vst [vmem:[#allocation2 + $0x50] sm:$0xff] 0.0
        %269 = vst [vmem:[#allocation2 + $0x58] sm:$0xff] 0.0
        %270 = vst [vmem:[#allocation2 + $0x60] sm:$0xff] 0.0
        %271 = vst [vmem:[#allocation2 + $0x68] sm:$0xff] 0.0
        %272 = vst [vmem:[#allocation2 + $0x70] sm:$0xff] 0.0
        %273 = vst [vmem:[#allocation2 + $0x78] sm:$0xff] 0.0
        %274 = vst [vmem:[#allocation2 + $0x80] sm:$0xff] 0.0
        %275 = vst [vmem:[#allocation2 + $0x88] sm:$0xff] 0.0
        %276 = vst [vmem:[#allocation2 + $0x90] sm:$0xff] 0.0
        %277 = vst [vmem:[#allocation2 + $0x98] sm:$0xff] 0.0
        %278 = vst [vmem:[#allocation2 + $0xa0] sm:$0xff] 0.0
        %279 = vst [vmem:[#allocation2 + $0xa8] sm:$0xff] 0.0
        %280 = vst [vmem:[#allocation2 + $0xb0] sm:$0xff] 0.0
        %281 = vst [vmem:[#allocation2 + $0xb8] sm:$0xff] 0.0
        %282 = vst [vmem:[#allocation2 + $0xc0] sm:$0xff] 0.0
        %283 = vst [vmem:[#allocation2 + $0xc8] sm:$0xff] 0.0
        %284 = vst [vmem:[#allocation2 + $0xd0] sm:$0xff] 0.0
        %285 = vst [vmem:[#allocation2 + $0xd8] sm:$0xff] 0.0
        %286 = vst [vmem:[#allocation2 + $0xe0] sm:$0xff] 0.0
        %287 = vst [vmem:[#allocation2 + $0xe8] sm:$0xff] 0.0
        %288 = vst [vmem:[#allocation2 + $0xf0] sm:$0xff] 0.0
        %289 = vst [vmem:[#allocation2 + $0xf8] sm:$0xff] 0.0
      $region36: #{srfbn_forward.27} parent=31 // pred_fallthru
        _
      %v290 = vld [vmem:[#allocation2] sm:$0xff]
      %v291 = vld [vmem:[#allocation2 + $0x8] sm:$0xff]
      %v292 = vld [vmem:[#allocation2 + $0x10] sm:$0xff]
      %v293 = vld [vmem:[#allocation2 + $0x18] sm:$0xff]
      %v294 = vld [vmem:[#allocation2 + $0x20] sm:$0xff]
      %v295 = vld [vmem:[#allocation2 + $0x28] sm:$0xff]
      %v296 = vld [vmem:[#allocation2 + $0x30] sm:$0xff]
      %v297 = vld [vmem:[#allocation2 + $0x38] sm:$0xff]
      %v298 = vld [vmem:[#allocation2 + $0x40] sm:$0xff]
      %v299 = vld [vmem:[#allocation2 + $0x48] sm:$0xff]
      %v300 = vld [vmem:[#allocation2 + $0x50] sm:$0xff]
      %v301 = vld [vmem:[#allocation2 + $0x58] sm:$0xff]
      %v302 = vld [vmem:[#allocation2 + $0x60] sm:$0xff]
      %v303 = vld [vmem:[#allocation2 + $0x68] sm:$0xff]
      %v304 = vld [vmem:[#allocation2 + $0x70] sm:$0xff]
      %v305 = vld [vmem:[#allocation2 + $0x78] sm:$0xff]
      %v306 = vld [vmem:[#allocation2 + $0x80] sm:$0xff]
      %v307 = vld [vmem:[#allocation2 + $0x88] sm:$0xff]
      %v308 = vld [vmem:[#allocation2 + $0x90] sm:$0xff]
      %v309 = vld [vmem:[#allocation2 + $0x98] sm:$0xff]
      %v310 = vld [vmem:[#allocation2 + $0xa0] sm:$0xff]
      %v311 = vld [vmem:[#allocation2 + $0xa8] sm:$0xff]
      %v312 = vld [vmem:[#allocation2 + $0xb0] sm:$0xff]
      %v313 = vld [vmem:[#allocation2 + $0xb8] sm:$0xff]
      %v314 = vld [vmem:[#allocation2 + $0xc0] sm:$0xff]
      %v315 = vld [vmem:[#allocation2 + $0xc8] sm:$0xff]
      %v316 = vld [vmem:[#allocation2 + $0xd0] sm:$0xff]
      %v317 = vld [vmem:[#allocation2 + $0xd8] sm:$0xff]
      %v318 = vld [vmem:[#allocation2 + $0xe0] sm:$0xff]
      %v319 = vld [vmem:[#allocation2 + $0xe8] sm:$0xff]
      %v320 = vld [vmem:[#allocation2 + $0xf0] sm:$0xff]
      %v321 = vld [vmem:[#allocation2 + $0xf8] sm:$0xff]
      %v322 = vld [vmem:[%s233] sm:$0xff]
      %v323 = vld [vmem:[%s233 + $0x8] sm:$0xff]
      %v324 = vld [vmem:[%s233 + $0x10] sm:$0xff]
      %v325 = vld [vmem:[%s233 + $0x18] sm:$0xff]
      %v326 = vld [vmem:[%s233 + $0x20] sm:$0xff]
      %v327 = vld [vmem:[%s233 + $0x28] sm:$0xff]
      %v328 = vld [vmem:[%s233 + $0x30] sm:$0xff]
      %v329 = vld [vmem:[%s233 + $0x38] sm:$0xff]
      %v330 = vld [vmem:[%s233 + $0x40] sm:$0xff]
      %v331 = vld [vmem:[%s233 + $0x48] sm:$0xff]
      %v332 = vld [vmem:[%s233 + $0x50] sm:$0xff]
      %v333 = vld [vmem:[%s233 + $0x58] sm:$0xff]
      %v334 = vld [vmem:[%s233 + $0x60] sm:$0xff]
      %v335 = vld [vmem:[%s233 + $0x68] sm:$0xff]
      %v336 = vld [vmem:[%s233 + $0x70] sm:$0xff]
      %v337 = vld [vmem:[%s233 + $0x78] sm:$0xff]
      %v338 = vld [vmem:[%s233 + $0x80] sm:$0xff]
      %v339 = vld [vmem:[%s233 + $0x88] sm:$0xff]
      %v340 = vld [vmem:[%s233 + $0x90] sm:$0xff]
      %v341 = vld [vmem:[%s233 + $0x98] sm:$0xff]
      %v342 = vld [vmem:[%s233 + $0xa0] sm:$0xff]
      %v343 = vld [vmem:[%s233 + $0xa8] sm:$0xff]
      %v344 = vld [vmem:[%s233 + $0xb0] sm:$0xff]
      %v345 = vld [vmem:[%s233 + $0xb8] sm:$0xff]
      %v346 = vld [vmem:[%s233 + $0xc0] sm:$0xff]
      %v347 = vld [vmem:[%s233 + $0xc8] sm:$0xff]
      %v348 = vld [vmem:[%s233 + $0xd0] sm:$0xff]
      %v349 = vld [vmem:[%s233 + $0xd8] sm:$0xff]
      %v350 = vld [vmem:[%s233 + $0xe0] sm:$0xff]
      %v351 = vld [vmem:[%s233 + $0xe8] sm:$0xff]
      %v352 = vld [vmem:[%s233 + $0xf0] sm:$0xff]
      %v353 = vld [vmem:[%s233 + $0xf8] sm:$0xff]
      %v354 = vld [vmem:[%s241] sm:$0x7]
      %vm355 = vcmask 23552
      %v357 = vsel %vm355, %v322, 0
      %v360 = vsel %vm355, %v323, 0
      %v363 = vsel %vm355, %v324, 0
      %v366 = vsel %vm355, %v325, 0
      %v369 = vsel %vm355, %v326, 0
      %v372 = vsel %vm355, %v327, 0
      %v375 = vsel %vm355, %v328, 0
      %v378 = vsel %vm355, %v329, 0
      %v381 = vsel %vm355, %v330, 0
      %v384 = vsel %vm355, %v331, 0
      %v387 = vsel %vm355, %v332, 0
      %v390 = vsel %vm355, %v333, 0
      %v393 = vsel %vm355, %v334, 0
      %v396 = vsel %vm355, %v335, 0
      %v399 = vsel %vm355, %v336, 0
      %v402 = vsel %vm355, %v337, 0
      %v405 = vsel %vm355, %v338, 0
      %v408 = vsel %vm355, %v339, 0
      %v411 = vsel %vm355, %v340, 0
      %v414 = vsel %vm355, %v341, 0
      %v417 = vsel %vm355, %v342, 0
      %v420 = vsel %vm355, %v343, 0
      %v423 = vsel %vm355, %v344, 0
      %v426 = vsel %vm355, %v345, 0
      %v429 = vsel %vm355, %v346, 0
      %v432 = vsel %vm355, %v347, 0
      %v435 = vsel %vm355, %v348, 0
      %v438 = vsel %vm355, %v349, 0
      %v441 = vsel %vm355, %v350, 0
      %v444 = vsel %vm355, %v351, 0
      %v447 = vsel %vm355, %v352, 0
      %v450 = vsel %vm355, %v353, 0
      %vm452 = vcmask 1042432
      %v454 = vsel %vm452, %v354, 0
      %456 = vmatprep.subr.mxu0 0.0
      %457 = vmatpush1.msra.mxu0 %v454
      %458 = vmatprep.subr.mxu0 0.0
      %459 = vmatpush1.msra.mxu0 0.0
      %460 = vmatprep.subr.mxu0 0.0
      %461 = vmatpush1.msra.mxu0 0.0
      %462 = vmatprep.subr.mxu0 0.0
      %463 = vmatpush1.msra.mxu0 0.0
      %464 = vmatprep.subr.mxu0 0.0
      %465 = vmatpush1.msra.mxu0 0.0
      %466 = vmatprep.subr.mxu0 0.0
      %467 = vmatpush1.msra.mxu0 0.0
      %468 = vmatprep.subr.mxu0 0.0
      %469 = vmatpush1.msra.mxu0 0.0
      %470 = vmatprep.subr.mxu0 0.0
      %471 = vmatpush1.msra.mxu0 0.0
      %472 = vmatprep.subr.mxu0 0.0
      %473 = vmatpush1.msra.mxu0 0.0
      %474 = vmatprep.subr.mxu0 0.0
      %475 = vmatpush1.msra.mxu0 0.0
      %476 = vmatprep.subr.mxu0 0.0
      %477 = vmatpush1.msra.mxu0 0.0
      %478 = vmatprep.subr.mxu0 0.0
      %479 = vmatpush1.msra.mxu0 0.0
      %480 = vmatprep.subr.mxu0 0.0
      %481 = vmatpush1.msra.mxu0 0.0
      %482 = vmatprep.subr.mxu0 0.0
      %483 = vmatpush1.msra.mxu0 0.0
      %484 = vmatprep.subr.mxu0 0.0
      %485 = vmatpush1.msra.mxu0 0.0
      %486 = vmatprep.subr.mxu0 0.0
      %487 = vmatpush1.msra.mxu0 0.0
      %488 = vmatprep.subr.mxu0 0.0
      %489 = vmatpush1.msra.mxu0 0.0
      %490 = vmatprep.subr.mxu0 0.0
      %491 = vmatpush1.msra.mxu0 0.0
      %492 = vmatprep.subr.mxu0 0.0
      %493 = vmatpush1.msra.mxu0 0.0
      %494 = vmatprep.subr.mxu0 0.0
      %495 = vmatpush1.msra.mxu0 0.0
      %496 = vmatprep.subr.mxu0 0.0
      %497 = vmatpush1.msra.mxu0 0.0
      %498 = vmatprep.subr.mxu0 0.0
      %499 = vmatpush1.msra.mxu0 0.0
      %500 = vmatprep.subr.mxu0 0.0
      %501 = vmatpush1.msra.mxu0 0.0
      %502 = vmatprep.subr.mxu0 0.0
      %503 = vmatpush1.msra.mxu0 0.0
      %504 = vmatprep.subr.mxu0 0.0
      %505 = vmatpush1.msra.mxu0 0.0
      %506 = vmatprep.subr.mxu0 0.0
      %507 = vmatpush1.msra.mxu0 0.0
      %508 = vmatprep.subr.mxu0 0.0
      %509 = vmatpush1.msra.mxu0 0.0
      %510 = vmatprep.subr.mxu0 0.0
      %511 = vmatpush1.msra.mxu0 0.0
      %512 = vmatprep.subr.mxu0 0.0
      %513 = vmatpush1.msra.mxu0 0.0
      %514 = vmatprep.subr.mxu0 0.0
      %515 = vmatpush1.msra.mxu0 0.0
      %516 = vmatprep.subr.mxu0 0.0
      %517 = vmatpush1.msra.mxu0 0.0
      %518 = vmatprep.subr.mxu0 0.0
      %519 = vmatpush1.msra.mxu0 0.0
      %520 = vmatprep.mubr.f32.mxu0 0.0
      %521 = vmatmul.mubr.f32.gmra.mrb[0].mxu0 %v357
      %v522 = vpop.f32.mrb[0].mxu0
      %v523 = vadd.f32 0.0, %v522
      %v524 = vpop.f32.mrb[0].mxu0
      %525 = vmatprep.mubr.f32.mxu0 0.0
      %526 = vmatmul.mubr.f32.gmra.mrb[0].mxu0 %v360
      %v527 = vpop.f32.mrb[0].mxu0
      %v528 = vadd.f32 0.0, %v527
      %v529 = vpop.f32.mrb[0].mxu0
      %530 = vmatprep.mubr.f32.mxu0 0.0
      %531 = vmatmul.mubr.f32.gmra.mrb[0].mxu0 %v363
      %v532 = vpop.f32.mrb[0].mxu0
      %v533 = vadd.f32 0.0, %v532
      %v534 = vpop.f32.mrb[0].mxu0
      %535 = vmatprep.mubr.f32.mxu0 0.0
      %536 = vmatmul.mubr.f32.gmra.mrb[0].mxu0 %v366
      %v537 = vpop.f32.mrb[0].mxu0
      %v538 = vadd.f32 0.0, %v537
      %v539 = vpop.f32.mrb[0].mxu0
      %540 = vmatprep.mubr.f32.mxu0 0.0
      %541 = vmatmul.mubr.f32.gmra.mrb[0].mxu0 %v369
      %v542 = vpop.f32.mrb[0].mxu0
      %v543 = vadd.f32 0.0, %v542
      %v544 = vpop.f32.mrb[0].mxu0
      %545 = vmatprep.mubr.f32.mxu0 0.0
      %546 = vmatmul.mubr.f32.gmra.mrb[0].mxu0 %v372
      %v547 = vpop.f32.mrb[0].mxu0
      %v548 = vadd.f32 0.0, %v547
      %v549 = vpop.f32.mrb[0].mxu0
      %550 = vmatprep.mubr.f32.mxu0 0.0
      %551 = vmatmul.mubr.f32.gmra.mrb[0].mxu0 %v375
      %v552 = vpop.f32.mrb[0].mxu0
      %v553 = vadd.f32 0.0, %v552
      %v554 = vpop.f32.mrb[0].mxu0
      %555 = vmatprep.mubr.f32.mxu0 0.0
      %556 = vmatmul.mubr.f32.gmra.mrb[0].mxu0 %v378
      %v557 = vpop.f32.mrb[0].mxu0
      %v558 = vadd.f32 0.0, %v557
      %v559 = vpop.f32.mrb[0].mxu0
      %560 = vmatprep.mubr.f32.mxu0 0.0
      %561 = vmatmul.mubr.f32.gmra.mrb[0].mxu0 %v381
      %v562 = vpop.f32.mrb[0].mxu0
      %v563 = vadd.f32 0.0, %v562
      %v564 = vpop.f32.mrb[0].mxu0
      %565 = vmatprep.mubr.f32.mxu0 0.0
      %566 = vmatmul.mubr.f32.gmra.mrb[0].mxu0 %v384
      %v567 = vpop.f32.mrb[0].mxu0
      %v568 = vadd.f32 0.0, %v567
      %v569 = vpop.f32.mrb[0].mxu0
      %570 = vmatprep.mubr.f32.mxu0 0.0
      %571 = vmatmul.mubr.f32.gmra.mrb[0].mxu0 %v387
      %v572 = vpop.f32.mrb[0].mxu0
      %v573 = vadd.f32 0.0, %v572
      %v574 = vpop.f32.mrb[0].mxu0
      %575 = vmatprep.mubr.f32.mxu0 0.0
      %576 = vmatmul.mubr.f32.gmra.mrb[0].mxu0 %v390
      %v577 = vpop.f32.mrb[0].mxu0
      %v578 = vadd.f32 0.0, %v577
      %v579 = vpop.f32.mrb[0].mxu0
      %580 = vmatprep.mubr.f32.mxu0 0.0
      %581 = vmatmul.mubr.f32.gmra.mrb[0].mxu0 %v393
      %v582 = vpop.f32.mrb[0].mxu0
      %v583 = vadd.f32 0.0, %v582
      %v584 = vpop.f32.mrb[0].mxu0
      %585 = vmatprep.mubr.f32.mxu0 0.0
      %586 = vmatmul.mubr.f32.gmra.mrb[0].mxu0 %v396
      %v587 = vpop.f32.mrb[0].mxu0
      %v588 = vadd.f32 0.0, %v587
      %v589 = vpop.f32.mrb[0].mxu0
      %590 = vmatprep.mubr.f32.mxu0 0.0
      %591 = vmatmul.mubr.f32.gmra.mrb[0].mxu0 %v399
      %v592 = vpop.f32.mrb[0].mxu0
      %v593 = vadd.f32 0.0, %v592
      %v594 = vpop.f32.mrb[0].mxu0
      %595 = vmatprep.mubr.f32.mxu0 0.0
      %596 = vmatmul.mubr.f32.gmra.mrb[0].mxu0 %v402
      %v597 = vpop.f32.mrb[0].mxu0
      %v598 = vadd.f32 0.0, %v597
      %v599 = vpop.f32.mrb[0].mxu0
      %600 = vmatprep.mubr.f32.mxu0 0.0
      %601 = vmatmul.mubr.f32.gmra.mrb[0].mxu0 %v405
      %v602 = vpop.f32.mrb[0].mxu0
      %v603 = vadd.f32 0.0, %v602
      %v604 = vpop.f32.mrb[0].mxu0
      %605 = vmatprep.mubr.f32.mxu0 0.0
      %606 = vmatmul.mubr.f32.gmra.mrb[0].mxu0 %v408
      %v607 = vpop.f32.mrb[0].mxu0
      %v608 = vadd.f32 0.0, %v607
      %v609 = vpop.f32.mrb[0].mxu0
      %610 = vmatprep.mubr.f32.mxu0 0.0
      %611 = vmatmul.mubr.f32.gmra.mrb[0].mxu0 %v411
      %v612 = vpop.f32.mrb[0].mxu0
      %v613 = vadd.f32 0.0, %v612
      %v614 = vpop.f32.mrb[0].mxu0
      %615 = vmatprep.mubr.f32.mxu0 0.0
      %616 = vmatmul.mubr.f32.gmra.mrb[0].mxu0 %v414
      %v617 = vpop.f32.mrb[0].mxu0
      %v618 = vadd.f32 0.0, %v617
      %v619 = vpop.f32.mrb[0].mxu0
      %620 = vmatprep.mubr.f32.mxu0 0.0
      %621 = vmatmul.mubr.f32.gmra.mrb[0].mxu0 %v417
      %v622 = vpop.f32.mrb[0].mxu0
      %v623 = vadd.f32 0.0, %v622
      %v624 = vpop.f32.mrb[0].mxu0
      %625 = vmatprep.mubr.f32.mxu0 0.0
      %626 = vmatmul.mubr.f32.gmra.mrb[0].mxu0 %v420
      %v627 = vpop.f32.mrb[0].mxu0
      %v628 = vadd.f32 0.0, %v627
      %v629 = vpop.f32.mrb[0].mxu0
      %630 = vmatprep.mubr.f32.mxu0 0.0
      %631 = vmatmul.mubr.f32.gmra.mrb[0].mxu0 %v423
      %v632 = vpop.f32.mrb[0].mxu0
      %v633 = vadd.f32 0.0, %v632
      %v634 = vpop.f32.mrb[0].mxu0
      %635 = vmatprep.mubr.f32.mxu0 0.0
      %636 = vmatmul.mubr.f32.gmra.mrb[0].mxu0 %v426
      %v637 = vpop.f32.mrb[0].mxu0
      %v638 = vadd.f32 0.0, %v637
      %v639 = vpop.f32.mrb[0].mxu0
      %640 = vmatprep.mubr.f32.mxu0 0.0
      %641 = vmatmul.mubr.f32.gmra.mrb[0].mxu0 %v429
      %v642 = vpop.f32.mrb[0].mxu0
      %v643 = vadd.f32 0.0, %v642
      %v644 = vpop.f32.mrb[0].mxu0
      %645 = vmatprep.mubr.f32.mxu0 0.0
      %646 = vmatmul.mubr.f32.gmra.mrb[0].mxu0 %v432
      %v647 = vpop.f32.mrb[0].mxu0
      %v648 = vadd.f32 0.0, %v647
      %v649 = vpop.f32.mrb[0].mxu0
      %650 = vmatprep.mubr.f32.mxu0 0.0
      %651 = vmatmul.mubr.f32.gmra.mrb[0].mxu0 %v435
      %v652 = vpop.f32.mrb[0].mxu0
      %v653 = vadd.f32 0.0, %v652
      %v654 = vpop.f32.mrb[0].mxu0
      %655 = vmatprep.mubr.f32.mxu0 0.0
      %656 = vmatmul.mubr.f32.gmra.mrb[0].mxu0 %v438
      %v657 = vpop.f32.mrb[0].mxu0
      %v658 = vadd.f32 0.0, %v657
      %v659 = vpop.f32.mrb[0].mxu0
      %660 = vmatprep.mubr.f32.mxu0 0.0
      %661 = vmatmul.mubr.f32.gmra.mrb[0].mxu0 %v441
      %v662 = vpop.f32.mrb[0].mxu0
      %v663 = vadd.f32 0.0, %v662
      %v664 = vpop.f32.mrb[0].mxu0
      %665 = vmatprep.mubr.f32.mxu0 0.0
      %666 = vmatmul.mubr.f32.gmra.mrb[0].mxu0 %v444
      %v667 = vpop.f32.mrb[0].mxu0
      %v668 = vadd.f32 0.0, %v667
      %v669 = vpop.f32.mrb[0].mxu0
      %670 = vmatprep.mubr.f32.mxu0 0.0
      %671 = vmatmul.mubr.f32.gmra.mrb[0].mxu0 %v447
      %v672 = vpop.f32.mrb[0].mxu0
      %v673 = vadd.f32 0.0, %v672
      %v674 = vpop.f32.mrb[0].mxu0
      %675 = vmatprep.mubr.f32.mxu0 0.0
      %676 = vmatmul.mubr.f32.gmra.mrb[0].mxu0 %v450
      %v677 = vpop.f32.mrb[0].mxu0
      %v678 = vadd.f32 0.0, %v677
      %v679 = vpop.f32.mrb[0].mxu0
      %680 = vdwg.mxu0
      %v681 = vadd.f32 %v290, %v523
      %v682 = vadd.f32 %v291, %v528
      %v683 = vadd.f32 %v292, %v533
      %v684 = vadd.f32 %v293, %v538
      %v685 = vadd.f32 %v294, %v543
      %v686 = vadd.f32 %v295, %v548
      %v687 = vadd.f32 %v296, %v553
      %v688 = vadd.f32 %v297, %v558
      %v689 = vadd.f32 %v298, %v563
      %v690 = vadd.f32 %v299, %v568
      %v691 = vadd.f32 %v300, %v573
      %v692 = vadd.f32 %v301, %v578
      %v693 = vadd.f32 %v302, %v583
      %v694 = vadd.f32 %v303, %v588
      %v695 = vadd.f32 %v304, %v593
      %v696 = vadd.f32 %v305, %v598
      %v697 = vadd.f32 %v306, %v603
      %v698 = vadd.f32 %v307, %v608
      %v699 = vadd.f32 %v308, %v613
      %v700 = vadd.f32 %v309, %v618
      %v701 = vadd.f32 %v310, %v623
      %v702 = vadd.f32 %v311, %v628
      %v703 = vadd.f32 %v312, %v633
      %v704 = vadd.f32 %v313, %v638
      %v705 = vadd.f32 %v314, %v643
      %v706 = vadd.f32 %v315, %v648
      %v707 = vadd.f32 %v316, %v653
      %v708 = vadd.f32 %v317, %v658
      %v709 = vadd.f32 %v318, %v663
      %v710 = vadd.f32 %v319, %v668
      %v711 = vadd.f32 %v320, %v673
      %v712 = vadd.f32 %v321, %v678
      %713 = vst [vmem:[#allocation2] sm:$0xff] %v681
      %714 = vst [vmem:[#allocation2 + $0x8] sm:$0xff] %v682
      %715 = vst [vmem:[#allocation2 + $0x10] sm:$0xff] %v683
      %716 = vst [vmem:[#allocation2 + $0x18] sm:$0xff] %v684
      %717 = vst [vmem:[#allocation2 + $0x20] sm:$0xff] %v685
      %718 = vst [vmem:[#allocation2 + $0x28] sm:$0xff] %v686
      %719 = vst [vmem:[#allocation2 + $0x30] sm:$0xff] %v687
      %720 = vst [vmem:[#allocation2 + $0x38] sm:$0xff] %v688
      %721 = vst [vmem:[#allocation2 + $0x40] sm:$0xff] %v689
      %722 = vst [vmem:[#allocation2 + $0x48] sm:$0xff] %v690
      %723 = vst [vmem:[#allocation2 + $0x50] sm:$0xff] %v691
      %724 = vst [vmem:[#allocation2 + $0x58] sm:$0xff] %v692
      %725 = vst [vmem:[#allocation2 + $0x60] sm:$0xff] %v693
      %726 = vst [vmem:[#allocation2 + $0x68] sm:$0xff] %v694
      %727 = vst [vmem:[#allocation2 + $0x70] sm:$0xff] %v695
      %728 = vst [vmem:[#allocation2 + $0x78] sm:$0xff] %v696
      %729 = vst [vmem:[#allocation2 + $0x80] sm:$0xff] %v697
      %730 = vst [vmem:[#allocation2 + $0x88] sm:$0xff] %v698
      %731 = vst [vmem:[#allocation2 + $0x90] sm:$0xff] %v699
      %732 = vst [vmem:[#allocation2 + $0x98] sm:$0xff] %v700
      %733 = vst [vmem:[#allocation2 + $0xa0] sm:$0xff] %v701
      %734 = vst [vmem:[#allocation2 + $0xa8] sm:$0xff] %v702
      %735 = vst [vmem:[#allocation2 + $0xb0] sm:$0xff] %v703
      %736 = vst [vmem:[#allocation2 + $0xb8] sm:$0xff] %v704
      %737 = vst [vmem:[#allocation2 + $0xc0] sm:$0xff] %v705
      %738 = vst [vmem:[#allocation2 + $0xc8] sm:$0xff] %v706
      %739 = vst [vmem:[#allocation2 + $0xd0] sm:$0xff] %v707
      %740 = vst [vmem:[#allocation2 + $0xd8] sm:$0xff] %v708
      %741 = vst [vmem:[#allocation2 + $0xe0] sm:$0xff] %v709
      %742 = vst [vmem:[#allocation2 + $0xe8] sm:$0xff] %v710
      %743 = vst [vmem:[#allocation2 + $0xf0] sm:$0xff] %v711
      %744 = vst [vmem:[#allocation2 + $0xf8] sm:$0xff] %v712
      // Predicated region
      $region37: #{srfbn_forward.27} parent=31 // pred_check
        %p745 = pneg %p254
      $region38: #{srfbn_forward.27} parent=31 // pred_check_branch
        %747 = sbr.rel (%p745) target = $region40
      $region39: #{srfbn_forward.27} parent=31 // pred_region
        %v748 = vld [vmem:[#allocation2] sm:$0xff]
        %v749 = vld [vmem:[#allocation2 + $0x8] sm:$0xff]
        %v750 = vld [vmem:[#allocation2 + $0x10] sm:$0xff]
        %v751 = vld [vmem:[#allocation2 + $0x18] sm:$0xff]
        %v752 = vld [vmem:[#allocation2 + $0x20] sm:$0xff]
        %v753 = vld [vmem:[#allocation2 + $0x28] sm:$0xff]
        %v754 = vld [vmem:[#allocation2 + $0x30] sm:$0xff]
        %v755 = vld [vmem:[#allocation2 + $0x38] sm:$0xff]
        %v756 = vld [vmem:[#allocation2 + $0x40] sm:$0xff]
        %v757 = vld [vmem:[#allocation2 + $0x48] sm:$0xff]
        %v758 = vld [vmem:[#allocation2 + $0x50] sm:$0xff]
        %v759 = vld [vmem:[#allocation2 + $0x58] sm:$0xff]
        %v760 = vld [vmem:[#allocation2 + $0x60] sm:$0xff]
        %v761 = vld [vmem:[#allocation2 + $0x68] sm:$0xff]
        %v762 = vld [vmem:[#allocation2 + $0x70] sm:$0xff]
        %v763 = vld [vmem:[#allocation2 + $0x78] sm:$0xff]
        %v764 = vld [vmem:[#allocation2 + $0x80] sm:$0xff]
        %v765 = vld [vmem:[#allocation2 + $0x88] sm:$0xff]
        %v766 = vld [vmem:[#allocation2 + $0x90] sm:$0xff]
        %v767 = vld [vmem:[#allocation2 + $0x98] sm:$0xff]
        %v768 = vld [vmem:[#allocation2 + $0xa0] sm:$0xff]
        %v769 = vld [vmem:[#allocation2 + $0xa8] sm:$0xff]
        %v770 = vld [vmem:[#allocation2 + $0xb0] sm:$0xff]
        %v771 = vld [vmem:[#allocation2 + $0xb8] sm:$0xff]
        %v772 = vld [vmem:[#allocation2 + $0xc0] sm:$0xff]
        %v773 = vld [vmem:[#allocation2 + $0xc8] sm:$0xff]
        %v774 = vld [vmem:[#allocation2 + $0xd0] sm:$0xff]
        %v775 = vld [vmem:[#allocation2 + $0xd8] sm:$0xff]
        %v776 = vld [vmem:[#allocation2 + $0xe0] sm:$0xff]
        %v777 = vld [vmem:[#allocation2 + $0xe8] sm:$0xff]
        %v778 = vld [vmem:[#allocation2 + $0xf0] sm:$0xff]
        %v779 = vld [vmem:[#allocation2 + $0xf8] sm:$0xff]
        %v780 = vld [vmem:[%s244] sm:$0x1]
        %v782 = vlaneseq
        %v783 = vshrl.u32 %v782, 7
        %v784 = vsub.s32 0, %v783
        %v785 = vrot.slane %v780, %v784
        %v787 = vadd.f32 %v748, %v785
        %v788 = vadd.f32 %v749, %v785
        %v789 = vadd.f32 %v750, %v785
        %v790 = vadd.f32 %v751, %v785
        %v791 = vadd.f32 %v752, %v785
        %v792 = vadd.f32 %v753, %v785
        %v793 = vadd.f32 %v754, %v785
        %v794 = vadd.f32 %v755, %v785
        %v795 = vadd.f32 %v756, %v785
        %v796 = vadd.f32 %v757, %v785
        %v797 = vadd.f32 %v758, %v785
        %v798 = vadd.f32 %v759, %v785
        %v799 = vadd.f32 %v760, %v785
        %v800 = vadd.f32 %v761, %v785
        %v801 = vadd.f32 %v762, %v785
        %v802 = vadd.f32 %v763, %v785
        %v803 = vadd.f32 %v764, %v785
        %v804 = vadd.f32 %v765, %v785
        %v805 = vadd.f32 %v766, %v785
        %v806 = vadd.f32 %v767, %v785
        %v807 = vadd.f32 %v768, %v785
        %v808 = vadd.f32 %v769, %v785
        %v809 = vadd.f32 %v770, %v785
        %v810 = vadd.f32 %v771, %v785
        %v811 = vadd.f32 %v772, %v785
        %v812 = vadd.f32 %v773, %v785
        %v813 = vadd.f32 %v774, %v785
        %v814 = vadd.f32 %v775, %v785
        %v815 = vadd.f32 %v776, %v785
        %v816 = vadd.f32 %v777, %v785
        %v817 = vadd.f32 %v778, %v785
        %v818 = vadd.f32 %v779, %v785
        %819 = vst [vmem:[%s252] sm:$0xff] %v787
        %820 = vst [vmem:[%s252 + $0x8] sm:$0xff] %v788
        %821 = vst [vmem:[%s252 + $0x10] sm:$0xff] %v789
        %822 = vst [vmem:[%s252 + $0x18] sm:$0xff] %v790
        %823 = vst [vmem:[%s252 + $0x20] sm:$0xff] %v791
        %824 = vst [vmem:[%s252 + $0x28] sm:$0xff] %v792
        %825 = vst [vmem:[%s252 + $0x30] sm:$0xff] %v793
        %826 = vst [vmem:[%s252 + $0x38] sm:$0xff] %v794
        %827 = vst [vmem:[%s252 + $0x40] sm:$0xff] %v795
        %828 = vst [vmem:[%s252 + $0x48] sm:$0xff] %v796
        %829 = vst [vmem:[%s252 + $0x50] sm:$0xff] %v797
        %830 = vst [vmem:[%s252 + $0x58] sm:$0xff] %v798
        %831 = vst [vmem:[%s252 + $0x60] sm:$0xff] %v799
        %832 = vst [vmem:[%s252 + $0x68] sm:$0xff] %v800
        %833 = vst [vmem:[%s252 + $0x70] sm:$0xff] %v801
        %834 = vst [vmem:[%s252 + $0x78] sm:$0xff] %v802
        %835 = vst [vmem:[%s252 + $0x80] sm:$0xff] %v803
        %836 = vst [vmem:[%s252 + $0x88] sm:$0xff] %v804
        %837 = vst [vmem:[%s252 + $0x90] sm:$0xff] %v805
        %838 = vst [vmem:[%s252 + $0x98] sm:$0xff] %v806
        %839 = vst [vmem:[%s252 + $0xa0] sm:$0xff] %v807
        %840 = vst [vmem:[%s252 + $0xa8] sm:$0xff] %v808
        %841 = vst [vmem:[%s252 + $0xb0] sm:$0xff] %v809
        %842 = vst [vmem:[%s252 + $0xb8] sm:$0xff] %v810
        %843 = vst [vmem:[%s252 + $0xc0] sm:$0xff] %v811
        %844 = vst [vmem:[%s252 + $0xc8] sm:$0xff] %v812
        %845 = vst [vmem:[%s252 + $0xd0] sm:$0xff] %v813
        %846 = vst [vmem:[%s252 + $0xd8] sm:$0xff] %v814
        %847 = vst [vmem:[%s252 + $0xe0] sm:$0xff] %v815
        %848 = vst [vmem:[%s252 + $0xe8] sm:$0xff] %v816
        %849 = vst [vmem:[%s252 + $0xf0] sm:$0xff] %v817
        %850 = vst [vmem:[%s252 + $0xf8] sm:$0xff] %v818
      $region40: #{srfbn_forward.27} parent=31 // pred_fallthru
        _
      %s851 = smul.u32 32, %s19
      %p852 = scmp.lt.s32.totalorder %s851, 63
      %s853 = scalar_select %p852, %s851, 63
      %p854 = scmp.lt.s32.totalorder %s20, 0
      %s855 = scalar_select %p854, %s20, 0
      %s856 = sadd.s32 %s855, %s853
      %s857 = smul.addr %s856, 8
      %s858 = scalar_lea.vmem %s3, %s857
      // Predicated region
      $region41: #{srfbn_forward.27} parent=31 // pred_check
        %p859 = pneg %p135
      $region42: #{srfbn_forward.27} parent=31 // pred_check_branch
        %861 = sbr.rel (%p859) target = $region44
      $region43: #{srfbn_forward.27} parent=31 // pred_region
        %s862 = smul.u32 32, %s19
      $region44: #{srfbn_forward.27} parent=31 // pred_fallthru
        _
    $region32: #{srfbn_forward.27} parent=5 // pred_fallthru
      _
    %p863 = scmp.le.s32.totalorder 2, %s9
    // Predicated region
    $region45: #{srfbn_forward.27} parent=5 // pred_check
      %p864 = pneg %p863
    $region46: #{srfbn_forward.27} parent=5 // pred_check_branch
      %866 = sbr.rel (%p864) target = $region48
    $region47: #{srfbn_forward.27} parent=5 // pred_region
      %s867 = ssub.s32 %s9, 2
      // Predicated region
      $region49: #{srfbn_forward.27} parent=47 // pred_check
        %p868 = pneg %p141
      $region50: #{srfbn_forward.27} parent=47 // pred_check_branch
        %870 = sbr.rel (%p868) target = $region52
      $region51: #{srfbn_forward.27} parent=47 // pred_region
        %s871 = smul.u32 32, %s22
        %p872 = scmp.lt.s32.totalorder %s871, 63
        %s873 = scalar_select %p872, %s871, 63
        %p874 = scmp.lt.s32.totalorder %s23, 0
        %s875 = scalar_select %p874, %s23, 0
        %s876 = sadd.s32 %s875, %s873
        %s877 = smul.addr %s876, 8
        %s878 = scalar_lea.vmem %s3, %s877
      $region52: #{srfbn_forward.27} parent=47 // pred_fallthru
        _
    $region48: #{srfbn_forward.27} parent=5 // pred_fallthru
      _
  $region6: #{srfbn_forward.27} parent=0 // loop_footer
    %s13 = sadd.s32 1, %s9
  $region7: #{srfbn_forward.27} parent=0 // loop_footer_branch
    %8 = sbr.rel target = $region3
  $region8: #{srfbn_forward.27} parent=0 // loop_exit
    _

</llo_original>
